<compile_context>
chip_gen: v7x
topology: tpu7x:2x2x1
jax: 0.10.0
libtpu: 0.0.40
codegen_flags: <defaults>
</compile_context>

<pallas_src>
import functools
import math

import jax
import jax.numpy as jnp
from jax.experimental import pallas as pl
from jax.experimental.pallas import tpu as pltpu


# --------------------------------------------------------------------------
# In-kernel math helpers (operate on loaded values / refs)
# --------------------------------------------------------------------------

def _gelu(x):
    # TODO(synk): F.gelu default in PyTorch is the exact erf form; the tanh
    # approximation is used here to guarantee a Mosaic lowering (|err| ~ 1e-3).
    return jax.nn.gelu(x, approximate=True)


def _layernorm(x, g, b, eps):
    mean = jnp.mean(x, axis=-1, keepdims=True)
    xc = x - mean
    var = jnp.mean(xc * xc, axis=-1, keepdims=True)
    return xc * jax.lax.rsqrt(var + eps) * g + b


def _softmax_exact(x):
    m = jnp.max(x, axis=-1, keepdims=True)
    e = jnp.exp(x - m)
    return e / jnp.sum(e, axis=-1, keepdims=True)


def _attention_block(hn, mask_row, wqkv_ref, bqkv_ref, wo_ref, bo, num_heads):
    """Multi-head self-attention on one sequence, fully in-register.

    hn:       (S, D)   pre-layernormed tokens
    mask_row: (1, S)   additive attention mask (broadcast over heads & queries)
    wqkv_ref: (3*nh, D, Dh) stacked [q_h0..q_h(nh-1), k_h0.., v_h0..] weights
    bqkv_ref: (3*nh, 1, Dh) stacked biases
    wo_ref:   (nh, Dh, D)  output-projection rows per head
    bo:       (1, D)
    """
    S, D = hn.shape
    Dh = D // num_heads
    scale = 1.0 / math.sqrt(Dh)
    acc = jnp.zeros((S, D), jnp.float32)
    for h in range(num_heads):                       # static unroll over heads
        q = jnp.dot(hn, wqkv_ref[h], preferred_element_type=jnp.float32) + bqkv_ref[h]
        k = jnp.dot(hn, wqkv_ref[num_heads + h],
                    preferred_element_type=jnp.float32) + bqkv_ref[num_heads + h]
        v = jnp.dot(hn, wqkv_ref[2 * num_heads + h],
                    preferred_element_type=jnp.float32) + bqkv_ref[2 * num_heads + h]
        # scores = q @ k^T
        s = jax.lax.dot_general(q, k, (((1,), (1,)), ((), ())),
                                preferred_element_type=jnp.float32) * scale
        s = s + mask_row                              # (S,S) + (1,S) broadcast
        m = jnp.max(s, axis=-1, keepdims=True)
        e = jnp.exp(s - m)
        p = e * pl.reciprocal(jnp.sum(e, axis=-1, keepdims=True), approx=True)
        ctx = jnp.dot(p, v, preferred_element_type=jnp.float32)        # (S, Dh)
        # ctx_all @ Wo  ==  sum_h ctx_h @ Wo[rows of head h]
        acc = acc + jnp.dot(ctx, wo_ref[h], preferred_element_type=jnp.float32)
    return acc + bo


def _vit_layer_body(x, mask_row, ln1g, ln1b, wqkv_ref, bqkv_ref, wo_ref, bo,
                    ln2g, ln2b, wi, bi, wo2, bo2, num_heads, eps):
    """VanillaViTLayer (pre-layernorm ViT block), dropouts are identity."""
    hn = _layernorm(x, ln1g, ln1b, eps)
    x = x + _attention_block(hn, mask_row, wqkv_ref, bqkv_ref, wo_ref, bo, num_heads)
    hn2 = _layernorm(x, ln2g, ln2b, eps)
    mlp = _gelu(jnp.dot(hn2, wi, preferred_element_type=jnp.float32) + bi)
    return x + jnp.dot(mlp, wo2, preferred_element_type=jnp.float32) + bo2


# --------------------------------------------------------------------------
# Pallas kernels
# --------------------------------------------------------------------------

def embed_kernel(x_ref, wp_ref, bp_ref, o_ref):
    """Patch-embedding conv as matmul: (1,NP,CPP) @ (CPP,H) + b."""
    o_ref[0] = jnp.dot(x_ref[0], wp_ref[...],
                       preferred_element_type=jnp.float32) + bp_ref[...]


def vit_layer_kernel(h_ref, mask_ref, ln1g_ref, ln1b_ref, wqkv_ref, bqkv_ref,
                     wo_ref, bo_ref, ln2g_ref, ln2b_ref, wi_ref, bi_ref,
                     wo2_ref, bo2_ref, o_ref, *, num_heads, eps):
    """One full encoder layer for one batch element, fused."""
    o_ref[0] = _vit_layer_body(
        h_ref[0], mask_ref[0],
        ln1g_ref[...], ln1b_ref[...], wqkv_ref, bqkv_ref, wo_ref, bo_ref[...],
        ln2g_ref[...], ln2b_ref[...], wi_ref[...], bi_ref[...],
        wo2_ref[...], bo2_ref[...], num_heads, eps)


def side_layer_kernel(h_ref, side_ref, mask_ref, wmap_ref, bmap_ref,
                      ln1g_ref, ln1b_ref, wqkv_ref, bqkv_ref, wo_ref, bo_ref,
                      ln2g_ref, ln2b_ref, wi_ref, bi_ref, wo2_ref, bo2_ref,
                      o_ref, *, num_heads, eps):
    """Fused side-branch step: side += gelu(h @ Wmap + bmap); side = ViTLayer(side)."""
    side_in = side_ref[0] + _gelu(
        jnp.dot(h_ref[0], wmap_ref[...], preferred_element_type=jnp.float32)
        + bmap_ref[...])
    o_ref[0] = _vit_layer_body(
        side_in, mask_ref[0],
        ln1g_ref[...], ln1b_ref[...], wqkv_ref, bqkv_ref, wo_ref, bo_ref[...],
        ln2g_ref[...], ln2b_ref[...], wi_ref[...], bi_ref[...],
        wo2_ref[...], bo2_ref[...], num_heads, eps)


def heads_kernel(ch_ref, cs_ref, lng_ref, lnb_ref, slng_ref, slnb_ref,
                 wc_ref, bc_ref, wsc_ref, bsc_ref, logits_ref, srg_ref, *, eps):
    """Final LayerNorm (CLS rows only) + both classifiers + both softmaxes."""
    h = _layernorm(ch_ref[...], lng_ref[...], lnb_ref[...], eps)
    s = _layernorm(cs_ref[...], slng_ref[...], slnb_ref[...], eps)
    logits_ref[...] = _softmax_exact(
        jnp.dot(h, wc_ref[...], preferred_element_type=jnp.float32) + bc_ref[...])
    srg_ref[...] = _softmax_exact(
        jnp.dot(s, wsc_ref[...], preferred_element_type=jnp.float32) + bsc_ref[...])


# --------------------------------------------------------------------------
# pallas_call wrappers
# --------------------------------------------------------------------------

def _rep_spec(shape):
    """Full-array block, same block for every grid step (DMA'd once, revisited)."""
    zeros = (0,) * len(shape)
    return pl.BlockSpec(shape, lambda b, _z=zeros: _z)


def patch_embed(x, pe):
    B, NP, CPP = x.shape
    H = pe['wp'].shape[1]
    return pl.pallas_call(
        embed_kernel,
        out_shape=jax.ShapeDtypeStruct((B, NP, H), jnp.float32),
        grid=(B,),
        in_specs=[pl.BlockSpec((1, NP, CPP), lambda b: (b, 0, 0)),
                  _rep_spec(pe['wp'].shape), _rep_spec(pe['bp'].shape)],
        out_specs=pl.BlockSpec((1, NP, H), lambda b: (b, 0, 0)),
        compiler_params=pltpu.CompilerParams(dimension_semantics=("parallel",)),
    )(x, pe['wp'], pe['bp'])


def vit_layer(h, mask3, p, num_heads, eps):
    B, S, D = h.shape
    inputs = (h, mask3, p['ln1_g'], p['ln1_b'], p['wqkv'], p['bqkv'], p['wo'],
              p['bo'], p['ln2_g'], p['ln2_b'], p['wi'], p['bi'], p['wo2'], p['bo2'])
    in_specs = [pl.BlockSpec((1, S, D), lambda b: (b, 0, 0)),
                pl.BlockSpec((1, 1, S), lambda b: (b, 0, 0))]
    in_specs += [_rep_spec(a.shape) for a in inputs[2:]]
    return pl.pallas_call(
        functools.partial(vit_layer_kernel, num_heads=num_heads, eps=eps),
        out_shape=jax.ShapeDtypeStruct((B, S, D), jnp.float32),
        grid=(B,),
        in_specs=in_specs,
        out_specs=pl.BlockSpec((1, S, D), lambda b: (b, 0, 0)),
        compiler_params=pltpu.CompilerParams(dimension_semantics=("parallel",)),
    )(*inputs)


def side_layer(h, side_prev, mask3, mp, p, num_heads, eps):
    B, S, D = h.shape
    SH = side_prev.shape[-1]
    inputs = (h, side_prev, mask3, mp['w'], mp['b'],
              p['ln1_g'], p['ln1_b'], p['wqkv'], p['bqkv'], p['wo'], p['bo'],
              p['ln2_g'], p['ln2_b'], p['wi'], p['bi'], p['wo2'], p['bo2'])
    in_specs = [pl.BlockSpec((1, S, D), lambda b: (b, 0, 0)),
                pl.BlockSpec((1, S, SH), lambda b: (b, 0, 0)),
                pl.BlockSpec((1, 1, S), lambda b: (b, 0, 0))]
    in_specs += [_rep_spec(a.shape) for a in inputs[3:]]
    return pl.pallas_call(
        functools.partial(side_layer_kernel, num_heads=num_heads, eps=eps),
        out_shape=jax.ShapeDtypeStruct((B, S, SH), jnp.float32),
        grid=(B,),
        in_specs=in_specs,
        out_specs=pl.BlockSpec((1, S, SH), lambda b: (b, 0, 0)),
        compiler_params=pltpu.CompilerParams(dimension_semantics=("parallel",)),
    )(*inputs)


def classify_heads(cls_h, cls_s, params, eps):
    B = cls_h.shape[0]
    NL = params['wc'].shape[1]
    inputs = (cls_h, cls_s, params['ln_g'], params['ln_b'],
              params['s_ln_g'], params['s_ln_b'],
              params['wc'], params['bc'], params['wsc'], params['bsc'])
    in_specs = [_rep_spec(a.shape) for a in inputs]
    return pl.pallas_call(
        functools.partial(heads_kernel, eps=eps),
        out_shape=(jax.ShapeDtypeStruct((B, NL), jnp.float32),
                   jax.ShapeDtypeStruct((B, NL), jnp.float32)),
        grid=(1,),
        in_specs=in_specs,
        out_specs=(_rep_spec((B, NL)), _rep_spec((B, NL))),
        compiler_params=pltpu.CompilerParams(dimension_semantics=("arbitrary",)),
    )(*inputs)


# --------------------------------------------------------------------------
# LttViTSurrogate forward
# --------------------------------------------------------------------------

def ltt_vit_surrogate_forward(pixel_values, attention_mask, params, cfg):
    eps = cfg['layer_norm_eps']
    nh = cfg['num_attention_heads']
    H = cfg['hidden_size']
    SH = cfg['s_attn_hidden_size']
    P = cfg['img_patch_size']
    B, C, Hpx, Wpx = pixel_values.shape
    NP = (Hpx // P) * (Wpx // P)
    S = NP + 1

    # --- VanillaViTEmbeddings: patch conv (matmul kernel) + CLS + pos emb ---
    x = pixel_values.reshape(B, C, Hpx // P, P, Wpx // P, P)
    x = x.transpose(0, 2, 4, 1, 3, 5).reshape(B, NP, C * P * P)
    patches = patch_embed(x, params['emb'])                     # (B, NP, H)
    cls = jnp.broadcast_to(params['emb']['cls'], (B, 1, H))
    h = jnp.concatenate([cls, patches], axis=1) + params['emb']['pos']

    # TODO(synk): exact VanillaViTLayer attention-mask semantics are not given in
    # the source; standard BERT-style additive masking is used (1.0 = attend,
    # 0.0 = masked), a no-op for an all-ones mask.
    mask3 = ((1.0 - attention_mask) * -1e9).reshape(B, 1, S)

    # --- LttViTMultiEncoder, num_side_branches=1, side_layer_branches=[0] ---
    side = jnp.zeros((B, S, SH), jnp.float32)   # side_state starts as 0.0
    for i in range(cfg['num_hidden_layers']):
        h = vit_layer(h, mask3, params['layers'][i], nh, eps)
        side = side_layer(h, side, mask3, params['s_maps'][i],
                          params['s_layers'][i], nh, eps)

    # --- final LN + classifiers + softmax (LttViTSurrogate) ---
    # The final LayerNorms are per-token, and only the CLS token feeds the
    # classifiers, so we layernorm just the CLS rows inside the fused heads kernel.
    logits, srg_logits = classify_heads(h[:, 0, :], side[:, 0, :], params, eps)
    return srg_logits, logits


# --------------------------------------------------------------------------
# Deterministic parameter init (synthetic; shapes follow the module __init__)
# --------------------------------------------------------------------------

def init_params(key, cfg):
    H, I = cfg['hidden_size'], cfg['intermediate_size']
    SH, SI = cfg['s_attn_hidden_size'], cfg['s_attn_intermediate_size']
    C, P = cfg['img_channels'], cfg['img_patch_size']
    n_patches = (cfg['img_px_size'] // P) ** 2
    L, NL = cfg['num_hidden_layers'], cfg['num_labels']

    keys = iter(jax.random.split(key, 128))
    nk = lambda: next(keys)

    def lin(fi, fo):
        return {'w': jax.random.normal(nk(), (fi, fo), jnp.float32) * 0.02,
                'b': jnp.zeros((fo,), jnp.float32)}

    def vit_layer_p(h, inter):
        return {'ln1_g': jnp.ones((h,), jnp.float32), 'ln1_b': jnp.zeros((h,), jnp.float32),
                'q': lin(h, h), 'k': lin(h, h), 'v': lin(h, h), 'o': lin(h, h),
                'ln2_g': jnp.ones((h,), jnp.float32), 'ln2_b': jnp.zeros((h,), jnp.float32),
                'int': lin(h, inter), 'out': lin(inter, h)}

    return {
        'emb': {'patch': lin(C * P * P, H),
                'cls': jax.random.normal(nk(), (1, 1, H), jnp.float32) * 0.02,
                'pos': jax.random.normal(nk(), (1, n_patches + 1, H), jnp.float32) * 0.02},
        'layers': [vit_layer_p(H, I) for _ in range(L)],
        's_maps': [lin(H, SH) for _ in range(L)],
        's_layers': [vit_layer_p(SH, SI) for _ in range(L)],
        'ln_g': jnp.ones((H,), jnp.float32), 'ln_b': jnp.zeros((H,), jnp.float32),
        's_ln_g': jnp.ones((SH,), jnp.float32), 's_ln_b': jnp.zeros((SH,), jnp.float32),
        'classifier': lin(H, NL),
        's_classifier': lin(SH, NL),
    }


def prepare_params(p, cfg):
    """Reshape / stack the module-style params into kernel-friendly layouts.

    QKV weights are stacked per-head along a leading dim (3*nh, D, Dh) so the
    fused layer kernel gets them in one DMA stream and indexes heads on the
    untiled leading axis (avoids unaligned lane slicing at head_dim=8)."""
    nh = cfg['num_attention_heads']

    def prep_layer(lp):
        D = lp['q']['w'].shape[0]
        Dh = D // nh
        ws, bs = [], []
        for proj in ('q', 'k', 'v'):
            w, b = lp[proj]['w'], lp[proj]['b']
            for hh in range(nh):
                ws.append(w[:, hh * Dh:(hh + 1) * Dh])
                bs.append(b[hh * Dh:(hh + 1) * Dh].reshape(1, Dh))
        wo_stack = jnp.stack([lp['o']['w'][hh * Dh:(hh + 1) * Dh, :]
                              for hh in range(nh)], axis=0)
        return dict(
            ln1_g=lp['ln1_g'].reshape(1, -1), ln1_b=lp['ln1_b'].reshape(1, -1),
            wqkv=jnp.stack(ws, axis=0), bqkv=jnp.stack(bs, axis=0),
            wo=wo_stack, bo=lp['o']['b'].reshape(1, -1),
            ln2_g=lp['ln2_g'].reshape(1, -1), ln2_b=lp['ln2_b'].reshape(1, -1),
            wi=lp['int']['w'], bi=lp['int']['b'].reshape(1, -1),
            wo2=lp['out']['w'], bo2=lp['out']['b'].reshape(1, -1))

    return {
        'emb': dict(wp=p['emb']['patch']['w'],
                    bp=p['emb']['patch']['b'].reshape(1, -1),
                    cls=p['emb']['cls'], pos=p['emb']['pos']),
        'layers': [prep_layer(lp) for lp in p['layers']],
        's_maps': [dict(w=m['w'], b=m['b'].reshape(1, -1)) for m in p['s_maps']],
        's_layers': [prep_layer(lp) for lp in p['s_layers']],
        'ln_g': p['ln_g'].reshape(1, -1), 'ln_b': p['ln_b'].reshape(1, -1),
        's_ln_g': p['s_ln_g'].reshape(1, -1), 's_ln_b': p['s_ln_b'].reshape(1, -1),
        'wc': p['classifier']['w'], 'bc': p['classifier']['b'].reshape(1, -1),
        'wsc': p['s_classifier']['w'], 'bsc': p['s_classifier']['b'].reshape(1, -1),
    }


# --------------------------------------------------------------------------
# main
# --------------------------------------------------------------------------

if __name__ == "__main__":
    cfg = dict(
        attention_probs_dropout_prob=0.0,   # dropouts: identity (eval semantics)
        hidden_dropout_prob=0.0,
        hidden_size=32,
        intermediate_size=64,
        layer_norm_eps=1e-12,
        num_attention_heads=4,
        num_hidden_layers=2,
        num_labels=10,
        s_attn_hidden_size=32,
        s_attn_intermediate_size=64,
        img_channels=3,
        img_px_size=16,
        img_patch_size=4,
    )

    key = jax.random.PRNGKey(0)
    pkey, xkey = jax.random.split(key)
    raw_params = init_params(pkey, cfg)
    params = prepare_params(raw_params, cfg)

    B = 2
    S = (cfg['img_px_size'] // cfg['img_patch_size']) ** 2 + 1   # 17 (CLS + 16 patches)
    pixel_values = jax.random.normal(
        xkey, (B, cfg['img_channels'], cfg['img_px_size'], cfg['img_px_size']),
        jnp.float32)
    attention_mask = jnp.ones((B, S), jnp.float32)

    fwd = jax.jit(lambda pv, am: ltt_vit_surrogate_forward(pv, am, params, cfg))
    srg_logits, logits = fwd(pixel_values, attention_mask)
    jax.block_until_ready((srg_logits, logits))

    assert srg_logits.shape == (B, cfg['num_labels'])
    assert logits.shape == (B, cfg['num_labels'])
    assert jnp.all(jnp.isfinite(srg_logits)) and jnp.all(jnp.isfinite(logits))
    # classifier softmaxes use exact division -> rows sum to 1
    assert jnp.allclose(jnp.sum(logits, axis=-1), 1.0, atol=1e-5)
    assert jnp.allclose(jnp.sum(srg_logits, axis=-1), 1.0, atol=1e-5)

    print("KERNEL_OK")
</pallas_src>

<mosaic_0001>
module attributes {stable_mosaic.version = 11 : i64} {
  func.func @embed_kernel(%arg0: i32, %arg1: memref<1x16x48xf32, #tpu.memory_space<vmem>>, %arg2: memref<48x32xf32, #tpu.memory_space<vmem>>, %arg3: memref<1x32xf32, #tpu.memory_space<vmem>>, %arg4: memref<1x16x32xf32, #tpu.memory_space<vmem>>) attributes {dimension_semantics = [#tpu.dimension_semantics<parallel>], iteration_bounds = array<i64: 2>, scalar_prefetch = 0 : i64, scratch_operands = 0 : i64, tpu.core_type = #tpu.core_type<tc>, window_params = [{transform_indices = @transform_0, window_bounds = array<i64: 1, 16, 48>}, {pipeline_mode = #tpu.pipeline_mode<synchronous>, transform_indices = @transform_1, window_bounds = array<i64: 48, 32>}, {pipeline_mode = #tpu.pipeline_mode<synchronous>, transform_indices = @transform_2, window_bounds = array<i64: 1, 32>}, {transform_indices = @transform_3, window_bounds = array<i64: 1, 16, 32>}]} {
    %c0 = arith.constant 0 : index
    %c0_0 = arith.constant 0 : index
    %c0_1 = arith.constant 0 : index
    %0 = vector.load %arg1[%c0, %c0_0, %c0_1] : memref<1x16x48xf32, #tpu.memory_space<vmem>>, vector<1x16x48xf32>
    %1 = vector.shape_cast %0 : vector<1x16x48xf32> to vector<16x48xf32>
    %c0_2 = arith.constant 0 : index
    %c0_3 = arith.constant 0 : index
    %2 = vector.load %arg2[%c0_2, %c0_3] : memref<48x32xf32, #tpu.memory_space<vmem>>, vector<48x32xf32>
    %cst = arith.constant dense<0.000000e+00> : vector<16x32xf32>
    %3 = tpu.matmul %1, %2, %cst {dimension_numbers = #tpu.dot_dimension_numbers<[1], [0], [0], [1], [0, 0, 1, 1], [], []>} : vector<16x48xf32>, vector<48x32xf32>, vector<16x32xf32> -> vector<16x32xf32>
    %c0_4 = arith.constant 0 : index
    %c0_5 = arith.constant 0 : index
    %4 = vector.load %arg3[%c0_4, %c0_5] : memref<1x32xf32, #tpu.memory_space<vmem>>, vector<1x32xf32>
    %5 = vector.broadcast %4 : vector<1x32xf32> to vector<16x32xf32>
    %6 = arith.addf %3, %5 : vector<16x32xf32>
    %c0_6 = arith.constant 0 : index
    %c0_7 = arith.constant 0 : index
    %c0_8 = arith.constant 0 : index
    %7 = vector.load %arg4[%c0_6, %c0_7, %c0_8] : memref<1x16x32xf32, #tpu.memory_space<vmem>>, vector<1x16x32xf32>
    %8 = vector.shape_cast %7 : vector<1x16x32xf32> to vector<16x32xf32>
    %9 = vector.shape_cast %6 : vector<16x32xf32> to vector<1x16x32xf32>
    tpu.vector_store %arg4[%c0_6, %c0_7, %c0_8], %9 {strides = array<i32>} : memref<1x16x32xf32, #tpu.memory_space<vmem>>, vector<1x16x32xf32>,
    return
  }
  func.func @transform_0(%arg0: i32) -> (i32, i32, i32) {
    %c0_i32 = arith.constant 0 : i32
    %c0_i32_0 = arith.constant 0 : i32
    %c0_i32_1 = arith.constant 0 : i32
    return %arg0, %c0_i32, %c0_i32_0 : i32, i32, i32
  }
  func.func @transform_1(%arg0: i32) -> (i32, i32) {
    %c0_i32 = arith.constant 0 : i32
    %c0_i32_0 = arith.constant 0 : i32
    %c0_i32_1 = arith.constant 0 : i32
    return %c0_i32, %c0_i32_0 : i32, i32
  }
  func.func @transform_2(%arg0: i32) -> (i32, i32) {
    %c0_i32 = arith.constant 0 : i32
    %c0_i32_0 = arith.constant 0 : i32
    %c0_i32_1 = arith.constant 0 : i32
    return %c0_i32, %c0_i32_0 : i32, i32
  }
  func.func @transform_3(%arg0: i32) -> (i32, i32, i32) {
    %c0_i32 = arith.constant 0 : i32
    %c0_i32_0 = arith.constant 0 : i32
    %c0_i32_1 = arith.constant 0 : i32
    return %arg0, %c0_i32, %c0_i32_0 : i32, i32, i32
  }
}

module attributes {stable_mosaic.version = 11 : i64} {
  func.func @heads_kernel(%arg0: i32, %arg1: memref<2x32xf32, #tpu.memory_space<vmem>>, %arg2: memref<2x32xf32, #tpu.memory_space<vmem>>, %arg3: memref<1x32xf32, #tpu.memory_space<vmem>>, %arg4: memref<1x32xf32, #tpu.memory_space<vmem>>, %arg5: memref<1x32xf32, #tpu.memory_space<vmem>>, %arg6: memref<1x32xf32, #tpu.memory_space<vmem>>, %arg7: memref<32x10xf32, #tpu.memory_space<vmem>>, %arg8: memref<1x10xf32, #tpu.memory_space<vmem>>, %arg9: memref<32x10xf32, #tpu.memory_space<vmem>>, %arg10: memref<1x10xf32, #tpu.memory_space<vmem>>, %arg11: memref<2x10xf32, #tpu.memory_space<vmem>>, %arg12: memref<2x10xf32, #tpu.memory_space<vmem>>) attributes {dimension_semantics = [#tpu.dimension_semantics<arbitrary>], iteration_bounds = array<i64: 1>, scalar_prefetch = 0 : i64, scratch_operands = 0 : i64, tpu.core_type = #tpu.core_type<tc>, window_params = [{pipeline_mode = #tpu.pipeline_mode<synchronous>, transform_indices = @transform_0, window_bounds = array<i64: 2, 32>}, {pipeline_mode = #tpu.pipeline_mode<synchronous>, transform_indices = @transform_1, window_bounds = array<i64: 2, 32>}, {pipeline_mode = #tpu.pipeline_mode<synchronous>, transform_indices = @transform_2, window_bounds = array<i64: 1, 32>}, {pipeline_mode = #tpu.pipeline_mode<synchronous>, transform_indices = @transform_3, window_bounds = array<i64: 1, 32>}, {pipeline_mode = #tpu.pipeline_mode<synchronous>, transform_indices = @transform_4, window_bounds = array<i64: 1, 32>}, {pipeline_mode = #tpu.pipeline_mode<synchronous>, transform_indices = @transform_5, window_bounds = array<i64: 1, 32>}, {pipeline_mode = #tpu.pipeline_mode<synchronous>, transform_indices = @transform_6, window_bounds = array<i64: 32, 10>}, {pipeline_mode = #tpu.pipeline_mode<synchronous>, transform_indices = @transform_7, window_bounds = array<i64: 1, 10>}, {pipeline_mode = #tpu.pipeline_mode<synchronous>, transform_indices = @transform_8, window_bounds = array<i64: 32, 10>}, {pipeline_mode = #tpu.pipeline_mode<synchronous>, transform_indices = @transform_9, window_bounds = array<i64: 1, 10>}, {pipeline_mode = #tpu.pipeline_mode<synchronous>, transform_indices = @transform_10, window_bounds = array<i64: 2, 10>}, {pipeline_mode = #tpu.pipeline_mode<synchronous>, transform_indices = @transform_11, window_bounds = array<i64: 2, 10>}]} {
    %c0 = arith.constant 0 : index
    %c0_0 = arith.constant 0 : index
    %0 = vector.load %arg1[%c0, %c0_0] : memref<2x32xf32, #tpu.memory_space<vmem>>, vector<2x32xf32>
    %c0_1 = arith.constant 0 : index
    %c0_2 = arith.constant 0 : index
    %1 = vector.load %arg3[%c0_1, %c0_2] : memref<1x32xf32, #tpu.memory_space<vmem>>, vector<1x32xf32>
    %c0_3 = arith.constant 0 : index
    %c0_4 = arith.constant 0 : index
    %2 = vector.load %arg4[%c0_3, %c0_4] : memref<1x32xf32, #tpu.memory_space<vmem>>, vector<1x32xf32>
    %cst = arith.constant dense<0.000000e+00> : vector<2xf32>
    %3 = vector.multi_reduction <add>, %0, %cst [1] : vector<2x32xf32> to vector<2xf32>
    %4 = vector.shape_cast %3 : vector<2xf32> to vector<2x1xf32>
    %cst_5 = arith.constant 3.200000e+01 : f32
    %5 = vector.broadcast %cst_5 : f32 to vector<2x1xf32>
    %6 = arith.divf %4, %5 : vector<2x1xf32>
    %7 = vector.broadcast %6 : vector<2x1xf32> to vector<2x32xf32>
    %8 = arith.subf %0, %7 : vector<2x32xf32>
    %9 = arith.mulf %8, %8 : vector<2x32xf32>
    %cst_6 = arith.constant dense<0.000000e+00> : vector<2xf32>
    %10 = vector.multi_reduction <add>, %9, %cst_6 [1] : vector<2x32xf32> to vector<2xf32>
    %11 = vector.shape_cast %10 : vector<2xf32> to vector<2x1xf32>
    %cst_7 = arith.constant 3.200000e+01 : f32
    %12 = vector.broadcast %cst_7 : f32 to vector<2x1xf32>
    %13 = arith.divf %11, %12 : vector<2x1xf32>
    %cst_8 = arith.constant 9.99999996E-13 : f32
    %14 = vector.broadcast %cst_8 : f32 to vector<2x1xf32>
    %15 = arith.addf %13, %14 : vector<2x1xf32>
    %16 = math.rsqrt %15 : vector<2x1xf32>
    %17 = vector.broadcast %16 : vector<2x1xf32> to vector<2x32xf32>
    %18 = arith.mulf %8, %17 : vector<2x32xf32>
    %19 = vector.broadcast %1 : vector<1x32xf32> to vector<2x32xf32>
    %20 = arith.mulf %18, %19 : vector<2x32xf32>
    %21 = vector.broadcast %2 : vector<1x32xf32> to vector<2x32xf32>
    %22 = arith.addf %20, %21 : vector<2x32xf32>
    %c0_9 = arith.constant 0 : index
    %c0_10 = arith.constant 0 : index
    %23 = vector.load %arg2[%c0_9, %c0_10] : memref<2x32xf32, #tpu.memory_space<vmem>>, vector<2x32xf32>
    %c0_11 = arith.constant 0 : index
    %c0_12 = arith.constant 0 : index
    %24 = vector.load %arg5[%c0_11, %c0_12] : memref<1x32xf32, #tpu.memory_space<vmem>>, vector<1x32xf32>
    %c0_13 = arith.constant 0 : index
    %c0_14 = arith.constant 0 : index
    %25 = vector.load %arg6[%c0_13, %c0_14] : memref<1x32xf32, #tpu.memory_space<vmem>>, vector<1x32xf32>
    %cst_15 = arith.constant dense<0.000000e+00> : vector<2xf32>
    %26 = vector.multi_reduction <add>, %23, %cst_15 [1] : vector<2x32xf32> to vector<2xf32>
    %27 = vector.shape_cast %26 : vector<2xf32> to vector<2x1xf32>
    %cst_16 = arith.constant 3.200000e+01 : f32
    %28 = vector.broadcast %cst_16 : f32 to vector<2x1xf32>
    %29 = arith.divf %27, %28 : vector<2x1xf32>
    %30 = vector.broadcast %29 : vector<2x1xf32> to vector<2x32xf32>
    %31 = arith.subf %23, %30 : vector<2x32xf32>
    %32 = arith.mulf %31, %31 : vector<2x32xf32>
    %cst_17 = arith.constant dense<0.000000e+00> : vector<2xf32>
    %33 = vector.multi_reduction <add>, %32, %cst_17 [1] : vector<2x32xf32> to vector<2xf32>
    %34 = vector.shape_cast %33 : vector<2xf32> to vector<2x1xf32>
    %cst_18 = arith.constant 3.200000e+01 : f32
    %35 = vector.broadcast %cst_18 : f32 to vector<2x1xf32>
    %36 = arith.divf %34, %35 : vector<2x1xf32>
    %cst_19 = arith.constant 9.99999996E-13 : f32
    %37 = vector.broadcast %cst_19 : f32 to vector<2x1xf32>
    %38 = arith.addf %36, %37 : vector<2x1xf32>
    %39 = math.rsqrt %38 : vector<2x1xf32>
    %40 = vector.broadcast %39 : vector<2x1xf32> to vector<2x32xf32>
    %41 = arith.mulf %31, %40 : vector<2x32xf32>
    %42 = vector.broadcast %24 : vector<1x32xf32> to vector<2x32xf32>
    %43 = arith.mulf %41, %42 : vector<2x32xf32>
    %44 = vector.broadcast %25 : vector<1x32xf32> to vector<2x32xf32>
    %45 = arith.addf %43, %44 : vector<2x32xf32>
    %c0_20 = arith.constant 0 : index
    %c0_21 = arith.constant 0 : index
    %46 = vector.load %arg7[%c0_20, %c0_21] : memref<32x10xf32, #tpu.memory_space<vmem>>, vector<32x10xf32>
    %cst_22 = arith.constant dense<0.000000e+00> : vector<2x10xf32>
    %47 = tpu.matmul %22, %46, %cst_22 {dimension_numbers = #tpu.dot_dimension_numbers<[1], [0], [0], [1], [0, 0, 1, 1], [], []>} : vector<2x32xf32>, vector<32x10xf32>, vector<2x10xf32> -> vector<2x10xf32>
    %c0_23 = arith.constant 0 : index
    %c0_24 = arith.constant 0 : index
    %48 = vector.load %arg8[%c0_23, %c0_24] : memref<1x10xf32, #tpu.memory_space<vmem>>, vector<1x10xf32>
    %49 = vector.broadcast %48 : vector<1x10xf32> to vector<2x10xf32>
    %50 = arith.addf %47, %49 : vector<2x10xf32>
    %cst_25 = arith.constant dense<0xFF800000> : vector<2xf32>
    %51 = vector.multi_reduction <maximumf>, %50, %cst_25 [1] : vector<2x10xf32> to vector<2xf32>
    %52 = vector.shape_cast %51 : vector<2xf32> to vector<2x1xf32>
    %53 = vector.broadcast %52 : vector<2x1xf32> to vector<2x10xf32>
    %54 = arith.subf %50, %53 : vector<2x10xf32>
    %55 = math.exp %54 : vector<2x10xf32>
    %cst_26 = arith.constant dense<0.000000e+00> : vector<2xf32>
    %56 = vector.multi_reduction <add>, %55, %cst_26 [1] : vector<2x10xf32> to vector<2xf32>
    %57 = vector.shape_cast %56 : vector<2xf32> to vector<2x1xf32>
    %58 = vector.broadcast %57 : vector<2x1xf32> to vector<2x10xf32>
    %59 = arith.divf %55, %58 : vector<2x10xf32>
    %c0_27 = arith.constant 0 : index
    %c0_28 = arith.constant 0 : index
    %60 = vector.load %arg11[%c0_27, %c0_28] : memref<2x10xf32, #tpu.memory_space<vmem>>, vector<2x10xf32>
    tpu.vector_store %arg11[%c0_27, %c0_28], %59 {strides = array<i32>} : memref<2x10xf32, #tpu.memory_space<vmem>>, vector<2x10xf32>,
    %c0_29 = arith.constant 0 : index
    %c0_30 = arith.constant 0 : index
    %61 = vector.load %arg9[%c0_29, %c0_30] : memref<32x10xf32, #tpu.memory_space<vmem>>, vector<32x10xf32>
    %cst_31 = arith.constant dense<0.000000e+00> : vector<2x10xf32>
    %62 = tpu.matmul %45, %61, %cst_31 {dimension_numbers = #tpu.dot_dimension_numbers<[1], [0], [0], [1], [0, 0, 1, 1], [], []>} : vector<2x32xf32>, vector<32x10xf32>, vector<2x10xf32> -> vector<2x10xf32>
    %c0_32 = arith.constant 0 : index
    %c0_33 = arith.constant 0 : index
    %63 = vector.load %arg10[%c0_32, %c0_33] : memref<1x10xf32, #tpu.memory_space<vmem>>, vector<1x10xf32>
    %64 = vector.broadcast %63 : vector<1x10xf32> to vector<2x10xf32>
    %65 = arith.addf %62, %64 : vector<2x10xf32>
    %cst_34 = arith.constant dense<0xFF800000> : vector<2xf32>
    %66 = vector.multi_reduction <maximumf>, %65, %cst_34 [1] : vector<2x10xf32> to vector<2xf32>
    %67 = vector.shape_cast %66 : vector<2xf32> to vector<2x1xf32>
    %68 = vector.broadcast %67 : vector<2x1xf32> to vector<2x10xf32>
    %69 = arith.subf %65, %68 : vector<2x10xf32>
    %70 = math.exp %69 : vector<2x10xf32>
    %cst_35 = arith.constant dense<0.000000e+00> : vector<2xf32>
    %71 = vector.multi_reduction <add>, %70, %cst_35 [1] : vector<2x10xf32> to vector<2xf32>
    %72 = vector.shape_cast %71 : vector<2xf32> to vector<2x1xf32>
    %73 = vector.broadcast %72 : vector<2x1xf32> to vector<2x10xf32>
    %74 = arith.divf %70, %73 : vector<2x10xf32>
    %c0_36 = arith.constant 0 : index
    %c0_37 = arith.constant 0 : index
    %75 = vector.load %arg12[%c0_36, %c0_37] : memref<2x10xf32, #tpu.memory_space<vmem>>, vector<2x10xf32>
    tpu.vector_store %arg12[%c0_36, %c0_37], %74 {strides = array<i32>} : memref<2x10xf32, #tpu.memory_space<vmem>>, vector<2x10xf32>,
    return
  }
  func.func @transform_0(%arg0: i32) -> (i32, i32) {
    %c0_i32 = arith.constant 0 : i32
    %c0_i32_0 = arith.constant 0 : i32
    %c0_i32_1 = arith.constant 0 : i32
    return %c0_i32, %c0_i32_0 : i32, i32
  }
  func.func @transform_1(%arg0: i32) -> (i32, i32) {
    %c0_i32 = arith.constant 0 : i32
    %c0_i32_0 = arith.constant 0 : i32
    %c0_i32_1 = arith.constant 0 : i32
    return %c0_i32, %c0_i32_0 : i32, i32
  }
  func.func @transform_2(%arg0: i32) -> (i32, i32) {
    %c0_i32 = arith.constant 0 : i32
    %c0_i32_0 = arith.constant 0 : i32
    %c0_i32_1 = arith.constant 0 : i32
    return %c0_i32, %c0_i32_0 : i32, i32
  }
  func.func @transform_3(%arg0: i32) -> (i32, i32) {
    %c0_i32 = arith.constant 0 : i32
    %c0_i32_0 = arith.constant 0 : i32
    %c0_i32_1 = arith.constant 0 : i32
    return %c0_i32, %c0_i32_0 : i32, i32
  }
  func.func @transform_4(%arg0: i32) -> (i32, i32) {
    %c0_i32 = arith.constant 0 : i32
    %c0_i32_0 = arith.constant 0 : i32
    %c0_i32_1 = arith.constant 0 : i32
    return %c0_i32, %c0_i32_0 : i32, i32
  }
  func.func @transform_5(%arg0: i32) -> (i32, i32) {
    %c0_i32 = arith.constant 0 : i32
    %c0_i32_0 = arith.constant 0 : i32
    %c0_i32_1 = arith.constant 0 : i32
    return %c0_i32, %c0_i32_0 : i32, i32
  }
  func.func @transform_6(%arg0: i32) -> (i32, i32) {
    %c0_i32 = arith.constant 0 : i32
    %c0_i32_0 = arith.constant 0 : i32
    %c0_i32_1 = arith.constant 0 : i32
    return %c0_i32, %c0_i32_0 : i32, i32
  }
  func.func @transform_7(%arg0: i32) -> (i32, i32) {
    %c0_i32 = arith.constant 0 : i32
    %c0_i32_0 = arith.constant 0 : i32
    %c0_i32_1 = arith.constant 0 : i32
    return %c0_i32, %c0_i32_0 : i32, i32
  }
  func.func @transform_8(%arg0: i32) -> (i32, i32) {
    %c0_i32 = arith.constant 0 : i32
    %c0_i32_0 = arith.constant 0 : i32
    %c0_i32_1 = arith.constant 0 : i32
    return %c0_i32, %c0_i32_0 : i32, i32
  }
  func.func @transform_9(%arg0: i32) -> (i32, i32) {
    %c0_i32 = arith.constant 0 : i32
    %c0_i32_0 = arith.constant 0 : i32
    %c0_i32_1 = arith.constant 0 : i32
    return %c0_i32, %c0_i32_0 : i32, i32
  }
  func.func @transform_10(%arg0: i32) -> (i32, i32) {
    %c0_i32 = arith.constant 0 : i32
    %c0_i32_0 = arith.constant 0 : i32
    %c0_i32_1 = arith.constant 0 : i32
    return %c0_i32, %c0_i32_0 : i32, i32
  }
  func.func @transform_11(%arg0: i32) -> (i32, i32) {
    %c0_i32 = arith.constant 0 : i32
    %c0_i32_0 = arith.constant 0 : i32
    %c0_i32_1 = arith.constant 0 : i32
    return %c0_i32, %c0_i32_0 : i32, i32
  }
}

module attributes {stable_mosaic.version = 11 : i64} {
  func.func @vit_layer_kernel(%arg0: i32, %arg1: memref<1x17x32xf32, #tpu.memory_space<vmem>>, %arg2: memref<1x1x17xf32, #tpu.memory_space<vmem>>, %arg3: memref<1x32xf32, #tpu.memory_space<vmem>>, %arg4: memref<1x32xf32, #tpu.memory_space<vmem>>, %arg5: memref<12x32x8xf32, #tpu.memory_space<vmem>>, %arg6: memref<12x1x8xf32, #tpu.memory_space<vmem>>, %arg7: memref<4x8x32xf32, #tpu.memory_space<vmem>>, %arg8: memref<1x32xf32, #tpu.memory_space<vmem>>, %arg9: memref<1x32xf32, #tpu.memory_space<vmem>>, %arg10: memref<1x32xf32, #tpu.memory_space<vmem>>, %arg11: memref<32x64xf32, #tpu.memory_space<vmem>>, %arg12: memref<1x64xf32, #tpu.memory_space<vmem>>, %arg13: memref<64x32xf32, #tpu.memory_space<vmem>>, %arg14: memref<1x32xf32, #tpu.memory_space<vmem>>, %arg15: memref<1x17x32xf32, #tpu.memory_space<vmem>>) attributes {dimension_semantics = [#tpu.dimension_semantics<parallel>], iteration_bounds = array<i64: 2>, scalar_prefetch = 0 : i64, scratch_operands = 0 : i64, tpu.core_type = #tpu.core_type<tc>, window_params = [{transform_indices = @transform_0, window_bounds = array<i64: 1, 17, 32>}, {transform_indices = @transform_1, window_bounds = array<i64: 1, 1, 17>}, {pipeline_mode = #tpu.pipeline_mode<synchronous>, transform_indices = @transform_2, window_bounds = array<i64: 1, 32>}, {pipeline_mode = #tpu.pipeline_mode<synchronous>, transform_indices = @transform_3, window_bounds = array<i64: 1, 32>}, {pipeline_mode = #tpu.pipeline_mode<synchronous>, transform_indices = @transform_4, window_bounds = array<i64: 12, 32, 8>}, {pipeline_mode = #tpu.pipeline_mode<synchronous>, transform_indices = @transform_5, window_bounds = array<i64: 12, 1, 8>}, {pipeline_mode = #tpu.pipeline_mode<synchronous>, transform_indices = @transform_6, window_bounds = array<i64: 4, 8, 32>}, {pipeline_mode = #tpu.pipeline_mode<synchronous>, transform_indices = @transform_7, window_bounds = array<i64: 1, 32>}, {pipeline_mode = #tpu.pipeline_mode<synchronous>, transform_indices = @transform_8, window_bounds = array<i64: 1, 32>}, {pipeline_mode = #tpu.pipeline_mode<synchronous>, transform_indices = @transform_9, window_bounds = array<i64: 1, 32>}, {pipeline_mode = #tpu.pipeline_mode<synchronous>, transform_indices = @transform_10, window_bounds = array<i64: 32, 64>}, {pipeline_mode = #tpu.pipeline_mode<synchronous>, transform_indices = @transform_11, window_bounds = array<i64: 1, 64>}, {pipeline_mode = #tpu.pipeline_mode<synchronous>, transform_indices = @transform_12, window_bounds = array<i64: 64, 32>}, {pipeline_mode = #tpu.pipeline_mode<synchronous>, transform_indices = @transform_13, window_bounds = array<i64: 1, 32>}, {transform_indices = @transform_14, window_bounds = array<i64: 1, 17, 32>}]} {
    %c0 = arith.constant 0 : index
    %c0_0 = arith.constant 0 : index
    %c0_1 = arith.constant 0 : index
    %0 = vector.load %arg1[%c0, %c0_0, %c0_1] : memref<1x17x32xf32, #tpu.memory_space<vmem>>, vector<1x17x32xf32>
    %1 = vector.shape_cast %0 : vector<1x17x32xf32> to vector<17x32xf32>
    %c0_2 = arith.constant 0 : index
    %c0_3 = arith.constant 0 : index
    %c0_4 = arith.constant 0 : index
    %2 = vector.load %arg2[%c0_2, %c0_3, %c0_4] : memref<1x1x17xf32, #tpu.memory_space<vmem>>, vector<1x1x17xf32>
    %3 = vector.shape_cast %2 : vector<1x1x17xf32> to vector<1x17xf32>
    %c0_5 = arith.constant 0 : index
    %c0_6 = arith.constant 0 : index
    %4 = vector.load %arg3[%c0_5, %c0_6] : memref<1x32xf32, #tpu.memory_space<vmem>>, vector<1x32xf32>
    %c0_7 = arith.constant 0 : index
    %c0_8 = arith.constant 0 : index
    %5 = vector.load %arg4[%c0_7, %c0_8] : memref<1x32xf32, #tpu.memory_space<vmem>>, vector<1x32xf32>
    %c0_9 = arith.constant 0 : index
    %c0_10 = arith.constant 0 : index
    %6 = vector.load %arg8[%c0_9, %c0_10] : memref<1x32xf32, #tpu.memory_space<vmem>>, vector<1x32xf32>
    %c0_11 = arith.constant 0 : index
    %c0_12 = arith.constant 0 : index
    %7 = vector.load %arg9[%c0_11, %c0_12] : memref<1x32xf32, #tpu.memory_space<vmem>>, vector<1x32xf32>
    %c0_13 = arith.constant 0 : index
    %c0_14 = arith.constant 0 : index
    %8 = vector.load %arg10[%c0_13, %c0_14] : memref<1x32xf32, #tpu.memory_space<vmem>>, vector<1x32xf32>
    %c0_15 = arith.constant 0 : index
    %c0_16 = arith.constant 0 : index
    %9 = vector.load %arg11[%c0_15, %c0_16] : memref<32x64xf32, #tpu.memory_space<vmem>>, vector<32x64xf32>
    %c0_17 = arith.constant 0 : index
    %c0_18 = arith.constant 0 : index
    %10 = vector.load %arg12[%c0_17, %c0_18] : memref<1x64xf32, #tpu.memory_space<vmem>>, vector<1x64xf32>
    %c0_19 = arith.constant 0 : index
    %c0_20 = arith.constant 0 : index
    %11 = vector.load %arg13[%c0_19, %c0_20] : memref<64x32xf32, #tpu.memory_space<vmem>>, vector<64x32xf32>
    %c0_21 = arith.constant 0 : index
    %c0_22 = arith.constant 0 : index
    %12 = vector.load %arg14[%c0_21, %c0_22] : memref<1x32xf32, #tpu.memory_space<vmem>>, vector<1x32xf32>
    %cst = arith.constant dense<0.000000e+00> : vector<17xf32>
    %13 = vector.multi_reduction <add>, %1, %cst [1] : vector<17x32xf32> to vector<17xf32>
    %14 = vector.shape_cast %13 : vector<17xf32> to vector<17x1xf32>
    %cst_23 = arith.constant 3.200000e+01 : f32
    %15 = vector.broadcast %cst_23 : f32 to vector<17x1xf32>
    %16 = arith.divf %14, %15 : vector<17x1xf32>
    %17 = vector.broadcast %16 : vector<17x1xf32> to vector<17x32xf32>
    %18 = arith.subf %1, %17 : vector<17x32xf32>
    %19 = arith.mulf %18, %18 : vector<17x32xf32>
    %cst_24 = arith.constant dense<0.000000e+00> : vector<17xf32>
    %20 = vector.multi_reduction <add>, %19, %cst_24 [1] : vector<17x32xf32> to vector<17xf32>
    %21 = vector.shape_cast %20 : vector<17xf32> to vector<17x1xf32>
    %cst_25 = arith.constant 3.200000e+01 : f32
    %22 = vector.broadcast %cst_25 : f32 to vector<17x1xf32>
    %23 = arith.divf %21, %22 : vector<17x1xf32>
    %cst_26 = arith.constant 9.99999996E-13 : f32
    %24 = vector.broadcast %cst_26 : f32 to vector<17x1xf32>
    %25 = arith.addf %23, %24 : vector<17x1xf32>
    %26 = math.rsqrt %25 : vector<17x1xf32>
    %27 = vector.broadcast %26 : vector<17x1xf32> to vector<17x32xf32>
    %28 = arith.mulf %18, %27 : vector<17x32xf32>
    %29 = vector.broadcast %4 : vector<1x32xf32> to vector<17x32xf32>
    %30 = arith.mulf %28, %29 : vector<17x32xf32>
    %31 = vector.broadcast %5 : vector<1x32xf32> to vector<17x32xf32>
    %32 = arith.addf %30, %31 : vector<17x32xf32>
    %cst_27 = arith.constant 0.000000e+00 : f32
    %33 = vector.broadcast %cst_27 : f32 to vector<17x32xf32>
    %c0_28 = arith.constant 0 : index
    %c0_29 = arith.constant 0 : index
    %c0_30 = arith.constant 0 : index
    %34 = vector.load %arg5[%c0_28, %c0_29, %c0_30] : memref<12x32x8xf32, #tpu.memory_space<vmem>>, vector<1x32x8xf32>
    %35 = vector.shape_cast %34 : vector<1x32x8xf32> to vector<32x8xf32>
    %cst_31 = arith.constant dense<0.000000e+00> : vector<17x8xf32>
    %36 = tpu.matmul %32, %35, %cst_31 {dimension_numbers = #tpu.dot_dimension_numbers<[1], [0], [0], [1], [0, 0, 1, 1], [], []>} : vector<17x32xf32>, vector<32x8xf32>, vector<17x8xf32> -> vector<17x8xf32>
    %c0_32 = arith.constant 0 : index
    %c0_33 = arith.constant 0 : index
    %c0_34 = arith.constant 0 : index
    %37 = vector.load %arg6[%c0_32, %c0_33, %c0_34] : memref<12x1x8xf32, #tpu.memory_space<vmem>>, vector<1x1x8xf32>
    %38 = vector.shape_cast %37 : vector<1x1x8xf32> to vector<1x8xf32>
    %39 = vector.broadcast %38 : vector<1x8xf32> to vector<17x8xf32>
    %40 = arith.addf %36, %39 : vector<17x8xf32>
    %c4 = arith.constant 4 : index
    %c0_35 = arith.constant 0 : index
    %c0_36 = arith.constant 0 : index
    %41 = vector.load %arg5[%c4, %c0_35, %c0_36] : memref<12x32x8xf32, #tpu.memory_space<vmem>>, vector<1x32x8xf32>
    %42 = vector.shape_cast %41 : vector<1x32x8xf32> to vector<32x8xf32>
    %cst_37 = arith.constant dense<0.000000e+00> : vector<17x8xf32>
    %43 = tpu.matmul %32, %42, %cst_37 {dimension_numbers = #tpu.dot_dimension_numbers<[1], [0], [0], [1], [0, 0, 1, 1], [], []>} : vector<17x32xf32>, vector<32x8xf32>, vector<17x8xf32> -> vector<17x8xf32>
    %c4_38 = arith.constant 4 : index
    %c0_39 = arith.constant 0 : index
    %c0_40 = arith.constant 0 : index
    %44 = vector.load %arg6[%c4_38, %c0_39, %c0_40] : memref<12x1x8xf32, #tpu.memory_space<vmem>>, vector<1x1x8xf32>
    %45 = vector.shape_cast %44 : vector<1x1x8xf32> to vector<1x8xf32>
    %46 = vector.broadcast %45 : vector<1x8xf32> to vector<17x8xf32>
    %47 = arith.addf %43, %46 : vector<17x8xf32>
    %c8 = arith.constant 8 : index
    %c0_41 = arith.constant 0 : index
    %c0_42 = arith.constant 0 : index
    %48 = vector.load %arg5[%c8, %c0_41, %c0_42] : memref<12x32x8xf32, #tpu.memory_space<vmem>>, vector<1x32x8xf32>
    %49 = vector.shape_cast %48 : vector<1x32x8xf32> to vector<32x8xf32>
    %cst_43 = arith.constant dense<0.000000e+00> : vector<17x8xf32>
    %50 = tpu.matmul %32, %49, %cst_43 {dimension_numbers = #tpu.dot_dimension_numbers<[1], [0], [0], [1], [0, 0, 1, 1], [], []>} : vector<17x32xf32>, vector<32x8xf32>, vector<17x8xf32> -> vector<17x8xf32>
    %c8_44 = arith.constant 8 : index
    %c0_45 = arith.constant 0 : index
    %c0_46 = arith.constant 0 : index
    %51 = vector.load %arg6[%c8_44, %c0_45, %c0_46] : memref<12x1x8xf32, #tpu.memory_space<vmem>>, vector<1x1x8xf32>
    %52 = vector.shape_cast %51 : vector<1x1x8xf32> to vector<1x8xf32>
    %53 = vector.broadcast %52 : vector<1x8xf32> to vector<17x8xf32>
    %54 = arith.addf %50, %53 : vector<17x8xf32>
    %cst_47 = arith.constant dense<0.000000e+00> : vector<17x17xf32>
    %55 = tpu.matmul %40, %47, %cst_47 {dimension_numbers = #tpu.dot_dimension_numbers<[1], [1], [0], [0], [0, 0, 1, 0], [], []>} : vector<17x8xf32>, vector<17x8xf32>, vector<17x17xf32> -> vector<17x17xf32>
    %cst_48 = arith.constant 0.353553385 : f32
    %56 = vector.broadcast %cst_48 : f32 to vector<17x17xf32>
    %57 = arith.mulf %55, %56 : vector<17x17xf32>
    %58 = vector.broadcast %3 : vector<1x17xf32> to vector<17x17xf32>
    %59 = arith.addf %57, %58 : vector<17x17xf32>
    %cst_49 = arith.constant dense<0xFF800000> : vector<17xf32>
    %60 = vector.multi_reduction <maximumf>, %59, %cst_49 [1] : vector<17x17xf32> to vector<17xf32>
    %61 = vector.shape_cast %60 : vector<17xf32> to vector<17x1xf32>
    %62 = vector.broadcast %61 : vector<17x1xf32> to vector<17x17xf32>
    %63 = arith.subf %59, %62 : vector<17x17xf32>
    %64 = math.exp %63 : vector<17x17xf32>
    %cst_50 = arith.constant dense<0.000000e+00> : vector<17xf32>
    %65 = vector.multi_reduction <add>, %64, %cst_50 [1] : vector<17x17xf32> to vector<17xf32>
    %66 = vector.shape_cast %65 : vector<17xf32> to vector<17x1xf32>
    %67 = tpu.reciprocal %66 {approx = true} : vector<17x1xf32> -> vector<17x1xf32>
    %68 = vector.broadcast %67 : vector<17x1xf32> to vector<17x17xf32>
    %69 = arith.mulf %64, %68 : vector<17x17xf32>
    %cst_51 = arith.constant dense<0.000000e+00> : vector<17x8xf32>
    %70 = tpu.matmul %69, %54, %cst_51 {dimension_numbers = #tpu.dot_dimension_numbers<[1], [0], [0], [1], [0, 0, 1, 1], [], []>} : vector<17x17xf32>, vector<17x8xf32>, vector<17x8xf32> -> vector<17x8xf32>
    %c0_52 = arith.constant 0 : index
    %c0_53 = arith.constant 0 : index
    %c0_54 = arith.constant 0 : index
    %71 = vector.load %arg7[%c0_52, %c0_53, %c0_54] : memref<4x8x32xf32, #tpu.memory_space<vmem>>, vector<1x8x32xf32>
    %72 = vector.shape_cast %71 : vector<1x8x32xf32> to vector<8x32xf32>
    %cst_55 = arith.constant dense<0.000000e+00> : vector<17x32xf32>
    %73 = tpu.matmul %70, %72, %cst_55 {dimension_numbers = #tpu.dot_dimension_numbers<[1], [0], [0], [1], [0, 0, 1, 1], [], []>} : vector<17x8xf32>, vector<8x32xf32>, vector<17x32xf32> -> vector<17x32xf32>
    %74 = arith.addf %33, %73 : vector<17x32xf32>
    %c1 = arith.constant 1 : index
    %c0_56 = arith.constant 0 : index
    %c0_57 = arith.constant 0 : index
    %75 = vector.load %arg5[%c1, %c0_56, %c0_57] : memref<12x32x8xf32, #tpu.memory_space<vmem>>, vector<1x32x8xf32>
    %76 = vector.shape_cast %75 : vector<1x32x8xf32> to vector<32x8xf32>
    %cst_58 = arith.constant dense<0.000000e+00> : vector<17x8xf32>
    %77 = tpu.matmul %32, %76, %cst_58 {dimension_numbers = #tpu.dot_dimension_numbers<[1], [0], [0], [1], [0, 0, 1, 1], [], []>} : vector<17x32xf32>, vector<32x8xf32>, vector<17x8xf32> -> vector<17x8xf32>
    %c1_59 = arith.constant 1 : index
    %c0_60 = arith.constant 0 : index
    %c0_61 = arith.constant 0 : index
    %78 = vector.load %arg6[%c1_59, %c0_60, %c0_61] : memref<12x1x8xf32, #tpu.memory_space<vmem>>, vector<1x1x8xf32>
    %79 = vector.shape_cast %78 : vector<1x1x8xf32> to vector<1x8xf32>
    %80 = vector.broadcast %79 : vector<1x8xf32> to vector<17x8xf32>
    %81 = arith.addf %77, %80 : vector<17x8xf32>
    %c5 = arith.constant 5 : index
    %c0_62 = arith.constant 0 : index
    %c0_63 = arith.constant 0 : index
    %82 = vector.load %arg5[%c5, %c0_62, %c0_63] : memref<12x32x8xf32, #tpu.memory_space<vmem>>, vector<1x32x8xf32>
    %83 = vector.shape_cast %82 : vector<1x32x8xf32> to vector<32x8xf32>
    %cst_64 = arith.constant dense<0.000000e+00> : vector<17x8xf32>
    %84 = tpu.matmul %32, %83, %cst_64 {dimension_numbers = #tpu.dot_dimension_numbers<[1], [0], [0], [1], [0, 0, 1, 1], [], []>} : vector<17x32xf32>, vector<32x8xf32>, vector<17x8xf32> -> vector<17x8xf32>
    %c5_65 = arith.constant 5 : index
    %c0_66 = arith.constant 0 : index
    %c0_67 = arith.constant 0 : index
    %85 = vector.load %arg6[%c5_65, %c0_66, %c0_67] : memref<12x1x8xf32, #tpu.memory_space<vmem>>, vector<1x1x8xf32>
    %86 = vector.shape_cast %85 : vector<1x1x8xf32> to vector<1x8xf32>
    %87 = vector.broadcast %86 : vector<1x8xf32> to vector<17x8xf32>
    %88 = arith.addf %84, %87 : vector<17x8xf32>
    %c9 = arith.constant 9 : index
    %c0_68 = arith.constant 0 : index
    %c0_69 = arith.constant 0 : index
    %89 = vector.load %arg5[%c9, %c0_68, %c0_69] : memref<12x32x8xf32, #tpu.memory_space<vmem>>, vector<1x32x8xf32>
    %90 = vector.shape_cast %89 : vector<1x32x8xf32> to vector<32x8xf32>
    %cst_70 = arith.constant dense<0.000000e+00> : vector<17x8xf32>
    %91 = tpu.matmul %32, %90, %cst_70 {dimension_numbers = #tpu.dot_dimension_numbers<[1], [0], [0], [1], [0, 0, 1, 1], [], []>} : vector<17x32xf32>, vector<32x8xf32>, vector<17x8xf32> -> vector<17x8xf32>
    %c9_71 = arith.constant 9 : index
    %c0_72 = arith.constant 0 : index
    %c0_73 = arith.constant 0 : index
    %92 = vector.load %arg6[%c9_71, %c0_72, %c0_73] : memref<12x1x8xf32, #tpu.memory_space<vmem>>, vector<1x1x8xf32>
    %93 = vector.shape_cast %92 : vector<1x1x8xf32> to vector<1x8xf32>
    %94 = vector.broadcast %93 : vector<1x8xf32> to vector<17x8xf32>
    %95 = arith.addf %91, %94 : vector<17x8xf32>
    %cst_74 = arith.constant dense<0.000000e+00> : vector<17x17xf32>
    %96 = tpu.matmul %81, %88, %cst_74 {dimension_numbers = #tpu.dot_dimension_numbers<[1], [1], [0], [0], [0, 0, 1, 0], [], []>} : vector<17x8xf32>, vector<17x8xf32>, vector<17x17xf32> -> vector<17x17xf32>
    %cst_75 = arith.constant 0.353553385 : f32
    %97 = vector.broadcast %cst_75 : f32 to vector<17x17xf32>
    %98 = arith.mulf %96, %97 : vector<17x17xf32>
    %99 = vector.broadcast %3 : vector<1x17xf32> to vector<17x17xf32>
    %100 = arith.addf %98, %99 : vector<17x17xf32>
    %cst_76 = arith.constant dense<0xFF800000> : vector<17xf32>
    %101 = vector.multi_reduction <maximumf>, %100, %cst_76 [1] : vector<17x17xf32> to vector<17xf32>
    %102 = vector.shape_cast %101 : vector<17xf32> to vector<17x1xf32>
    %103 = vector.broadcast %102 : vector<17x1xf32> to vector<17x17xf32>
    %104 = arith.subf %100, %103 : vector<17x17xf32>
    %105 = math.exp %104 : vector<17x17xf32>
    %cst_77 = arith.constant dense<0.000000e+00> : vector<17xf32>
    %106 = vector.multi_reduction <add>, %105, %cst_77 [1] : vector<17x17xf32> to vector<17xf32>
    %107 = vector.shape_cast %106 : vector<17xf32> to vector<17x1xf32>
    %108 = tpu.reciprocal %107 {approx = true} : vector<17x1xf32> -> vector<17x1xf32>
    %109 = vector.broadcast %108 : vector<17x1xf32> to vector<17x17xf32>
    %110 = arith.mulf %105, %109 : vector<17x17xf32>
    %cst_78 = arith.constant dense<0.000000e+00> : vector<17x8xf32>
    %111 = tpu.matmul %110, %95, %cst_78 {dimension_numbers = #tpu.dot_dimension_numbers<[1], [0], [0], [1], [0, 0, 1, 1], [], []>} : vector<17x17xf32>, vector<17x8xf32>, vector<17x8xf32> -> vector<17x8xf32>
    %c1_79 = arith.constant 1 : index
    %c0_80 = arith.constant 0 : index
    %c0_81 = arith.constant 0 : index
    %112 = vector.load %arg7[%c1_79, %c0_80, %c0_81] : memref<4x8x32xf32, #tpu.memory_space<vmem>>, vector<1x8x32xf32>
    %113 = vector.shape_cast %112 : vector<1x8x32xf32> to vector<8x32xf32>
    %cst_82 = arith.constant dense<0.000000e+00> : vector<17x32xf32>
    %114 = tpu.matmul %111, %113, %cst_82 {dimension_numbers = #tpu.dot_dimension_numbers<[1], [0], [0], [1], [0, 0, 1, 1], [], []>} : vector<17x8xf32>, vector<8x32xf32>, vector<17x32xf32> -> vector<17x32xf32>
    %115 = arith.addf %74, %114 : vector<17x32xf32>
    %c2 = arith.constant 2 : index
    %c0_83 = arith.constant 0 : index
    %c0_84 = arith.constant 0 : index
    %116 = vector.load %arg5[%c2, %c0_83, %c0_84] : memref<12x32x8xf32, #tpu.memory_space<vmem>>, vector<1x32x8xf32>
    %117 = vector.shape_cast %116 : vector<1x32x8xf32> to vector<32x8xf32>
    %cst_85 = arith.constant dense<0.000000e+00> : vector<17x8xf32>
    %118 = tpu.matmul %32, %117, %cst_85 {dimension_numbers = #tpu.dot_dimension_numbers<[1], [0], [0], [1], [0, 0, 1, 1], [], []>} : vector<17x32xf32>, vector<32x8xf32>, vector<17x8xf32> -> vector<17x8xf32>
    %c2_86 = arith.constant 2 : index
    %c0_87 = arith.constant 0 : index
    %c0_88 = arith.constant 0 : index
    %119 = vector.load %arg6[%c2_86, %c0_87, %c0_88] : memref<12x1x8xf32, #tpu.memory_space<vmem>>, vector<1x1x8xf32>
    %120 = vector.shape_cast %119 : vector<1x1x8xf32> to vector<1x8xf32>
    %121 = vector.broadcast %120 : vector<1x8xf32> to vector<17x8xf32>
    %122 = arith.addf %118, %121 : vector<17x8xf32>
    %c6 = arith.constant 6 : index
    %c0_89 = arith.constant 0 : index
    %c0_90 = arith.constant 0 : index
    %123 = vector.load %arg5[%c6, %c0_89, %c0_90] : memref<12x32x8xf32, #tpu.memory_space<vmem>>, vector<1x32x8xf32>
    %124 = vector.shape_cast %123 : vector<1x32x8xf32> to vector<32x8xf32>
    %cst_91 = arith.constant dense<0.000000e+00> : vector<17x8xf32>
    %125 = tpu.matmul %32, %124, %cst_91 {dimension_numbers = #tpu.dot_dimension_numbers<[1], [0], [0], [1], [0, 0, 1, 1], [], []>} : vector<17x32xf32>, vector<32x8xf32>, vector<17x8xf32> -> vector<17x8xf32>
    %c6_92 = arith.constant 6 : index
    %c0_93 = arith.constant 0 : index
    %c0_94 = arith.constant 0 : index
    %126 = vector.load %arg6[%c6_92, %c0_93, %c0_94] : memref<12x1x8xf32, #tpu.memory_space<vmem>>, vector<1x1x8xf32>
    %127 = vector.shape_cast %126 : vector<1x1x8xf32> to vector<1x8xf32>
    %128 = vector.broadcast %127 : vector<1x8xf32> to vector<17x8xf32>
    %129 = arith.addf %125, %128 : vector<17x8xf32>
    %c10 = arith.constant 10 : index
    %c0_95 = arith.constant 0 : index
    %c0_96 = arith.constant 0 : index
    %130 = vector.load %arg5[%c10, %c0_95, %c0_96] : memref<12x32x8xf32, #tpu.memory_space<vmem>>, vector<1x32x8xf32>
    %131 = vector.shape_cast %130 : vector<1x32x8xf32> to vector<32x8xf32>
    %cst_97 = arith.constant dense<0.000000e+00> : vector<17x8xf32>
    %132 = tpu.matmul %32, %131, %cst_97 {dimension_numbers = #tpu.dot_dimension_numbers<[1], [0], [0], [1], [0, 0, 1, 1], [], []>} : vector<17x32xf32>, vector<32x8xf32>, vector<17x8xf32> -> vector<17x8xf32>
    %c10_98 = arith.constant 10 : index
    %c0_99 = arith.constant 0 : index
    %c0_100 = arith.constant 0 : index
    %133 = vector.load %arg6[%c10_98, %c0_99, %c0_100] : memref<12x1x8xf32, #tpu.memory_space<vmem>>, vector<1x1x8xf32>
    %134 = vector.shape_cast %133 : vector<1x1x8xf32> to vector<1x8xf32>
    %135 = vector.broadcast %134 : vector<1x8xf32> to vector<17x8xf32>
    %136 = arith.addf %132, %135 : vector<17x8xf32>
    %cst_101 = arith.constant dense<0.000000e+00> : vector<17x17xf32>
    %137 = tpu.matmul %122, %129, %cst_101 {dimension_numbers = #tpu.dot_dimension_numbers<[1], [1], [0], [0], [0, 0, 1, 0], [], []>} : vector<17x8xf32>, vector<17x8xf32>, vector<17x17xf32> -> vector<17x17xf32>
    %cst_102 = arith.constant 0.353553385 : f32
    %138 = vector.broadcast %cst_102 : f32 to vector<17x17xf32>
    %139 = arith.mulf %137, %138 : vector<17x17xf32>
    %140 = vector.broadcast %3 : vector<1x17xf32> to vector<17x17xf32>
    %141 = arith.addf %139, %140 : vector<17x17xf32>
    %cst_103 = arith.constant dense<0xFF800000> : vector<17xf32>
    %142 = vector.multi_reduction <maximumf>, %141, %cst_103 [1] : vector<17x17xf32> to vector<17xf32>
    %143 = vector.shape_cast %142 : vector<17xf32> to vector<17x1xf32>
    %144 = vector.broadcast %143 : vector<17x1xf32> to vector<17x17xf32>
    %145 = arith.subf %141, %144 : vector<17x17xf32>
    %146 = math.exp %145 : vector<17x17xf32>
    %cst_104 = arith.constant dense<0.000000e+00> : vector<17xf32>
    %147 = vector.multi_reduction <add>, %146, %cst_104 [1] : vector<17x17xf32> to vector<17xf32>
    %148 = vector.shape_cast %147 : vector<17xf32> to vector<17x1xf32>
    %149 = tpu.reciprocal %148 {approx = true} : vector<17x1xf32> -> vector<17x1xf32>
    %150 = vector.broadcast %149 : vector<17x1xf32> to vector<17x17xf32>
    %151 = arith.mulf %146, %150 : vector<17x17xf32>
    %cst_105 = arith.constant dense<0.000000e+00> : vector<17x8xf32>
    %152 = tpu.matmul %151, %136, %cst_105 {dimension_numbers = #tpu.dot_dimension_numbers<[1], [0], [0], [1], [0, 0, 1, 1], [], []>} : vector<17x17xf32>, vector<17x8xf32>, vector<17x8xf32> -> vector<17x8xf32>
    %c2_106 = arith.constant 2 : index
    %c0_107 = arith.constant 0 : index
    %c0_108 = arith.constant 0 : index
    %153 = vector.load %arg7[%c2_106, %c0_107, %c0_108] : memref<4x8x32xf32, #tpu.memory_space<vmem>>, vector<1x8x32xf32>
    %154 = vector.shape_cast %153 : vector<1x8x32xf32> to vector<8x32xf32>
    %cst_109 = arith.constant dense<0.000000e+00> : vector<17x32xf32>
    %155 = tpu.matmul %152, %154, %cst_109 {dimension_numbers = #tpu.dot_dimension_numbers<[1], [0], [0], [1], [0, 0, 1, 1], [], []>} : vector<17x8xf32>, vector<8x32xf32>, vector<17x32xf32> -> vector<17x32xf32>
    %156 = arith.addf %115, %155 : vector<17x32xf32>
    %c3 = arith.constant 3 : index
    %c0_110 = arith.constant 0 : index
    %c0_111 = arith.constant 0 : index
    %157 = vector.load %arg5[%c3, %c0_110, %c0_111] : memref<12x32x8xf32, #tpu.memory_space<vmem>>, vector<1x32x8xf32>
    %158 = vector.shape_cast %157 : vector<1x32x8xf32> to vector<32x8xf32>
    %cst_112 = arith.constant dense<0.000000e+00> : vector<17x8xf32>
    %159 = tpu.matmul %32, %158, %cst_112 {dimension_numbers = #tpu.dot_dimension_numbers<[1], [0], [0], [1], [0, 0, 1, 1], [], []>} : vector<17x32xf32>, vector<32x8xf32>, vector<17x8xf32> -> vector<17x8xf32>
    %c3_113 = arith.constant 3 : index
    %c0_114 = arith.constant 0 : index
    %c0_115 = arith.constant 0 : index
    %160 = vector.load %arg6[%c3_113, %c0_114, %c0_115] : memref<12x1x8xf32, #tpu.memory_space<vmem>>, vector<1x1x8xf32>
    %161 = vector.shape_cast %160 : vector<1x1x8xf32> to vector<1x8xf32>
    %162 = vector.broadcast %161 : vector<1x8xf32> to vector<17x8xf32>
    %163 = arith.addf %159, %162 : vector<17x8xf32>
    %c7 = arith.constant 7 : index
    %c0_116 = arith.constant 0 : index
    %c0_117 = arith.constant 0 : index
    %164 = vector.load %arg5[%c7, %c0_116, %c0_117] : memref<12x32x8xf32, #tpu.memory_space<vmem>>, vector<1x32x8xf32>
    %165 = vector.shape_cast %164 : vector<1x32x8xf32> to vector<32x8xf32>
    %cst_118 = arith.constant dense<0.000000e+00> : vector<17x8xf32>
    %166 = tpu.matmul %32, %165, %cst_118 {dimension_numbers = #tpu.dot_dimension_numbers<[1], [0], [0], [1], [0, 0, 1, 1], [], []>} : vector<17x32xf32>, vector<32x8xf32>, vector<17x8xf32> -> vector<17x8xf32>
    %c7_119 = arith.constant 7 : index
    %c0_120 = arith.constant 0 : index
    %c0_121 = arith.constant 0 : index
    %167 = vector.load %arg6[%c7_119, %c0_120, %c0_121] : memref<12x1x8xf32, #tpu.memory_space<vmem>>, vector<1x1x8xf32>
    %168 = vector.shape_cast %167 : vector<1x1x8xf32> to vector<1x8xf32>
    %169 = vector.broadcast %168 : vector<1x8xf32> to vector<17x8xf32>
    %170 = arith.addf %166, %169 : vector<17x8xf32>
    %c11 = arith.constant 11 : index
    %c0_122 = arith.constant 0 : index
    %c0_123 = arith.constant 0 : index
    %171 = vector.load %arg5[%c11, %c0_122, %c0_123] : memref<12x32x8xf32, #tpu.memory_space<vmem>>, vector<1x32x8xf32>
    %172 = vector.shape_cast %171 : vector<1x32x8xf32> to vector<32x8xf32>
    %cst_124 = arith.constant dense<0.000000e+00> : vector<17x8xf32>
    %173 = tpu.matmul %32, %172, %cst_124 {dimension_numbers = #tpu.dot_dimension_numbers<[1], [0], [0], [1], [0, 0, 1, 1], [], []>} : vector<17x32xf32>, vector<32x8xf32>, vector<17x8xf32> -> vector<17x8xf32>
    %c11_125 = arith.constant 11 : index
    %c0_126 = arith.constant 0 : index
    %c0_127 = arith.constant 0 : index
    %174 = vector.load %arg6[%c11_125, %c0_126, %c0_127] : memref<12x1x8xf32, #tpu.memory_space<vmem>>, vector<1x1x8xf32>
    %175 = vector.shape_cast %174 : vector<1x1x8xf32> to vector<1x8xf32>
    %176 = vector.broadcast %175 : vector<1x8xf32> to vector<17x8xf32>
    %177 = arith.addf %173, %176 : vector<17x8xf32>
    %cst_128 = arith.constant dense<0.000000e+00> : vector<17x17xf32>
    %178 = tpu.matmul %163, %170, %cst_128 {dimension_numbers = #tpu.dot_dimension_numbers<[1], [1], [0], [0], [0, 0, 1, 0], [], []>} : vector<17x8xf32>, vector<17x8xf32>, vector<17x17xf32> -> vector<17x17xf32>
    %cst_129 = arith.constant 0.353553385 : f32
    %179 = vector.broadcast %cst_129 : f32 to vector<17x17xf32>
    %180 = arith.mulf %178, %179 : vector<17x17xf32>
    %181 = vector.broadcast %3 : vector<1x17xf32> to vector<17x17xf32>
    %182 = arith.addf %180, %181 : vector<17x17xf32>
    %cst_130 = arith.constant dense<0xFF800000> : vector<17xf32>
    %183 = vector.multi_reduction <maximumf>, %182, %cst_130 [1] : vector<17x17xf32> to vector<17xf32>
    %184 = vector.shape_cast %183 : vector<17xf32> to vector<17x1xf32>
    %185 = vector.broadcast %184 : vector<17x1xf32> to vector<17x17xf32>
    %186 = arith.subf %182, %185 : vector<17x17xf32>
    %187 = math.exp %186 : vector<17x17xf32>
    %cst_131 = arith.constant dense<0.000000e+00> : vector<17xf32>
    %188 = vector.multi_reduction <add>, %187, %cst_131 [1] : vector<17x17xf32> to vector<17xf32>
    %189 = vector.shape_cast %188 : vector<17xf32> to vector<17x1xf32>
    %190 = tpu.reciprocal %189 {approx = true} : vector<17x1xf32> -> vector<17x1xf32>
    %191 = vector.broadcast %190 : vector<17x1xf32> to vector<17x17xf32>
    %192 = arith.mulf %187, %191 : vector<17x17xf32>
    %cst_132 = arith.constant dense<0.000000e+00> : vector<17x8xf32>
    %193 = tpu.matmul %192, %177, %cst_132 {dimension_numbers = #tpu.dot_dimension_numbers<[1], [0], [0], [1], [0, 0, 1, 1], [], []>} : vector<17x17xf32>, vector<17x8xf32>, vector<17x8xf32> -> vector<17x8xf32>
    %c3_133 = arith.constant 3 : index
    %c0_134 = arith.constant 0 : index
    %c0_135 = arith.constant 0 : index
    %194 = vector.load %arg7[%c3_133, %c0_134, %c0_135] : memref<4x8x32xf32, #tpu.memory_space<vmem>>, vector<1x8x32xf32>
    %195 = vector.shape_cast %194 : vector<1x8x32xf32> to vector<8x32xf32>
    %cst_136 = arith.constant dense<0.000000e+00> : vector<17x32xf32>
    %196 = tpu.matmul %193, %195, %cst_136 {dimension_numbers = #tpu.dot_dimension_numbers<[1], [0], [0], [1], [0, 0, 1, 1], [], []>} : vector<17x8xf32>, vector<8x32xf32>, vector<17x32xf32> -> vector<17x32xf32>
    %197 = arith.addf %156, %196 : vector<17x32xf32>
    %198 = vector.broadcast %6 : vector<1x32xf32> to vector<17x32xf32>
    %199 = arith.addf %197, %198 : vector<17x32xf32>
    %200 = arith.addf %1, %199 : vector<17x32xf32>
    %cst_137 = arith.constant dense<0.000000e+00> : vector<17xf32>
    %201 = vector.multi_reduction <add>, %200, %cst_137 [1] : vector<17x32xf32> to vector<17xf32>
    %202 = vector.shape_cast %201 : vector<17xf32> to vector<17x1xf32>
    %cst_138 = arith.constant 3.200000e+01 : f32
    %203 = vector.broadcast %cst_138 : f32 to vector<17x1xf32>
    %204 = arith.divf %202, %203 : vector<17x1xf32>
    %205 = vector.broadcast %204 : vector<17x1xf32> to vector<17x32xf32>
    %206 = arith.subf %200, %205 : vector<17x32xf32>
    %207 = arith.mulf %206, %206 : vector<17x32xf32>
    %cst_139 = arith.constant dense<0.000000e+00> : vector<17xf32>
    %208 = vector.multi_reduction <add>, %207, %cst_139 [1] : vector<17x32xf32> to vector<17xf32>
    %209 = vector.shape_cast %208 : vector<17xf32> to vector<17x1xf32>
    %cst_140 = arith.constant 3.200000e+01 : f32
    %210 = vector.broadcast %cst_140 : f32 to vector<17x1xf32>
    %211 = arith.divf %209, %210 : vector<17x1xf32>
    %cst_141 = arith.constant 9.99999996E-13 : f32
    %212 = vector.broadcast %cst_141 : f32 to vector<17x1xf32>
    %213 = arith.addf %211, %212 : vector<17x1xf32>
    %214 = math.rsqrt %213 : vector<17x1xf32>
    %215 = vector.broadcast %214 : vector<17x1xf32> to vector<17x32xf32>
    %216 = arith.mulf %206, %215 : vector<17x32xf32>
    %217 = vector.broadcast %7 : vector<1x32xf32> to vector<17x32xf32>
    %218 = arith.mulf %216, %217 : vector<17x32xf32>
    %219 = vector.broadcast %8 : vector<1x32xf32> to vector<17x32xf32>
    %220 = arith.addf %218, %219 : vector<17x32xf32>
    %cst_142 = arith.constant dense<0.000000e+00> : vector<17x64xf32>
    %221 = tpu.matmul %220, %9, %cst_142 {dimension_numbers = #tpu.dot_dimension_numbers<[1], [0], [0], [1], [0, 0, 1, 1], [], []>} : vector<17x32xf32>, vector<32x64xf32>, vector<17x64xf32> -> vector<17x64xf32>
    %222 = vector.broadcast %10 : vector<1x64xf32> to vector<17x64xf32>
    %223 = arith.addf %221, %222 : vector<17x64xf32>
    %224 = arith.mulf %223, %223 : vector<17x64xf32>
    %225 = arith.mulf %223, %224 : vector<17x64xf32>
    %cst_143 = arith.constant 4.471500e-02 : f32
    %226 = vector.broadcast %cst_143 : f32 to vector<17x64xf32>
    %227 = arith.mulf %226, %225 : vector<17x64xf32>
    %228 = arith.addf %223, %227 : vector<17x64xf32>
    %cst_144 = arith.constant 0.797884583 : f32
    %229 = vector.broadcast %cst_144 : f32 to vector<17x64xf32>
    %230 = arith.mulf %229, %228 : vector<17x64xf32>
    %231 = math.tanh %230 : vector<17x64xf32>
    %cst_145 = arith.constant 1.000000e+00 : f32
    %232 = vector.broadcast %cst_145 : f32 to vector<17x64xf32>
    %233 = arith.addf %232, %231 : vector<17x64xf32>
    %cst_146 = arith.constant 5.000000e-01 : f32
    %234 = vector.broadcast %cst_146 : f32 to vector<17x64xf32>
    %235 = arith.mulf %234, %233 : vector<17x64xf32>
    %236 = arith.mulf %223, %235 : vector<17x64xf32>
    %cst_147 = arith.constant dense<0.000000e+00> : vector<17x32xf32>
    %237 = tpu.matmul %236, %11, %cst_147 {dimension_numbers = #tpu.dot_dimension_numbers<[1], [0], [0], [1], [0, 0, 1, 1], [], []>} : vector<17x64xf32>, vector<64x32xf32>, vector<17x32xf32> -> vector<17x32xf32>
    %238 = arith.addf %200, %237 : vector<17x32xf32>
    %239 = vector.broadcast %12 : vector<1x32xf32> to vector<17x32xf32>
    %240 = arith.addf %238, %239 : vector<17x32xf32>
    %c0_148 = arith.constant 0 : index
    %c0_149 = arith.constant 0 : index
    %c0_150 = arith.constant 0 : index
    %241 = vector.load %arg15[%c0_148, %c0_149, %c0_150] : memref<1x17x32xf32, #tpu.memory_space<vmem>>, vector<1x17x32xf32>
    %242 = vector.shape_cast %241 : vector<1x17x32xf32> to vector<17x32xf32>
    %243 = vector.shape_cast %240 : vector<17x32xf32> to vector<1x17x32xf32>
    tpu.vector_store %arg15[%c0_148, %c0_149, %c0_150], %243 {strides = array<i32>} : memref<1x17x32xf32, #tpu.memory_space<vmem>>, vector<1x17x32xf32>,
    return
  }
  func.func @transform_0(%arg0: i32) -> (i32, i32, i32) {
    %c0_i32 = arith.constant 0 : i32
    %c0_i32_0 = arith.constant 0 : i32
    %c0_i32_1 = arith.constant 0 : i32
    return %arg0, %c0_i32, %c0_i32_0 : i32, i32, i32
  }
  func.func @transform_1(%arg0: i32) -> (i32, i32, i32) {
    %c0_i32 = arith.constant 0 : i32
    %c0_i32_0 = arith.constant 0 : i32
    %c0_i32_1 = arith.constant 0 : i32
    return %arg0, %c0_i32, %c0_i32_0 : i32, i32, i32
  }
  func.func @transform_2(%arg0: i32) -> (i32, i32) {
    %c0_i32 = arith.constant 0 : i32
    %c0_i32_0 = arith.constant 0 : i32
    %c0_i32_1 = arith.constant 0 : i32
    return %c0_i32, %c0_i32_0 : i32, i32
  }
  func.func @transform_3(%arg0: i32) -> (i32, i32) {
    %c0_i32 = arith.constant 0 : i32
    %c0_i32_0 = arith.constant 0 : i32
    %c0_i32_1 = arith.constant 0 : i32
    return %c0_i32, %c0_i32_0 : i32, i32
  }
  func.func @transform_4(%arg0: i32) -> (i32, i32, i32) {
    %c0_i32 = arith.constant 0 : i32
    %c0_i32_0 = arith.constant 0 : i32
    %c0_i32_1 = arith.constant 0 : i32
    %c0_i32_2 = arith.constant 0 : i32
    return %c0_i32, %c0_i32_0, %c0_i32_1 : i32, i32, i32
  }
  func.func @transform_5(%arg0: i32) -> (i32, i32, i32) {
    %c0_i32 = arith.constant 0 : i32
    %c0_i32_0 = arith.constant 0 : i32
    %c0_i32_1 = arith.constant 0 : i32
    %c0_i32_2 = arith.constant 0 : i32
    return %c0_i32, %c0_i32_0, %c0_i32_1 : i32, i32, i32
  }
  func.func @transform_6(%arg0: i32) -> (i32, i32, i32) {
    %c0_i32 = arith.constant 0 : i32
    %c0_i32_0 = arith.constant 0 : i32
    %c0_i32_1 = arith.constant 0 : i32
    %c0_i32_2 = arith.constant 0 : i32
    return %c0_i32, %c0_i32_0, %c0_i32_1 : i32, i32, i32
  }
  func.func @transform_7(%arg0: i32) -> (i32, i32) {
    %c0_i32 = arith.constant 0 : i32
    %c0_i32_0 = arith.constant 0 : i32
    %c0_i32_1 = arith.constant 0 : i32
    return %c0_i32, %c0_i32_0 : i32, i32
  }
  func.func @transform_8(%arg0: i32) -> (i32, i32) {
    %c0_i32 = arith.constant 0 : i32
    %c0_i32_0 = arith.constant 0 : i32
    %c0_i32_1 = arith.constant 0 : i32
    return %c0_i32, %c0_i32_0 : i32, i32
  }
  func.func @transform_9(%arg0: i32) -> (i32, i32) {
    %c0_i32 = arith.constant 0 : i32
    %c0_i32_0 = arith.constant 0 : i32
    %c0_i32_1 = arith.constant 0 : i32
    return %c0_i32, %c0_i32_0 : i32, i32
  }
  func.func @transform_10(%arg0: i32) -> (i32, i32) {
    %c0_i32 = arith.constant 0 : i32
    %c0_i32_0 = arith.constant 0 : i32
    %c0_i32_1 = arith.constant 0 : i32
    return %c0_i32, %c0_i32_0 : i32, i32
  }
  func.func @transform_11(%arg0: i32) -> (i32, i32) {
    %c0_i32 = arith.constant 0 : i32
    %c0_i32_0 = arith.constant 0 : i32
    %c0_i32_1 = arith.constant 0 : i32
    return %c0_i32, %c0_i32_0 : i32, i32
  }
  func.func @transform_12(%arg0: i32) -> (i32, i32) {
    %c0_i32 = arith.constant 0 : i32
    %c0_i32_0 = arith.constant 0 : i32
    %c0_i32_1 = arith.constant 0 : i32
    return %c0_i32, %c0_i32_0 : i32, i32
  }
  func.func @transform_13(%arg0: i32) -> (i32, i32) {
    %c0_i32 = arith.constant 0 : i32
    %c0_i32_0 = arith.constant 0 : i32
    %c0_i32_1 = arith.constant 0 : i32
    return %c0_i32, %c0_i32_0 : i32, i32
  }
  func.func @transform_14(%arg0: i32) -> (i32, i32, i32) {
    %c0_i32 = arith.constant 0 : i32
    %c0_i32_0 = arith.constant 0 : i32
    %c0_i32_1 = arith.constant 0 : i32
    return %arg0, %c0_i32, %c0_i32_0 : i32, i32, i32
  }
}

module attributes {stable_mosaic.version = 11 : i64} {
  func.func @side_layer_kernel(%arg0: i32, %arg1: memref<1x17x32xf32, #tpu.memory_space<vmem>>, %arg2: memref<1x17x32xf32, #tpu.memory_space<vmem>>, %arg3: memref<1x1x17xf32, #tpu.memory_space<vmem>>, %arg4: memref<32x32xf32, #tpu.memory_space<vmem>>, %arg5: memref<1x32xf32, #tpu.memory_space<vmem>>, %arg6: memref<1x32xf32, #tpu.memory_space<vmem>>, %arg7: memref<1x32xf32, #tpu.memory_space<vmem>>, %arg8: memref<12x32x8xf32, #tpu.memory_space<vmem>>, %arg9: memref<12x1x8xf32, #tpu.memory_space<vmem>>, %arg10: memref<4x8x32xf32, #tpu.memory_space<vmem>>, %arg11: memref<1x32xf32, #tpu.memory_space<vmem>>, %arg12: memref<1x32xf32, #tpu.memory_space<vmem>>, %arg13: memref<1x32xf32, #tpu.memory_space<vmem>>, %arg14: memref<32x64xf32, #tpu.memory_space<vmem>>, %arg15: memref<1x64xf32, #tpu.memory_space<vmem>>, %arg16: memref<64x32xf32, #tpu.memory_space<vmem>>, %arg17: memref<1x32xf32, #tpu.memory_space<vmem>>, %arg18: memref<1x17x32xf32, #tpu.memory_space<vmem>>) attributes {dimension_semantics = [#tpu.dimension_semantics<parallel>], iteration_bounds = array<i64: 2>, scalar_prefetch = 0 : i64, scratch_operands = 0 : i64, tpu.core_type = #tpu.core_type<tc>, window_params = [{transform_indices = @transform_0, window_bounds = array<i64: 1, 17, 32>}, {transform_indices = @transform_1, window_bounds = array<i64: 1, 17, 32>}, {transform_indices = @transform_2, window_bounds = array<i64: 1, 1, 17>}, {pipeline_mode = #tpu.pipeline_mode<synchronous>, transform_indices = @transform_3, window_bounds = array<i64: 32, 32>}, {pipeline_mode = #tpu.pipeline_mode<synchronous>, transform_indices = @transform_4, window_bounds = array<i64: 1, 32>}, {pipeline_mode = #tpu.pipeline_mode<synchronous>, transform_indices = @transform_5, window_bounds = array<i64: 1, 32>}, {pipeline_mode = #tpu.pipeline_mode<synchronous>, transform_indices = @transform_6, window_bounds = array<i64: 1, 32>}, {pipeline_mode = #tpu.pipeline_mode<synchronous>, transform_indices = @transform_7, window_bounds = array<i64: 12, 32, 8>}, {pipeline_mode = #tpu.pipeline_mode<synchronous>, transform_indices = @transform_8, window_bounds = array<i64: 12, 1, 8>}, {pipeline_mode = #tpu.pipeline_mode<synchronous>, transform_indices = @transform_9, window_bounds = array<i64: 4, 8, 32>}, {pipeline_mode = #tpu.pipeline_mode<synchronous>, transform_indices = @transform_10, window_bounds = array<i64: 1, 32>}, {pipeline_mode = #tpu.pipeline_mode<synchronous>, transform_indices = @transform_11, window_bounds = array<i64: 1, 32>}, {pipeline_mode = #tpu.pipeline_mode<synchronous>, transform_indices = @transform_12, window_bounds = array<i64: 1, 32>}, {pipeline_mode = #tpu.pipeline_mode<synchronous>, transform_indices = @transform_13, window_bounds = array<i64: 32, 64>}, {pipeline_mode = #tpu.pipeline_mode<synchronous>, transform_indices = @transform_14, window_bounds = array<i64: 1, 64>}, {pipeline_mode = #tpu.pipeline_mode<synchronous>, transform_indices = @transform_15, window_bounds = array<i64: 64, 32>}, {pipeline_mode = #tpu.pipeline_mode<synchronous>, transform_indices = @transform_16, window_bounds = array<i64: 1, 32>}, {transform_indices = @transform_17, window_bounds = array<i64: 1, 17, 32>}]} {
    %c0 = arith.constant 0 : index
    %c0_0 = arith.constant 0 : index
    %c0_1 = arith.constant 0 : index
    %0 = vector.load %arg2[%c0, %c0_0, %c0_1] : memref<1x17x32xf32, #tpu.memory_space<vmem>>, vector<1x17x32xf32>
    %1 = vector.shape_cast %0 : vector<1x17x32xf32> to vector<17x32xf32>
    %c0_2 = arith.constant 0 : index
    %c0_3 = arith.constant 0 : index
    %c0_4 = arith.constant 0 : index
    %2 = vector.load %arg1[%c0_2, %c0_3, %c0_4] : memref<1x17x32xf32, #tpu.memory_space<vmem>>, vector<1x17x32xf32>
    %3 = vector.shape_cast %2 : vector<1x17x32xf32> to vector<17x32xf32>
    %c0_5 = arith.constant 0 : index
    %c0_6 = arith.constant 0 : index
    %4 = vector.load %arg4[%c0_5, %c0_6] : memref<32x32xf32, #tpu.memory_space<vmem>>, vector<32x32xf32>
    %cst = arith.constant dense<0.000000e+00> : vector<17x32xf32>
    %5 = tpu.matmul %3, %4, %cst {dimension_numbers = #tpu.dot_dimension_numbers<[1], [0], [0], [1], [0, 0, 1, 1], [], []>} : vector<17x32xf32>, vector<32x32xf32>, vector<17x32xf32> -> vector<17x32xf32>
    %c0_7 = arith.constant 0 : index
    %c0_8 = arith.constant 0 : index
    %6 = vector.load %arg5[%c0_7, %c0_8] : memref<1x32xf32, #tpu.memory_space<vmem>>, vector<1x32xf32>
    %7 = vector.broadcast %6 : vector<1x32xf32> to vector<17x32xf32>
    %8 = arith.addf %5, %7 : vector<17x32xf32>
    %9 = arith.mulf %8, %8 : vector<17x32xf32>
    %10 = arith.mulf %8, %9 : vector<17x32xf32>
    %cst_9 = arith.constant 4.471500e-02 : f32
    %11 = vector.broadcast %cst_9 : f32 to vector<17x32xf32>
    %12 = arith.mulf %11, %10 : vector<17x32xf32>
    %13 = arith.addf %8, %12 : vector<17x32xf32>
    %cst_10 = arith.constant 0.797884583 : f32
    %14 = vector.broadcast %cst_10 : f32 to vector<17x32xf32>
    %15 = arith.mulf %14, %13 : vector<17x32xf32>
    %16 = math.tanh %15 : vector<17x32xf32>
    %cst_11 = arith.constant 1.000000e+00 : f32
    %17 = vector.broadcast %cst_11 : f32 to vector<17x32xf32>
    %18 = arith.addf %17, %16 : vector<17x32xf32>
    %cst_12 = arith.constant 5.000000e-01 : f32
    %19 = vector.broadcast %cst_12 : f32 to vector<17x32xf32>
    %20 = arith.mulf %19, %18 : vector<17x32xf32>
    %21 = arith.mulf %8, %20 : vector<17x32xf32>
    %22 = arith.addf %1, %21 : vector<17x32xf32>
    %c0_13 = arith.constant 0 : index
    %c0_14 = arith.constant 0 : index
    %c0_15 = arith.constant 0 : index
    %23 = vector.load %arg3[%c0_13, %c0_14, %c0_15] : memref<1x1x17xf32, #tpu.memory_space<vmem>>, vector<1x1x17xf32>
    %24 = vector.shape_cast %23 : vector<1x1x17xf32> to vector<1x17xf32>
    %c0_16 = arith.constant 0 : index
    %c0_17 = arith.constant 0 : index
    %25 = vector.load %arg6[%c0_16, %c0_17] : memref<1x32xf32, #tpu.memory_space<vmem>>, vector<1x32xf32>
    %c0_18 = arith.constant 0 : index
    %c0_19 = arith.constant 0 : index
    %26 = vector.load %arg7[%c0_18, %c0_19] : memref<1x32xf32, #tpu.memory_space<vmem>>, vector<1x32xf32>
    %c0_20 = arith.constant 0 : index
    %c0_21 = arith.constant 0 : index
    %27 = vector.load %arg11[%c0_20, %c0_21] : memref<1x32xf32, #tpu.memory_space<vmem>>, vector<1x32xf32>
    %c0_22 = arith.constant 0 : index
    %c0_23 = arith.constant 0 : index
    %28 = vector.load %arg12[%c0_22, %c0_23] : memref<1x32xf32, #tpu.memory_space<vmem>>, vector<1x32xf32>
    %c0_24 = arith.constant 0 : index
    %c0_25 = arith.constant 0 : index
    %29 = vector.load %arg13[%c0_24, %c0_25] : memref<1x32xf32, #tpu.memory_space<vmem>>, vector<1x32xf32>
    %c0_26 = arith.constant 0 : index
    %c0_27 = arith.constant 0 : index
    %30 = vector.load %arg14[%c0_26, %c0_27] : memref<32x64xf32, #tpu.memory_space<vmem>>, vector<32x64xf32>
    %c0_28 = arith.constant 0 : index
    %c0_29 = arith.constant 0 : index
    %31 = vector.load %arg15[%c0_28, %c0_29] : memref<1x64xf32, #tpu.memory_space<vmem>>, vector<1x64xf32>
    %c0_30 = arith.constant 0 : index
    %c0_31 = arith.constant 0 : index
    %32 = vector.load %arg16[%c0_30, %c0_31] : memref<64x32xf32, #tpu.memory_space<vmem>>, vector<64x32xf32>
    %c0_32 = arith.constant 0 : index
    %c0_33 = arith.constant 0 : index
    %33 = vector.load %arg17[%c0_32, %c0_33] : memref<1x32xf32, #tpu.memory_space<vmem>>, vector<1x32xf32>
    %cst_34 = arith.constant dense<0.000000e+00> : vector<17xf32>
    %34 = vector.multi_reduction <add>, %22, %cst_34 [1] : vector<17x32xf32> to vector<17xf32>
    %35 = vector.shape_cast %34 : vector<17xf32> to vector<17x1xf32>
    %cst_35 = arith.constant 3.200000e+01 : f32
    %36 = vector.broadcast %cst_35 : f32 to vector<17x1xf32>
    %37 = arith.divf %35, %36 : vector<17x1xf32>
    %38 = vector.broadcast %37 : vector<17x1xf32> to vector<17x32xf32>
    %39 = arith.subf %22, %38 : vector<17x32xf32>
    %40 = arith.mulf %39, %39 : vector<17x32xf32>
    %cst_36 = arith.constant dense<0.000000e+00> : vector<17xf32>
    %41 = vector.multi_reduction <add>, %40, %cst_36 [1] : vector<17x32xf32> to vector<17xf32>
    %42 = vector.shape_cast %41 : vector<17xf32> to vector<17x1xf32>
    %cst_37 = arith.constant 3.200000e+01 : f32
    %43 = vector.broadcast %cst_37 : f32 to vector<17x1xf32>
    %44 = arith.divf %42, %43 : vector<17x1xf32>
    %cst_38 = arith.constant 9.99999996E-13 : f32
    %45 = vector.broadcast %cst_38 : f32 to vector<17x1xf32>
    %46 = arith.addf %44, %45 : vector<17x1xf32>
    %47 = math.rsqrt %46 : vector<17x1xf32>
    %48 = vector.broadcast %47 : vector<17x1xf32> to vector<17x32xf32>
    %49 = arith.mulf %39, %48 : vector<17x32xf32>
    %50 = vector.broadcast %25 : vector<1x32xf32> to vector<17x32xf32>
    %51 = arith.mulf %49, %50 : vector<17x32xf32>
    %52 = vector.broadcast %26 : vector<1x32xf32> to vector<17x32xf32>
    %53 = arith.addf %51, %52 : vector<17x32xf32>
    %cst_39 = arith.constant 0.000000e+00 : f32
    %54 = vector.broadcast %cst_39 : f32 to vector<17x32xf32>
    %c0_40 = arith.constant 0 : index
    %c0_41 = arith.constant 0 : index
    %c0_42 = arith.constant 0 : index
    %55 = vector.load %arg8[%c0_40, %c0_41, %c0_42] : memref<12x32x8xf32, #tpu.memory_space<vmem>>, vector<1x32x8xf32>
    %56 = vector.shape_cast %55 : vector<1x32x8xf32> to vector<32x8xf32>
    %cst_43 = arith.constant dense<0.000000e+00> : vector<17x8xf32>
    %57 = tpu.matmul %53, %56, %cst_43 {dimension_numbers = #tpu.dot_dimension_numbers<[1], [0], [0], [1], [0, 0, 1, 1], [], []>} : vector<17x32xf32>, vector<32x8xf32>, vector<17x8xf32> -> vector<17x8xf32>
    %c0_44 = arith.constant 0 : index
    %c0_45 = arith.constant 0 : index
    %c0_46 = arith.constant 0 : index
    %58 = vector.load %arg9[%c0_44, %c0_45, %c0_46] : memref<12x1x8xf32, #tpu.memory_space<vmem>>, vector<1x1x8xf32>
    %59 = vector.shape_cast %58 : vector<1x1x8xf32> to vector<1x8xf32>
    %60 = vector.broadcast %59 : vector<1x8xf32> to vector<17x8xf32>
    %61 = arith.addf %57, %60 : vector<17x8xf32>
    %c4 = arith.constant 4 : index
    %c0_47 = arith.constant 0 : index
    %c0_48 = arith.constant 0 : index
    %62 = vector.load %arg8[%c4, %c0_47, %c0_48] : memref<12x32x8xf32, #tpu.memory_space<vmem>>, vector<1x32x8xf32>
    %63 = vector.shape_cast %62 : vector<1x32x8xf32> to vector<32x8xf32>
    %cst_49 = arith.constant dense<0.000000e+00> : vector<17x8xf32>
    %64 = tpu.matmul %53, %63, %cst_49 {dimension_numbers = #tpu.dot_dimension_numbers<[1], [0], [0], [1], [0, 0, 1, 1], [], []>} : vector<17x32xf32>, vector<32x8xf32>, vector<17x8xf32> -> vector<17x8xf32>
    %c4_50 = arith.constant 4 : index
    %c0_51 = arith.constant 0 : index
    %c0_52 = arith.constant 0 : index
    %65 = vector.load %arg9[%c4_50, %c0_51, %c0_52] : memref<12x1x8xf32, #tpu.memory_space<vmem>>, vector<1x1x8xf32>
    %66 = vector.shape_cast %65 : vector<1x1x8xf32> to vector<1x8xf32>
    %67 = vector.broadcast %66 : vector<1x8xf32> to vector<17x8xf32>
    %68 = arith.addf %64, %67 : vector<17x8xf32>
    %c8 = arith.constant 8 : index
    %c0_53 = arith.constant 0 : index
    %c0_54 = arith.constant 0 : index
    %69 = vector.load %arg8[%c8, %c0_53, %c0_54] : memref<12x32x8xf32, #tpu.memory_space<vmem>>, vector<1x32x8xf32>
    %70 = vector.shape_cast %69 : vector<1x32x8xf32> to vector<32x8xf32>
    %cst_55 = arith.constant dense<0.000000e+00> : vector<17x8xf32>
    %71 = tpu.matmul %53, %70, %cst_55 {dimension_numbers = #tpu.dot_dimension_numbers<[1], [0], [0], [1], [0, 0, 1, 1], [], []>} : vector<17x32xf32>, vector<32x8xf32>, vector<17x8xf32> -> vector<17x8xf32>
    %c8_56 = arith.constant 8 : index
    %c0_57 = arith.constant 0 : index
    %c0_58 = arith.constant 0 : index
    %72 = vector.load %arg9[%c8_56, %c0_57, %c0_58] : memref<12x1x8xf32, #tpu.memory_space<vmem>>, vector<1x1x8xf32>
    %73 = vector.shape_cast %72 : vector<1x1x8xf32> to vector<1x8xf32>
    %74 = vector.broadcast %73 : vector<1x8xf32> to vector<17x8xf32>
    %75 = arith.addf %71, %74 : vector<17x8xf32>
    %cst_59 = arith.constant dense<0.000000e+00> : vector<17x17xf32>
    %76 = tpu.matmul %61, %68, %cst_59 {dimension_numbers = #tpu.dot_dimension_numbers<[1], [1], [0], [0], [0, 0, 1, 0], [], []>} : vector<17x8xf32>, vector<17x8xf32>, vector<17x17xf32> -> vector<17x17xf32>
    %cst_60 = arith.constant 0.353553385 : f32
    %77 = vector.broadcast %cst_60 : f32 to vector<17x17xf32>
    %78 = arith.mulf %76, %77 : vector<17x17xf32>
    %79 = vector.broadcast %24 : vector<1x17xf32> to vector<17x17xf32>
    %80 = arith.addf %78, %79 : vector<17x17xf32>
    %cst_61 = arith.constant dense<0xFF800000> : vector<17xf32>
    %81 = vector.multi_reduction <maximumf>, %80, %cst_61 [1] : vector<17x17xf32> to vector<17xf32>
    %82 = vector.shape_cast %81 : vector<17xf32> to vector<17x1xf32>
    %83 = vector.broadcast %82 : vector<17x1xf32> to vector<17x17xf32>
    %84 = arith.subf %80, %83 : vector<17x17xf32>
    %85 = math.exp %84 : vector<17x17xf32>
    %cst_62 = arith.constant dense<0.000000e+00> : vector<17xf32>
    %86 = vector.multi_reduction <add>, %85, %cst_62 [1] : vector<17x17xf32> to vector<17xf32>
    %87 = vector.shape_cast %86 : vector<17xf32> to vector<17x1xf32>
    %88 = tpu.reciprocal %87 {approx = true} : vector<17x1xf32> -> vector<17x1xf32>
    %89 = vector.broadcast %88 : vector<17x1xf32> to vector<17x17xf32>
    %90 = arith.mulf %85, %89 : vector<17x17xf32>
    %cst_63 = arith.constant dense<0.000000e+00> : vector<17x8xf32>
    %91 = tpu.matmul %90, %75, %cst_63 {dimension_numbers = #tpu.dot_dimension_numbers<[1], [0], [0], [1], [0, 0, 1, 1], [], []>} : vector<17x17xf32>, vector<17x8xf32>, vector<17x8xf32> -> vector<17x8xf32>
    %c0_64 = arith.constant 0 : index
    %c0_65 = arith.constant 0 : index
    %c0_66 = arith.constant 0 : index
    %92 = vector.load %arg10[%c0_64, %c0_65, %c0_66] : memref<4x8x32xf32, #tpu.memory_space<vmem>>, vector<1x8x32xf32>
    %93 = vector.shape_cast %92 : vector<1x8x32xf32> to vector<8x32xf32>
    %cst_67 = arith.constant dense<0.000000e+00> : vector<17x32xf32>
    %94 = tpu.matmul %91, %93, %cst_67 {dimension_numbers = #tpu.dot_dimension_numbers<[1], [0], [0], [1], [0, 0, 1, 1], [], []>} : vector<17x8xf32>, vector<8x32xf32>, vector<17x32xf32> -> vector<17x32xf32>
    %95 = arith.addf %54, %94 : vector<17x32xf32>
    %c1 = arith.constant 1 : index
    %c0_68 = arith.constant 0 : index
    %c0_69 = arith.constant 0 : index
    %96 = vector.load %arg8[%c1, %c0_68, %c0_69] : memref<12x32x8xf32, #tpu.memory_space<vmem>>, vector<1x32x8xf32>
    %97 = vector.shape_cast %96 : vector<1x32x8xf32> to vector<32x8xf32>
    %cst_70 = arith.constant dense<0.000000e+00> : vector<17x8xf32>
    %98 = tpu.matmul %53, %97, %cst_70 {dimension_numbers = #tpu.dot_dimension_numbers<[1], [0], [0], [1], [0, 0, 1, 1], [], []>} : vector<17x32xf32>, vector<32x8xf32>, vector<17x8xf32> -> vector<17x8xf32>
    %c1_71 = arith.constant 1 : index
    %c0_72 = arith.constant 0 : index
    %c0_73 = arith.constant 0 : index
    %99 = vector.load %arg9[%c1_71, %c0_72, %c0_73] : memref<12x1x8xf32, #tpu.memory_space<vmem>>, vector<1x1x8xf32>
    %100 = vector.shape_cast %99 : vector<1x1x8xf32> to vector<1x8xf32>
    %101 = vector.broadcast %100 : vector<1x8xf32> to vector<17x8xf32>
    %102 = arith.addf %98, %101 : vector<17x8xf32>
    %c5 = arith.constant 5 : index
    %c0_74 = arith.constant 0 : index
    %c0_75 = arith.constant 0 : index
    %103 = vector.load %arg8[%c5, %c0_74, %c0_75] : memref<12x32x8xf32, #tpu.memory_space<vmem>>, vector<1x32x8xf32>
    %104 = vector.shape_cast %103 : vector<1x32x8xf32> to vector<32x8xf32>
    %cst_76 = arith.constant dense<0.000000e+00> : vector<17x8xf32>
    %105 = tpu.matmul %53, %104, %cst_76 {dimension_numbers = #tpu.dot_dimension_numbers<[1], [0], [0], [1], [0, 0, 1, 1], [], []>} : vector<17x32xf32>, vector<32x8xf32>, vector<17x8xf32> -> vector<17x8xf32>
    %c5_77 = arith.constant 5 : index
    %c0_78 = arith.constant 0 : index
    %c0_79 = arith.constant 0 : index
    %106 = vector.load %arg9[%c5_77, %c0_78, %c0_79] : memref<12x1x8xf32, #tpu.memory_space<vmem>>, vector<1x1x8xf32>
    %107 = vector.shape_cast %106 : vector<1x1x8xf32> to vector<1x8xf32>
    %108 = vector.broadcast %107 : vector<1x8xf32> to vector<17x8xf32>
    %109 = arith.addf %105, %108 : vector<17x8xf32>
    %c9 = arith.constant 9 : index
    %c0_80 = arith.constant 0 : index
    %c0_81 = arith.constant 0 : index
    %110 = vector.load %arg8[%c9, %c0_80, %c0_81] : memref<12x32x8xf32, #tpu.memory_space<vmem>>, vector<1x32x8xf32>
    %111 = vector.shape_cast %110 : vector<1x32x8xf32> to vector<32x8xf32>
    %cst_82 = arith.constant dense<0.000000e+00> : vector<17x8xf32>
    %112 = tpu.matmul %53, %111, %cst_82 {dimension_numbers = #tpu.dot_dimension_numbers<[1], [0], [0], [1], [0, 0, 1, 1], [], []>} : vector<17x32xf32>, vector<32x8xf32>, vector<17x8xf32> -> vector<17x8xf32>
    %c9_83 = arith.constant 9 : index
    %c0_84 = arith.constant 0 : index
    %c0_85 = arith.constant 0 : index
    %113 = vector.load %arg9[%c9_83, %c0_84, %c0_85] : memref<12x1x8xf32, #tpu.memory_space<vmem>>, vector<1x1x8xf32>
    %114 = vector.shape_cast %113 : vector<1x1x8xf32> to vector<1x8xf32>
    %115 = vector.broadcast %114 : vector<1x8xf32> to vector<17x8xf32>
    %116 = arith.addf %112, %115 : vector<17x8xf32>
    %cst_86 = arith.constant dense<0.000000e+00> : vector<17x17xf32>
    %117 = tpu.matmul %102, %109, %cst_86 {dimension_numbers = #tpu.dot_dimension_numbers<[1], [1], [0], [0], [0, 0, 1, 0], [], []>} : vector<17x8xf32>, vector<17x8xf32>, vector<17x17xf32> -> vector<17x17xf32>
    %cst_87 = arith.constant 0.353553385 : f32
    %118 = vector.broadcast %cst_87 : f32 to vector<17x17xf32>
    %119 = arith.mulf %117, %118 : vector<17x17xf32>
    %120 = vector.broadcast %24 : vector<1x17xf32> to vector<17x17xf32>
    %121 = arith.addf %119, %120 : vector<17x17xf32>
    %cst_88 = arith.constant dense<0xFF800000> : vector<17xf32>
    %122 = vector.multi_reduction <maximumf>, %121, %cst_88 [1] : vector<17x17xf32> to vector<17xf32>
    %123 = vector.shape_cast %122 : vector<17xf32> to vector<17x1xf32>
    %124 = vector.broadcast %123 : vector<17x1xf32> to vector<17x17xf32>
    %125 = arith.subf %121, %124 : vector<17x17xf32>
    %126 = math.exp %125 : vector<17x17xf32>
    %cst_89 = arith.constant dense<0.000000e+00> : vector<17xf32>
    %127 = vector.multi_reduction <add>, %126, %cst_89 [1] : vector<17x17xf32> to vector<17xf32>
    %128 = vector.shape_cast %127 : vector<17xf32> to vector<17x1xf32>
    %129 = tpu.reciprocal %128 {approx = true} : vector<17x1xf32> -> vector<17x1xf32>
    %130 = vector.broadcast %129 : vector<17x1xf32> to vector<17x17xf32>
    %131 = arith.mulf %126, %130 : vector<17x17xf32>
    %cst_90 = arith.constant dense<0.000000e+00> : vector<17x8xf32>
    %132 = tpu.matmul %131, %116, %cst_90 {dimension_numbers = #tpu.dot_dimension_numbers<[1], [0], [0], [1], [0, 0, 1, 1], [], []>} : vector<17x17xf32>, vector<17x8xf32>, vector<17x8xf32> -> vector<17x8xf32>
    %c1_91 = arith.constant 1 : index
    %c0_92 = arith.constant 0 : index
    %c0_93 = arith.constant 0 : index
    %133 = vector.load %arg10[%c1_91, %c0_92, %c0_93] : memref<4x8x32xf32, #tpu.memory_space<vmem>>, vector<1x8x32xf32>
    %134 = vector.shape_cast %133 : vector<1x8x32xf32> to vector<8x32xf32>
    %cst_94 = arith.constant dense<0.000000e+00> : vector<17x32xf32>
    %135 = tpu.matmul %132, %134, %cst_94 {dimension_numbers = #tpu.dot_dimension_numbers<[1], [0], [0], [1], [0, 0, 1, 1], [], []>} : vector<17x8xf32>, vector<8x32xf32>, vector<17x32xf32> -> vector<17x32xf32>
    %136 = arith.addf %95, %135 : vector<17x32xf32>
    %c2 = arith.constant 2 : index
    %c0_95 = arith.constant 0 : index
    %c0_96 = arith.constant 0 : index
    %137 = vector.load %arg8[%c2, %c0_95, %c0_96] : memref<12x32x8xf32, #tpu.memory_space<vmem>>, vector<1x32x8xf32>
    %138 = vector.shape_cast %137 : vector<1x32x8xf32> to vector<32x8xf32>
    %cst_97 = arith.constant dense<0.000000e+00> : vector<17x8xf32>
    %139 = tpu.matmul %53, %138, %cst_97 {dimension_numbers = #tpu.dot_dimension_numbers<[1], [0], [0], [1], [0, 0, 1, 1], [], []>} : vector<17x32xf32>, vector<32x8xf32>, vector<17x8xf32> -> vector<17x8xf32>
    %c2_98 = arith.constant 2 : index
    %c0_99 = arith.constant 0 : index
    %c0_100 = arith.constant 0 : index
    %140 = vector.load %arg9[%c2_98, %c0_99, %c0_100] : memref<12x1x8xf32, #tpu.memory_space<vmem>>, vector<1x1x8xf32>
    %141 = vector.shape_cast %140 : vector<1x1x8xf32> to vector<1x8xf32>
    %142 = vector.broadcast %141 : vector<1x8xf32> to vector<17x8xf32>
    %143 = arith.addf %139, %142 : vector<17x8xf32>
    %c6 = arith.constant 6 : index
    %c0_101 = arith.constant 0 : index
    %c0_102 = arith.constant 0 : index
    %144 = vector.load %arg8[%c6, %c0_101, %c0_102] : memref<12x32x8xf32, #tpu.memory_space<vmem>>, vector<1x32x8xf32>
    %145 = vector.shape_cast %144 : vector<1x32x8xf32> to vector<32x8xf32>
    %cst_103 = arith.constant dense<0.000000e+00> : vector<17x8xf32>
    %146 = tpu.matmul %53, %145, %cst_103 {dimension_numbers = #tpu.dot_dimension_numbers<[1], [0], [0], [1], [0, 0, 1, 1], [], []>} : vector<17x32xf32>, vector<32x8xf32>, vector<17x8xf32> -> vector<17x8xf32>
    %c6_104 = arith.constant 6 : index
    %c0_105 = arith.constant 0 : index
    %c0_106 = arith.constant 0 : index
    %147 = vector.load %arg9[%c6_104, %c0_105, %c0_106] : memref<12x1x8xf32, #tpu.memory_space<vmem>>, vector<1x1x8xf32>
    %148 = vector.shape_cast %147 : vector<1x1x8xf32> to vector<1x8xf32>
    %149 = vector.broadcast %148 : vector<1x8xf32> to vector<17x8xf32>
    %150 = arith.addf %146, %149 : vector<17x8xf32>
    %c10 = arith.constant 10 : index
    %c0_107 = arith.constant 0 : index
    %c0_108 = arith.constant 0 : index
    %151 = vector.load %arg8[%c10, %c0_107, %c0_108] : memref<12x32x8xf32, #tpu.memory_space<vmem>>, vector<1x32x8xf32>
    %152 = vector.shape_cast %151 : vector<1x32x8xf32> to vector<32x8xf32>
    %cst_109 = arith.constant dense<0.000000e+00> : vector<17x8xf32>
    %153 = tpu.matmul %53, %152, %cst_109 {dimension_numbers = #tpu.dot_dimension_numbers<[1], [0], [0], [1], [0, 0, 1, 1], [], []>} : vector<17x32xf32>, vector<32x8xf32>, vector<17x8xf32> -> vector<17x8xf32>
    %c10_110 = arith.constant 10 : index
    %c0_111 = arith.constant 0 : index
    %c0_112 = arith.constant 0 : index
    %154 = vector.load %arg9[%c10_110, %c0_111, %c0_112] : memref<12x1x8xf32, #tpu.memory_space<vmem>>, vector<1x1x8xf32>
    %155 = vector.shape_cast %154 : vector<1x1x8xf32> to vector<1x8xf32>
    %156 = vector.broadcast %155 : vector<1x8xf32> to vector<17x8xf32>
    %157 = arith.addf %153, %156 : vector<17x8xf32>
    %cst_113 = arith.constant dense<0.000000e+00> : vector<17x17xf32>
    %158 = tpu.matmul %143, %150, %cst_113 {dimension_numbers = #tpu.dot_dimension_numbers<[1], [1], [0], [0], [0, 0, 1, 0], [], []>} : vector<17x8xf32>, vector<17x8xf32>, vector<17x17xf32> -> vector<17x17xf32>
    %cst_114 = arith.constant 0.353553385 : f32
    %159 = vector.broadcast %cst_114 : f32 to vector<17x17xf32>
    %160 = arith.mulf %158, %159 : vector<17x17xf32>
    %161 = vector.broadcast %24 : vector<1x17xf32> to vector<17x17xf32>
    %162 = arith.addf %160, %161 : vector<17x17xf32>
    %cst_115 = arith.constant dense<0xFF800000> : vector<17xf32>
    %163 = vector.multi_reduction <maximumf>, %162, %cst_115 [1] : vector<17x17xf32> to vector<17xf32>
    %164 = vector.shape_cast %163 : vector<17xf32> to vector<17x1xf32>
    %165 = vector.broadcast %164 : vector<17x1xf32> to vector<17x17xf32>
    %166 = arith.subf %162, %165 : vector<17x17xf32>
    %167 = math.exp %166 : vector<17x17xf32>
    %cst_116 = arith.constant dense<0.000000e+00> : vector<17xf32>
    %168 = vector.multi_reduction <add>, %167, %cst_116 [1] : vector<17x17xf32> to vector<17xf32>
    %169 = vector.shape_cast %168 : vector<17xf32> to vector<17x1xf32>
    %170 = tpu.reciprocal %169 {approx = true} : vector<17x1xf32> -> vector<17x1xf32>
    %171 = vector.broadcast %170 : vector<17x1xf32> to vector<17x17xf32>
    %172 = arith.mulf %167, %171 : vector<17x17xf32>
    %cst_117 = arith.constant dense<0.000000e+00> : vector<17x8xf32>
    %173 = tpu.matmul %172, %157, %cst_117 {dimension_numbers = #tpu.dot_dimension_numbers<[1], [0], [0], [1], [0, 0, 1, 1], [], []>} : vector<17x17xf32>, vector<17x8xf32>, vector<17x8xf32> -> vector<17x8xf32>
    %c2_118 = arith.constant 2 : index
    %c0_119 = arith.constant 0 : index
    %c0_120 = arith.constant 0 : index
    %174 = vector.load %arg10[%c2_118, %c0_119, %c0_120] : memref<4x8x32xf32, #tpu.memory_space<vmem>>, vector<1x8x32xf32>
    %175 = vector.shape_cast %174 : vector<1x8x32xf32> to vector<8x32xf32>
    %cst_121 = arith.constant dense<0.000000e+00> : vector<17x32xf32>
    %176 = tpu.matmul %173, %175, %cst_121 {dimension_numbers = #tpu.dot_dimension_numbers<[1], [0], [0], [1], [0, 0, 1, 1], [], []>} : vector<17x8xf32>, vector<8x32xf32>, vector<17x32xf32> -> vector<17x32xf32>
    %177 = arith.addf %136, %176 : vector<17x32xf32>
    %c3 = arith.constant 3 : index
    %c0_122 = arith.constant 0 : index
    %c0_123 = arith.constant 0 : index
    %178 = vector.load %arg8[%c3, %c0_122, %c0_123] : memref<12x32x8xf32, #tpu.memory_space<vmem>>, vector<1x32x8xf32>
    %179 = vector.shape_cast %178 : vector<1x32x8xf32> to vector<32x8xf32>
    %cst_124 = arith.constant dense<0.000000e+00> : vector<17x8xf32>
    %180 = tpu.matmul %53, %179, %cst_124 {dimension_numbers = #tpu.dot_dimension_numbers<[1], [0], [0], [1], [0, 0, 1, 1], [], []>} : vector<17x32xf32>, vector<32x8xf32>, vector<17x8xf32> -> vector<17x8xf32>
    %c3_125 = arith.constant 3 : index
    %c0_126 = arith.constant 0 : index
    %c0_127 = arith.constant 0 : index
    %181 = vector.load %arg9[%c3_125, %c0_126, %c0_127] : memref<12x1x8xf32, #tpu.memory_space<vmem>>, vector<1x1x8xf32>
    %182 = vector.shape_cast %181 : vector<1x1x8xf32> to vector<1x8xf32>
    %183 = vector.broadcast %182 : vector<1x8xf32> to vector<17x8xf32>
    %184 = arith.addf %180, %183 : vector<17x8xf32>
    %c7 = arith.constant 7 : index
    %c0_128 = arith.constant 0 : index
    %c0_129 = arith.constant 0 : index
    %185 = vector.load %arg8[%c7, %c0_128, %c0_129] : memref<12x32x8xf32, #tpu.memory_space<vmem>>, vector<1x32x8xf32>
    %186 = vector.shape_cast %185 : vector<1x32x8xf32> to vector<32x8xf32>
    %cst_130 = arith.constant dense<0.000000e+00> : vector<17x8xf32>
    %187 = tpu.matmul %53, %186, %cst_130 {dimension_numbers = #tpu.dot_dimension_numbers<[1], [0], [0], [1], [0, 0, 1, 1], [], []>} : vector<17x32xf32>, vector<32x8xf32>, vector<17x8xf32> -> vector<17x8xf32>
    %c7_131 = arith.constant 7 : index
    %c0_132 = arith.constant 0 : index
    %c0_133 = arith.constant 0 : index
    %188 = vector.load %arg9[%c7_131, %c0_132, %c0_133] : memref<12x1x8xf32, #tpu.memory_space<vmem>>, vector<1x1x8xf32>
    %189 = vector.shape_cast %188 : vector<1x1x8xf32> to vector<1x8xf32>
    %190 = vector.broadcast %189 : vector<1x8xf32> to vector<17x8xf32>
    %191 = arith.addf %187, %190 : vector<17x8xf32>
    %c11 = arith.constant 11 : index
    %c0_134 = arith.constant 0 : index
    %c0_135 = arith.constant 0 : index
    %192 = vector.load %arg8[%c11, %c0_134, %c0_135] : memref<12x32x8xf32, #tpu.memory_space<vmem>>, vector<1x32x8xf32>
    %193 = vector.shape_cast %192 : vector<1x32x8xf32> to vector<32x8xf32>
    %cst_136 = arith.constant dense<0.000000e+00> : vector<17x8xf32>
    %194 = tpu.matmul %53, %193, %cst_136 {dimension_numbers = #tpu.dot_dimension_numbers<[1], [0], [0], [1], [0, 0, 1, 1], [], []>} : vector<17x32xf32>, vector<32x8xf32>, vector<17x8xf32> -> vector<17x8xf32>
    %c11_137 = arith.constant 11 : index
    %c0_138 = arith.constant 0 : index
    %c0_139 = arith.constant 0 : index
    %195 = vector.load %arg9[%c11_137, %c0_138, %c0_139] : memref<12x1x8xf32, #tpu.memory_space<vmem>>, vector<1x1x8xf32>
    %196 = vector.shape_cast %195 : vector<1x1x8xf32> to vector<1x8xf32>
    %197 = vector.broadcast %196 : vector<1x8xf32> to vector<17x8xf32>
    %198 = arith.addf %194, %197 : vector<17x8xf32>
    %cst_140 = arith.constant dense<0.000000e+00> : vector<17x17xf32>
    %199 = tpu.matmul %184, %191, %cst_140 {dimension_numbers = #tpu.dot_dimension_numbers<[1], [1], [0], [0], [0, 0, 1, 0], [], []>} : vector<17x8xf32>, vector<17x8xf32>, vector<17x17xf32> -> vector<17x17xf32>
    %cst_141 = arith.constant 0.353553385 : f32
    %200 = vector.broadcast %cst_141 : f32 to vector<17x17xf32>
    %201 = arith.mulf %199, %200 : vector<17x17xf32>
    %202 = vector.broadcast %24 : vector<1x17xf32> to vector<17x17xf32>
    %203 = arith.addf %201, %202 : vector<17x17xf32>
    %cst_142 = arith.constant dense<0xFF800000> : vector<17xf32>
    %204 = vector.multi_reduction <maximumf>, %203, %cst_142 [1] : vector<17x17xf32> to vector<17xf32>
    %205 = vector.shape_cast %204 : vector<17xf32> to vector<17x1xf32>
    %206 = vector.broadcast %205 : vector<17x1xf32> to vector<17x17xf32>
    %207 = arith.subf %203, %206 : vector<17x17xf32>
    %208 = math.exp %207 : vector<17x17xf32>
    %cst_143 = arith.constant dense<0.000000e+00> : vector<17xf32>
    %209 = vector.multi_reduction <add>, %208, %cst_143 [1] : vector<17x17xf32> to vector<17xf32>
    %210 = vector.shape_cast %209 : vector<17xf32> to vector<17x1xf32>
    %211 = tpu.reciprocal %210 {approx = true} : vector<17x1xf32> -> vector<17x1xf32>
    %212 = vector.broadcast %211 : vector<17x1xf32> to vector<17x17xf32>
    %213 = arith.mulf %208, %212 : vector<17x17xf32>
    %cst_144 = arith.constant dense<0.000000e+00> : vector<17x8xf32>
    %214 = tpu.matmul %213, %198, %cst_144 {dimension_numbers = #tpu.dot_dimension_numbers<[1], [0], [0], [1], [0, 0, 1, 1], [], []>} : vector<17x17xf32>, vector<17x8xf32>, vector<17x8xf32> -> vector<17x8xf32>
    %c3_145 = arith.constant 3 : index
    %c0_146 = arith.constant 0 : index
    %c0_147 = arith.constant 0 : index
    %215 = vector.load %arg10[%c3_145, %c0_146, %c0_147] : memref<4x8x32xf32, #tpu.memory_space<vmem>>, vector<1x8x32xf32>
    %216 = vector.shape_cast %215 : vector<1x8x32xf32> to vector<8x32xf32>
    %cst_148 = arith.constant dense<0.000000e+00> : vector<17x32xf32>
    %217 = tpu.matmul %214, %216, %cst_148 {dimension_numbers = #tpu.dot_dimension_numbers<[1], [0], [0], [1], [0, 0, 1, 1], [], []>} : vector<17x8xf32>, vector<8x32xf32>, vector<17x32xf32> -> vector<17x32xf32>
    %218 = arith.addf %177, %217 : vector<17x32xf32>
    %219 = vector.broadcast %27 : vector<1x32xf32> to vector<17x32xf32>
    %220 = arith.addf %218, %219 : vector<17x32xf32>
    %221 = arith.addf %22, %220 : vector<17x32xf32>
    %cst_149 = arith.constant dense<0.000000e+00> : vector<17xf32>
    %222 = vector.multi_reduction <add>, %221, %cst_149 [1] : vector<17x32xf32> to vector<17xf32>
    %223 = vector.shape_cast %222 : vector<17xf32> to vector<17x1xf32>
    %cst_150 = arith.constant 3.200000e+01 : f32
    %224 = vector.broadcast %cst_150 : f32 to vector<17x1xf32>
    %225 = arith.divf %223, %224 : vector<17x1xf32>
    %226 = vector.broadcast %225 : vector<17x1xf32> to vector<17x32xf32>
    %227 = arith.subf %221, %226 : vector<17x32xf32>
    %228 = arith.mulf %227, %227 : vector<17x32xf32>
    %cst_151 = arith.constant dense<0.000000e+00> : vector<17xf32>
    %229 = vector.multi_reduction <add>, %228, %cst_151 [1] : vector<17x32xf32> to vector<17xf32>
    %230 = vector.shape_cast %229 : vector<17xf32> to vector<17x1xf32>
    %cst_152 = arith.constant 3.200000e+01 : f32
    %231 = vector.broadcast %cst_152 : f32 to vector<17x1xf32>
    %232 = arith.divf %230, %231 : vector<17x1xf32>
    %cst_153 = arith.constant 9.99999996E-13 : f32
    %233 = vector.broadcast %cst_153 : f32 to vector<17x1xf32>
    %234 = arith.addf %232, %233 : vector<17x1xf32>
    %235 = math.rsqrt %234 : vector<17x1xf32>
    %236 = vector.broadcast %235 : vector<17x1xf32> to vector<17x32xf32>
    %237 = arith.mulf %227, %236 : vector<17x32xf32>
    %238 = vector.broadcast %28 : vector<1x32xf32> to vector<17x32xf32>
    %239 = arith.mulf %237, %238 : vector<17x32xf32>
    %240 = vector.broadcast %29 : vector<1x32xf32> to vector<17x32xf32>
    %241 = arith.addf %239, %240 : vector<17x32xf32>
    %cst_154 = arith.constant dense<0.000000e+00> : vector<17x64xf32>
    %242 = tpu.matmul %241, %30, %cst_154 {dimension_numbers = #tpu.dot_dimension_numbers<[1], [0], [0], [1], [0, 0, 1, 1], [], []>} : vector<17x32xf32>, vector<32x64xf32>, vector<17x64xf32> -> vector<17x64xf32>
    %243 = vector.broadcast %31 : vector<1x64xf32> to vector<17x64xf32>
    %244 = arith.addf %242, %243 : vector<17x64xf32>
    %245 = arith.mulf %244, %244 : vector<17x64xf32>
    %246 = arith.mulf %244, %245 : vector<17x64xf32>
    %cst_155 = arith.constant 4.471500e-02 : f32
    %247 = vector.broadcast %cst_155 : f32 to vector<17x64xf32>
    %248 = arith.mulf %247, %246 : vector<17x64xf32>
    %249 = arith.addf %244, %248 : vector<17x64xf32>
    %cst_156 = arith.constant 0.797884583 : f32
    %250 = vector.broadcast %cst_156 : f32 to vector<17x64xf32>
    %251 = arith.mulf %250, %249 : vector<17x64xf32>
    %252 = math.tanh %251 : vector<17x64xf32>
    %cst_157 = arith.constant 1.000000e+00 : f32
    %253 = vector.broadcast %cst_157 : f32 to vector<17x64xf32>
    %254 = arith.addf %253, %252 : vector<17x64xf32>
    %cst_158 = arith.constant 5.000000e-01 : f32
    %255 = vector.broadcast %cst_158 : f32 to vector<17x64xf32>
    %256 = arith.mulf %255, %254 : vector<17x64xf32>
    %257 = arith.mulf %244, %256 : vector<17x64xf32>
    %cst_159 = arith.constant dense<0.000000e+00> : vector<17x32xf32>
    %258 = tpu.matmul %257, %32, %cst_159 {dimension_numbers = #tpu.dot_dimension_numbers<[1], [0], [0], [1], [0, 0, 1, 1], [], []>} : vector<17x64xf32>, vector<64x32xf32>, vector<17x32xf32> -> vector<17x32xf32>
    %259 = arith.addf %221, %258 : vector<17x32xf32>
    %260 = vector.broadcast %33 : vector<1x32xf32> to vector<17x32xf32>
    %261 = arith.addf %259, %260 : vector<17x32xf32>
    %c0_160 = arith.constant 0 : index
    %c0_161 = arith.constant 0 : index
    %c0_162 = arith.constant 0 : index
    %262 = vector.load %arg18[%c0_160, %c0_161, %c0_162] : memref<1x17x32xf32, #tpu.memory_space<vmem>>, vector<1x17x32xf32>
    %263 = vector.shape_cast %262 : vector<1x17x32xf32> to vector<17x32xf32>
    %264 = vector.shape_cast %261 : vector<17x32xf32> to vector<1x17x32xf32>
    tpu.vector_store %arg18[%c0_160, %c0_161, %c0_162], %264 {strides = array<i32>} : memref<1x17x32xf32, #tpu.memory_space<vmem>>, vector<1x17x32xf32>,
    return
  }
  func.func @transform_0(%arg0: i32) -> (i32, i32, i32) {
    %c0_i32 = arith.constant 0 : i32
    %c0_i32_0 = arith.constant 0 : i32
    %c0_i32_1 = arith.constant 0 : i32
    return %arg0, %c0_i32, %c0_i32_0 : i32, i32, i32
  }
  func.func @transform_1(%arg0: i32) -> (i32, i32, i32) {
    %c0_i32 = arith.constant 0 : i32
    %c0_i32_0 = arith.constant 0 : i32
    %c0_i32_1 = arith.constant 0 : i32
    return %arg0, %c0_i32, %c0_i32_0 : i32, i32, i32
  }
  func.func @transform_2(%arg0: i32) -> (i32, i32, i32) {
    %c0_i32 = arith.constant 0 : i32
    %c0_i32_0 = arith.constant 0 : i32
    %c0_i32_1 = arith.constant 0 : i32
    return %arg0, %c0_i32, %c0_i32_0 : i32, i32, i32
  }
  func.func @transform_3(%arg0: i32) -> (i32, i32) {
    %c0_i32 = arith.constant 0 : i32
    %c0_i32_0 = arith.constant 0 : i32
    %c0_i32_1 = arith.constant 0 : i32
    return %c0_i32, %c0_i32_0 : i32, i32
  }
  func.func @transform_4(%arg0: i32) -> (i32, i32) {
    %c0_i32 = arith.constant 0 : i32
    %c0_i32_0 = arith.constant 0 : i32
    %c0_i32_1 = arith.constant 0 : i32
    return %c0_i32, %c0_i32_0 : i32, i32
  }
  func.func @transform_5(%arg0: i32) -> (i32, i32) {
    %c0_i32 = arith.constant 0 : i32
    %c0_i32_0 = arith.constant 0 : i32
    %c0_i32_1 = arith.constant 0 : i32
    return %c0_i32, %c0_i32_0 : i32, i32
  }
  func.func @transform_6(%arg0: i32) -> (i32, i32) {
    %c0_i32 = arith.constant 0 : i32
    %c0_i32_0 = arith.constant 0 : i32
    %c0_i32_1 = arith.constant 0 : i32
    return %c0_i32, %c0_i32_0 : i32, i32
  }
  func.func @transform_7(%arg0: i32) -> (i32, i32, i32) {
    %c0_i32 = arith.constant 0 : i32
    %c0_i32_0 = arith.constant 0 : i32
    %c0_i32_1 = arith.constant 0 : i32
    %c0_i32_2 = arith.constant 0 : i32
    return %c0_i32, %c0_i32_0, %c0_i32_1 : i32, i32, i32
  }
  func.func @transform_8(%arg0: i32) -> (i32, i32, i32) {
    %c0_i32 = arith.constant 0 : i32
    %c0_i32_0 = arith.constant 0 : i32
    %c0_i32_1 = arith.constant 0 : i32
    %c0_i32_2 = arith.constant 0 : i32
    return %c0_i32, %c0_i32_0, %c0_i32_1 : i32, i32, i32
  }
  func.func @transform_9(%arg0: i32) -> (i32, i32, i32) {
    %c0_i32 = arith.constant 0 : i32
    %c0_i32_0 = arith.constant 0 : i32
    %c0_i32_1 = arith.constant 0 : i32
    %c0_i32_2 = arith.constant 0 : i32
    return %c0_i32, %c0_i32_0, %c0_i32_1 : i32, i32, i32
  }
  func.func @transform_10(%arg0: i32) -> (i32, i32) {
    %c0_i32 = arith.constant 0 : i32
    %c0_i32_0 = arith.constant 0 : i32
    %c0_i32_1 = arith.constant 0 : i32
    return %c0_i32, %c0_i32_0 : i32, i32
  }
  func.func @transform_11(%arg0: i32) -> (i32, i32) {
    %c0_i32 = arith.constant 0 : i32
    %c0_i32_0 = arith.constant 0 : i32
    %c0_i32_1 = arith.constant 0 : i32
    return %c0_i32, %c0_i32_0 : i32, i32
  }
  func.func @transform_12(%arg0: i32) -> (i32, i32) {
    %c0_i32 = arith.constant 0 : i32
    %c0_i32_0 = arith.constant 0 : i32
    %c0_i32_1 = arith.constant 0 : i32
    return %c0_i32, %c0_i32_0 : i32, i32
  }
  func.func @transform_13(%arg0: i32) -> (i32, i32) {
    %c0_i32 = arith.constant 0 : i32
    %c0_i32_0 = arith.constant 0 : i32
    %c0_i32_1 = arith.constant 0 : i32
    return %c0_i32, %c0_i32_0 : i32, i32
  }
  func.func @transform_14(%arg0: i32) -> (i32, i32) {
    %c0_i32 = arith.constant 0 : i32
    %c0_i32_0 = arith.constant 0 : i32
    %c0_i32_1 = arith.constant 0 : i32
    return %c0_i32, %c0_i32_0 : i32, i32
  }
  func.func @transform_15(%arg0: i32) -> (i32, i32) {
    %c0_i32 = arith.constant 0 : i32
    %c0_i32_0 = arith.constant 0 : i32
    %c0_i32_1 = arith.constant 0 : i32
    return %c0_i32, %c0_i32_0 : i32, i32
  }
  func.func @transform_16(%arg0: i32) -> (i32, i32) {
    %c0_i32 = arith.constant 0 : i32
    %c0_i32_0 = arith.constant 0 : i32
    %c0_i32_1 = arith.constant 0 : i32
    return %c0_i32, %c0_i32_0 : i32, i32
  }
  func.func @transform_17(%arg0: i32) -> (i32, i32, i32) {
    %c0_i32 = arith.constant 0 : i32
    %c0_i32_0 = arith.constant 0 : i32
    %c0_i32_1 = arith.constant 0 : i32
    return %arg0, %c0_i32, %c0_i32_0 : i32, i32, i32
  }
}

</mosaic_0001>

<llo_original>
// kernel: _lambda_.6
$region0: #{_lambda_.6}
  #allocation0 [shape = 'u32[]', space=smem, size = 0x4, offset = 0x4, fixed_abs, tag = 'smem constant byte address 0x4 - core index']
  #allocation1 [shape = 'u32[144,128]{1,0:T(1,128)}', space=vmem, size = 0x12000, scoped, tag = 'internal scratch']
  %s0 = inlined_call_operand.vmem [shape: f32[2,16,48], index: 0, kind: input, shape index: {}]
  %s1 = inlined_call_operand.vmem [shape: f32[48,32], index: 1, kind: input, shape index: {}]
  %s2 = inlined_call_operand.vmem [shape: f32[1,32], index: 2, kind: input, shape index: {}]
  %s3 = inlined_call_operand.vmem [shape: f32[2,16,32], index: 3, kind: output, shape index: {}]
  %s4 = sld [smem:[#allocation0]]
  $region45: #{_lambda_.6} parent=0
    _
  %s6 = ssub.s32 1, %s4
  %s7 = scalar_select 0, %s6, %s4
  loop: start=0, step=1, limit=4
  $region2: #{_lambda_.6} parent=0 // loop_pre_header
    _
  $region3: #{_lambda_.6} parent=0 // loop_header
    %s9 = sphi 0, %s13
    %p10 = scmp.ge.s32.totalorder %s9, 4
    %s19 = sphi 0, %s21
    %s22 = sphi 0, %s19
    %s23 = sphi 0, %s22
    %s39 = sphi 0, %s23
    %s43 = sphi 0, %s43
    %s45 = sphi 0, %s43
    %s46 = sphi 0, %s45
    %s60 = sphi 0, %s46
    %s64 = sphi 0, %s64
    %s66 = sphi 0, %s64
    %s67 = sphi 0, %s66
    %s81 = sphi 0, %s67
    %s87 = sphi 0, %s89
    %s90 = sphi 0, %s87
    %s91 = sphi 0, %s90
    %s107 = sphi 0, %s91
  $region4: #{_lambda_.6} parent=0 // loop_header_branch
    %12 = sbr.rel (%p10) target = $region8
  $region5: #{_lambda_.6} parent=0 // loop_body
    %s14 = ssub.s32 %s9, 1
    %s15 = ssub.s32 %s9, 2
    %s16 = sadd.s32 %s9, 1
    %s17 = ssub.s32 %s9, %s16
    %p18 = scmp.eq.s32.totalorder %s17, 0
    %s20 = sadd.s32 %s19, 1
    %s21 = scalar_select %p18, %s19, %s20
    %p24 = pneg %p18
    %p25 = scmp.eq.s32.totalorder %s9, 1
    %p26 = por %p24, %p25
    %p27 = scmp.ne.s32.totalorder %s19, %s22
    %p28 = scmp.eq.s32.totalorder %s9, 0
    %p29 = por %p27, %p28
    %p30 = scmp.ne.s32.totalorder %s19, %s22
    %p31 = scmp.eq.s32.totalorder %s14, 1
    %p32 = por %p30, %p31
    %p33 = scmp.ne.s32.totalorder %s22, %s23
    %p34 = scmp.eq.s32.totalorder %s14, 0
    %p35 = por %p33, %p34
    %p36 = scmp.ne.s32.totalorder %s22, %s23
    %p37 = scmp.eq.s32.totalorder %s15, 1
    %p38 = por %p36, %p37
    %p40 = scmp.ne.s32.totalorder %s23, %s39
    %p41 = scmp.eq.s32.totalorder %s15, 0
    %p42 = por %p40, %p41
    %s44 = sadd.s32 %s43, 1
    %p47 = scmp.eq.s32.totalorder %s9, 1
    %p48 = scmp.ne.s32.totalorder %s43, %s45
    %p49 = scmp.eq.s32.totalorder %s9, 0
    %p50 = por %p48, %p49
    %p51 = scmp.ne.s32.totalorder %s43, %s45
    %p52 = scmp.eq.s32.totalorder %s14, 1
    %p53 = por %p51, %p52
    %p54 = scmp.ne.s32.totalorder %s45, %s46
    %p55 = scmp.eq.s32.totalorder %s14, 0
    %p56 = por %p54, %p55
    %p57 = scmp.ne.s32.totalorder %s45, %s46
    %p58 = scmp.eq.s32.totalorder %s15, 1
    %p59 = por %p57, %p58
    %p61 = scmp.ne.s32.totalorder %s46, %s60
    %p62 = scmp.eq.s32.totalorder %s15, 0
    %p63 = por %p61, %p62
    %s65 = sadd.s32 %s64, 1
    %p68 = scmp.eq.s32.totalorder %s9, 1
    %p69 = scmp.ne.s32.totalorder %s64, %s66
    %p70 = scmp.eq.s32.totalorder %s9, 0
    %p71 = por %p69, %p70
    %p72 = scmp.ne.s32.totalorder %s64, %s66
    %p73 = scmp.eq.s32.totalorder %s14, 1
    %p74 = por %p72, %p73
    %p75 = scmp.ne.s32.totalorder %s66, %s67
    %p76 = scmp.eq.s32.totalorder %s14, 0
    %p77 = por %p75, %p76
    %p78 = scmp.ne.s32.totalorder %s66, %s67
    %p79 = scmp.eq.s32.totalorder %s15, 1
    %p80 = por %p78, %p79
    %p82 = scmp.ne.s32.totalorder %s67, %s81
    %p83 = scmp.eq.s32.totalorder %s15, 0
    %p84 = por %p82, %p83
    %s85 = ssub.s32 %s9, %s16
    %p86 = scmp.eq.s32.totalorder %s85, 0
    %s88 = sadd.s32 %s87, 1
    %s89 = scalar_select %p86, %s87, %s88
    %p92 = pneg %p86
    %p93 = scmp.eq.s32.totalorder %s9, 1
    %p94 = por %p92, %p93
    %p95 = scmp.ne.s32.totalorder %s87, %s90
    %p96 = scmp.eq.s32.totalorder %s9, 0
    %p97 = por %p95, %p96
    %p98 = scmp.ne.s32.totalorder %s87, %s90
    %p99 = scmp.eq.s32.totalorder %s14, 1
    %p100 = por %p98, %p99
    %p101 = scmp.ne.s32.totalorder %s90, %s91
    %p102 = scmp.eq.s32.totalorder %s14, 0
    %p103 = por %p101, %p102
    %p104 = scmp.ne.s32.totalorder %s90, %s91
    %p105 = scmp.eq.s32.totalorder %s15, 1
    %p106 = por %p104, %p105
    %p108 = scmp.ne.s32.totalorder %s91, %s107
    %p109 = scmp.eq.s32.totalorder %s15, 0
    %p110 = por %p108, %p109
    %p111 = scmp.le.s32.totalorder 1, %s9
    %p112 = scmp.lt.s32.totalorder %s9, 3
    %p113 = pnand %p111, %p112
    %p114 = pneg %p113
    // Predicated region
    $region9: #{_lambda_.6} parent=5 // pred_check
      _
    $region10: #{_lambda_.6} parent=5 // pred_check_branch
      %116 = sbr.rel (%p113) target = $region12
    $region11: #{_lambda_.6} parent=5 // pred_region
      %s117 = ssub.s32 %s9, 1
      // Predicated region
      $region13: #{_lambda_.6} parent=11 // pred_check
        %p118 = pneg %p56
      $region14: #{_lambda_.6} parent=11 // pred_check_branch
        %120 = sbr.rel (%p118) target = $region16
      $region15: #{_lambda_.6} parent=11 // pred_region
        _
      $region16: #{_lambda_.6} parent=11 // pred_fallthru
        _
      // Predicated region
      $region17: #{_lambda_.6} parent=11 // pred_check
        %p121 = pneg %p77
      $region18: #{_lambda_.6} parent=11 // pred_check_branch
        %123 = sbr.rel (%p121) target = $region20
      $region19: #{_lambda_.6} parent=11 // pred_region
        _
      $region20: #{_lambda_.6} parent=11 // pred_fallthru
        _
    $region12: #{_lambda_.6} parent=5 // pred_fallthru
      _
    %p124 = scmp.lt.s32.totalorder %s9, 2
    // Predicated region
    $region21: #{_lambda_.6} parent=5 // pred_check
      %p125 = pneg %p124
    $region22: #{_lambda_.6} parent=5 // pred_check_branch
      %127 = sbr.rel (%p125) target = $region24
    $region23: #{_lambda_.6} parent=5 // pred_region
      // Predicated region
      $region25: #{_lambda_.6} parent=23 // pred_check
        %p128 = pneg %p29
      $region26: #{_lambda_.6} parent=23 // pred_check_branch
        %130 = sbr.rel (%p128) target = $region28
      $region27: #{_lambda_.6} parent=23 // pred_region
        %p131 = scmp.lt.s32.totalorder %s9, 1
        %s132 = scalar_select %p131, %s9, 1
        %s133 = smul.addr %s132, 2
        %s134 = smul.addr %s133, 8
        %s135 = scalar_lea.vmem %s0, %s134
      $region28: #{_lambda_.6} parent=23 // pred_fallthru
        _
    $region24: #{_lambda_.6} parent=5 // pred_fallthru
      _
    %p136 = scmp.le.s32.totalorder 1, %s9
    %p137 = scmp.lt.s32.totalorder %s9, 3
    %p138 = pnand %p136, %p137
    %p139 = pneg %p138
    // Predicated region
    $region29: #{_lambda_.6} parent=5 // pred_check
      _
    $region30: #{_lambda_.6} parent=5 // pred_check_branch
      %141 = sbr.rel (%p138) target = $region32
    $region31: #{_lambda_.6} parent=5 // pred_region
      %s142 = ssub.s32 %s9, 1
      %p143 = scmp.lt.s32.totalorder %s14, 1
      %s144 = scalar_select %p143, %s14, 1
      %s145 = smul.addr %s144, 2
      %s146 = smul.addr %s145, 8
      %s147 = scalar_lea.vmem %s0, %s146
      %p148 = pneg %p35
      %p149 = pneg %p32
      %p150 = pneg %p56
      %p151 = pneg %p53
      %p152 = pneg %p77
      %p153 = pneg %p74
      %p154 = pneg %p103
      %p155 = pneg %p100
      %p156 = scmp.lt.s32.totalorder %s14, 1
      %s157 = scalar_select %p156, %s14, 1
      %s158 = smul.addr %s157, 2
      %s159 = smul.addr %s158, 8
      %s160 = scalar_lea.vmem %s3, %s159
      %p161 = scmp.lt.s32.totalorder %s14, 1
      %s162 = scalar_select %p161, %s14, 1
      %s163 = smul.addr %s162, 2
      %s164 = smul.addr %s163, 8
      %s165 = scalar_lea.vmem %s0, %s164
      %p166 = scmp.lt.s32.totalorder %s14, 1
      %s167 = scalar_select %p166, %s14, 1
      %s168 = smul.addr %s167, 2
      %s169 = smul.addr %s168, 8
      %s170 = scalar_lea.vmem %s3, %s169
      %v171 = vld [vmem:[%s165] sm:$0xff]
      %v172 = vld [vmem:[%s165 + $0x8] sm:$0xff]
      %v173 = vld [vmem:[%s1] sm:$0xff]
      %v174 = vld [vmem:[%s1 + $0x8] sm:$0xff]
      %v175 = vld [vmem:[%s1 + $0x10] sm:$0xff]
      %v176 = vld [vmem:[%s1 + $0x18] sm:$0xff]
      %v177 = vld [vmem:[%s1 + $0x20] sm:$0xff]
      %v178 = vld [vmem:[%s1 + $0x28] sm:$0xff]
      %v179 = vld [vmem:[%s2] sm:$0x1]
      %v181 = vlaneseq
      %v182 = vshrl.u32 %v181, 7
      %v183 = vsub.s32 0, %v182
      %v184 = vrot.slane %v179, %v183
      %vm186 = vcmask 392192
      %v188 = vsel %vm186, %v171, 0
      %v191 = vsel %vm186, %v172, 0
      %193 = vmatprep.subr.mxu0 0.0
      %194 = vmatpush1.msra.mxu0 %v173
      %195 = vmatprep.subr.mxu0 0.0
      %196 = vmatpush1.msra.mxu0 %v174
      %197 = vmatprep.subr.mxu0 0.0
      %198 = vmatpush1.msra.mxu0 %v175
      %199 = vmatprep.subr.mxu0 0.0
      %200 = vmatpush1.msra.mxu0 %v176
      %201 = vmatprep.subr.mxu0 0.0
      %202 = vmatpush1.msra.mxu0 %v177
      %203 = vmatprep.subr.mxu0 0.0
      %204 = vmatpush1.msra.mxu0 %v178
      %205 = vmatprep.subr.mxu0 0.0
      %206 = vmatpush1.msra.mxu0 0.0
      %207 = vmatprep.subr.mxu0 0.0
      %208 = vmatpush1.msra.mxu0 0.0
      %209 = vmatprep.subr.mxu0 0.0
      %210 = vmatpush1.msra.mxu0 0.0
      %211 = vmatprep.subr.mxu0 0.0
      %212 = vmatpush1.msra.mxu0 0.0
      %213 = vmatprep.subr.mxu0 0.0
      %214 = vmatpush1.msra.mxu0 0.0
      %215 = vmatprep.subr.mxu0 0.0
      %216 = vmatpush1.msra.mxu0 0.0
      %217 = vmatprep.subr.mxu0 0.0
      %218 = vmatpush1.msra.mxu0 0.0
      %219 = vmatprep.subr.mxu0 0.0
      %220 = vmatpush1.msra.mxu0 0.0
      %221 = vmatprep.subr.mxu0 0.0
      %222 = vmatpush1.msra.mxu0 0.0
      %223 = vmatprep.subr.mxu0 0.0
      %224 = vmatpush1.msra.mxu0 0.0
      %225 = vmatprep.subr.mxu0 0.0
      %226 = vmatpush1.msra.mxu0 0.0
      %227 = vmatprep.subr.mxu0 0.0
      %228 = vmatpush1.msra.mxu0 0.0
      %229 = vmatprep.subr.mxu0 0.0
      %230 = vmatpush1.msra.mxu0 0.0
      %231 = vmatprep.subr.mxu0 0.0
      %232 = vmatpush1.msra.mxu0 0.0
      %233 = vmatprep.subr.mxu0 0.0
      %234 = vmatpush1.msra.mxu0 0.0
      %235 = vmatprep.subr.mxu0 0.0
      %236 = vmatpush1.msra.mxu0 0.0
      %237 = vmatprep.subr.mxu0 0.0
      %238 = vmatpush1.msra.mxu0 0.0
      %239 = vmatprep.subr.mxu0 0.0
      %240 = vmatpush1.msra.mxu0 0.0
      %241 = vmatprep.subr.mxu0 0.0
      %242 = vmatpush1.msra.mxu0 0.0
      %243 = vmatprep.subr.mxu0 0.0
      %244 = vmatpush1.msra.mxu0 0.0
      %245 = vmatprep.subr.mxu0 0.0
      %246 = vmatpush1.msra.mxu0 0.0
      %247 = vmatprep.subr.mxu0 0.0
      %248 = vmatpush1.msra.mxu0 0.0
      %249 = vmatprep.subr.mxu0 0.0
      %250 = vmatpush1.msra.mxu0 0.0
      %251 = vmatprep.subr.mxu0 0.0
      %252 = vmatpush1.msra.mxu0 0.0
      %253 = vmatprep.subr.mxu0 0.0
      %254 = vmatpush1.msra.mxu0 0.0
      %255 = vmatprep.subr.mxu0 0.0
      %256 = vmatpush1.msra.mxu0 0.0
      %257 = vmatprep.mubr.f32.mxu0 0.0
      %258 = vmatmul.mubr.f32.gmra.mrb[0].mxu0 %v188
      %v259 = vpop.f32.mrb[0].mxu0
      %v260 = vadd.f32 %v184, %v259
      %v261 = vpop.f32.mrb[0].mxu0
      %262 = vmatprep.mubr.f32.mxu0 0.0
      %263 = vmatmul.mubr.f32.gmra.mrb[0].mxu0 %v191
      %v264 = vpop.f32.mrb[0].mxu0
      %v265 = vadd.f32 %v184, %v264
      %v266 = vpop.f32.mrb[0].mxu0
      %267 = vdwg.mxu0
      %vm268 = vcmask 261120
      %269 = vst.msk [vmem:[%s170] sm:$0xff] %vm268, %v260
      %270 = vst.msk [vmem:[%s170 + $0x8] sm:$0xff] %vm268, %v265
      %p271 = scmp.lt.s32.totalorder %s14, 1
      %s272 = scalar_select %p271, %s14, 1
      %s273 = smul.addr %s272, 2
      %s274 = smul.addr %s273, 8
      %s275 = scalar_lea.vmem %s3, %s274
      // Predicated region
      $region33: #{_lambda_.6} parent=31 // pred_check
        %p276 = pneg %p100
      $region34: #{_lambda_.6} parent=31 // pred_check_branch
        %278 = sbr.rel (%p276) target = $region36
      $region35: #{_lambda_.6} parent=31 // pred_region
        _
      $region36: #{_lambda_.6} parent=31 // pred_fallthru
        _
    $region32: #{_lambda_.6} parent=5 // pred_fallthru
      _
    %p279 = scmp.le.s32.totalorder 2, %s9
    // Predicated region
    $region37: #{_lambda_.6} parent=5 // pred_check
      %p280 = pneg %p279
    $region38: #{_lambda_.6} parent=5 // pred_check_branch
      %282 = sbr.rel (%p280) target = $region40
    $region39: #{_lambda_.6} parent=5 // pred_region
      %s283 = ssub.s32 %s9, 2
      // Predicated region
      $region41: #{_lambda_.6} parent=39 // pred_check
        %p284 = pneg %p106
      $region42: #{_lambda_.6} parent=39 // pred_check_branch
        %286 = sbr.rel (%p284) target = $region44
      $region43: #{_lambda_.6} parent=39 // pred_region
        %p287 = scmp.lt.s32.totalorder %s15, 1
        %s288 = scalar_select %p287, %s15, 1
        %s289 = smul.addr %s288, 2
        %s290 = smul.addr %s289, 8
        %s291 = scalar_lea.vmem %s3, %s290
      $region44: #{_lambda_.6} parent=39 // pred_fallthru
        _
    $region40: #{_lambda_.6} parent=5 // pred_fallthru
      _
  $region6: #{_lambda_.6} parent=0 // loop_footer
    %s13 = sadd.s32 1, %s9
  $region7: #{_lambda_.6} parent=0 // loop_footer_branch
    %8 = sbr.rel target = $region3
  $region8: #{_lambda_.6} parent=0 // loop_exit
    _

// kernel: _lambda_.11
$region0: #{_lambda_.11}
  #allocation0 [shape = 'u32[]', space=smem, size = 0x4, offset = 0x4, fixed_abs, tag = 'smem constant byte address 0x4 - core index']
  #allocation1 [shape = 'u32[144,128]{1,0:T(1,128)}', space=vmem, size = 0x12000, scoped, tag = 'internal scratch']
  %s0 = inlined_call_operand.vmem [shape: f32[2,32], index: 0, kind: input, shape index: {}]
  %s1 = inlined_call_operand.vmem [shape: f32[2,32], index: 1, kind: input, shape index: {}]
  %s2 = inlined_call_operand.vmem [shape: f32[1,32], index: 2, kind: input, shape index: {}, may-alias: {2,4}]
  %s3 = inlined_call_operand.vmem [shape: f32[1,32], index: 3, kind: input, shape index: {}, may-alias: {3,5}]
  %s4 = inlined_call_operand.vmem [shape: f32[1,32], index: 4, kind: input, shape index: {}, may-alias: {2,4}]
  %s5 = inlined_call_operand.vmem [shape: f32[1,32], index: 5, kind: input, shape index: {}, may-alias: {3,5}]
  %s6 = inlined_call_operand.vmem [shape: f32[32,10], index: 6, kind: input, shape index: {}]
  %s7 = inlined_call_operand.vmem [shape: f32[1,10], index: 7, kind: input, shape index: {}, may-alias: {7,9}]
  %s8 = inlined_call_operand.vmem [shape: f32[32,10], index: 8, kind: input, shape index: {}]
  %s9 = inlined_call_operand.vmem [shape: f32[1,10], index: 9, kind: input, shape index: {}, may-alias: {7,9}]
  %s10 = inlined_call_operand.hbm [shape: f32[2,10], index: 10, kind: output, shape index: {0}]
  %s11 = inlined_call_operand.hbm [shape: f32[2,10], index: 11, kind: output, shape index: {1}]
  %12 = xla_tuple %s10, %s11
  %s13 = sld [smem:[#allocation0]]
  $region58: #{_lambda_.11} parent=0
    _
  %s15 = ssub.s32 1, %s13
  %s16 = scalar_select 0, %s15, %s13
  $region1: #{_lambda_.11} parent=0
    #allocation2 [shape = 'u8[1024]{0}', space=vmem, size = 0x400, scoped, tag = 'output window, operand 0, single buffered']
    #allocation3 [shape = 's32[1]{0}', space=sflag, size = 0x4, scoped, tag = 'scoped memory for _lambda_.11']
    #allocation4 [shape = 'u8[1024]{0}', space=vmem, size = 0x400, scoped, tag = 'output window, operand 1, single buffered']
    #allocation5 [shape = 's32[1]{0}', space=sflag, size = 0x4, scoped, tag = 'scoped memory for _lambda_.11']
    %17 = vsyncpa [#allocation3], 0
    %18 = vsyncpa [#allocation5], 0
    // Predicated region
    $region2: #{_lambda_.11} parent=1 // pred_check
      _
    $region3: #{_lambda_.11} parent=1 // pred_check_branch
      %20 = sbr.rel (0) target = $region5
    $region4: #{_lambda_.11} parent=1 // pred_region
      _
    $region5: #{_lambda_.11} parent=1 // pred_fallthru
      _
    // Predicated region
    $region6: #{_lambda_.11} parent=1 // pred_check
      _
    $region7: #{_lambda_.11} parent=1 // pred_check_branch
      %22 = sbr.rel (0) target = $region9
    $region8: #{_lambda_.11} parent=1 // pred_region
      _
    $region9: #{_lambda_.11} parent=1 // pred_fallthru
      _
    // Predicated region
    $region10: #{_lambda_.11} parent=1 // pred_check
      _
    $region11: #{_lambda_.11} parent=1 // pred_check_branch
      %24 = sbr.rel (0) target = $region13
    $region12: #{_lambda_.11} parent=1 // pred_region
      _
    $region13: #{_lambda_.11} parent=1 // pred_fallthru
      _
    // Predicated region
    $region14: #{_lambda_.11} parent=1 // pred_check
      _
    $region15: #{_lambda_.11} parent=1 // pred_check_branch
      %26 = sbr.rel (0) target = $region17
    $region16: #{_lambda_.11} parent=1 // pred_region
      _
    $region17: #{_lambda_.11} parent=1 // pred_fallthru
      _
    // Predicated region
    $region18: #{_lambda_.11} parent=1 // pred_check
      _
    $region19: #{_lambda_.11} parent=1 // pred_check_branch
      %28 = sbr.rel (0) target = $region21
    $region20: #{_lambda_.11} parent=1 // pred_region
      _
    $region21: #{_lambda_.11} parent=1 // pred_fallthru
      _
    // Predicated region
    $region22: #{_lambda_.11} parent=1 // pred_check
      _
    $region23: #{_lambda_.11} parent=1 // pred_check_branch
      %30 = sbr.rel (0) target = $region25
    $region24: #{_lambda_.11} parent=1 // pred_region
      _
    $region25: #{_lambda_.11} parent=1 // pred_fallthru
      _
    // Predicated region
    $region26: #{_lambda_.11} parent=1 // pred_check
      _
    $region27: #{_lambda_.11} parent=1 // pred_check_branch
      %32 = sbr.rel (0) target = $region29
    $region28: #{_lambda_.11} parent=1 // pred_region
      _
    $region29: #{_lambda_.11} parent=1 // pred_fallthru
      _
    // Predicated region
    $region30: #{_lambda_.11} parent=1 // pred_check
      _
    $region31: #{_lambda_.11} parent=1 // pred_check_branch
      %34 = sbr.rel (0) target = $region33
    $region32: #{_lambda_.11} parent=1 // pred_region
      _
    $region33: #{_lambda_.11} parent=1 // pred_fallthru
      _
    // Predicated region
    $region34: #{_lambda_.11} parent=1 // pred_check
      _
    $region35: #{_lambda_.11} parent=1 // pred_check_branch
      %36 = sbr.rel (0) target = $region37
    $region36: #{_lambda_.11} parent=1 // pred_region
      _
    $region37: #{_lambda_.11} parent=1 // pred_fallthru
      _
    // Predicated region
    $region38: #{_lambda_.11} parent=1 // pred_check
      _
    $region39: #{_lambda_.11} parent=1 // pred_check_branch
      %38 = sbr.rel (0) target = $region41
    $region40: #{_lambda_.11} parent=1 // pred_region
      _
    $region41: #{_lambda_.11} parent=1 // pred_fallthru
      _
    %v39 = vld [vmem:[%s0] sm:$0x3]
    %v40 = vld [vmem:[%s2] sm:$0x1]
    %v41 = vld [vmem:[%s3] sm:$0x1]
    %vm42 = vcmask 254976
    %v43 = vsel %vm42, %v39, 0.0
    %44 = vadd.xlane.f32.xlu0 %v43
    %v45 = vpop.xlane.xlu0 %44
    %v46 = vrcp.pop 32.0
    %v47 = vmul.f32 %v45, %v46
    %v48 = vsub.f32 %v39, %v47
    %v49 = vmul.f32 %v48, %v48
    %v50 = vsel %vm42, %v49, 0.0
    %51 = vadd.xlane.f32.xlu0 %v50
    %v52 = vpop.xlane.xlu0 %51
    %v53 = vmul.f32 %v52, %v46
    %v54 = vadd.f32 %v53, 1e-12
    %v55 = vrsqrt.pop %v54
    %v56 = vmul.f32 %v48, %v55
    %v58 = vlaneseq
    %v59 = vshrl.u32 %v58, 7
    %v60 = vsub.s32 0, %v59
    %v61 = vrot.slane %v40, %v60
    %v63 = vmul.f32 %v56, %v61
    %v65 = vlaneseq
    %v66 = vshrl.u32 %v65, 7
    %v67 = vsub.s32 0, %v66
    %v68 = vrot.slane %v41, %v67
    %v70 = vadd.f32 %v63, %v68
    %v71 = vld [vmem:[%s1] sm:$0x3]
    %v72 = vld [vmem:[%s4] sm:$0x1]
    %v73 = vld [vmem:[%s5] sm:$0x1]
    %v74 = vsel %vm42, %v71, 0.0
    %75 = vadd.xlane.f32.xlu0 %v74
    %v76 = vpop.xlane.xlu0 %75
    %v77 = vmul.f32 %v76, %v46
    %v78 = vsub.f32 %v71, %v77
    %v79 = vmul.f32 %v78, %v78
    %v80 = vsel %vm42, %v79, 0.0
    %81 = vadd.xlane.f32.xlu0 %v80
    %v82 = vpop.xlane.xlu0 %81
    %v83 = vmul.f32 %v82, %v46
    %v84 = vadd.f32 %v83, 1e-12
    %v85 = vrsqrt.pop %v84
    %v86 = vmul.f32 %v78, %v85
    %v88 = vlaneseq
    %v89 = vshrl.u32 %v88, 7
    %v90 = vsub.s32 0, %v89
    %v91 = vrot.slane %v72, %v90
    %v93 = vmul.f32 %v86, %v91
    %v95 = vlaneseq
    %v96 = vshrl.u32 %v95, 7
    %v97 = vsub.s32 0, %v96
    %v98 = vrot.slane %v73, %v97
    %v100 = vadd.f32 %v93, %v98
    %v101 = vld [vmem:[%s6] sm:$0xff]
    %v102 = vld [vmem:[%s6 + $0x8] sm:$0xff]
    %v103 = vld [vmem:[%s6 + $0x10] sm:$0xff]
    %v104 = vld [vmem:[%s6 + $0x18] sm:$0xff]
    %v105 = vld [vmem:[%s7] sm:$0x1]
    %v107 = vlaneseq
    %v108 = vshrl.u32 %v107, 7
    %v109 = vsub.s32 0, %v108
    %v110 = vrot.slane %v105, %v109
    %vm112 = vcmask 261120
    %v114 = vsel %vm112, %v70, 0
    %116 = vmatprep.subr.mxu0 0.0
    %117 = vmatpush1.msra.mxu0 %v101
    %118 = vmatprep.subr.mxu0 0.0
    %119 = vmatpush1.msra.mxu0 %v102
    %120 = vmatprep.subr.mxu0 0.0
    %121 = vmatpush1.msra.mxu0 %v103
    %122 = vmatprep.subr.mxu0 0.0
    %123 = vmatpush1.msra.mxu0 %v104
    %124 = vmatprep.subr.mxu0 0.0
    %125 = vmatpush1.msra.mxu0 0.0
    %126 = vmatprep.subr.mxu0 0.0
    %127 = vmatpush1.msra.mxu0 0.0
    %128 = vmatprep.subr.mxu0 0.0
    %129 = vmatpush1.msra.mxu0 0.0
    %130 = vmatprep.subr.mxu0 0.0
    %131 = vmatpush1.msra.mxu0 0.0
    %132 = vmatprep.subr.mxu0 0.0
    %133 = vmatpush1.msra.mxu0 0.0
    %134 = vmatprep.subr.mxu0 0.0
    %135 = vmatpush1.msra.mxu0 0.0
    %136 = vmatprep.subr.mxu0 0.0
    %137 = vmatpush1.msra.mxu0 0.0
    %138 = vmatprep.subr.mxu0 0.0
    %139 = vmatpush1.msra.mxu0 0.0
    %140 = vmatprep.subr.mxu0 0.0
    %141 = vmatpush1.msra.mxu0 0.0
    %142 = vmatprep.subr.mxu0 0.0
    %143 = vmatpush1.msra.mxu0 0.0
    %144 = vmatprep.subr.mxu0 0.0
    %145 = vmatpush1.msra.mxu0 0.0
    %146 = vmatprep.subr.mxu0 0.0
    %147 = vmatpush1.msra.mxu0 0.0
    %148 = vmatprep.subr.mxu0 0.0
    %149 = vmatpush1.msra.mxu0 0.0
    %150 = vmatprep.subr.mxu0 0.0
    %151 = vmatpush1.msra.mxu0 0.0
    %152 = vmatprep.subr.mxu0 0.0
    %153 = vmatpush1.msra.mxu0 0.0
    %154 = vmatprep.subr.mxu0 0.0
    %155 = vmatpush1.msra.mxu0 0.0
    %156 = vmatprep.subr.mxu0 0.0
    %157 = vmatpush1.msra.mxu0 0.0
    %158 = vmatprep.subr.mxu0 0.0
    %159 = vmatpush1.msra.mxu0 0.0
    %160 = vmatprep.subr.mxu0 0.0
    %161 = vmatpush1.msra.mxu0 0.0
    %162 = vmatprep.subr.mxu0 0.0
    %163 = vmatpush1.msra.mxu0 0.0
    %164 = vmatprep.subr.mxu0 0.0
    %165 = vmatpush1.msra.mxu0 0.0
    %166 = vmatprep.subr.mxu0 0.0
    %167 = vmatpush1.msra.mxu0 0.0
    %168 = vmatprep.subr.mxu0 0.0
    %169 = vmatpush1.msra.mxu0 0.0
    %170 = vmatprep.subr.mxu0 0.0
    %171 = vmatpush1.msra.mxu0 0.0
    %172 = vmatprep.subr.mxu0 0.0
    %173 = vmatpush1.msra.mxu0 0.0
    %174 = vmatprep.subr.mxu0 0.0
    %175 = vmatpush1.msra.mxu0 0.0
    %176 = vmatprep.subr.mxu0 0.0
    %177 = vmatpush1.msra.mxu0 0.0
    %178 = vmatprep.subr.mxu0 0.0
    %179 = vmatpush1.msra.mxu0 0.0
    %180 = vmatprep.mubr.f32.mxu0 0.0
    %181 = vmatmul.mubr.f32.gmra.mrb[0].mxu0 %v114
    %v182 = vpop.f32.mrb[0].mxu0
    %v183 = vadd.f32 %v110, %v182
    %v184 = vpop.f32.mrb[0].mxu0
    %185 = vdwg.mxu0
    %vm186 = vcmask 74752
    %v187 = vsel %vm186, %v183, -inf
    %188 = vmax.xlane.f32.xlu0 %v187
    %v189 = vpop.xlane.xlu0 %188
    %v190 = vsub.f32 %v183, %v189
    %v191 = vmul.f32 %v190, 1.442695
    %v192 = vpow.pop %v191
    %v193 = vsel %vm186, %v192, 0.0
    %194 = vadd.xlane.f32.xlu0 %v193
    %v195 = vpop.xlane.xlu0 %194
    %v196 = vrcp.pop %v195
    %v197 = vmul.f32 %v192, %v196
    %198 = vst.msk [vmem:[#allocation2] sm:$0x3] %vm186, %v197
    %v199 = vld [vmem:[%s8] sm:$0xff]
    %v200 = vld [vmem:[%s8 + $0x8] sm:$0xff]
    %v201 = vld [vmem:[%s8 + $0x10] sm:$0xff]
    %v202 = vld [vmem:[%s8 + $0x18] sm:$0xff]
    %v203 = vld [vmem:[%s9] sm:$0x1]
    %v205 = vlaneseq
    %v206 = vshrl.u32 %v205, 7
    %v207 = vsub.s32 0, %v206
    %v208 = vrot.slane %v203, %v207
    %v211 = vsel %vm112, %v100, 0
    %213 = vmatprep.subr.mxu0 0.0
    %214 = vmatpush1.msra.mxu0 %v199
    %215 = vmatprep.subr.mxu0 0.0
    %216 = vmatpush1.msra.mxu0 %v200
    %217 = vmatprep.subr.mxu0 0.0
    %218 = vmatpush1.msra.mxu0 %v201
    %219 = vmatprep.subr.mxu0 0.0
    %220 = vmatpush1.msra.mxu0 %v202
    %221 = vmatprep.subr.mxu0 0.0
    %222 = vmatpush1.msra.mxu0 0.0
    %223 = vmatprep.subr.mxu0 0.0
    %224 = vmatpush1.msra.mxu0 0.0
    %225 = vmatprep.subr.mxu0 0.0
    %226 = vmatpush1.msra.mxu0 0.0
    %227 = vmatprep.subr.mxu0 0.0
    %228 = vmatpush1.msra.mxu0 0.0
    %229 = vmatprep.subr.mxu0 0.0
    %230 = vmatpush1.msra.mxu0 0.0
    %231 = vmatprep.subr.mxu0 0.0
    %232 = vmatpush1.msra.mxu0 0.0
    %233 = vmatprep.subr.mxu0 0.0
    %234 = vmatpush1.msra.mxu0 0.0
    %235 = vmatprep.subr.mxu0 0.0
    %236 = vmatpush1.msra.mxu0 0.0
    %237 = vmatprep.subr.mxu0 0.0
    %238 = vmatpush1.msra.mxu0 0.0
    %239 = vmatprep.subr.mxu0 0.0
    %240 = vmatpush1.msra.mxu0 0.0
    %241 = vmatprep.subr.mxu0 0.0
    %242 = vmatpush1.msra.mxu0 0.0
    %243 = vmatprep.subr.mxu0 0.0
    %244 = vmatpush1.msra.mxu0 0.0
    %245 = vmatprep.subr.mxu0 0.0
    %246 = vmatpush1.msra.mxu0 0.0
    %247 = vmatprep.subr.mxu0 0.0
    %248 = vmatpush1.msra.mxu0 0.0
    %249 = vmatprep.subr.mxu0 0.0
    %250 = vmatpush1.msra.mxu0 0.0
    %251 = vmatprep.subr.mxu0 0.0
    %252 = vmatpush1.msra.mxu0 0.0
    %253 = vmatprep.subr.mxu0 0.0
    %254 = vmatpush1.msra.mxu0 0.0
    %255 = vmatprep.subr.mxu0 0.0
    %256 = vmatpush1.msra.mxu0 0.0
    %257 = vmatprep.subr.mxu0 0.0
    %258 = vmatpush1.msra.mxu0 0.0
    %259 = vmatprep.subr.mxu0 0.0
    %260 = vmatpush1.msra.mxu0 0.0
    %261 = vmatprep.subr.mxu0 0.0
    %262 = vmatpush1.msra.mxu0 0.0
    %263 = vmatprep.subr.mxu0 0.0
    %264 = vmatpush1.msra.mxu0 0.0
    %265 = vmatprep.subr.mxu0 0.0
    %266 = vmatpush1.msra.mxu0 0.0
    %267 = vmatprep.subr.mxu0 0.0
    %268 = vmatpush1.msra.mxu0 0.0
    %269 = vmatprep.subr.mxu0 0.0
    %270 = vmatpush1.msra.mxu0 0.0
    %271 = vmatprep.subr.mxu0 0.0
    %272 = vmatpush1.msra.mxu0 0.0
    %273 = vmatprep.subr.mxu0 0.0
    %274 = vmatpush1.msra.mxu0 0.0
    %275 = vmatprep.subr.mxu0 0.0
    %276 = vmatpush1.msra.mxu0 0.0
    %277 = vmatprep.mubr.f32.mxu0 0.0
    %278 = vmatmul.mubr.f32.gmra.mrb[0].mxu0 %v211
    %v279 = vpop.f32.mrb[0].mxu0
    %v280 = vadd.f32 %v208, %v279
    %v281 = vpop.f32.mrb[0].mxu0
    %282 = vdwg.mxu0
    %v283 = vsel %vm186, %v280, -inf
    %284 = vmax.xlane.f32.xlu0 %v283
    %v285 = vpop.xlane.xlu0 %284
    %v286 = vsub.f32 %v280, %v285
    %v287 = vmul.f32 %v286, 1.442695
    %v288 = vpow.pop %v287
    %v289 = vsel %vm186, %v288, 0.0
    %290 = vadd.xlane.f32.xlu0 %v289
    %v291 = vpop.xlane.xlu0 %290
    %v292 = vrcp.pop %v291
    %v293 = vmul.f32 %v288, %v292
    %294 = vst.msk [vmem:[#allocation4] sm:$0x3] %vm186, %v293
    // Predicated region
    $region42: #{_lambda_.11} parent=1 // pred_check
      _
    $region43: #{_lambda_.11} parent=1 // pred_check_branch
      %296 = sbr.rel (0) target = $region45
    $region44: #{_lambda_.11} parent=1 // pred_region
      %s298 = ssub.s32 32, 32
      %299 = vsyncadd [#allocation3], %s298
      %s301 = sshll.u32 [#allocation2], 4
      %s302 = int_to_ptr.vmem [resolvable:$true] %s301
      %304 = dma.vmem_to_hbm [thread:$0]  %s302, 32, %s10, [#allocation3]
    $region45: #{_lambda_.11} parent=1 // pred_fallthru
      _
    // Predicated region
    $region46: #{_lambda_.11} parent=1 // pred_check
      _
    $region47: #{_lambda_.11} parent=1 // pred_check_branch
      %306 = sbr.rel (0) target = $region49
    $region48: #{_lambda_.11} parent=1 // pred_region
      %s308 = ssub.s32 32, 32
      %309 = vsyncadd [#allocation5], %s308
      %s311 = sshll.u32 [#allocation4], 4
      %s312 = int_to_ptr.vmem [resolvable:$true] %s311
      %314 = dma.vmem_to_hbm [thread:$0]  %s312, 32, %s11, [#allocation5]
    $region49: #{_lambda_.11} parent=1 // pred_fallthru
      _
    // Predicated region
    $region50: #{_lambda_.11} parent=1 // pred_check
      _
    $region51: #{_lambda_.11} parent=1 // pred_check_branch
      %316 = sbr.rel (0) target = $region53
    $region52: #{_lambda_.11} parent=1 // pred_region
      %317 = dma.done [#allocation3], 32
    $region53: #{_lambda_.11} parent=1 // pred_fallthru
      _
    // Predicated region
    $region54: #{_lambda_.11} parent=1 // pred_check
      _
    $region55: #{_lambda_.11} parent=1 // pred_check_branch
      %319 = sbr.rel (0) target = $region57
    $region56: #{_lambda_.11} parent=1 // pred_region
      %320 = dma.done [#allocation5], 32
    $region57: #{_lambda_.11} parent=1 // pred_fallthru
      _
    %321 = vsyncpa [#allocation3], 1
    %322 = vsyncpa [#allocation5], 1

// kernel: _lambda_.7
$region0: #{_lambda_.7}
  #allocation0 [shape = 'u32[]', space=smem, size = 0x4, offset = 0x4, fixed_abs, tag = 'smem constant byte address 0x4 - core index']
  #allocation1 [shape = 'u32[144,128]{1,0:T(1,128)}', space=vmem, size = 0x12000, scoped, tag = 'internal scratch']
  %s0 = inlined_call_operand.vmem [shape: f32[2,17,32], index: 0, kind: input, shape index: {}]
  %s1 = inlined_call_operand.vmem [shape: f32[2,1,17], index: 1, kind: input, shape index: {}]
  %s2 = inlined_call_operand.vmem [shape: f32[1,32], index: 2, kind: input, shape index: {}, may-alias: {2,8}]
  %s3 = inlined_call_operand.vmem [shape: f32[1,32], index: 3, kind: input, shape index: {}, may-alias: {3,7,9,13}]
  %s4 = inlined_call_operand.vmem [shape: f32[12,32,8], index: 4, kind: input, shape index: {}]
  %s5 = inlined_call_operand.vmem [shape: f32[12,1,8], index: 5, kind: input, shape index: {}]
  %s6 = inlined_call_operand.vmem [shape: f32[4,8,32], index: 6, kind: input, shape index: {}]
  %s7 = inlined_call_operand.vmem [shape: f32[1,32], index: 7, kind: input, shape index: {}, may-alias: {3,7,9,13}]
  %s8 = inlined_call_operand.vmem [shape: f32[1,32], index: 8, kind: input, shape index: {}, may-alias: {2,8}]
  %s9 = inlined_call_operand.vmem [shape: f32[1,32], index: 9, kind: input, shape index: {}, may-alias: {3,7,9,13}]
  %s10 = inlined_call_operand.vmem [shape: f32[32,64], index: 10, kind: input, shape index: {}]
  %s11 = inlined_call_operand.vmem [shape: f32[1,64], index: 11, kind: input, shape index: {}]
  %s12 = inlined_call_operand.vmem [shape: f32[64,32], index: 12, kind: input, shape index: {}]
  %s13 = inlined_call_operand.vmem [shape: f32[1,32], index: 13, kind: input, shape index: {}, may-alias: {3,7,9,13}]
  %s14 = inlined_call_operand.vmem [shape: f32[2,17,32], index: 14, kind: output, shape index: {}]
  %s15 = sld [smem:[#allocation0]]
  $region89: #{_lambda_.7} parent=0
    _
  %s17 = ssub.s32 1, %s15
  %s18 = scalar_select 0, %s17, %s15
  loop: start=0, step=1, limit=4
  $region2: #{_lambda_.7} parent=0 // loop_pre_header
    _
  $region3: #{_lambda_.7} parent=0 // loop_header
    %s20 = sphi 0, %s24
    %p21 = scmp.ge.s32.totalorder %s20, 4
    %s30 = sphi 0, %s32
    %s33 = sphi 0, %s30
    %s34 = sphi 0, %s33
    %s50 = sphi 0, %s34
    %s56 = sphi 0, %s58
    %s59 = sphi 0, %s56
    %s60 = sphi 0, %s59
    %s76 = sphi 0, %s60
    %s80 = sphi 0, %s80
    %s82 = sphi 0, %s80
    %s83 = sphi 0, %s82
    %s97 = sphi 0, %s83
    %s101 = sphi 0, %s101
    %s103 = sphi 0, %s101
    %s104 = sphi 0, %s103
    %s118 = sphi 0, %s104
    %s122 = sphi 0, %s122
    %s124 = sphi 0, %s122
    %s125 = sphi 0, %s124
    %s139 = sphi 0, %s125
    %s143 = sphi 0, %s143
    %s145 = sphi 0, %s143
    %s146 = sphi 0, %s145
    %s160 = sphi 0, %s146
    %s164 = sphi 0, %s164
    %s166 = sphi 0, %s164
    %s167 = sphi 0, %s166
    %s181 = sphi 0, %s167
    %s185 = sphi 0, %s185
    %s187 = sphi 0, %s185
    %s188 = sphi 0, %s187
    %s202 = sphi 0, %s188
    %s206 = sphi 0, %s206
    %s208 = sphi 0, %s206
    %s209 = sphi 0, %s208
    %s223 = sphi 0, %s209
    %s227 = sphi 0, %s227
    %s229 = sphi 0, %s227
    %s230 = sphi 0, %s229
    %s244 = sphi 0, %s230
    %s248 = sphi 0, %s248
    %s250 = sphi 0, %s248
    %s251 = sphi 0, %s250
    %s265 = sphi 0, %s251
    %s269 = sphi 0, %s269
    %s271 = sphi 0, %s269
    %s272 = sphi 0, %s271
    %s286 = sphi 0, %s272
    %s290 = sphi 0, %s290
    %s292 = sphi 0, %s290
    %s293 = sphi 0, %s292
    %s307 = sphi 0, %s293
    %s311 = sphi 0, %s311
    %s313 = sphi 0, %s311
    %s314 = sphi 0, %s313
    %s328 = sphi 0, %s314
    %s334 = sphi 0, %s336
    %s337 = sphi 0, %s334
    %s338 = sphi 0, %s337
    %s354 = sphi 0, %s338
  $region4: #{_lambda_.7} parent=0 // loop_header_branch
    %23 = sbr.rel (%p21) target = $region8
  $region5: #{_lambda_.7} parent=0 // loop_body
    %s25 = ssub.s32 %s20, 1
    %s26 = ssub.s32 %s20, 2
    %s27 = sadd.s32 %s20, 1
    %s28 = ssub.s32 %s20, %s27
    %p29 = scmp.eq.s32.totalorder %s28, 0
    %s31 = sadd.s32 %s30, 1
    %s32 = scalar_select %p29, %s30, %s31
    %p35 = pneg %p29
    %p36 = scmp.eq.s32.totalorder %s20, 1
    %p37 = por %p35, %p36
    %p38 = scmp.ne.s32.totalorder %s30, %s33
    %p39 = scmp.eq.s32.totalorder %s20, 0
    %p40 = por %p38, %p39
    %p41 = scmp.ne.s32.totalorder %s30, %s33
    %p42 = scmp.eq.s32.totalorder %s25, 1
    %p43 = por %p41, %p42
    %p44 = scmp.ne.s32.totalorder %s33, %s34
    %p45 = scmp.eq.s32.totalorder %s25, 0
    %p46 = por %p44, %p45
    %p47 = scmp.ne.s32.totalorder %s33, %s34
    %p48 = scmp.eq.s32.totalorder %s26, 1
    %p49 = por %p47, %p48
    %p51 = scmp.ne.s32.totalorder %s34, %s50
    %p52 = scmp.eq.s32.totalorder %s26, 0
    %p53 = por %p51, %p52
    %s54 = ssub.s32 %s20, %s27
    %p55 = scmp.eq.s32.totalorder %s54, 0
    %s57 = sadd.s32 %s56, 1
    %s58 = scalar_select %p55, %s56, %s57
    %p61 = pneg %p55
    %p62 = scmp.eq.s32.totalorder %s20, 1
    %p63 = por %p61, %p62
    %p64 = scmp.ne.s32.totalorder %s56, %s59
    %p65 = scmp.eq.s32.totalorder %s20, 0
    %p66 = por %p64, %p65
    %p67 = scmp.ne.s32.totalorder %s56, %s59
    %p68 = scmp.eq.s32.totalorder %s25, 1
    %p69 = por %p67, %p68
    %p70 = scmp.ne.s32.totalorder %s59, %s60
    %p71 = scmp.eq.s32.totalorder %s25, 0
    %p72 = por %p70, %p71
    %p73 = scmp.ne.s32.totalorder %s59, %s60
    %p74 = scmp.eq.s32.totalorder %s26, 1
    %p75 = por %p73, %p74
    %p77 = scmp.ne.s32.totalorder %s60, %s76
    %p78 = scmp.eq.s32.totalorder %s26, 0
    %p79 = por %p77, %p78
    %s81 = sadd.s32 %s80, 1
    %p84 = scmp.eq.s32.totalorder %s20, 1
    %p85 = scmp.ne.s32.totalorder %s80, %s82
    %p86 = scmp.eq.s32.totalorder %s20, 0
    %p87 = por %p85, %p86
    %p88 = scmp.ne.s32.totalorder %s80, %s82
    %p89 = scmp.eq.s32.totalorder %s25, 1
    %p90 = por %p88, %p89
    %p91 = scmp.ne.s32.totalorder %s82, %s83
    %p92 = scmp.eq.s32.totalorder %s25, 0
    %p93 = por %p91, %p92
    %p94 = scmp.ne.s32.totalorder %s82, %s83
    %p95 = scmp.eq.s32.totalorder %s26, 1
    %p96 = por %p94, %p95
    %p98 = scmp.ne.s32.totalorder %s83, %s97
    %p99 = scmp.eq.s32.totalorder %s26, 0
    %p100 = por %p98, %p99
    %s102 = sadd.s32 %s101, 1
    %p105 = scmp.eq.s32.totalorder %s20, 1
    %p106 = scmp.ne.s32.totalorder %s101, %s103
    %p107 = scmp.eq.s32.totalorder %s20, 0
    %p108 = por %p106, %p107
    %p109 = scmp.ne.s32.totalorder %s101, %s103
    %p110 = scmp.eq.s32.totalorder %s25, 1
    %p111 = por %p109, %p110
    %p112 = scmp.ne.s32.totalorder %s103, %s104
    %p113 = scmp.eq.s32.totalorder %s25, 0
    %p114 = por %p112, %p113
    %p115 = scmp.ne.s32.totalorder %s103, %s104
    %p116 = scmp.eq.s32.totalorder %s26, 1
    %p117 = por %p115, %p116
    %p119 = scmp.ne.s32.totalorder %s104, %s118
    %p120 = scmp.eq.s32.totalorder %s26, 0
    %p121 = por %p119, %p120
    %s123 = sadd.s32 %s122, 1
    %p126 = scmp.eq.s32.totalorder %s20, 1
    %p127 = scmp.ne.s32.totalorder %s122, %s124
    %p128 = scmp.eq.s32.totalorder %s20, 0
    %p129 = por %p127, %p128
    %p130 = scmp.ne.s32.totalorder %s122, %s124
    %p131 = scmp.eq.s32.totalorder %s25, 1
    %p132 = por %p130, %p131
    %p133 = scmp.ne.s32.totalorder %s124, %s125
    %p134 = scmp.eq.s32.totalorder %s25, 0
    %p135 = por %p133, %p134
    %p136 = scmp.ne.s32.totalorder %s124, %s125
    %p137 = scmp.eq.s32.totalorder %s26, 1
    %p138 = por %p136, %p137
    %p140 = scmp.ne.s32.totalorder %s125, %s139
    %p141 = scmp.eq.s32.totalorder %s26, 0
    %p142 = por %p140, %p141
    %s144 = sadd.s32 %s143, 1
    %p147 = scmp.eq.s32.totalorder %s20, 1
    %p148 = scmp.ne.s32.totalorder %s143, %s145
    %p149 = scmp.eq.s32.totalorder %s20, 0
    %p150 = por %p148, %p149
    %p151 = scmp.ne.s32.totalorder %s143, %s145
    %p152 = scmp.eq.s32.totalorder %s25, 1
    %p153 = por %p151, %p152
    %p154 = scmp.ne.s32.totalorder %s145, %s146
    %p155 = scmp.eq.s32.totalorder %s25, 0
    %p156 = por %p154, %p155
    %p157 = scmp.ne.s32.totalorder %s145, %s146
    %p158 = scmp.eq.s32.totalorder %s26, 1
    %p159 = por %p157, %p158
    %p161 = scmp.ne.s32.totalorder %s146, %s160
    %p162 = scmp.eq.s32.totalorder %s26, 0
    %p163 = por %p161, %p162
    %s165 = sadd.s32 %s164, 1
    %p168 = scmp.eq.s32.totalorder %s20, 1
    %p169 = scmp.ne.s32.totalorder %s164, %s166
    %p170 = scmp.eq.s32.totalorder %s20, 0
    %p171 = por %p169, %p170
    %p172 = scmp.ne.s32.totalorder %s164, %s166
    %p173 = scmp.eq.s32.totalorder %s25, 1
    %p174 = por %p172, %p173
    %p175 = scmp.ne.s32.totalorder %s166, %s167
    %p176 = scmp.eq.s32.totalorder %s25, 0
    %p177 = por %p175, %p176
    %p178 = scmp.ne.s32.totalorder %s166, %s167
    %p179 = scmp.eq.s32.totalorder %s26, 1
    %p180 = por %p178, %p179
    %p182 = scmp.ne.s32.totalorder %s167, %s181
    %p183 = scmp.eq.s32.totalorder %s26, 0
    %p184 = por %p182, %p183
    %s186 = sadd.s32 %s185, 1
    %p189 = scmp.eq.s32.totalorder %s20, 1
    %p190 = scmp.ne.s32.totalorder %s185, %s187
    %p191 = scmp.eq.s32.totalorder %s20, 0
    %p192 = por %p190, %p191
    %p193 = scmp.ne.s32.totalorder %s185, %s187
    %p194 = scmp.eq.s32.totalorder %s25, 1
    %p195 = por %p193, %p194
    %p196 = scmp.ne.s32.totalorder %s187, %s188
    %p197 = scmp.eq.s32.totalorder %s25, 0
    %p198 = por %p196, %p197
    %p199 = scmp.ne.s32.totalorder %s187, %s188
    %p200 = scmp.eq.s32.totalorder %s26, 1
    %p201 = por %p199, %p200
    %p203 = scmp.ne.s32.totalorder %s188, %s202
    %p204 = scmp.eq.s32.totalorder %s26, 0
    %p205 = por %p203, %p204
    %s207 = sadd.s32 %s206, 1
    %p210 = scmp.eq.s32.totalorder %s20, 1
    %p211 = scmp.ne.s32.totalorder %s206, %s208
    %p212 = scmp.eq.s32.totalorder %s20, 0
    %p213 = por %p211, %p212
    %p214 = scmp.ne.s32.totalorder %s206, %s208
    %p215 = scmp.eq.s32.totalorder %s25, 1
    %p216 = por %p214, %p215
    %p217 = scmp.ne.s32.totalorder %s208, %s209
    %p218 = scmp.eq.s32.totalorder %s25, 0
    %p219 = por %p217, %p218
    %p220 = scmp.ne.s32.totalorder %s208, %s209
    %p221 = scmp.eq.s32.totalorder %s26, 1
    %p222 = por %p220, %p221
    %p224 = scmp.ne.s32.totalorder %s209, %s223
    %p225 = scmp.eq.s32.totalorder %s26, 0
    %p226 = por %p224, %p225
    %s228 = sadd.s32 %s227, 1
    %p231 = scmp.eq.s32.totalorder %s20, 1
    %p232 = scmp.ne.s32.totalorder %s227, %s229
    %p233 = scmp.eq.s32.totalorder %s20, 0
    %p234 = por %p232, %p233
    %p235 = scmp.ne.s32.totalorder %s227, %s229
    %p236 = scmp.eq.s32.totalorder %s25, 1
    %p237 = por %p235, %p236
    %p238 = scmp.ne.s32.totalorder %s229, %s230
    %p239 = scmp.eq.s32.totalorder %s25, 0
    %p240 = por %p238, %p239
    %p241 = scmp.ne.s32.totalorder %s229, %s230
    %p242 = scmp.eq.s32.totalorder %s26, 1
    %p243 = por %p241, %p242
    %p245 = scmp.ne.s32.totalorder %s230, %s244
    %p246 = scmp.eq.s32.totalorder %s26, 0
    %p247 = por %p245, %p246
    %s249 = sadd.s32 %s248, 1
    %p252 = scmp.eq.s32.totalorder %s20, 1
    %p253 = scmp.ne.s32.totalorder %s248, %s250
    %p254 = scmp.eq.s32.totalorder %s20, 0
    %p255 = por %p253, %p254
    %p256 = scmp.ne.s32.totalorder %s248, %s250
    %p257 = scmp.eq.s32.totalorder %s25, 1
    %p258 = por %p256, %p257
    %p259 = scmp.ne.s32.totalorder %s250, %s251
    %p260 = scmp.eq.s32.totalorder %s25, 0
    %p261 = por %p259, %p260
    %p262 = scmp.ne.s32.totalorder %s250, %s251
    %p263 = scmp.eq.s32.totalorder %s26, 1
    %p264 = por %p262, %p263
    %p266 = scmp.ne.s32.totalorder %s251, %s265
    %p267 = scmp.eq.s32.totalorder %s26, 0
    %p268 = por %p266, %p267
    %s270 = sadd.s32 %s269, 1
    %p273 = scmp.eq.s32.totalorder %s20, 1
    %p274 = scmp.ne.s32.totalorder %s269, %s271
    %p275 = scmp.eq.s32.totalorder %s20, 0
    %p276 = por %p274, %p275
    %p277 = scmp.ne.s32.totalorder %s269, %s271
    %p278 = scmp.eq.s32.totalorder %s25, 1
    %p279 = por %p277, %p278
    %p280 = scmp.ne.s32.totalorder %s271, %s272
    %p281 = scmp.eq.s32.totalorder %s25, 0
    %p282 = por %p280, %p281
    %p283 = scmp.ne.s32.totalorder %s271, %s272
    %p284 = scmp.eq.s32.totalorder %s26, 1
    %p285 = por %p283, %p284
    %p287 = scmp.ne.s32.totalorder %s272, %s286
    %p288 = scmp.eq.s32.totalorder %s26, 0
    %p289 = por %p287, %p288
    %s291 = sadd.s32 %s290, 1
    %p294 = scmp.eq.s32.totalorder %s20, 1
    %p295 = scmp.ne.s32.totalorder %s290, %s292
    %p296 = scmp.eq.s32.totalorder %s20, 0
    %p297 = por %p295, %p296
    %p298 = scmp.ne.s32.totalorder %s290, %s292
    %p299 = scmp.eq.s32.totalorder %s25, 1
    %p300 = por %p298, %p299
    %p301 = scmp.ne.s32.totalorder %s292, %s293
    %p302 = scmp.eq.s32.totalorder %s25, 0
    %p303 = por %p301, %p302
    %p304 = scmp.ne.s32.totalorder %s292, %s293
    %p305 = scmp.eq.s32.totalorder %s26, 1
    %p306 = por %p304, %p305
    %p308 = scmp.ne.s32.totalorder %s293, %s307
    %p309 = scmp.eq.s32.totalorder %s26, 0
    %p310 = por %p308, %p309
    %s312 = sadd.s32 %s311, 1
    %p315 = scmp.eq.s32.totalorder %s20, 1
    %p316 = scmp.ne.s32.totalorder %s311, %s313
    %p317 = scmp.eq.s32.totalorder %s20, 0
    %p318 = por %p316, %p317
    %p319 = scmp.ne.s32.totalorder %s311, %s313
    %p320 = scmp.eq.s32.totalorder %s25, 1
    %p321 = por %p319, %p320
    %p322 = scmp.ne.s32.totalorder %s313, %s314
    %p323 = scmp.eq.s32.totalorder %s25, 0
    %p324 = por %p322, %p323
    %p325 = scmp.ne.s32.totalorder %s313, %s314
    %p326 = scmp.eq.s32.totalorder %s26, 1
    %p327 = por %p325, %p326
    %p329 = scmp.ne.s32.totalorder %s314, %s328
    %p330 = scmp.eq.s32.totalorder %s26, 0
    %p331 = por %p329, %p330
    %s332 = ssub.s32 %s20, %s27
    %p333 = scmp.eq.s32.totalorder %s332, 0
    %s335 = sadd.s32 %s334, 1
    %s336 = scalar_select %p333, %s334, %s335
    %p339 = pneg %p333
    %p340 = scmp.eq.s32.totalorder %s20, 1
    %p341 = por %p339, %p340
    %p342 = scmp.ne.s32.totalorder %s334, %s337
    %p343 = scmp.eq.s32.totalorder %s20, 0
    %p344 = por %p342, %p343
    %p345 = scmp.ne.s32.totalorder %s334, %s337
    %p346 = scmp.eq.s32.totalorder %s25, 1
    %p347 = por %p345, %p346
    %p348 = scmp.ne.s32.totalorder %s337, %s338
    %p349 = scmp.eq.s32.totalorder %s25, 0
    %p350 = por %p348, %p349
    %p351 = scmp.ne.s32.totalorder %s337, %s338
    %p352 = scmp.eq.s32.totalorder %s26, 1
    %p353 = por %p351, %p352
    %p355 = scmp.ne.s32.totalorder %s338, %s354
    %p356 = scmp.eq.s32.totalorder %s26, 0
    %p357 = por %p355, %p356
    %p358 = scmp.le.s32.totalorder 1, %s20
    %p359 = scmp.lt.s32.totalorder %s20, 3
    %p360 = pnand %p358, %p359
    %p361 = pneg %p360
    // Predicated region
    $region9: #{_lambda_.7} parent=5 // pred_check
      _
    $region10: #{_lambda_.7} parent=5 // pred_check_branch
      %363 = sbr.rel (%p360) target = $region12
    $region11: #{_lambda_.7} parent=5 // pred_region
      %s364 = ssub.s32 %s20, 1
      // Predicated region
      $region13: #{_lambda_.7} parent=11 // pred_check
        %p365 = pneg %p93
      $region14: #{_lambda_.7} parent=11 // pred_check_branch
        %367 = sbr.rel (%p365) target = $region16
      $region15: #{_lambda_.7} parent=11 // pred_region
        _
      $region16: #{_lambda_.7} parent=11 // pred_fallthru
        _
      // Predicated region
      $region17: #{_lambda_.7} parent=11 // pred_check
        %p368 = pneg %p114
      $region18: #{_lambda_.7} parent=11 // pred_check_branch
        %370 = sbr.rel (%p368) target = $region20
      $region19: #{_lambda_.7} parent=11 // pred_region
        _
      $region20: #{_lambda_.7} parent=11 // pred_fallthru
        _
      // Predicated region
      $region21: #{_lambda_.7} parent=11 // pred_check
        %p371 = pneg %p135
      $region22: #{_lambda_.7} parent=11 // pred_check_branch
        %373 = sbr.rel (%p371) target = $region24
      $region23: #{_lambda_.7} parent=11 // pred_region
        _
      $region24: #{_lambda_.7} parent=11 // pred_fallthru
        _
      // Predicated region
      $region25: #{_lambda_.7} parent=11 // pred_check
        %p374 = pneg %p156
      $region26: #{_lambda_.7} parent=11 // pred_check_branch
        %376 = sbr.rel (%p374) target = $region28
      $region27: #{_lambda_.7} parent=11 // pred_region
        _
      $region28: #{_lambda_.7} parent=11 // pred_fallthru
        _
      // Predicated region
      $region29: #{_lambda_.7} parent=11 // pred_check
        %p377 = pneg %p177
      $region30: #{_lambda_.7} parent=11 // pred_check_branch
        %379 = sbr.rel (%p377) target = $region32
      $region31: #{_lambda_.7} parent=11 // pred_region
        _
      $region32: #{_lambda_.7} parent=11 // pred_fallthru
        _
      // Predicated region
      $region33: #{_lambda_.7} parent=11 // pred_check
        %p380 = pneg %p198
      $region34: #{_lambda_.7} parent=11 // pred_check_branch
        %382 = sbr.rel (%p380) target = $region36
      $region35: #{_lambda_.7} parent=11 // pred_region
        _
      $region36: #{_lambda_.7} parent=11 // pred_fallthru
        _
      // Predicated region
      $region37: #{_lambda_.7} parent=11 // pred_check
        %p383 = pneg %p219
      $region38: #{_lambda_.7} parent=11 // pred_check_branch
        %385 = sbr.rel (%p383) target = $region40
      $region39: #{_lambda_.7} parent=11 // pred_region
        _
      $region40: #{_lambda_.7} parent=11 // pred_fallthru
        _
      // Predicated region
      $region41: #{_lambda_.7} parent=11 // pred_check
        %p386 = pneg %p240
      $region42: #{_lambda_.7} parent=11 // pred_check_branch
        %388 = sbr.rel (%p386) target = $region44
      $region43: #{_lambda_.7} parent=11 // pred_region
        _
      $region44: #{_lambda_.7} parent=11 // pred_fallthru
        _
      // Predicated region
      $region45: #{_lambda_.7} parent=11 // pred_check
        %p389 = pneg %p261
      $region46: #{_lambda_.7} parent=11 // pred_check_branch
        %391 = sbr.rel (%p389) target = $region48
      $region47: #{_lambda_.7} parent=11 // pred_region
        _
      $region48: #{_lambda_.7} parent=11 // pred_fallthru
        _
      // Predicated region
      $region49: #{_lambda_.7} parent=11 // pred_check
        %p392 = pneg %p282
      $region50: #{_lambda_.7} parent=11 // pred_check_branch
        %394 = sbr.rel (%p392) target = $region52
      $region51: #{_lambda_.7} parent=11 // pred_region
        _
      $region52: #{_lambda_.7} parent=11 // pred_fallthru
        _
      // Predicated region
      $region53: #{_lambda_.7} parent=11 // pred_check
        %p395 = pneg %p303
      $region54: #{_lambda_.7} parent=11 // pred_check_branch
        %397 = sbr.rel (%p395) target = $region56
      $region55: #{_lambda_.7} parent=11 // pred_region
        _
      $region56: #{_lambda_.7} parent=11 // pred_fallthru
        _
      // Predicated region
      $region57: #{_lambda_.7} parent=11 // pred_check
        %p398 = pneg %p324
      $region58: #{_lambda_.7} parent=11 // pred_check_branch
        %400 = sbr.rel (%p398) target = $region60
      $region59: #{_lambda_.7} parent=11 // pred_region
        _
      $region60: #{_lambda_.7} parent=11 // pred_fallthru
        _
    $region12: #{_lambda_.7} parent=5 // pred_fallthru
      _
    %p401 = scmp.lt.s32.totalorder %s20, 2
    // Predicated region
    $region61: #{_lambda_.7} parent=5 // pred_check
      %p402 = pneg %p401
    $region62: #{_lambda_.7} parent=5 // pred_check_branch
      %404 = sbr.rel (%p402) target = $region64
    $region63: #{_lambda_.7} parent=5 // pred_region
      // Predicated region
      $region65: #{_lambda_.7} parent=63 // pred_check
        %p405 = pneg %p40
      $region66: #{_lambda_.7} parent=63 // pred_check_branch
        %407 = sbr.rel (%p405) target = $region68
      $region67: #{_lambda_.7} parent=63 // pred_region
        %p408 = scmp.lt.s32.totalorder %s20, 1
        %s409 = scalar_select %p408, %s20, 1
        %s410 = smul.addr %s409, 3
        %s411 = smul.addr %s410, 8
        %s412 = scalar_lea.vmem %s0, %s411
      $region68: #{_lambda_.7} parent=63 // pred_fallthru
        _
      // Predicated region
      $region69: #{_lambda_.7} parent=63 // pred_check
        %p413 = pneg %p66
      $region70: #{_lambda_.7} parent=63 // pred_check_branch
        %415 = sbr.rel (%p413) target = $region72
      $region71: #{_lambda_.7} parent=63 // pred_region
        %p416 = scmp.lt.s32.totalorder %s20, 1
        %s417 = scalar_select %p416, %s20, 1
        %s418 = scalar_lea.vmem %s1, %s417
      $region72: #{_lambda_.7} parent=63 // pred_fallthru
        _
    $region64: #{_lambda_.7} parent=5 // pred_fallthru
      _
    %p419 = scmp.le.s32.totalorder 1, %s20
    %p420 = scmp.lt.s32.totalorder %s20, 3
    %p421 = pnand %p419, %p420
    %p422 = pneg %p421
    // Predicated region
    $region73: #{_lambda_.7} parent=5 // pred_check
      _
    $region74: #{_lambda_.7} parent=5 // pred_check_branch
      %424 = sbr.rel (%p421) target = $region76
    $region75: #{_lambda_.7} parent=5 // pred_region
      %s425 = ssub.s32 %s20, 1
      %p426 = scmp.lt.s32.totalorder %s25, 1
      %s427 = scalar_select %p426, %s25, 1
      %s428 = smul.addr %s427, 3
      %s429 = smul.addr %s428, 8
      %s430 = scalar_lea.vmem %s0, %s429
      %p431 = pneg %p46
      %p432 = pneg %p43
      %p433 = scmp.lt.s32.totalorder %s25, 1
      %s434 = scalar_select %p433, %s25, 1
      %s435 = scalar_lea.vmem %s1, %s434
      %p436 = pneg %p72
      %p437 = pneg %p69
      %p438 = pneg %p93
      %p439 = pneg %p90
      %p440 = pneg %p114
      %p441 = pneg %p111
      %p442 = pneg %p135
      %p443 = pneg %p132
      %p444 = pneg %p156
      %p445 = pneg %p153
      %p446 = pneg %p177
      %p447 = pneg %p174
      %p448 = pneg %p198
      %p449 = pneg %p195
      %p450 = pneg %p219
      %p451 = pneg %p216
      %p452 = pneg %p240
      %p453 = pneg %p237
      %p454 = pneg %p261
      %p455 = pneg %p258
      %p456 = pneg %p282
      %p457 = pneg %p279
      %p458 = pneg %p303
      %p459 = pneg %p300
      %p460 = pneg %p324
      %p461 = pneg %p321
      %p462 = pneg %p350
      %p463 = pneg %p347
      %p464 = scmp.lt.s32.totalorder %s25, 1
      %s465 = scalar_select %p464, %s25, 1
      %s466 = smul.addr %s465, 3
      %s467 = smul.addr %s466, 8
      %s468 = scalar_lea.vmem %s14, %s467
      %p469 = scmp.lt.s32.totalorder %s25, 1
      %s470 = scalar_select %p469, %s25, 1
      %s471 = smul.addr %s470, 3
      %s472 = smul.addr %s471, 8
      %s473 = scalar_lea.vmem %s0, %s472
      %p474 = scmp.lt.s32.totalorder %s25, 1
      %s475 = scalar_select %p474, %s25, 1
      %s476 = scalar_lea.vmem %s1, %s475
      %p477 = scmp.lt.s32.totalorder %s25, 1
      %s478 = scalar_select %p477, %s25, 1
      %s479 = smul.addr %s478, 3
      %s480 = smul.addr %s479, 8
      %s481 = scalar_lea.vmem %s14, %s480
      %v482 = vld [vmem:[%s473] sm:$0xff]
      %v483 = vld [vmem:[%s473 + $0x8] sm:$0xff]
      %v484 = vld [vmem:[%s473 + $0x10] sm:$0x1]
      %v485 = vld [vmem:[%s476] sm:$0x1]
      %v486 = vld [vmem:[%s2] sm:$0x1]
      %v487 = vld [vmem:[%s3] sm:$0x1]
      %v488 = vld [vmem:[%s7] sm:$0x1]
      %v489 = vld [vmem:[%s8] sm:$0x1]
      %v490 = vld [vmem:[%s9] sm:$0x1]
      %v491 = vld [vmem:[%s10] sm:$0xff]
      %v492 = vld [vmem:[%s10 + $0x8] sm:$0xff]
      %v493 = vld [vmem:[%s10 + $0x10] sm:$0xff]
      %v494 = vld [vmem:[%s10 + $0x18] sm:$0xff]
      %v495 = vld [vmem:[%s11] sm:$0x1]
      %v496 = vld [vmem:[%s12] sm:$0xff]
      %v497 = vld [vmem:[%s12 + $0x8] sm:$0xff]
      %v498 = vld [vmem:[%s12 + $0x10] sm:$0xff]
      %v499 = vld [vmem:[%s12 + $0x18] sm:$0xff]
      %v500 = vld [vmem:[%s12 + $0x20] sm:$0xff]
      %v501 = vld [vmem:[%s12 + $0x28] sm:$0xff]
      %v502 = vld [vmem:[%s12 + $0x30] sm:$0xff]
      %v503 = vld [vmem:[%s12 + $0x38] sm:$0xff]
      %v504 = vld [vmem:[%s13] sm:$0x1]
      %vm505 = vcmask 261120
      %v506 = vsel %vm505, %v482, 0.0
      %507 = vadd.xlane.f32.xlu0 %v506
      %v508 = vpop.xlane.xlu0 %507
      %v509 = vsel %vm505, %v483, 0.0
      %510 = vadd.xlane.f32.xlu0 %v509
      %v511 = vpop.xlane.xlu0 %510
      %vm512 = vcmask 253952
      %v513 = vsel %vm512, %v484, 0.0
      %514 = vadd.xlane.f32.xlu0 %v513
      %v515 = vpop.xlane.xlu0 %514
      %v516 = vrcp.pop 32.0
      %v517 = vmul.f32 %v508, %v516
      %v518 = vmul.f32 %v511, %v516
      %v519 = vmul.f32 %v515, %v516
      %v520 = vsub.f32 %v482, %v517
      %v521 = vsub.f32 %v483, %v518
      %v522 = vsub.f32 %v484, %v519
      %v523 = vmul.f32 %v520, %v520
      %v524 = vmul.f32 %v521, %v521
      %v525 = vmul.f32 %v522, %v522
      %v526 = vsel %vm505, %v523, 0.0
      %527 = vadd.xlane.f32.xlu0 %v526
      %v528 = vpop.xlane.xlu0 %527
      %v529 = vsel %vm505, %v524, 0.0
      %530 = vadd.xlane.f32.xlu0 %v529
      %v531 = vpop.xlane.xlu0 %530
      %v532 = vsel %vm512, %v525, 0.0
      %533 = vadd.xlane.f32.xlu0 %v532
      %v534 = vpop.xlane.xlu0 %533
      %v535 = vmul.f32 %v528, %v516
      %v536 = vmul.f32 %v531, %v516
      %v537 = vmul.f32 %v534, %v516
      %v538 = vadd.f32 %v535, 1e-12
      %v539 = vadd.f32 %v536, 1e-12
      %v540 = vadd.f32 %v537, 1e-12
      %v541 = vrsqrt.pop %v538
      %v542 = vrsqrt.pop %v539
      %v543 = vrsqrt.pop %v540
      %v544 = vmul.f32 %v520, %v541
      %v545 = vmul.f32 %v521, %v542
      %v546 = vmul.f32 %v522, %v543
      %v548 = vlaneseq
      %v549 = vshrl.u32 %v548, 7
      %v550 = vsub.s32 0, %v549
      %v551 = vrot.slane %v486, %v550
      %v553 = vmul.f32 %v544, %v551
      %v554 = vmul.f32 %v545, %v551
      %v555 = vmul.f32 %v546, %v551
      %v557 = vlaneseq
      %v558 = vshrl.u32 %v557, 7
      %v559 = vsub.s32 0, %v558
      %v560 = vrot.slane %v487, %v559
      %v562 = vadd.f32 %v553, %v560
      %v563 = vadd.f32 %v554, %v560
      %v564 = vadd.f32 %v555, %v560
      %v565 = vld [vmem:[%s4] sm:$0xff]
      %v566 = vld [vmem:[%s4 + $0x8] sm:$0xff]
      %v567 = vld [vmem:[%s4 + $0x10] sm:$0xff]
      %v568 = vld [vmem:[%s4 + $0x18] sm:$0xff]
      %v569 = vld [vmem:[%s5] sm:$0x1]
      %v571 = vlaneseq
      %v572 = vshrl.u32 %v571, 7
      %v573 = vsub.s32 0, %v572
      %v574 = vrot.slane %v569, %v573
      %v577 = vsel %vm505, %v562, 0
      %v580 = vsel %vm505, %v563, 0
      %v583 = vsel %vm505, %v564, 0
      %585 = vmatprep.subr.mxu0 0.0
      %586 = vmatpush1.msra.mxu0 %v565
      %587 = vmatprep.subr.mxu0 0.0
      %588 = vmatpush1.msra.mxu0 %v566
      %589 = vmatprep.subr.mxu0 0.0
      %590 = vmatpush1.msra.mxu0 %v567
      %591 = vmatprep.subr.mxu0 0.0
      %592 = vmatpush1.msra.mxu0 %v568
      %593 = vmatprep.subr.mxu0 0.0
      %594 = vmatpush1.msra.mxu0 0.0
      %595 = vmatprep.subr.mxu0 0.0
      %596 = vmatpush1.msra.mxu0 0.0
      %597 = vmatprep.subr.mxu0 0.0
      %598 = vmatpush1.msra.mxu0 0.0
      %599 = vmatprep.subr.mxu0 0.0
      %600 = vmatpush1.msra.mxu0 0.0
      %601 = vmatprep.subr.mxu0 0.0
      %602 = vmatpush1.msra.mxu0 0.0
      %603 = vmatprep.subr.mxu0 0.0
      %604 = vmatpush1.msra.mxu0 0.0
      %605 = vmatprep.subr.mxu0 0.0
      %606 = vmatpush1.msra.mxu0 0.0
      %607 = vmatprep.subr.mxu0 0.0
      %608 = vmatpush1.msra.mxu0 0.0
      %609 = vmatprep.subr.mxu0 0.0
      %610 = vmatpush1.msra.mxu0 0.0
      %611 = vmatprep.subr.mxu0 0.0
      %612 = vmatpush1.msra.mxu0 0.0
      %613 = vmatprep.subr.mxu0 0.0
      %614 = vmatpush1.msra.mxu0 0.0
      %615 = vmatprep.subr.mxu0 0.0
      %616 = vmatpush1.msra.mxu0 0.0
      %617 = vmatprep.subr.mxu0 0.0
      %618 = vmatpush1.msra.mxu0 0.0
      %619 = vmatprep.subr.mxu0 0.0
      %620 = vmatpush1.msra.mxu0 0.0
      %621 = vmatprep.subr.mxu0 0.0
      %622 = vmatpush1.msra.mxu0 0.0
      %623 = vmatprep.subr.mxu0 0.0
      %624 = vmatpush1.msra.mxu0 0.0
      %625 = vmatprep.subr.mxu0 0.0
      %626 = vmatpush1.msra.mxu0 0.0
      %627 = vmatprep.subr.mxu0 0.0
      %628 = vmatpush1.msra.mxu0 0.0
      %629 = vmatprep.subr.mxu0 0.0
      %630 = vmatpush1.msra.mxu0 0.0
      %631 = vmatprep.subr.mxu0 0.0
      %632 = vmatpush1.msra.mxu0 0.0
      %633 = vmatprep.subr.mxu0 0.0
      %634 = vmatpush1.msra.mxu0 0.0
      %635 = vmatprep.subr.mxu0 0.0
      %636 = vmatpush1.msra.mxu0 0.0
      %637 = vmatprep.subr.mxu0 0.0
      %638 = vmatpush1.msra.mxu0 0.0
      %639 = vmatprep.subr.mxu0 0.0
      %640 = vmatpush1.msra.mxu0 0.0
      %641 = vmatprep.subr.mxu0 0.0
      %642 = vmatpush1.msra.mxu0 0.0
      %643 = vmatprep.subr.mxu0 0.0
      %644 = vmatpush1.msra.mxu0 0.0
      %645 = vmatprep.subr.mxu0 0.0
      %646 = vmatpush1.msra.mxu0 0.0
      %647 = vmatprep.subr.mxu0 0.0
      %648 = vmatpush1.msra.mxu0 0.0
      %649 = vmatprep.mubr.f32.mxu0 0.0
      %650 = vmatmul.mubr.f32.gmra.mrb[0].mxu0 %v577
      %v651 = vpop.f32.mrb[0].mxu0
      %v652 = vadd.f32 %v574, %v651
      %v653 = vpop.f32.mrb[0].mxu0
      %654 = vmatprep.mubr.f32.mxu0 0.0
      %655 = vmatmul.mubr.f32.gmra.mrb[0].mxu0 %v580
      %v656 = vpop.f32.mrb[0].mxu0
      %v657 = vadd.f32 %v574, %v656
      %v658 = vpop.f32.mrb[0].mxu0
      %659 = vmatprep.mubr.f32.mxu0 0.0
      %660 = vmatmul.mubr.f32.gmra.mrb[0].mxu0 %v583
      %v661 = vpop.f32.mrb[0].mxu0
      %v662 = vadd.f32 %v574, %v661
      %v663 = vpop.f32.mrb[0].mxu0
      %664 = vdwg.mxu0
      %s665 = scalar_lea.vmem %s4, 128
      %v666 = vld [vmem:[%s665] sm:$0xff]
      %v667 = vld [vmem:[%s665 + $0x8] sm:$0xff]
      %v668 = vld [vmem:[%s665 + $0x10] sm:$0xff]
      %v669 = vld [vmem:[%s665 + $0x18] sm:$0xff]
      %s670 = scalar_lea.vmem %s5, 4
      %v671 = vld [vmem:[%s670] sm:$0x1]
      %v673 = vlaneseq
      %v674 = vshrl.u32 %v673, 7
      %v675 = vsub.s32 0, %v674
      %v676 = vrot.slane %v671, %v675
      %678 = vmatprep.subr.mxu0 0.0
      %679 = vmatpush1.msra.mxu0 %v666
      %680 = vmatprep.subr.mxu0 0.0
      %681 = vmatpush1.msra.mxu0 %v667
      %682 = vmatprep.subr.mxu0 0.0
      %683 = vmatpush1.msra.mxu0 %v668
      %684 = vmatprep.subr.mxu0 0.0
      %685 = vmatpush1.msra.mxu0 %v669
      %686 = vmatprep.subr.mxu0 0.0
      %687 = vmatpush1.msra.mxu0 0.0
      %688 = vmatprep.subr.mxu0 0.0
      %689 = vmatpush1.msra.mxu0 0.0
      %690 = vmatprep.subr.mxu0 0.0
      %691 = vmatpush1.msra.mxu0 0.0
      %692 = vmatprep.subr.mxu0 0.0
      %693 = vmatpush1.msra.mxu0 0.0
      %694 = vmatprep.subr.mxu0 0.0
      %695 = vmatpush1.msra.mxu0 0.0
      %696 = vmatprep.subr.mxu0 0.0
      %697 = vmatpush1.msra.mxu0 0.0
      %698 = vmatprep.subr.mxu0 0.0
      %699 = vmatpush1.msra.mxu0 0.0
      %700 = vmatprep.subr.mxu0 0.0
      %701 = vmatpush1.msra.mxu0 0.0
      %702 = vmatprep.subr.mxu0 0.0
      %703 = vmatpush1.msra.mxu0 0.0
      %704 = vmatprep.subr.mxu0 0.0
      %705 = vmatpush1.msra.mxu0 0.0
      %706 = vmatprep.subr.mxu0 0.0
      %707 = vmatpush1.msra.mxu0 0.0
      %708 = vmatprep.subr.mxu0 0.0
      %709 = vmatpush1.msra.mxu0 0.0
      %710 = vmatprep.subr.mxu0 0.0
      %711 = vmatpush1.msra.mxu0 0.0
      %712 = vmatprep.subr.mxu0 0.0
      %713 = vmatpush1.msra.mxu0 0.0
      %714 = vmatprep.subr.mxu0 0.0
      %715 = vmatpush1.msra.mxu0 0.0
      %716 = vmatprep.subr.mxu0 0.0
      %717 = vmatpush1.msra.mxu0 0.0
      %718 = vmatprep.subr.mxu0 0.0
      %719 = vmatpush1.msra.mxu0 0.0
      %720 = vmatprep.subr.mxu0 0.0
      %721 = vmatpush1.msra.mxu0 0.0
      %722 = vmatprep.subr.mxu0 0.0
      %723 = vmatpush1.msra.mxu0 0.0
      %724 = vmatprep.subr.mxu0 0.0
      %725 = vmatpush1.msra.mxu0 0.0
      %726 = vmatprep.subr.mxu0 0.0
      %727 = vmatpush1.msra.mxu0 0.0
      %728 = vmatprep.subr.mxu0 0.0
      %729 = vmatpush1.msra.mxu0 0.0
      %730 = vmatprep.subr.mxu0 0.0
      %731 = vmatpush1.msra.mxu0 0.0
      %732 = vmatprep.subr.mxu0 0.0
      %733 = vmatpush1.msra.mxu0 0.0
      %734 = vmatprep.subr.mxu0 0.0
      %735 = vmatpush1.msra.mxu0 0.0
      %736 = vmatprep.subr.mxu0 0.0
      %737 = vmatpush1.msra.mxu0 0.0
      %738 = vmatprep.subr.mxu0 0.0
      %739 = vmatpush1.msra.mxu0 0.0
      %740 = vmatprep.subr.mxu0 0.0
      %741 = vmatpush1.msra.mxu0 0.0
      %742 = vmatprep.mubr.f32.mxu0 0.0
      %743 = vmatmul.mubr.f32.gmra.mrb[0].mxu0 %v577
      %v744 = vpop.f32.mrb[0].mxu0
      %v745 = vadd.f32 %v676, %v744
      %v746 = vpop.f32.mrb[0].mxu0
      %747 = vmatprep.mubr.f32.mxu0 0.0
      %748 = vmatmul.mubr.f32.gmra.mrb[0].mxu0 %v580
      %v749 = vpop.f32.mrb[0].mxu0
      %v750 = vadd.f32 %v676, %v749
      %v751 = vpop.f32.mrb[0].mxu0
      %752 = vmatprep.mubr.f32.mxu0 0.0
      %753 = vmatmul.mubr.f32.gmra.mrb[0].mxu0 %v583
      %v754 = vpop.f32.mrb[0].mxu0
      %v755 = vadd.f32 %v676, %v754
      %v756 = vpop.f32.mrb[0].mxu0
      %757 = vdwg.mxu0
      %s758 = scalar_lea.vmem %s4, 256
      %v759 = vld [vmem:[%s758] sm:$0xff]
      %v760 = vld [vmem:[%s758 + $0x8] sm:$0xff]
      %v761 = vld [vmem:[%s758 + $0x10] sm:$0xff]
      %v762 = vld [vmem:[%s758 + $0x18] sm:$0xff]
      %s763 = scalar_lea.vmem %s5, 8
      %v764 = vld [vmem:[%s763] sm:$0x1]
      %v766 = vlaneseq
      %v767 = vshrl.u32 %v766, 7
      %v768 = vsub.s32 0, %v767
      %v769 = vrot.slane %v764, %v768
      %771 = vmatprep.subr.mxu0 0.0
      %772 = vmatpush1.msra.mxu0 %v759
      %773 = vmatprep.subr.mxu0 0.0
      %774 = vmatpush1.msra.mxu0 %v760
      %775 = vmatprep.subr.mxu0 0.0
      %776 = vmatpush1.msra.mxu0 %v761
      %777 = vmatprep.subr.mxu0 0.0
      %778 = vmatpush1.msra.mxu0 %v762
      %779 = vmatprep.subr.mxu0 0.0
      %780 = vmatpush1.msra.mxu0 0.0
      %781 = vmatprep.subr.mxu0 0.0
      %782 = vmatpush1.msra.mxu0 0.0
      %783 = vmatprep.subr.mxu0 0.0
      %784 = vmatpush1.msra.mxu0 0.0
      %785 = vmatprep.subr.mxu0 0.0
      %786 = vmatpush1.msra.mxu0 0.0
      %787 = vmatprep.subr.mxu0 0.0
      %788 = vmatpush1.msra.mxu0 0.0
      %789 = vmatprep.subr.mxu0 0.0
      %790 = vmatpush1.msra.mxu0 0.0
      %791 = vmatprep.subr.mxu0 0.0
      %792 = vmatpush1.msra.mxu0 0.0
      %793 = vmatprep.subr.mxu0 0.0
      %794 = vmatpush1.msra.mxu0 0.0
      %795 = vmatprep.subr.mxu0 0.0
      %796 = vmatpush1.msra.mxu0 0.0
      %797 = vmatprep.subr.mxu0 0.0
      %798 = vmatpush1.msra.mxu0 0.0
      %799 = vmatprep.subr.mxu0 0.0
      %800 = vmatpush1.msra.mxu0 0.0
      %801 = vmatprep.subr.mxu0 0.0
      %802 = vmatpush1.msra.mxu0 0.0
      %803 = vmatprep.subr.mxu0 0.0
      %804 = vmatpush1.msra.mxu0 0.0
      %805 = vmatprep.subr.mxu0 0.0
      %806 = vmatpush1.msra.mxu0 0.0
      %807 = vmatprep.subr.mxu0 0.0
      %808 = vmatpush1.msra.mxu0 0.0
      %809 = vmatprep.subr.mxu0 0.0
      %810 = vmatpush1.msra.mxu0 0.0
      %811 = vmatprep.subr.mxu0 0.0
      %812 = vmatpush1.msra.mxu0 0.0
      %813 = vmatprep.subr.mxu0 0.0
      %814 = vmatpush1.msra.mxu0 0.0
      %815 = vmatprep.subr.mxu0 0.0
      %816 = vmatpush1.msra.mxu0 0.0
      %817 = vmatprep.subr.mxu0 0.0
      %818 = vmatpush1.msra.mxu0 0.0
      %819 = vmatprep.subr.mxu0 0.0
      %820 = vmatpush1.msra.mxu0 0.0
      %821 = vmatprep.subr.mxu0 0.0
      %822 = vmatpush1.msra.mxu0 0.0
      %823 = vmatprep.subr.mxu0 0.0
      %824 = vmatpush1.msra.mxu0 0.0
      %825 = vmatprep.subr.mxu0 0.0
      %826 = vmatpush1.msra.mxu0 0.0
      %827 = vmatprep.subr.mxu0 0.0
      %828 = vmatpush1.msra.mxu0 0.0
      %829 = vmatprep.subr.mxu0 0.0
      %830 = vmatpush1.msra.mxu0 0.0
      %831 = vmatprep.subr.mxu0 0.0
      %832 = vmatpush1.msra.mxu0 0.0
      %833 = vmatprep.subr.mxu0 0.0
      %834 = vmatpush1.msra.mxu0 0.0
      %835 = vmatprep.mubr.f32.mxu0 0.0
      %836 = vmatmul.mubr.f32.gmra.mrb[0].mxu0 %v577
      %v837 = vpop.f32.mrb[0].mxu0
      %v838 = vadd.f32 %v769, %v837
      %v839 = vpop.f32.mrb[0].mxu0
      %840 = vmatprep.mubr.f32.mxu0 0.0
      %841 = vmatmul.mubr.f32.gmra.mrb[0].mxu0 %v580
      %v842 = vpop.f32.mrb[0].mxu0
      %v843 = vadd.f32 %v769, %v842
      %v844 = vpop.f32.mrb[0].mxu0
      %845 = vmatprep.mubr.f32.mxu0 0.0
      %846 = vmatmul.mubr.f32.gmra.mrb[0].mxu0 %v583
      %v847 = vpop.f32.mrb[0].mxu0
      %v848 = vadd.f32 %v769, %v847
      %v849 = vpop.f32.mrb[0].mxu0
      %850 = vdwg.mxu0
      %vm851 = vcmask 64512
      %v853 = vsel %vm851, %v652, 0
      %v856 = vsel %vm851, %v657, 0
      %v859 = vsel %vm851, %v662, 0
      %v862 = vsel %vm851, %v745, 0
      %v865 = vsel %vm851, %v750, 0
      %v868 = vsel %vm851, %v755, 0
      %870 = vmatprep.subr.mxu0 0.0
      %871 = vmatpush1.xpose.msra.mxu0 %v862
      %872 = vmatprep.subr.mxu0 0.0
      %873 = vmatpush1.xpose.msra.mxu0 %v865
      %874 = vmatprep.subr.mxu0 0.0
      %875 = vmatpush1.xpose.msra.mxu0 %v868
      %876 = vmatprep.subr.mxu0 0.0
      %877 = vmatpush1.xpose.msra.mxu0 0.0
      %878 = vmatprep.subr.mxu0 0.0
      %879 = vmatpush1.xpose.msra.mxu0 0.0
      %880 = vmatprep.subr.mxu0 0.0
      %881 = vmatpush1.xpose.msra.mxu0 0.0
      %882 = vmatprep.subr.mxu0 0.0
      %883 = vmatpush1.xpose.msra.mxu0 0.0
      %884 = vmatprep.subr.mxu0 0.0
      %885 = vmatpush1.xpose.msra.mxu0 0.0
      %886 = vmatprep.subr.mxu0 0.0
      %887 = vmatpush1.xpose.msra.mxu0 0.0
      %888 = vmatprep.subr.mxu0 0.0
      %889 = vmatpush1.xpose.msra.mxu0 0.0
      %890 = vmatprep.subr.mxu0 0.0
      %891 = vmatpush1.xpose.msra.mxu0 0.0
      %892 = vmatprep.subr.mxu0 0.0
      %893 = vmatpush1.xpose.msra.mxu0 0.0
      %894 = vmatprep.subr.mxu0 0.0
      %895 = vmatpush1.xpose.msra.mxu0 0.0
      %896 = vmatprep.subr.mxu0 0.0
      %897 = vmatpush1.xpose.msra.mxu0 0.0
      %898 = vmatprep.subr.mxu0 0.0
      %899 = vmatpush1.xpose.msra.mxu0 0.0
      %900 = vmatprep.subr.mxu0 0.0
      %901 = vmatpush1.xpose.msra.mxu0 0.0
      %902 = vmatprep.subr.mxu0 0.0
      %903 = vmatpush1.xpose.msra.mxu0 0.0
      %904 = vmatprep.subr.mxu0 0.0
      %905 = vmatpush1.xpose.msra.mxu0 0.0
      %906 = vmatprep.subr.mxu0 0.0
      %907 = vmatpush1.xpose.msra.mxu0 0.0
      %908 = vmatprep.subr.mxu0 0.0
      %909 = vmatpush1.xpose.msra.mxu0 0.0
      %910 = vmatprep.subr.mxu0 0.0
      %911 = vmatpush1.xpose.msra.mxu0 0.0
      %912 = vmatprep.subr.mxu0 0.0
      %913 = vmatpush1.xpose.msra.mxu0 0.0
      %914 = vmatprep.subr.mxu0 0.0
      %915 = vmatpush1.xpose.msra.mxu0 0.0
      %916 = vmatprep.subr.mxu0 0.0
      %917 = vmatpush1.xpose.msra.mxu0 0.0
      %918 = vmatprep.subr.mxu0 0.0
      %919 = vmatpush1.xpose.msra.mxu0 0.0
      %920 = vmatprep.subr.mxu0 0.0
      %921 = vmatpush1.xpose.msra.mxu0 0.0
      %922 = vmatprep.subr.mxu0 0.0
      %923 = vmatpush1.xpose.msra.mxu0 0.0
      %924 = vmatprep.subr.mxu0 0.0
      %925 = vmatpush1.xpose.msra.mxu0 0.0
      %926 = vmatprep.subr.mxu0 0.0
      %927 = vmatpush1.xpose.msra.mxu0 0.0
      %928 = vmatprep.subr.mxu0 0.0
      %929 = vmatpush1.xpose.msra.mxu0 0.0
      %930 = vmatprep.subr.mxu0 0.0
      %931 = vmatpush1.xpose.msra.mxu0 0.0
      %932 = vmatprep.subr.mxu0 0.0
      %933 = vmatpush1.xpose.msra.mxu0 0.0
      %934 = vmatprep.mubr.f32.mxu0 0.0
      %935 = vmatmul.mubr.f32.gmra.mrb[0].mxu0 %v853
      %v936 = vpop.f32.mrb[0].mxu0
      %v937 = vadd.f32 0.0, %v936
      %v938 = vpop.f32.mrb[0].mxu0
      %939 = vmatprep.mubr.f32.mxu0 0.0
      %940 = vmatmul.mubr.f32.gmra.mrb[0].mxu0 %v856
      %v941 = vpop.f32.mrb[0].mxu0
      %v942 = vadd.f32 0.0, %v941
      %v943 = vpop.f32.mrb[0].mxu0
      %944 = vmatprep.mubr.f32.mxu0 0.0
      %945 = vmatmul.mubr.f32.gmra.mrb[0].mxu0 %v859
      %v946 = vpop.f32.mrb[0].mxu0
      %v947 = vadd.f32 0.0, %v946
      %v948 = vpop.f32.mrb[0].mxu0
      %949 = vdwg.mxu0
      %v950 = vmul.f32 %v937, 0.35355338
      %v951 = vmul.f32 %v942, 0.35355338
      %v952 = vmul.f32 %v947, 0.35355338
      %v954 = vlaneseq
      %v955 = vshrl.u32 %v954, 7
      %v956 = vsub.s32 0, %v955
      %v957 = vrot.slane %v485, %v956
      %v959 = vadd.f32 %v950, %v957
      %v960 = vadd.f32 %v951, %v957
      %v961 = vadd.f32 %v952, %v957
      %vm962 = vcmask 138240
      %v963 = vsel %vm962, %v959, -inf
      %964 = vmax.xlane.f32.xlu0 %v963
      %v965 = vpop.xlane.xlu0 %964
      %v966 = vsel %vm962, %v960, -inf
      %967 = vmax.xlane.f32.xlu0 %v966
      %v968 = vpop.xlane.xlu0 %967
      %vm969 = vcmask 131072
      %v970 = vsel %vm969, %v961, -inf
      %971 = vmax.xlane.f32.xlu0 %v970
      %v972 = vpop.xlane.xlu0 %971
      %v973 = vsub.f32 %v959, %v965
      %v974 = vsub.f32 %v960, %v968
      %v975 = vsub.f32 %v961, %v972
      %v976 = vmul.f32 %v973, 1.442695
      %v977 = vpow.pop %v976
      %v978 = vmul.f32 %v974, 1.442695
      %v979 = vpow.pop %v978
      %v980 = vmul.f32 %v975, 1.442695
      %v981 = vpow.pop %v980
      %v982 = vsel %vm962, %v977, 0.0
      %983 = vadd.xlane.f32.xlu0 %v982
      %v984 = vpop.xlane.xlu0 %983
      %v985 = vsel %vm962, %v979, 0.0
      %986 = vadd.xlane.f32.xlu0 %v985
      %v987 = vpop.xlane.xlu0 %986
      %v988 = vsel %vm969, %v981, 0.0
      %989 = vadd.xlane.f32.xlu0 %v988
      %v990 = vpop.xlane.xlu0 %989
      %v991 = vrcp.pop %v984
      %v992 = vrcp.pop %v987
      %v993 = vrcp.pop %v990
      %v994 = vmul.f32 %v977, %v991
      %v995 = vmul.f32 %v979, %v992
      %v996 = vmul.f32 %v981, %v993
      %v998 = vsel %vm962, %v994, 0
      %v1001 = vsel %vm962, %v995, 0
      %v1004 = vsel %vm962, %v996, 0
      %vm1006 = vcmask 1040384
      %v1008 = vsel %vm1006, %v848, 0
      %1010 = vmatprep.subr.mxu0 0.0
      %1011 = vmatpush1.msra.mxu0 %v838
      %1012 = vmatprep.subr.mxu0 0.0
      %1013 = vmatpush1.msra.mxu0 %v843
      %1014 = vmatprep.subr.mxu0 0.0
      %1015 = vmatpush1.msra.mxu0 %v1008
      %1016 = vmatprep.subr.mxu0 0.0
      %1017 = vmatpush1.msra.mxu0 0.0
      %1018 = vmatprep.subr.mxu0 0.0
      %1019 = vmatpush1.msra.mxu0 0.0
      %1020 = vmatprep.subr.mxu0 0.0
      %1021 = vmatpush1.msra.mxu0 0.0
      %1022 = vmatprep.subr.mxu0 0.0
      %1023 = vmatpush1.msra.mxu0 0.0
      %1024 = vmatprep.subr.mxu0 0.0
      %1025 = vmatpush1.msra.mxu0 0.0
      %1026 = vmatprep.subr.mxu0 0.0
      %1027 = vmatpush1.msra.mxu0 0.0
      %1028 = vmatprep.subr.mxu0 0.0
      %1029 = vmatpush1.msra.mxu0 0.0
      %1030 = vmatprep.subr.mxu0 0.0
      %1031 = vmatpush1.msra.mxu0 0.0
      %1032 = vmatprep.subr.mxu0 0.0
      %1033 = vmatpush1.msra.mxu0 0.0
      %1034 = vmatprep.subr.mxu0 0.0
      %1035 = vmatpush1.msra.mxu0 0.0
      %1036 = vmatprep.subr.mxu0 0.0
      %1037 = vmatpush1.msra.mxu0 0.0
      %1038 = vmatprep.subr.mxu0 0.0
      %1039 = vmatpush1.msra.mxu0 0.0
      %1040 = vmatprep.subr.mxu0 0.0
      %1041 = vmatpush1.msra.mxu0 0.0
      %1042 = vmatprep.subr.mxu0 0.0
      %1043 = vmatpush1.msra.mxu0 0.0
      %1044 = vmatprep.subr.mxu0 0.0
      %1045 = vmatpush1.msra.mxu0 0.0
      %1046 = vmatprep.subr.mxu0 0.0
      %1047 = vmatpush1.msra.mxu0 0.0
      %1048 = vmatprep.subr.mxu0 0.0
      %1049 = vmatpush1.msra.mxu0 0.0
      %1050 = vmatprep.subr.mxu0 0.0
      %1051 = vmatpush1.msra.mxu0 0.0
      %1052 = vmatprep.subr.mxu0 0.0
      %1053 = vmatpush1.msra.mxu0 0.0
      %1054 = vmatprep.subr.mxu0 0.0
      %1055 = vmatpush1.msra.mxu0 0.0
      %1056 = vmatprep.subr.mxu0 0.0
      %1057 = vmatpush1.msra.mxu0 0.0
      %1058 = vmatprep.subr.mxu0 0.0
      %1059 = vmatpush1.msra.mxu0 0.0
      %1060 = vmatprep.subr.mxu0 0.0
      %1061 = vmatpush1.msra.mxu0 0.0
      %1062 = vmatprep.subr.mxu0 0.0
      %1063 = vmatpush1.msra.mxu0 0.0
      %1064 = vmatprep.subr.mxu0 0.0
      %1065 = vmatpush1.msra.mxu0 0.0
      %1066 = vmatprep.subr.mxu0 0.0
      %1067 = vmatpush1.msra.mxu0 0.0
      %1068 = vmatprep.subr.mxu0 0.0
      %1069 = vmatpush1.msra.mxu0 0.0
      %1070 = vmatprep.subr.mxu0 0.0
      %1071 = vmatpush1.msra.mxu0 0.0
      %1072 = vmatprep.subr.mxu0 0.0
      %1073 = vmatpush1.msra.mxu0 0.0
      %1074 = vmatprep.mubr.f32.mxu0 0.0
      %1075 = vmatmul.mubr.f32.gmra.mrb[0].mxu0 %v998
      %v1076 = vpop.f32.mrb[0].mxu0
      %v1077 = vadd.f32 0.0, %v1076
      %v1078 = vpop.f32.mrb[0].mxu0
      %1079 = vmatprep.mubr.f32.mxu0 0.0
      %1080 = vmatmul.mubr.f32.gmra.mrb[0].mxu0 %v1001
      %v1081 = vpop.f32.mrb[0].mxu0
      %v1082 = vadd.f32 0.0, %v1081
      %v1083 = vpop.f32.mrb[0].mxu0
      %1084 = vmatprep.mubr.f32.mxu0 0.0
      %1085 = vmatmul.mubr.f32.gmra.mrb[0].mxu0 %v1004
      %v1086 = vpop.f32.mrb[0].mxu0
      %v1087 = vadd.f32 0.0, %v1086
      %v1088 = vpop.f32.mrb[0].mxu0
      %1089 = vdwg.mxu0
      %v1090 = vld [vmem:[%s6] sm:$0xff]
      %s1091 = scalar_lea.vmem %s4, 32
      %v1092 = vld [vmem:[%s1091] sm:$0xff]
      %v1093 = vld [vmem:[%s1091 + $0x8] sm:$0xff]
      %v1094 = vld [vmem:[%s1091 + $0x10] sm:$0xff]
      %v1095 = vld [vmem:[%s1091 + $0x18] sm:$0xff]
      %s1096 = scalar_lea.vmem %s5, 1
      %v1097 = vld [vmem:[%s1096] sm:$0x1]
      %v1099 = vlaneseq
      %v1100 = vshrl.u32 %v1099, 7
      %v1101 = vsub.s32 0, %v1100
      %v1102 = vrot.slane %v1097, %v1101
      %1104 = vmatprep.subr.mxu0 0.0
      %1105 = vmatpush1.msra.mxu0 %v1092
      %1106 = vmatprep.subr.mxu0 0.0
      %1107 = vmatpush1.msra.mxu0 %v1093
      %1108 = vmatprep.subr.mxu0 0.0
      %1109 = vmatpush1.msra.mxu0 %v1094
      %1110 = vmatprep.subr.mxu0 0.0
      %1111 = vmatpush1.msra.mxu0 %v1095
      %1112 = vmatprep.subr.mxu0 0.0
      %1113 = vmatpush1.msra.mxu0 0.0
      %1114 = vmatprep.subr.mxu0 0.0
      %1115 = vmatpush1.msra.mxu0 0.0
      %1116 = vmatprep.subr.mxu0 0.0
      %1117 = vmatpush1.msra.mxu0 0.0
      %1118 = vmatprep.subr.mxu0 0.0
      %1119 = vmatpush1.msra.mxu0 0.0
      %1120 = vmatprep.subr.mxu0 0.0
      %1121 = vmatpush1.msra.mxu0 0.0
      %1122 = vmatprep.subr.mxu0 0.0
      %1123 = vmatpush1.msra.mxu0 0.0
      %1124 = vmatprep.subr.mxu0 0.0
      %1125 = vmatpush1.msra.mxu0 0.0
      %1126 = vmatprep.subr.mxu0 0.0
      %1127 = vmatpush1.msra.mxu0 0.0
      %1128 = vmatprep.subr.mxu0 0.0
      %1129 = vmatpush1.msra.mxu0 0.0
      %1130 = vmatprep.subr.mxu0 0.0
      %1131 = vmatpush1.msra.mxu0 0.0
      %1132 = vmatprep.subr.mxu0 0.0
      %1133 = vmatpush1.msra.mxu0 0.0
      %1134 = vmatprep.subr.mxu0 0.0
      %1135 = vmatpush1.msra.mxu0 0.0
      %1136 = vmatprep.subr.mxu0 0.0
      %1137 = vmatpush1.msra.mxu0 0.0
      %1138 = vmatprep.subr.mxu0 0.0
      %1139 = vmatpush1.msra.mxu0 0.0
      %1140 = vmatprep.subr.mxu0 0.0
      %1141 = vmatpush1.msra.mxu0 0.0
      %1142 = vmatprep.subr.mxu0 0.0
      %1143 = vmatpush1.msra.mxu0 0.0
      %1144 = vmatprep.subr.mxu0 0.0
      %1145 = vmatpush1.msra.mxu0 0.0
      %1146 = vmatprep.subr.mxu0 0.0
      %1147 = vmatpush1.msra.mxu0 0.0
      %1148 = vmatprep.subr.mxu0 0.0
      %1149 = vmatpush1.msra.mxu0 0.0
      %1150 = vmatprep.subr.mxu0 0.0
      %1151 = vmatpush1.msra.mxu0 0.0
      %1152 = vmatprep.subr.mxu0 0.0
      %1153 = vmatpush1.msra.mxu0 0.0
      %1154 = vmatprep.subr.mxu0 0.0
      %1155 = vmatpush1.msra.mxu0 0.0
      %1156 = vmatprep.subr.mxu0 0.0
      %1157 = vmatpush1.msra.mxu0 0.0
      %1158 = vmatprep.subr.mxu0 0.0
      %1159 = vmatpush1.msra.mxu0 0.0
      %1160 = vmatprep.subr.mxu0 0.0
      %1161 = vmatpush1.msra.mxu0 0.0
      %1162 = vmatprep.subr.mxu0 0.0
      %1163 = vmatpush1.msra.mxu0 0.0
      %1164 = vmatprep.subr.mxu0 0.0
      %1165 = vmatpush1.msra.mxu0 0.0
      %1166 = vmatprep.subr.mxu0 0.0
      %1167 = vmatpush1.msra.mxu0 0.0
      %1168 = vmatprep.mubr.f32.mxu0 0.0
      %1169 = vmatmul.mubr.f32.gmra.mrb[0].mxu0 %v577
      %v1170 = vpop.f32.mrb[0].mxu0
      %v1171 = vadd.f32 %v1102, %v1170
      %v1172 = vpop.f32.mrb[0].mxu0
      %1173 = vmatprep.mubr.f32.mxu0 0.0
      %1174 = vmatmul.mubr.f32.gmra.mrb[0].mxu0 %v580
      %v1175 = vpop.f32.mrb[0].mxu0
      %v1176 = vadd.f32 %v1102, %v1175
      %v1177 = vpop.f32.mrb[0].mxu0
      %1178 = vmatprep.mubr.f32.mxu0 0.0
      %1179 = vmatmul.mubr.f32.gmra.mrb[0].mxu0 %v583
      %v1180 = vpop.f32.mrb[0].mxu0
      %v1181 = vadd.f32 %v1102, %v1180
      %v1182 = vpop.f32.mrb[0].mxu0
      %1183 = vdwg.mxu0
      %s1184 = scalar_lea.vmem %s4, 160
      %v1185 = vld [vmem:[%s1184] sm:$0xff]
      %v1186 = vld [vmem:[%s1184 + $0x8] sm:$0xff]
      %v1187 = vld [vmem:[%s1184 + $0x10] sm:$0xff]
      %v1188 = vld [vmem:[%s1184 + $0x18] sm:$0xff]
      %s1189 = scalar_lea.vmem %s5, 5
      %v1190 = vld [vmem:[%s1189] sm:$0x1]
      %v1192 = vlaneseq
      %v1193 = vshrl.u32 %v1192, 7
      %v1194 = vsub.s32 0, %v1193
      %v1195 = vrot.slane %v1190, %v1194
      %1197 = vmatprep.subr.mxu0 0.0
      %1198 = vmatpush1.msra.mxu0 %v1185
      %1199 = vmatprep.subr.mxu0 0.0
      %1200 = vmatpush1.msra.mxu0 %v1186
      %1201 = vmatprep.subr.mxu0 0.0
      %1202 = vmatpush1.msra.mxu0 %v1187
      %1203 = vmatprep.subr.mxu0 0.0
      %1204 = vmatpush1.msra.mxu0 %v1188
      %1205 = vmatprep.subr.mxu0 0.0
      %1206 = vmatpush1.msra.mxu0 0.0
      %1207 = vmatprep.subr.mxu0 0.0
      %1208 = vmatpush1.msra.mxu0 0.0
      %1209 = vmatprep.subr.mxu0 0.0
      %1210 = vmatpush1.msra.mxu0 0.0
      %1211 = vmatprep.subr.mxu0 0.0
      %1212 = vmatpush1.msra.mxu0 0.0
      %1213 = vmatprep.subr.mxu0 0.0
      %1214 = vmatpush1.msra.mxu0 0.0
      %1215 = vmatprep.subr.mxu0 0.0
      %1216 = vmatpush1.msra.mxu0 0.0
      %1217 = vmatprep.subr.mxu0 0.0
      %1218 = vmatpush1.msra.mxu0 0.0
      %1219 = vmatprep.subr.mxu0 0.0
      %1220 = vmatpush1.msra.mxu0 0.0
      %1221 = vmatprep.subr.mxu0 0.0
      %1222 = vmatpush1.msra.mxu0 0.0
      %1223 = vmatprep.subr.mxu0 0.0
      %1224 = vmatpush1.msra.mxu0 0.0
      %1225 = vmatprep.subr.mxu0 0.0
      %1226 = vmatpush1.msra.mxu0 0.0
      %1227 = vmatprep.subr.mxu0 0.0
      %1228 = vmatpush1.msra.mxu0 0.0
      %1229 = vmatprep.subr.mxu0 0.0
      %1230 = vmatpush1.msra.mxu0 0.0
      %1231 = vmatprep.subr.mxu0 0.0
      %1232 = vmatpush1.msra.mxu0 0.0
      %1233 = vmatprep.subr.mxu0 0.0
      %1234 = vmatpush1.msra.mxu0 0.0
      %1235 = vmatprep.subr.mxu0 0.0
      %1236 = vmatpush1.msra.mxu0 0.0
      %1237 = vmatprep.subr.mxu0 0.0
      %1238 = vmatpush1.msra.mxu0 0.0
      %1239 = vmatprep.subr.mxu0 0.0
      %1240 = vmatpush1.msra.mxu0 0.0
      %1241 = vmatprep.subr.mxu0 0.0
      %1242 = vmatpush1.msra.mxu0 0.0
      %1243 = vmatprep.subr.mxu0 0.0
      %1244 = vmatpush1.msra.mxu0 0.0
      %1245 = vmatprep.subr.mxu0 0.0
      %1246 = vmatpush1.msra.mxu0 0.0
      %1247 = vmatprep.subr.mxu0 0.0
      %1248 = vmatpush1.msra.mxu0 0.0
      %1249 = vmatprep.subr.mxu0 0.0
      %1250 = vmatpush1.msra.mxu0 0.0
      %1251 = vmatprep.subr.mxu0 0.0
      %1252 = vmatpush1.msra.mxu0 0.0
      %1253 = vmatprep.subr.mxu0 0.0
      %1254 = vmatpush1.msra.mxu0 0.0
      %1255 = vmatprep.subr.mxu0 0.0
      %1256 = vmatpush1.msra.mxu0 0.0
      %1257 = vmatprep.subr.mxu0 0.0
      %1258 = vmatpush1.msra.mxu0 0.0
      %1259 = vmatprep.subr.mxu0 0.0
      %1260 = vmatpush1.msra.mxu0 0.0
      %1261 = vmatprep.mubr.f32.mxu0 0.0
      %1262 = vmatmul.mubr.f32.gmra.mrb[0].mxu0 %v577
      %v1263 = vpop.f32.mrb[0].mxu0
      %v1264 = vadd.f32 %v1195, %v1263
      %v1265 = vpop.f32.mrb[0].mxu0
      %1266 = vmatprep.mubr.f32.mxu0 0.0
      %1267 = vmatmul.mubr.f32.gmra.mrb[0].mxu0 %v580
      %v1268 = vpop.f32.mrb[0].mxu0
      %v1269 = vadd.f32 %v1195, %v1268
      %v1270 = vpop.f32.mrb[0].mxu0
      %1271 = vmatprep.mubr.f32.mxu0 0.0
      %1272 = vmatmul.mubr.f32.gmra.mrb[0].mxu0 %v583
      %v1273 = vpop.f32.mrb[0].mxu0
      %v1274 = vadd.f32 %v1195, %v1273
      %v1275 = vpop.f32.mrb[0].mxu0
      %1276 = vdwg.mxu0
      %s1277 = scalar_lea.vmem %s4, 288
      %v1278 = vld [vmem:[%s1277] sm:$0xff]
      %v1279 = vld [vmem:[%s1277 + $0x8] sm:$0xff]
      %v1280 = vld [vmem:[%s1277 + $0x10] sm:$0xff]
      %v1281 = vld [vmem:[%s1277 + $0x18] sm:$0xff]
      %s1282 = scalar_lea.vmem %s5, 9
      %v1283 = vld [vmem:[%s1282] sm:$0x1]
      %v1285 = vlaneseq
      %v1286 = vshrl.u32 %v1285, 7
      %v1287 = vsub.s32 0, %v1286
      %v1288 = vrot.slane %v1283, %v1287
      %1290 = vmatprep.subr.mxu0 0.0
      %1291 = vmatpush1.msra.mxu0 %v1278
      %1292 = vmatprep.subr.mxu0 0.0
      %1293 = vmatpush1.msra.mxu0 %v1279
      %1294 = vmatprep.subr.mxu0 0.0
      %1295 = vmatpush1.msra.mxu0 %v1280
      %1296 = vmatprep.subr.mxu0 0.0
      %1297 = vmatpush1.msra.mxu0 %v1281
      %1298 = vmatprep.subr.mxu0 0.0
      %1299 = vmatpush1.msra.mxu0 0.0
      %1300 = vmatprep.subr.mxu0 0.0
      %1301 = vmatpush1.msra.mxu0 0.0
      %1302 = vmatprep.subr.mxu0 0.0
      %1303 = vmatpush1.msra.mxu0 0.0
      %1304 = vmatprep.subr.mxu0 0.0
      %1305 = vmatpush1.msra.mxu0 0.0
      %1306 = vmatprep.subr.mxu0 0.0
      %1307 = vmatpush1.msra.mxu0 0.0
      %1308 = vmatprep.subr.mxu0 0.0
      %1309 = vmatpush1.msra.mxu0 0.0
      %1310 = vmatprep.subr.mxu0 0.0
      %1311 = vmatpush1.msra.mxu0 0.0
      %1312 = vmatprep.subr.mxu0 0.0
      %1313 = vmatpush1.msra.mxu0 0.0
      %1314 = vmatprep.subr.mxu0 0.0
      %1315 = vmatpush1.msra.mxu0 0.0
      %1316 = vmatprep.subr.mxu0 0.0
      %1317 = vmatpush1.msra.mxu0 0.0
      %1318 = vmatprep.subr.mxu0 0.0
      %1319 = vmatpush1.msra.mxu0 0.0
      %1320 = vmatprep.subr.mxu0 0.0
      %1321 = vmatpush1.msra.mxu0 0.0
      %1322 = vmatprep.subr.mxu0 0.0
      %1323 = vmatpush1.msra.mxu0 0.0
      %1324 = vmatprep.subr.mxu0 0.0
      %1325 = vmatpush1.msra.mxu0 0.0
      %1326 = vmatprep.subr.mxu0 0.0
      %1327 = vmatpush1.msra.mxu0 0.0
      %1328 = vmatprep.subr.mxu0 0.0
      %1329 = vmatpush1.msra.mxu0 0.0
      %1330 = vmatprep.subr.mxu0 0.0
      %1331 = vmatpush1.msra.mxu0 0.0
      %1332 = vmatprep.subr.mxu0 0.0
      %1333 = vmatpush1.msra.mxu0 0.0
      %1334 = vmatprep.subr.mxu0 0.0
      %1335 = vmatpush1.msra.mxu0 0.0
      %1336 = vmatprep.subr.mxu0 0.0
      %1337 = vmatpush1.msra.mxu0 0.0
      %1338 = vmatprep.subr.mxu0 0.0
      %1339 = vmatpush1.msra.mxu0 0.0
      %1340 = vmatprep.subr.mxu0 0.0
      %1341 = vmatpush1.msra.mxu0 0.0
      %1342 = vmatprep.subr.mxu0 0.0
      %1343 = vmatpush1.msra.mxu0 0.0
      %1344 = vmatprep.subr.mxu0 0.0
      %1345 = vmatpush1.msra.mxu0 0.0
      %1346 = vmatprep.subr.mxu0 0.0
      %1347 = vmatpush1.msra.mxu0 0.0
      %1348 = vmatprep.subr.mxu0 0.0
      %1349 = vmatpush1.msra.mxu0 0.0
      %1350 = vmatprep.subr.mxu0 0.0
      %1351 = vmatpush1.msra.mxu0 0.0
      %1352 = vmatprep.subr.mxu0 0.0
      %1353 = vmatpush1.msra.mxu0 0.0
      %1354 = vmatprep.mubr.f32.mxu0 0.0
      %1355 = vmatmul.mubr.f32.gmra.mrb[0].mxu0 %v577
      %v1356 = vpop.f32.mrb[0].mxu0
      %v1357 = vadd.f32 %v1288, %v1356
      %v1358 = vpop.f32.mrb[0].mxu0
      %1359 = vmatprep.mubr.f32.mxu0 0.0
      %1360 = vmatmul.mubr.f32.gmra.mrb[0].mxu0 %v580
      %v1361 = vpop.f32.mrb[0].mxu0
      %v1362 = vadd.f32 %v1288, %v1361
      %v1363 = vpop.f32.mrb[0].mxu0
      %1364 = vmatprep.mubr.f32.mxu0 0.0
      %1365 = vmatmul.mubr.f32.gmra.mrb[0].mxu0 %v583
      %v1366 = vpop.f32.mrb[0].mxu0
      %v1367 = vadd.f32 %v1288, %v1366
      %v1368 = vpop.f32.mrb[0].mxu0
      %1369 = vdwg.mxu0
      %v1371 = vsel %vm851, %v1171, 0
      %v1374 = vsel %vm851, %v1176, 0
      %v1377 = vsel %vm851, %v1181, 0
      %v1380 = vsel %vm851, %v1264, 0
      %v1383 = vsel %vm851, %v1269, 0
      %v1386 = vsel %vm851, %v1274, 0
      %1388 = vmatprep.subr.mxu0 0.0
      %1389 = vmatpush1.xpose.msra.mxu0 %v1380
      %1390 = vmatprep.subr.mxu0 0.0
      %1391 = vmatpush1.xpose.msra.mxu0 %v1383
      %1392 = vmatprep.subr.mxu0 0.0
      %1393 = vmatpush1.xpose.msra.mxu0 %v1386
      %1394 = vmatprep.subr.mxu0 0.0
      %1395 = vmatpush1.xpose.msra.mxu0 0.0
      %1396 = vmatprep.subr.mxu0 0.0
      %1397 = vmatpush1.xpose.msra.mxu0 0.0
      %1398 = vmatprep.subr.mxu0 0.0
      %1399 = vmatpush1.xpose.msra.mxu0 0.0
      %1400 = vmatprep.subr.mxu0 0.0
      %1401 = vmatpush1.xpose.msra.mxu0 0.0
      %1402 = vmatprep.subr.mxu0 0.0
      %1403 = vmatpush1.xpose.msra.mxu0 0.0
      %1404 = vmatprep.subr.mxu0 0.0
      %1405 = vmatpush1.xpose.msra.mxu0 0.0
      %1406 = vmatprep.subr.mxu0 0.0
      %1407 = vmatpush1.xpose.msra.mxu0 0.0
      %1408 = vmatprep.subr.mxu0 0.0
      %1409 = vmatpush1.xpose.msra.mxu0 0.0
      %1410 = vmatprep.subr.mxu0 0.0
      %1411 = vmatpush1.xpose.msra.mxu0 0.0
      %1412 = vmatprep.subr.mxu0 0.0
      %1413 = vmatpush1.xpose.msra.mxu0 0.0
      %1414 = vmatprep.subr.mxu0 0.0
      %1415 = vmatpush1.xpose.msra.mxu0 0.0
      %1416 = vmatprep.subr.mxu0 0.0
      %1417 = vmatpush1.xpose.msra.mxu0 0.0
      %1418 = vmatprep.subr.mxu0 0.0
      %1419 = vmatpush1.xpose.msra.mxu0 0.0
      %1420 = vmatprep.subr.mxu0 0.0
      %1421 = vmatpush1.xpose.msra.mxu0 0.0
      %1422 = vmatprep.subr.mxu0 0.0
      %1423 = vmatpush1.xpose.msra.mxu0 0.0
      %1424 = vmatprep.subr.mxu0 0.0
      %1425 = vmatpush1.xpose.msra.mxu0 0.0
      %1426 = vmatprep.subr.mxu0 0.0
      %1427 = vmatpush1.xpose.msra.mxu0 0.0
      %1428 = vmatprep.subr.mxu0 0.0
      %1429 = vmatpush1.xpose.msra.mxu0 0.0
      %1430 = vmatprep.subr.mxu0 0.0
      %1431 = vmatpush1.xpose.msra.mxu0 0.0
      %1432 = vmatprep.subr.mxu0 0.0
      %1433 = vmatpush1.xpose.msra.mxu0 0.0
      %1434 = vmatprep.subr.mxu0 0.0
      %1435 = vmatpush1.xpose.msra.mxu0 0.0
      %1436 = vmatprep.subr.mxu0 0.0
      %1437 = vmatpush1.xpose.msra.mxu0 0.0
      %1438 = vmatprep.subr.mxu0 0.0
      %1439 = vmatpush1.xpose.msra.mxu0 0.0
      %1440 = vmatprep.subr.mxu0 0.0
      %1441 = vmatpush1.xpose.msra.mxu0 0.0
      %1442 = vmatprep.subr.mxu0 0.0
      %1443 = vmatpush1.xpose.msra.mxu0 0.0
      %1444 = vmatprep.subr.mxu0 0.0
      %1445 = vmatpush1.xpose.msra.mxu0 0.0
      %1446 = vmatprep.subr.mxu0 0.0
      %1447 = vmatpush1.xpose.msra.mxu0 0.0
      %1448 = vmatprep.subr.mxu0 0.0
      %1449 = vmatpush1.xpose.msra.mxu0 0.0
      %1450 = vmatprep.subr.mxu0 0.0
      %1451 = vmatpush1.xpose.msra.mxu0 0.0
      %1452 = vmatprep.mubr.f32.mxu0 0.0
      %1453 = vmatmul.mubr.f32.gmra.mrb[0].mxu0 %v1371
      %v1454 = vpop.f32.mrb[0].mxu0
      %v1455 = vadd.f32 0.0, %v1454
      %v1456 = vpop.f32.mrb[0].mxu0
      %1457 = vmatprep.mubr.f32.mxu0 0.0
      %1458 = vmatmul.mubr.f32.gmra.mrb[0].mxu0 %v1374
      %v1459 = vpop.f32.mrb[0].mxu0
      %v1460 = vadd.f32 0.0, %v1459
      %v1461 = vpop.f32.mrb[0].mxu0
      %1462 = vmatprep.mubr.f32.mxu0 0.0
      %1463 = vmatmul.mubr.f32.gmra.mrb[0].mxu0 %v1377
      %v1464 = vpop.f32.mrb[0].mxu0
      %v1465 = vadd.f32 0.0, %v1464
      %v1466 = vpop.f32.mrb[0].mxu0
      %1467 = vdwg.mxu0
      %v1468 = vmul.f32 %v1455, 0.35355338
      %v1469 = vmul.f32 %v1460, 0.35355338
      %v1470 = vmul.f32 %v1465, 0.35355338
      %v1471 = vadd.f32 %v1468, %v957
      %v1472 = vadd.f32 %v1469, %v957
      %v1473 = vadd.f32 %v1470, %v957
      %v1474 = vsel %vm962, %v1471, -inf
      %1475 = vmax.xlane.f32.xlu0 %v1474
      %v1476 = vpop.xlane.xlu0 %1475
      %v1477 = vsel %vm962, %v1472, -inf
      %1478 = vmax.xlane.f32.xlu0 %v1477
      %v1479 = vpop.xlane.xlu0 %1478
      %v1480 = vsel %vm969, %v1473, -inf
      %1481 = vmax.xlane.f32.xlu0 %v1480
      %v1482 = vpop.xlane.xlu0 %1481
      %v1483 = vsub.f32 %v1471, %v1476
      %v1484 = vsub.f32 %v1472, %v1479
      %v1485 = vsub.f32 %v1473, %v1482
      %v1486 = vmul.f32 %v1483, 1.442695
      %v1487 = vpow.pop %v1486
      %v1488 = vmul.f32 %v1484, 1.442695
      %v1489 = vpow.pop %v1488
      %v1490 = vmul.f32 %v1485, 1.442695
      %v1491 = vpow.pop %v1490
      %v1492 = vsel %vm962, %v1487, 0.0
      %1493 = vadd.xlane.f32.xlu0 %v1492
      %v1494 = vpop.xlane.xlu0 %1493
      %v1495 = vsel %vm962, %v1489, 0.0
      %1496 = vadd.xlane.f32.xlu0 %v1495
      %v1497 = vpop.xlane.xlu0 %1496
      %v1498 = vsel %vm969, %v1491, 0.0
      %1499 = vadd.xlane.f32.xlu0 %v1498
      %v1500 = vpop.xlane.xlu0 %1499
      %v1501 = vrcp.pop %v1494
      %v1502 = vrcp.pop %v1497
      %v1503 = vrcp.pop %v1500
      %v1504 = vmul.f32 %v1487, %v1501
      %v1505 = vmul.f32 %v1489, %v1502
      %v1506 = vmul.f32 %v1491, %v1503
      %v1508 = vsel %vm962, %v1504, 0
      %v1511 = vsel %vm962, %v1505, 0
      %v1514 = vsel %vm962, %v1506, 0
      %v1517 = vsel %vm1006, %v1367, 0
      %1519 = vmatprep.subr.mxu0 0.0
      %1520 = vmatpush1.msra.mxu0 %v1357
      %1521 = vmatprep.subr.mxu0 0.0
      %1522 = vmatpush1.msra.mxu0 %v1362
      %1523 = vmatprep.subr.mxu0 0.0
      %1524 = vmatpush1.msra.mxu0 %v1517
      %1525 = vmatprep.subr.mxu0 0.0
      %1526 = vmatpush1.msra.mxu0 0.0
      %1527 = vmatprep.subr.mxu0 0.0
      %1528 = vmatpush1.msra.mxu0 0.0
      %1529 = vmatprep.subr.mxu0 0.0
      %1530 = vmatpush1.msra.mxu0 0.0
      %1531 = vmatprep.subr.mxu0 0.0
      %1532 = vmatpush1.msra.mxu0 0.0
      %1533 = vmatprep.subr.mxu0 0.0
      %1534 = vmatpush1.msra.mxu0 0.0
      %1535 = vmatprep.subr.mxu0 0.0
      %1536 = vmatpush1.msra.mxu0 0.0
      %1537 = vmatprep.subr.mxu0 0.0
      %1538 = vmatpush1.msra.mxu0 0.0
      %1539 = vmatprep.subr.mxu0 0.0
      %1540 = vmatpush1.msra.mxu0 0.0
      %1541 = vmatprep.subr.mxu0 0.0
      %1542 = vmatpush1.msra.mxu0 0.0
      %1543 = vmatprep.subr.mxu0 0.0
      %1544 = vmatpush1.msra.mxu0 0.0
      %1545 = vmatprep.subr.mxu0 0.0
      %1546 = vmatpush1.msra.mxu0 0.0
      %1547 = vmatprep.subr.mxu0 0.0
      %1548 = vmatpush1.msra.mxu0 0.0
      %1549 = vmatprep.subr.mxu0 0.0
      %1550 = vmatpush1.msra.mxu0 0.0
      %1551 = vmatprep.subr.mxu0 0.0
      %1552 = vmatpush1.msra.mxu0 0.0
      %1553 = vmatprep.subr.mxu0 0.0
      %1554 = vmatpush1.msra.mxu0 0.0
      %1555 = vmatprep.subr.mxu0 0.0
      %1556 = vmatpush1.msra.mxu0 0.0
      %1557 = vmatprep.subr.mxu0 0.0
      %1558 = vmatpush1.msra.mxu0 0.0
      %1559 = vmatprep.subr.mxu0 0.0
      %1560 = vmatpush1.msra.mxu0 0.0
      %1561 = vmatprep.subr.mxu0 0.0
      %1562 = vmatpush1.msra.mxu0 0.0
      %1563 = vmatprep.subr.mxu0 0.0
      %1564 = vmatpush1.msra.mxu0 0.0
      %1565 = vmatprep.subr.mxu0 0.0
      %1566 = vmatpush1.msra.mxu0 0.0
      %1567 = vmatprep.subr.mxu0 0.0
      %1568 = vmatpush1.msra.mxu0 0.0
      %1569 = vmatprep.subr.mxu0 0.0
      %1570 = vmatpush1.msra.mxu0 0.0
      %1571 = vmatprep.subr.mxu0 0.0
      %1572 = vmatpush1.msra.mxu0 0.0
      %1573 = vmatprep.subr.mxu0 0.0
      %1574 = vmatpush1.msra.mxu0 0.0
      %1575 = vmatprep.subr.mxu0 0.0
      %1576 = vmatpush1.msra.mxu0 0.0
      %1577 = vmatprep.subr.mxu0 0.0
      %1578 = vmatpush1.msra.mxu0 0.0
      %1579 = vmatprep.subr.mxu0 0.0
      %1580 = vmatpush1.msra.mxu0 0.0
      %1581 = vmatprep.subr.mxu0 0.0
      %1582 = vmatpush1.msra.mxu0 0.0
      %1583 = vmatprep.mubr.f32.mxu0 0.0
      %1584 = vmatmul.mubr.f32.gmra.mrb[0].mxu0 %v1508
      %v1585 = vpop.f32.mrb[0].mxu0
      %v1586 = vadd.f32 0.0, %v1585
      %v1587 = vpop.f32.mrb[0].mxu0
      %1588 = vmatprep.mubr.f32.mxu0 0.0
      %1589 = vmatmul.mubr.f32.gmra.mrb[0].mxu0 %v1511
      %v1590 = vpop.f32.mrb[0].mxu0
      %v1591 = vadd.f32 0.0, %v1590
      %v1592 = vpop.f32.mrb[0].mxu0
      %1593 = vmatprep.mubr.f32.mxu0 0.0
      %1594 = vmatmul.mubr.f32.gmra.mrb[0].mxu0 %v1514
      %v1595 = vpop.f32.mrb[0].mxu0
      %v1596 = vadd.f32 0.0, %v1595
      %v1597 = vpop.f32.mrb[0].mxu0
      %1598 = vdwg.mxu0
      %s1599 = scalar_lea.vmem %s6, 8
      %v1600 = vld [vmem:[%s1599] sm:$0xff]
      %v1602 = vsel %vm851, %v1586, 0
      %v1605 = vsel %vm851, %v1591, 0
      %v1608 = vsel %vm851, %v1596, 0
      %1610 = vmatprep.subr.mxu0 0.0
      %1611 = vmatpush1.msra.mxu0 %v1600
      %1612 = vmatprep.subr.mxu0 0.0
      %1613 = vmatpush1.msra.mxu0 0.0
      %1614 = vmatprep.subr.mxu0 0.0
      %1615 = vmatpush1.msra.mxu0 0.0
      %1616 = vmatprep.subr.mxu0 0.0
      %1617 = vmatpush1.msra.mxu0 0.0
      %1618 = vmatprep.subr.mxu0 0.0
      %1619 = vmatpush1.msra.mxu0 0.0
      %1620 = vmatprep.subr.mxu0 0.0
      %1621 = vmatpush1.msra.mxu0 0.0
      %1622 = vmatprep.subr.mxu0 0.0
      %1623 = vmatpush1.msra.mxu0 0.0
      %1624 = vmatprep.subr.mxu0 0.0
      %1625 = vmatpush1.msra.mxu0 0.0
      %1626 = vmatprep.subr.mxu0 0.0
      %1627 = vmatpush1.msra.mxu0 0.0
      %1628 = vmatprep.subr.mxu0 0.0
      %1629 = vmatpush1.msra.mxu0 0.0
      %1630 = vmatprep.subr.mxu0 0.0
      %1631 = vmatpush1.msra.mxu0 0.0
      %1632 = vmatprep.subr.mxu0 0.0
      %1633 = vmatpush1.msra.mxu0 0.0
      %1634 = vmatprep.subr.mxu0 0.0
      %1635 = vmatpush1.msra.mxu0 0.0
      %1636 = vmatprep.subr.mxu0 0.0
      %1637 = vmatpush1.msra.mxu0 0.0
      %1638 = vmatprep.subr.mxu0 0.0
      %1639 = vmatpush1.msra.mxu0 0.0
      %1640 = vmatprep.subr.mxu0 0.0
      %1641 = vmatpush1.msra.mxu0 0.0
      %1642 = vmatprep.subr.mxu0 0.0
      %1643 = vmatpush1.msra.mxu0 0.0
      %1644 = vmatprep.subr.mxu0 0.0
      %1645 = vmatpush1.msra.mxu0 0.0
      %1646 = vmatprep.subr.mxu0 0.0
      %1647 = vmatpush1.msra.mxu0 0.0
      %1648 = vmatprep.subr.mxu0 0.0
      %1649 = vmatpush1.msra.mxu0 0.0
      %1650 = vmatprep.subr.mxu0 0.0
      %1651 = vmatpush1.msra.mxu0 0.0
      %1652 = vmatprep.subr.mxu0 0.0
      %1653 = vmatpush1.msra.mxu0 0.0
      %1654 = vmatprep.subr.mxu0 0.0
      %1655 = vmatpush1.msra.mxu0 0.0
      %1656 = vmatprep.subr.mxu0 0.0
      %1657 = vmatpush1.msra.mxu0 0.0
      %1658 = vmatprep.subr.mxu0 0.0
      %1659 = vmatpush1.msra.mxu0 0.0
      %1660 = vmatprep.subr.mxu0 0.0
      %1661 = vmatpush1.msra.mxu0 0.0
      %1662 = vmatprep.subr.mxu0 0.0
      %1663 = vmatpush1.msra.mxu0 0.0
      %1664 = vmatprep.subr.mxu0 0.0
      %1665 = vmatpush1.msra.mxu0 0.0
      %1666 = vmatprep.subr.mxu0 0.0
      %1667 = vmatpush1.msra.mxu0 0.0
      %1668 = vmatprep.subr.mxu0 0.0
      %1669 = vmatpush1.msra.mxu0 0.0
      %1670 = vmatprep.subr.mxu0 0.0
      %1671 = vmatpush1.msra.mxu0 0.0
      %1672 = vmatprep.subr.mxu0 0.0
      %1673 = vmatpush1.msra.mxu0 0.0
      %1674 = vmatprep.mubr.f32.mxu0 0.0
      %1675 = vmatmul.mubr.f32.gmra.mrb[0].mxu0 %v1602
      %v1676 = vpop.f32.mrb[0].mxu0
      %v1677 = vadd.f32 0.0, %v1676
      %v1678 = vpop.f32.mrb[0].mxu0
      %1679 = vmatprep.mubr.f32.mxu0 0.0
      %1680 = vmatmul.mubr.f32.gmra.mrb[0].mxu0 %v1605
      %v1681 = vpop.f32.mrb[0].mxu0
      %v1682 = vadd.f32 0.0, %v1681
      %v1683 = vpop.f32.mrb[0].mxu0
      %1684 = vmatprep.mubr.f32.mxu0 0.0
      %1685 = vmatmul.mubr.f32.gmra.mrb[0].mxu0 %v1608
      %v1686 = vpop.f32.mrb[0].mxu0
      %v1687 = vadd.f32 0.0, %v1686
      %v1688 = vpop.f32.mrb[0].mxu0
      %1689 = vdwg.mxu0
      %v1691 = vsel %vm851, %v1077, 0
      %v1694 = vsel %vm851, %v1082, 0
      %v1697 = vsel %vm851, %v1087, 0
      %1699 = vmatprep.subr.mxu0 0.0
      %1700 = vmatpush1.msra.mxu0 %v1090
      %1701 = vmatprep.subr.mxu0 0.0
      %1702 = vmatpush1.msra.mxu0 0.0
      %1703 = vmatprep.subr.mxu0 0.0
      %1704 = vmatpush1.msra.mxu0 0.0
      %1705 = vmatprep.subr.mxu0 0.0
      %1706 = vmatpush1.msra.mxu0 0.0
      %1707 = vmatprep.subr.mxu0 0.0
      %1708 = vmatpush1.msra.mxu0 0.0
      %1709 = vmatprep.subr.mxu0 0.0
      %1710 = vmatpush1.msra.mxu0 0.0
      %1711 = vmatprep.subr.mxu0 0.0
      %1712 = vmatpush1.msra.mxu0 0.0
      %1713 = vmatprep.subr.mxu0 0.0
      %1714 = vmatpush1.msra.mxu0 0.0
      %1715 = vmatprep.subr.mxu0 0.0
      %1716 = vmatpush1.msra.mxu0 0.0
      %1717 = vmatprep.subr.mxu0 0.0
      %1718 = vmatpush1.msra.mxu0 0.0
      %1719 = vmatprep.subr.mxu0 0.0
      %1720 = vmatpush1.msra.mxu0 0.0
      %1721 = vmatprep.subr.mxu0 0.0
      %1722 = vmatpush1.msra.mxu0 0.0
      %1723 = vmatprep.subr.mxu0 0.0
      %1724 = vmatpush1.msra.mxu0 0.0
      %1725 = vmatprep.subr.mxu0 0.0
      %1726 = vmatpush1.msra.mxu0 0.0
      %1727 = vmatprep.subr.mxu0 0.0
      %1728 = vmatpush1.msra.mxu0 0.0
      %1729 = vmatprep.subr.mxu0 0.0
      %1730 = vmatpush1.msra.mxu0 0.0
      %1731 = vmatprep.subr.mxu0 0.0
      %1732 = vmatpush1.msra.mxu0 0.0
      %1733 = vmatprep.subr.mxu0 0.0
      %1734 = vmatpush1.msra.mxu0 0.0
      %1735 = vmatprep.subr.mxu0 0.0
      %1736 = vmatpush1.msra.mxu0 0.0
      %1737 = vmatprep.subr.mxu0 0.0
      %1738 = vmatpush1.msra.mxu0 0.0
      %1739 = vmatprep.subr.mxu0 0.0
      %1740 = vmatpush1.msra.mxu0 0.0
      %1741 = vmatprep.subr.mxu0 0.0
      %1742 = vmatpush1.msra.mxu0 0.0
      %1743 = vmatprep.subr.mxu0 0.0
      %1744 = vmatpush1.msra.mxu0 0.0
      %1745 = vmatprep.subr.mxu0 0.0
      %1746 = vmatpush1.msra.mxu0 0.0
      %1747 = vmatprep.subr.mxu0 0.0
      %1748 = vmatpush1.msra.mxu0 0.0
      %1749 = vmatprep.subr.mxu0 0.0
      %1750 = vmatpush1.msra.mxu0 0.0
      %1751 = vmatprep.subr.mxu0 0.0
      %1752 = vmatpush1.msra.mxu0 0.0
      %1753 = vmatprep.subr.mxu0 0.0
      %1754 = vmatpush1.msra.mxu0 0.0
      %1755 = vmatprep.subr.mxu0 0.0
      %1756 = vmatpush1.msra.mxu0 0.0
      %1757 = vmatprep.subr.mxu0 0.0
      %1758 = vmatpush1.msra.mxu0 0.0
      %1759 = vmatprep.subr.mxu0 0.0
      %1760 = vmatpush1.msra.mxu0 0.0
      %1761 = vmatprep.subr.mxu0 0.0
      %1762 = vmatpush1.msra.mxu0 0.0
      %1763 = vmatprep.mubr.f32.mxu0 0.0
      %1764 = vmatmul.mubr.f32.gmra.mrb[0].mxu0 %v1691
      %v1765 = vpop.f32.mrb[0].mxu0
      %v1766 = vadd.f32 %v1677, %v1765
      %v1767 = vpop.f32.mrb[0].mxu0
      %1768 = vmatprep.mubr.f32.mxu0 0.0
      %1769 = vmatmul.mubr.f32.gmra.mrb[0].mxu0 %v1694
      %v1770 = vpop.f32.mrb[0].mxu0
      %v1771 = vadd.f32 %v1682, %v1770
      %v1772 = vpop.f32.mrb[0].mxu0
      %1773 = vmatprep.mubr.f32.mxu0 0.0
      %1774 = vmatmul.mubr.f32.gmra.mrb[0].mxu0 %v1697
      %v1775 = vpop.f32.mrb[0].mxu0
      %v1776 = vadd.f32 %v1687, %v1775
      %v1777 = vpop.f32.mrb[0].mxu0
      %1778 = vdwg.mxu0
      %s1779 = scalar_lea.vmem %s4, 64
      %v1780 = vld [vmem:[%s1779] sm:$0xff]
      %v1781 = vld [vmem:[%s1779 + $0x8] sm:$0xff]
      %v1782 = vld [vmem:[%s1779 + $0x10] sm:$0xff]
      %v1783 = vld [vmem:[%s1779 + $0x18] sm:$0xff]
      %s1784 = scalar_lea.vmem %s5, 2
      %v1785 = vld [vmem:[%s1784] sm:$0x1]
      %v1787 = vlaneseq
      %v1788 = vshrl.u32 %v1787, 7
      %v1789 = vsub.s32 0, %v1788
      %v1790 = vrot.slane %v1785, %v1789
      %1792 = vmatprep.subr.mxu0 0.0
      %1793 = vmatpush1.msra.mxu0 %v1780
      %1794 = vmatprep.subr.mxu0 0.0
      %1795 = vmatpush1.msra.mxu0 %v1781
      %1796 = vmatprep.subr.mxu0 0.0
      %1797 = vmatpush1.msra.mxu0 %v1782
      %1798 = vmatprep.subr.mxu0 0.0
      %1799 = vmatpush1.msra.mxu0 %v1783
      %1800 = vmatprep.subr.mxu0 0.0
      %1801 = vmatpush1.msra.mxu0 0.0
      %1802 = vmatprep.subr.mxu0 0.0
      %1803 = vmatpush1.msra.mxu0 0.0
      %1804 = vmatprep.subr.mxu0 0.0
      %1805 = vmatpush1.msra.mxu0 0.0
      %1806 = vmatprep.subr.mxu0 0.0
      %1807 = vmatpush1.msra.mxu0 0.0
      %1808 = vmatprep.subr.mxu0 0.0
      %1809 = vmatpush1.msra.mxu0 0.0
      %1810 = vmatprep.subr.mxu0 0.0
      %1811 = vmatpush1.msra.mxu0 0.0
      %1812 = vmatprep.subr.mxu0 0.0
      %1813 = vmatpush1.msra.mxu0 0.0
      %1814 = vmatprep.subr.mxu0 0.0
      %1815 = vmatpush1.msra.mxu0 0.0
      %1816 = vmatprep.subr.mxu0 0.0
      %1817 = vmatpush1.msra.mxu0 0.0
      %1818 = vmatprep.subr.mxu0 0.0
      %1819 = vmatpush1.msra.mxu0 0.0
      %1820 = vmatprep.subr.mxu0 0.0
      %1821 = vmatpush1.msra.mxu0 0.0
      %1822 = vmatprep.subr.mxu0 0.0
      %1823 = vmatpush1.msra.mxu0 0.0
      %1824 = vmatprep.subr.mxu0 0.0
      %1825 = vmatpush1.msra.mxu0 0.0
      %1826 = vmatprep.subr.mxu0 0.0
      %1827 = vmatpush1.msra.mxu0 0.0
      %1828 = vmatprep.subr.mxu0 0.0
      %1829 = vmatpush1.msra.mxu0 0.0
      %1830 = vmatprep.subr.mxu0 0.0
      %1831 = vmatpush1.msra.mxu0 0.0
      %1832 = vmatprep.subr.mxu0 0.0
      %1833 = vmatpush1.msra.mxu0 0.0
      %1834 = vmatprep.subr.mxu0 0.0
      %1835 = vmatpush1.msra.mxu0 0.0
      %1836 = vmatprep.subr.mxu0 0.0
      %1837 = vmatpush1.msra.mxu0 0.0
      %1838 = vmatprep.subr.mxu0 0.0
      %1839 = vmatpush1.msra.mxu0 0.0
      %1840 = vmatprep.subr.mxu0 0.0
      %1841 = vmatpush1.msra.mxu0 0.0
      %1842 = vmatprep.subr.mxu0 0.0
      %1843 = vmatpush1.msra.mxu0 0.0
      %1844 = vmatprep.subr.mxu0 0.0
      %1845 = vmatpush1.msra.mxu0 0.0
      %1846 = vmatprep.subr.mxu0 0.0
      %1847 = vmatpush1.msra.mxu0 0.0
      %1848 = vmatprep.subr.mxu0 0.0
      %1849 = vmatpush1.msra.mxu0 0.0
      %1850 = vmatprep.subr.mxu0 0.0
      %1851 = vmatpush1.msra.mxu0 0.0
      %1852 = vmatprep.subr.mxu0 0.0
      %1853 = vmatpush1.msra.mxu0 0.0
      %1854 = vmatprep.subr.mxu0 0.0
      %1855 = vmatpush1.msra.mxu0 0.0
      %1856 = vmatprep.mubr.f32.mxu0 0.0
      %1857 = vmatmul.mubr.f32.gmra.mrb[0].mxu0 %v577
      %v1858 = vpop.f32.mrb[0].mxu0
      %v1859 = vadd.f32 %v1790, %v1858
      %v1860 = vpop.f32.mrb[0].mxu0
      %1861 = vmatprep.mubr.f32.mxu0 0.0
      %1862 = vmatmul.mubr.f32.gmra.mrb[0].mxu0 %v580
      %v1863 = vpop.f32.mrb[0].mxu0
      %v1864 = vadd.f32 %v1790, %v1863
      %v1865 = vpop.f32.mrb[0].mxu0
      %1866 = vmatprep.mubr.f32.mxu0 0.0
      %1867 = vmatmul.mubr.f32.gmra.mrb[0].mxu0 %v583
      %v1868 = vpop.f32.mrb[0].mxu0
      %v1869 = vadd.f32 %v1790, %v1868
      %v1870 = vpop.f32.mrb[0].mxu0
      %1871 = vdwg.mxu0
      %s1872 = scalar_lea.vmem %s4, 192
      %v1873 = vld [vmem:[%s1872] sm:$0xff]
      %v1874 = vld [vmem:[%s1872 + $0x8] sm:$0xff]
      %v1875 = vld [vmem:[%s1872 + $0x10] sm:$0xff]
      %v1876 = vld [vmem:[%s1872 + $0x18] sm:$0xff]
      %s1877 = scalar_lea.vmem %s5, 6
      %v1878 = vld [vmem:[%s1877] sm:$0x1]
      %v1880 = vlaneseq
      %v1881 = vshrl.u32 %v1880, 7
      %v1882 = vsub.s32 0, %v1881
      %v1883 = vrot.slane %v1878, %v1882
      %1885 = vmatprep.subr.mxu0 0.0
      %1886 = vmatpush1.msra.mxu0 %v1873
      %1887 = vmatprep.subr.mxu0 0.0
      %1888 = vmatpush1.msra.mxu0 %v1874
      %1889 = vmatprep.subr.mxu0 0.0
      %1890 = vmatpush1.msra.mxu0 %v1875
      %1891 = vmatprep.subr.mxu0 0.0
      %1892 = vmatpush1.msra.mxu0 %v1876
      %1893 = vmatprep.subr.mxu0 0.0
      %1894 = vmatpush1.msra.mxu0 0.0
      %1895 = vmatprep.subr.mxu0 0.0
      %1896 = vmatpush1.msra.mxu0 0.0
      %1897 = vmatprep.subr.mxu0 0.0
      %1898 = vmatpush1.msra.mxu0 0.0
      %1899 = vmatprep.subr.mxu0 0.0
      %1900 = vmatpush1.msra.mxu0 0.0
      %1901 = vmatprep.subr.mxu0 0.0
      %1902 = vmatpush1.msra.mxu0 0.0
      %1903 = vmatprep.subr.mxu0 0.0
      %1904 = vmatpush1.msra.mxu0 0.0
      %1905 = vmatprep.subr.mxu0 0.0
      %1906 = vmatpush1.msra.mxu0 0.0
      %1907 = vmatprep.subr.mxu0 0.0
      %1908 = vmatpush1.msra.mxu0 0.0
      %1909 = vmatprep.subr.mxu0 0.0
      %1910 = vmatpush1.msra.mxu0 0.0
      %1911 = vmatprep.subr.mxu0 0.0
      %1912 = vmatpush1.msra.mxu0 0.0
      %1913 = vmatprep.subr.mxu0 0.0
      %1914 = vmatpush1.msra.mxu0 0.0
      %1915 = vmatprep.subr.mxu0 0.0
      %1916 = vmatpush1.msra.mxu0 0.0
      %1917 = vmatprep.subr.mxu0 0.0
      %1918 = vmatpush1.msra.mxu0 0.0
      %1919 = vmatprep.subr.mxu0 0.0
      %1920 = vmatpush1.msra.mxu0 0.0
      %1921 = vmatprep.subr.mxu0 0.0
      %1922 = vmatpush1.msra.mxu0 0.0
      %1923 = vmatprep.subr.mxu0 0.0
      %1924 = vmatpush1.msra.mxu0 0.0
      %1925 = vmatprep.subr.mxu0 0.0
      %1926 = vmatpush1.msra.mxu0 0.0
      %1927 = vmatprep.subr.mxu0 0.0
      %1928 = vmatpush1.msra.mxu0 0.0
      %1929 = vmatprep.subr.mxu0 0.0
      %1930 = vmatpush1.msra.mxu0 0.0
      %1931 = vmatprep.subr.mxu0 0.0
      %1932 = vmatpush1.msra.mxu0 0.0
      %1933 = vmatprep.subr.mxu0 0.0
      %1934 = vmatpush1.msra.mxu0 0.0
      %1935 = vmatprep.subr.mxu0 0.0
      %1936 = vmatpush1.msra.mxu0 0.0
      %1937 = vmatprep.subr.mxu0 0.0
      %1938 = vmatpush1.msra.mxu0 0.0
      %1939 = vmatprep.subr.mxu0 0.0
      %1940 = vmatpush1.msra.mxu0 0.0
      %1941 = vmatprep.subr.mxu0 0.0
      %1942 = vmatpush1.msra.mxu0 0.0
      %1943 = vmatprep.subr.mxu0 0.0
      %1944 = vmatpush1.msra.mxu0 0.0
      %1945 = vmatprep.subr.mxu0 0.0
      %1946 = vmatpush1.msra.mxu0 0.0
      %1947 = vmatprep.subr.mxu0 0.0
      %1948 = vmatpush1.msra.mxu0 0.0
      %1949 = vmatprep.mubr.f32.mxu0 0.0
      %1950 = vmatmul.mubr.f32.gmra.mrb[0].mxu0 %v577
      %v1951 = vpop.f32.mrb[0].mxu0
      %v1952 = vadd.f32 %v1883, %v1951
      %v1953 = vpop.f32.mrb[0].mxu0
      %1954 = vmatprep.mubr.f32.mxu0 0.0
      %1955 = vmatmul.mubr.f32.gmra.mrb[0].mxu0 %v580
      %v1956 = vpop.f32.mrb[0].mxu0
      %v1957 = vadd.f32 %v1883, %v1956
      %v1958 = vpop.f32.mrb[0].mxu0
      %1959 = vmatprep.mubr.f32.mxu0 0.0
      %1960 = vmatmul.mubr.f32.gmra.mrb[0].mxu0 %v583
      %v1961 = vpop.f32.mrb[0].mxu0
      %v1962 = vadd.f32 %v1883, %v1961
      %v1963 = vpop.f32.mrb[0].mxu0
      %1964 = vdwg.mxu0
      %s1965 = scalar_lea.vmem %s4, 320
      %v1966 = vld [vmem:[%s1965] sm:$0xff]
      %v1967 = vld [vmem:[%s1965 + $0x8] sm:$0xff]
      %v1968 = vld [vmem:[%s1965 + $0x10] sm:$0xff]
      %v1969 = vld [vmem:[%s1965 + $0x18] sm:$0xff]
      %s1970 = scalar_lea.vmem %s5, 10
      %v1971 = vld [vmem:[%s1970] sm:$0x1]
      %v1973 = vlaneseq
      %v1974 = vshrl.u32 %v1973, 7
      %v1975 = vsub.s32 0, %v1974
      %v1976 = vrot.slane %v1971, %v1975
      %1978 = vmatprep.subr.mxu0 0.0
      %1979 = vmatpush1.msra.mxu0 %v1966
      %1980 = vmatprep.subr.mxu0 0.0
      %1981 = vmatpush1.msra.mxu0 %v1967
      %1982 = vmatprep.subr.mxu0 0.0
      %1983 = vmatpush1.msra.mxu0 %v1968
      %1984 = vmatprep.subr.mxu0 0.0
      %1985 = vmatpush1.msra.mxu0 %v1969
      %1986 = vmatprep.subr.mxu0 0.0
      %1987 = vmatpush1.msra.mxu0 0.0
      %1988 = vmatprep.subr.mxu0 0.0
      %1989 = vmatpush1.msra.mxu0 0.0
      %1990 = vmatprep.subr.mxu0 0.0
      %1991 = vmatpush1.msra.mxu0 0.0
      %1992 = vmatprep.subr.mxu0 0.0
      %1993 = vmatpush1.msra.mxu0 0.0
      %1994 = vmatprep.subr.mxu0 0.0
      %1995 = vmatpush1.msra.mxu0 0.0
      %1996 = vmatprep.subr.mxu0 0.0
      %1997 = vmatpush1.msra.mxu0 0.0
      %1998 = vmatprep.subr.mxu0 0.0
      %1999 = vmatpush1.msra.mxu0 0.0
      %2000 = vmatprep.subr.mxu0 0.0
      %2001 = vmatpush1.msra.mxu0 0.0
      %2002 = vmatprep.subr.mxu0 0.0
      %2003 = vmatpush1.msra.mxu0 0.0
      %2004 = vmatprep.subr.mxu0 0.0
      %2005 = vmatpush1.msra.mxu0 0.0
      %2006 = vmatprep.subr.mxu0 0.0
      %2007 = vmatpush1.msra.mxu0 0.0
      %2008 = vmatprep.subr.mxu0 0.0
      %2009 = vmatpush1.msra.mxu0 0.0
      %2010 = vmatprep.subr.mxu0 0.0
      %2011 = vmatpush1.msra.mxu0 0.0
      %2012 = vmatprep.subr.mxu0 0.0
      %2013 = vmatpush1.msra.mxu0 0.0
      %2014 = vmatprep.subr.mxu0 0.0
      %2015 = vmatpush1.msra.mxu0 0.0
      %2016 = vmatprep.subr.mxu0 0.0
      %2017 = vmatpush1.msra.mxu0 0.0
      %2018 = vmatprep.subr.mxu0 0.0
      %2019 = vmatpush1.msra.mxu0 0.0
      %2020 = vmatprep.subr.mxu0 0.0
      %2021 = vmatpush1.msra.mxu0 0.0
      %2022 = vmatprep.subr.mxu0 0.0
      %2023 = vmatpush1.msra.mxu0 0.0
      %2024 = vmatprep.subr.mxu0 0.0
      %2025 = vmatpush1.msra.mxu0 0.0
      %2026 = vmatprep.subr.mxu0 0.0
      %2027 = vmatpush1.msra.mxu0 0.0
      %2028 = vmatprep.subr.mxu0 0.0
      %2029 = vmatpush1.msra.mxu0 0.0
      %2030 = vmatprep.subr.mxu0 0.0
      %2031 = vmatpush1.msra.mxu0 0.0
      %2032 = vmatprep.subr.mxu0 0.0
      %2033 = vmatpush1.msra.mxu0 0.0
      %2034 = vmatprep.subr.mxu0 0.0
      %2035 = vmatpush1.msra.mxu0 0.0
      %2036 = vmatprep.subr.mxu0 0.0
      %2037 = vmatpush1.msra.mxu0 0.0
      %2038 = vmatprep.subr.mxu0 0.0
      %2039 = vmatpush1.msra.mxu0 0.0
      %2040 = vmatprep.subr.mxu0 0.0
      %2041 = vmatpush1.msra.mxu0 0.0
      %2042 = vmatprep.mubr.f32.mxu0 0.0
      %2043 = vmatmul.mubr.f32.gmra.mrb[0].mxu0 %v577
      %v2044 = vpop.f32.mrb[0].mxu0
      %v2045 = vadd.f32 %v1976, %v2044
      %v2046 = vpop.f32.mrb[0].mxu0
      %2047 = vmatprep.mubr.f32.mxu0 0.0
      %2048 = vmatmul.mubr.f32.gmra.mrb[0].mxu0 %v580
      %v2049 = vpop.f32.mrb[0].mxu0
      %v2050 = vadd.f32 %v1976, %v2049
      %v2051 = vpop.f32.mrb[0].mxu0
      %2052 = vmatprep.mubr.f32.mxu0 0.0
      %2053 = vmatmul.mubr.f32.gmra.mrb[0].mxu0 %v583
      %v2054 = vpop.f32.mrb[0].mxu0
      %v2055 = vadd.f32 %v1976, %v2054
      %v2056 = vpop.f32.mrb[0].mxu0
      %2057 = vdwg.mxu0
      %v2059 = vsel %vm851, %v1859, 0
      %v2062 = vsel %vm851, %v1864, 0
      %v2065 = vsel %vm851, %v1869, 0
      %v2068 = vsel %vm851, %v1952, 0
      %v2071 = vsel %vm851, %v1957, 0
      %v2074 = vsel %vm851, %v1962, 0
      %2076 = vmatprep.subr.mxu0 0.0
      %2077 = vmatpush1.xpose.msra.mxu0 %v2068
      %2078 = vmatprep.subr.mxu0 0.0
      %2079 = vmatpush1.xpose.msra.mxu0 %v2071
      %2080 = vmatprep.subr.mxu0 0.0
      %2081 = vmatpush1.xpose.msra.mxu0 %v2074
      %2082 = vmatprep.subr.mxu0 0.0
      %2083 = vmatpush1.xpose.msra.mxu0 0.0
      %2084 = vmatprep.subr.mxu0 0.0
      %2085 = vmatpush1.xpose.msra.mxu0 0.0
      %2086 = vmatprep.subr.mxu0 0.0
      %2087 = vmatpush1.xpose.msra.mxu0 0.0
      %2088 = vmatprep.subr.mxu0 0.0
      %2089 = vmatpush1.xpose.msra.mxu0 0.0
      %2090 = vmatprep.subr.mxu0 0.0
      %2091 = vmatpush1.xpose.msra.mxu0 0.0
      %2092 = vmatprep.subr.mxu0 0.0
      %2093 = vmatpush1.xpose.msra.mxu0 0.0
      %2094 = vmatprep.subr.mxu0 0.0
      %2095 = vmatpush1.xpose.msra.mxu0 0.0
      %2096 = vmatprep.subr.mxu0 0.0
      %2097 = vmatpush1.xpose.msra.mxu0 0.0
      %2098 = vmatprep.subr.mxu0 0.0
      %2099 = vmatpush1.xpose.msra.mxu0 0.0
      %2100 = vmatprep.subr.mxu0 0.0
      %2101 = vmatpush1.xpose.msra.mxu0 0.0
      %2102 = vmatprep.subr.mxu0 0.0
      %2103 = vmatpush1.xpose.msra.mxu0 0.0
      %2104 = vmatprep.subr.mxu0 0.0
      %2105 = vmatpush1.xpose.msra.mxu0 0.0
      %2106 = vmatprep.subr.mxu0 0.0
      %2107 = vmatpush1.xpose.msra.mxu0 0.0
      %2108 = vmatprep.subr.mxu0 0.0
      %2109 = vmatpush1.xpose.msra.mxu0 0.0
      %2110 = vmatprep.subr.mxu0 0.0
      %2111 = vmatpush1.xpose.msra.mxu0 0.0
      %2112 = vmatprep.subr.mxu0 0.0
      %2113 = vmatpush1.xpose.msra.mxu0 0.0
      %2114 = vmatprep.subr.mxu0 0.0
      %2115 = vmatpush1.xpose.msra.mxu0 0.0
      %2116 = vmatprep.subr.mxu0 0.0
      %2117 = vmatpush1.xpose.msra.mxu0 0.0
      %2118 = vmatprep.subr.mxu0 0.0
      %2119 = vmatpush1.xpose.msra.mxu0 0.0
      %2120 = vmatprep.subr.mxu0 0.0
      %2121 = vmatpush1.xpose.msra.mxu0 0.0
      %2122 = vmatprep.subr.mxu0 0.0
      %2123 = vmatpush1.xpose.msra.mxu0 0.0
      %2124 = vmatprep.subr.mxu0 0.0
      %2125 = vmatpush1.xpose.msra.mxu0 0.0
      %2126 = vmatprep.subr.mxu0 0.0
      %2127 = vmatpush1.xpose.msra.mxu0 0.0
      %2128 = vmatprep.subr.mxu0 0.0
      %2129 = vmatpush1.xpose.msra.mxu0 0.0
      %2130 = vmatprep.subr.mxu0 0.0
      %2131 = vmatpush1.xpose.msra.mxu0 0.0
      %2132 = vmatprep.subr.mxu0 0.0
      %2133 = vmatpush1.xpose.msra.mxu0 0.0
      %2134 = vmatprep.subr.mxu0 0.0
      %2135 = vmatpush1.xpose.msra.mxu0 0.0
      %2136 = vmatprep.subr.mxu0 0.0
      %2137 = vmatpush1.xpose.msra.mxu0 0.0
      %2138 = vmatprep.subr.mxu0 0.0
      %2139 = vmatpush1.xpose.msra.mxu0 0.0
      %2140 = vmatprep.mubr.f32.mxu0 0.0
      %2141 = vmatmul.mubr.f32.gmra.mrb[0].mxu0 %v2059
      %v2142 = vpop.f32.mrb[0].mxu0
      %v2143 = vadd.f32 0.0, %v2142
      %v2144 = vpop.f32.mrb[0].mxu0
      %2145 = vmatprep.mubr.f32.mxu0 0.0
      %2146 = vmatmul.mubr.f32.gmra.mrb[0].mxu0 %v2062
      %v2147 = vpop.f32.mrb[0].mxu0
      %v2148 = vadd.f32 0.0, %v2147
      %v2149 = vpop.f32.mrb[0].mxu0
      %2150 = vmatprep.mubr.f32.mxu0 0.0
      %2151 = vmatmul.mubr.f32.gmra.mrb[0].mxu0 %v2065
      %v2152 = vpop.f32.mrb[0].mxu0
      %v2153 = vadd.f32 0.0, %v2152
      %v2154 = vpop.f32.mrb[0].mxu0
      %2155 = vdwg.mxu0
      %v2156 = vmul.f32 %v2143, 0.35355338
      %v2157 = vmul.f32 %v2148, 0.35355338
      %v2158 = vmul.f32 %v2153, 0.35355338
      %v2159 = vadd.f32 %v2156, %v957
      %v2160 = vadd.f32 %v2157, %v957
      %v2161 = vadd.f32 %v2158, %v957
      %v2162 = vsel %vm962, %v2159, -inf
      %2163 = vmax.xlane.f32.xlu0 %v2162
      %v2164 = vpop.xlane.xlu0 %2163
      %v2165 = vsel %vm962, %v2160, -inf
      %2166 = vmax.xlane.f32.xlu0 %v2165
      %v2167 = vpop.xlane.xlu0 %2166
      %v2168 = vsel %vm969, %v2161, -inf
      %2169 = vmax.xlane.f32.xlu0 %v2168
      %v2170 = vpop.xlane.xlu0 %2169
      %v2171 = vsub.f32 %v2159, %v2164
      %v2172 = vsub.f32 %v2160, %v2167
      %v2173 = vsub.f32 %v2161, %v2170
      %v2174 = vmul.f32 %v2171, 1.442695
      %v2175 = vpow.pop %v2174
      %v2176 = vmul.f32 %v2172, 1.442695
      %v2177 = vpow.pop %v2176
      %v2178 = vmul.f32 %v2173, 1.442695
      %v2179 = vpow.pop %v2178
      %v2180 = vsel %vm962, %v2175, 0.0
      %2181 = vadd.xlane.f32.xlu0 %v2180
      %v2182 = vpop.xlane.xlu0 %2181
      %v2183 = vsel %vm962, %v2177, 0.0
      %2184 = vadd.xlane.f32.xlu0 %v2183
      %v2185 = vpop.xlane.xlu0 %2184
      %v2186 = vsel %vm969, %v2179, 0.0
      %2187 = vadd.xlane.f32.xlu0 %v2186
      %v2188 = vpop.xlane.xlu0 %2187
      %v2189 = vrcp.pop %v2182
      %v2190 = vrcp.pop %v2185
      %v2191 = vrcp.pop %v2188
      %v2192 = vmul.f32 %v2175, %v2189
      %v2193 = vmul.f32 %v2177, %v2190
      %v2194 = vmul.f32 %v2179, %v2191
      %v2196 = vsel %vm962, %v2192, 0
      %v2199 = vsel %vm962, %v2193, 0
      %v2202 = vsel %vm962, %v2194, 0
      %v2205 = vsel %vm1006, %v2055, 0
      %2207 = vmatprep.subr.mxu0 0.0
      %2208 = vmatpush1.msra.mxu0 %v2045
      %2209 = vmatprep.subr.mxu0 0.0
      %2210 = vmatpush1.msra.mxu0 %v2050
      %2211 = vmatprep.subr.mxu0 0.0
      %2212 = vmatpush1.msra.mxu0 %v2205
      %2213 = vmatprep.subr.mxu0 0.0
      %2214 = vmatpush1.msra.mxu0 0.0
      %2215 = vmatprep.subr.mxu0 0.0
      %2216 = vmatpush1.msra.mxu0 0.0
      %2217 = vmatprep.subr.mxu0 0.0
      %2218 = vmatpush1.msra.mxu0 0.0
      %2219 = vmatprep.subr.mxu0 0.0
      %2220 = vmatpush1.msra.mxu0 0.0
      %2221 = vmatprep.subr.mxu0 0.0
      %2222 = vmatpush1.msra.mxu0 0.0
      %2223 = vmatprep.subr.mxu0 0.0
      %2224 = vmatpush1.msra.mxu0 0.0
      %2225 = vmatprep.subr.mxu0 0.0
      %2226 = vmatpush1.msra.mxu0 0.0
      %2227 = vmatprep.subr.mxu0 0.0
      %2228 = vmatpush1.msra.mxu0 0.0
      %2229 = vmatprep.subr.mxu0 0.0
      %2230 = vmatpush1.msra.mxu0 0.0
      %2231 = vmatprep.subr.mxu0 0.0
      %2232 = vmatpush1.msra.mxu0 0.0
      %2233 = vmatprep.subr.mxu0 0.0
      %2234 = vmatpush1.msra.mxu0 0.0
      %2235 = vmatprep.subr.mxu0 0.0
      %2236 = vmatpush1.msra.mxu0 0.0
      %2237 = vmatprep.subr.mxu0 0.0
      %2238 = vmatpush1.msra.mxu0 0.0
      %2239 = vmatprep.subr.mxu0 0.0
      %2240 = vmatpush1.msra.mxu0 0.0
      %2241 = vmatprep.subr.mxu0 0.0
      %2242 = vmatpush1.msra.mxu0 0.0
      %2243 = vmatprep.subr.mxu0 0.0
      %2244 = vmatpush1.msra.mxu0 0.0
      %2245 = vmatprep.subr.mxu0 0.0
      %2246 = vmatpush1.msra.mxu0 0.0
      %2247 = vmatprep.subr.mxu0 0.0
      %2248 = vmatpush1.msra.mxu0 0.0
      %2249 = vmatprep.subr.mxu0 0.0
      %2250 = vmatpush1.msra.mxu0 0.0
      %2251 = vmatprep.subr.mxu0 0.0
      %2252 = vmatpush1.msra.mxu0 0.0
      %2253 = vmatprep.subr.mxu0 0.0
      %2254 = vmatpush1.msra.mxu0 0.0
      %2255 = vmatprep.subr.mxu0 0.0
      %2256 = vmatpush1.msra.mxu0 0.0
      %2257 = vmatprep.subr.mxu0 0.0
      %2258 = vmatpush1.msra.mxu0 0.0
      %2259 = vmatprep.subr.mxu0 0.0
      %2260 = vmatpush1.msra.mxu0 0.0
      %2261 = vmatprep.subr.mxu0 0.0
      %2262 = vmatpush1.msra.mxu0 0.0
      %2263 = vmatprep.subr.mxu0 0.0
      %2264 = vmatpush1.msra.mxu0 0.0
      %2265 = vmatprep.subr.mxu0 0.0
      %2266 = vmatpush1.msra.mxu0 0.0
      %2267 = vmatprep.subr.mxu0 0.0
      %2268 = vmatpush1.msra.mxu0 0.0
      %2269 = vmatprep.subr.mxu0 0.0
      %2270 = vmatpush1.msra.mxu0 0.0
      %2271 = vmatprep.mubr.f32.mxu0 0.0
      %2272 = vmatmul.mubr.f32.gmra.mrb[0].mxu0 %v2196
      %v2273 = vpop.f32.mrb[0].mxu0
      %v2274 = vadd.f32 0.0, %v2273
      %v2275 = vpop.f32.mrb[0].mxu0
      %2276 = vmatprep.mubr.f32.mxu0 0.0
      %2277 = vmatmul.mubr.f32.gmra.mrb[0].mxu0 %v2199
      %v2278 = vpop.f32.mrb[0].mxu0
      %v2279 = vadd.f32 0.0, %v2278
      %v2280 = vpop.f32.mrb[0].mxu0
      %2281 = vmatprep.mubr.f32.mxu0 0.0
      %2282 = vmatmul.mubr.f32.gmra.mrb[0].mxu0 %v2202
      %v2283 = vpop.f32.mrb[0].mxu0
      %v2284 = vadd.f32 0.0, %v2283
      %v2285 = vpop.f32.mrb[0].mxu0
      %2286 = vdwg.mxu0
      %s2287 = scalar_lea.vmem %s6, 16
      %v2288 = vld [vmem:[%s2287] sm:$0xff]
      %v2290 = vsel %vm851, %v2274, 0
      %v2293 = vsel %vm851, %v2279, 0
      %v2296 = vsel %vm851, %v2284, 0
      %2298 = vmatprep.subr.mxu0 0.0
      %2299 = vmatpush1.msra.mxu0 %v2288
      %2300 = vmatprep.subr.mxu0 0.0
      %2301 = vmatpush1.msra.mxu0 0.0
      %2302 = vmatprep.subr.mxu0 0.0
      %2303 = vmatpush1.msra.mxu0 0.0
      %2304 = vmatprep.subr.mxu0 0.0
      %2305 = vmatpush1.msra.mxu0 0.0
      %2306 = vmatprep.subr.mxu0 0.0
      %2307 = vmatpush1.msra.mxu0 0.0
      %2308 = vmatprep.subr.mxu0 0.0
      %2309 = vmatpush1.msra.mxu0 0.0
      %2310 = vmatprep.subr.mxu0 0.0
      %2311 = vmatpush1.msra.mxu0 0.0
      %2312 = vmatprep.subr.mxu0 0.0
      %2313 = vmatpush1.msra.mxu0 0.0
      %2314 = vmatprep.subr.mxu0 0.0
      %2315 = vmatpush1.msra.mxu0 0.0
      %2316 = vmatprep.subr.mxu0 0.0
      %2317 = vmatpush1.msra.mxu0 0.0
      %2318 = vmatprep.subr.mxu0 0.0
      %2319 = vmatpush1.msra.mxu0 0.0
      %2320 = vmatprep.subr.mxu0 0.0
      %2321 = vmatpush1.msra.mxu0 0.0
      %2322 = vmatprep.subr.mxu0 0.0
      %2323 = vmatpush1.msra.mxu0 0.0
      %2324 = vmatprep.subr.mxu0 0.0
      %2325 = vmatpush1.msra.mxu0 0.0
      %2326 = vmatprep.subr.mxu0 0.0
      %2327 = vmatpush1.msra.mxu0 0.0
      %2328 = vmatprep.subr.mxu0 0.0
      %2329 = vmatpush1.msra.mxu0 0.0
      %2330 = vmatprep.subr.mxu0 0.0
      %2331 = vmatpush1.msra.mxu0 0.0
      %2332 = vmatprep.subr.mxu0 0.0
      %2333 = vmatpush1.msra.mxu0 0.0
      %2334 = vmatprep.subr.mxu0 0.0
      %2335 = vmatpush1.msra.mxu0 0.0
      %2336 = vmatprep.subr.mxu0 0.0
      %2337 = vmatpush1.msra.mxu0 0.0
      %2338 = vmatprep.subr.mxu0 0.0
      %2339 = vmatpush1.msra.mxu0 0.0
      %2340 = vmatprep.subr.mxu0 0.0
      %2341 = vmatpush1.msra.mxu0 0.0
      %2342 = vmatprep.subr.mxu0 0.0
      %2343 = vmatpush1.msra.mxu0 0.0
      %2344 = vmatprep.subr.mxu0 0.0
      %2345 = vmatpush1.msra.mxu0 0.0
      %2346 = vmatprep.subr.mxu0 0.0
      %2347 = vmatpush1.msra.mxu0 0.0
      %2348 = vmatprep.subr.mxu0 0.0
      %2349 = vmatpush1.msra.mxu0 0.0
      %2350 = vmatprep.subr.mxu0 0.0
      %2351 = vmatpush1.msra.mxu0 0.0
      %2352 = vmatprep.subr.mxu0 0.0
      %2353 = vmatpush1.msra.mxu0 0.0
      %2354 = vmatprep.subr.mxu0 0.0
      %2355 = vmatpush1.msra.mxu0 0.0
      %2356 = vmatprep.subr.mxu0 0.0
      %2357 = vmatpush1.msra.mxu0 0.0
      %2358 = vmatprep.subr.mxu0 0.0
      %2359 = vmatpush1.msra.mxu0 0.0
      %2360 = vmatprep.subr.mxu0 0.0
      %2361 = vmatpush1.msra.mxu0 0.0
      %2362 = vmatprep.mubr.f32.mxu0 0.0
      %2363 = vmatmul.mubr.f32.gmra.mrb[0].mxu0 %v2290
      %v2364 = vpop.f32.mrb[0].mxu0
      %v2365 = vadd.f32 0.0, %v2364
      %v2366 = vpop.f32.mrb[0].mxu0
      %2367 = vmatprep.mubr.f32.mxu0 0.0
      %2368 = vmatmul.mubr.f32.gmra.mrb[0].mxu0 %v2293
      %v2369 = vpop.f32.mrb[0].mxu0
      %v2370 = vadd.f32 0.0, %v2369
      %v2371 = vpop.f32.mrb[0].mxu0
      %2372 = vmatprep.mubr.f32.mxu0 0.0
      %2373 = vmatmul.mubr.f32.gmra.mrb[0].mxu0 %v2296
      %v2374 = vpop.f32.mrb[0].mxu0
      %v2375 = vadd.f32 0.0, %v2374
      %v2376 = vpop.f32.mrb[0].mxu0
      %2377 = vdwg.mxu0
      %v2378 = vadd.f32 %v1766, %v2365
      %v2379 = vadd.f32 %v1771, %v2370
      %v2380 = vadd.f32 %v1776, %v2375
      %s2381 = scalar_lea.vmem %s4, 96
      %v2382 = vld [vmem:[%s2381] sm:$0xff]
      %v2383 = vld [vmem:[%s2381 + $0x8] sm:$0xff]
      %v2384 = vld [vmem:[%s2381 + $0x10] sm:$0xff]
      %v2385 = vld [vmem:[%s2381 + $0x18] sm:$0xff]
      %s2386 = scalar_lea.vmem %s5, 3
      %v2387 = vld [vmem:[%s2386] sm:$0x1]
      %v2389 = vlaneseq
      %v2390 = vshrl.u32 %v2389, 7
      %v2391 = vsub.s32 0, %v2390
      %v2392 = vrot.slane %v2387, %v2391
      %2394 = vmatprep.subr.mxu0 0.0
      %2395 = vmatpush1.msra.mxu0 %v2382
      %2396 = vmatprep.subr.mxu0 0.0
      %2397 = vmatpush1.msra.mxu0 %v2383
      %2398 = vmatprep.subr.mxu0 0.0
      %2399 = vmatpush1.msra.mxu0 %v2384
      %2400 = vmatprep.subr.mxu0 0.0
      %2401 = vmatpush1.msra.mxu0 %v2385
      %2402 = vmatprep.subr.mxu0 0.0
      %2403 = vmatpush1.msra.mxu0 0.0
      %2404 = vmatprep.subr.mxu0 0.0
      %2405 = vmatpush1.msra.mxu0 0.0
      %2406 = vmatprep.subr.mxu0 0.0
      %2407 = vmatpush1.msra.mxu0 0.0
      %2408 = vmatprep.subr.mxu0 0.0
      %2409 = vmatpush1.msra.mxu0 0.0
      %2410 = vmatprep.subr.mxu0 0.0
      %2411 = vmatpush1.msra.mxu0 0.0
      %2412 = vmatprep.subr.mxu0 0.0
      %2413 = vmatpush1.msra.mxu0 0.0
      %2414 = vmatprep.subr.mxu0 0.0
      %2415 = vmatpush1.msra.mxu0 0.0
      %2416 = vmatprep.subr.mxu0 0.0
      %2417 = vmatpush1.msra.mxu0 0.0
      %2418 = vmatprep.subr.mxu0 0.0
      %2419 = vmatpush1.msra.mxu0 0.0
      %2420 = vmatprep.subr.mxu0 0.0
      %2421 = vmatpush1.msra.mxu0 0.0
      %2422 = vmatprep.subr.mxu0 0.0
      %2423 = vmatpush1.msra.mxu0 0.0
      %2424 = vmatprep.subr.mxu0 0.0
      %2425 = vmatpush1.msra.mxu0 0.0
      %2426 = vmatprep.subr.mxu0 0.0
      %2427 = vmatpush1.msra.mxu0 0.0
      %2428 = vmatprep.subr.mxu0 0.0
      %2429 = vmatpush1.msra.mxu0 0.0
      %2430 = vmatprep.subr.mxu0 0.0
      %2431 = vmatpush1.msra.mxu0 0.0
      %2432 = vmatprep.subr.mxu0 0.0
      %2433 = vmatpush1.msra.mxu0 0.0
      %2434 = vmatprep.subr.mxu0 0.0
      %2435 = vmatpush1.msra.mxu0 0.0
      %2436 = vmatprep.subr.mxu0 0.0
      %2437 = vmatpush1.msra.mxu0 0.0
      %2438 = vmatprep.subr.mxu0 0.0
      %2439 = vmatpush1.msra.mxu0 0.0
      %2440 = vmatprep.subr.mxu0 0.0
      %2441 = vmatpush1.msra.mxu0 0.0
      %2442 = vmatprep.subr.mxu0 0.0
      %2443 = vmatpush1.msra.mxu0 0.0
      %2444 = vmatprep.subr.mxu0 0.0
      %2445 = vmatpush1.msra.mxu0 0.0
      %2446 = vmatprep.subr.mxu0 0.0
      %2447 = vmatpush1.msra.mxu0 0.0
      %2448 = vmatprep.subr.mxu0 0.0
      %2449 = vmatpush1.msra.mxu0 0.0
      %2450 = vmatprep.subr.mxu0 0.0
      %2451 = vmatpush1.msra.mxu0 0.0
      %2452 = vmatprep.subr.mxu0 0.0
      %2453 = vmatpush1.msra.mxu0 0.0
      %2454 = vmatprep.subr.mxu0 0.0
      %2455 = vmatpush1.msra.mxu0 0.0
      %2456 = vmatprep.subr.mxu0 0.0
      %2457 = vmatpush1.msra.mxu0 0.0
      %2458 = vmatprep.mubr.f32.mxu0 0.0
      %2459 = vmatmul.mubr.f32.gmra.mrb[0].mxu0 %v577
      %v2460 = vpop.f32.mrb[0].mxu0
      %v2461 = vadd.f32 %v2392, %v2460
      %v2462 = vpop.f32.mrb[0].mxu0
      %2463 = vmatprep.mubr.f32.mxu0 0.0
      %2464 = vmatmul.mubr.f32.gmra.mrb[0].mxu0 %v580
      %v2465 = vpop.f32.mrb[0].mxu0
      %v2466 = vadd.f32 %v2392, %v2465
      %v2467 = vpop.f32.mrb[0].mxu0
      %2468 = vmatprep.mubr.f32.mxu0 0.0
      %2469 = vmatmul.mubr.f32.gmra.mrb[0].mxu0 %v583
      %v2470 = vpop.f32.mrb[0].mxu0
      %v2471 = vadd.f32 %v2392, %v2470
      %v2472 = vpop.f32.mrb[0].mxu0
      %2473 = vdwg.mxu0
      %s2474 = scalar_lea.vmem %s4, 224
      %v2475 = vld [vmem:[%s2474] sm:$0xff]
      %v2476 = vld [vmem:[%s2474 + $0x8] sm:$0xff]
      %v2477 = vld [vmem:[%s2474 + $0x10] sm:$0xff]
      %v2478 = vld [vmem:[%s2474 + $0x18] sm:$0xff]
      %s2479 = scalar_lea.vmem %s5, 7
      %v2480 = vld [vmem:[%s2479] sm:$0x1]
      %v2482 = vlaneseq
      %v2483 = vshrl.u32 %v2482, 7
      %v2484 = vsub.s32 0, %v2483
      %v2485 = vrot.slane %v2480, %v2484
      %2487 = vmatprep.subr.mxu0 0.0
      %2488 = vmatpush1.msra.mxu0 %v2475
      %2489 = vmatprep.subr.mxu0 0.0
      %2490 = vmatpush1.msra.mxu0 %v2476
      %2491 = vmatprep.subr.mxu0 0.0
      %2492 = vmatpush1.msra.mxu0 %v2477
      %2493 = vmatprep.subr.mxu0 0.0
      %2494 = vmatpush1.msra.mxu0 %v2478
      %2495 = vmatprep.subr.mxu0 0.0
      %2496 = vmatpush1.msra.mxu0 0.0
      %2497 = vmatprep.subr.mxu0 0.0
      %2498 = vmatpush1.msra.mxu0 0.0
      %2499 = vmatprep.subr.mxu0 0.0
      %2500 = vmatpush1.msra.mxu0 0.0
      %2501 = vmatprep.subr.mxu0 0.0
      %2502 = vmatpush1.msra.mxu0 0.0
      %2503 = vmatprep.subr.mxu0 0.0
      %2504 = vmatpush1.msra.mxu0 0.0
      %2505 = vmatprep.subr.mxu0 0.0
      %2506 = vmatpush1.msra.mxu0 0.0
      %2507 = vmatprep.subr.mxu0 0.0
      %2508 = vmatpush1.msra.mxu0 0.0
      %2509 = vmatprep.subr.mxu0 0.0
      %2510 = vmatpush1.msra.mxu0 0.0
      %2511 = vmatprep.subr.mxu0 0.0
      %2512 = vmatpush1.msra.mxu0 0.0
      %2513 = vmatprep.subr.mxu0 0.0
      %2514 = vmatpush1.msra.mxu0 0.0
      %2515 = vmatprep.subr.mxu0 0.0
      %2516 = vmatpush1.msra.mxu0 0.0
      %2517 = vmatprep.subr.mxu0 0.0
      %2518 = vmatpush1.msra.mxu0 0.0
      %2519 = vmatprep.subr.mxu0 0.0
      %2520 = vmatpush1.msra.mxu0 0.0
      %2521 = vmatprep.subr.mxu0 0.0
      %2522 = vmatpush1.msra.mxu0 0.0
      %2523 = vmatprep.subr.mxu0 0.0
      %2524 = vmatpush1.msra.mxu0 0.0
      %2525 = vmatprep.subr.mxu0 0.0
      %2526 = vmatpush1.msra.mxu0 0.0
      %2527 = vmatprep.subr.mxu0 0.0
      %2528 = vmatpush1.msra.mxu0 0.0
      %2529 = vmatprep.subr.mxu0 0.0
      %2530 = vmatpush1.msra.mxu0 0.0
      %2531 = vmatprep.subr.mxu0 0.0
      %2532 = vmatpush1.msra.mxu0 0.0
      %2533 = vmatprep.subr.mxu0 0.0
      %2534 = vmatpush1.msra.mxu0 0.0
      %2535 = vmatprep.subr.mxu0 0.0
      %2536 = vmatpush1.msra.mxu0 0.0
      %2537 = vmatprep.subr.mxu0 0.0
      %2538 = vmatpush1.msra.mxu0 0.0
      %2539 = vmatprep.subr.mxu0 0.0
      %2540 = vmatpush1.msra.mxu0 0.0
      %2541 = vmatprep.subr.mxu0 0.0
      %2542 = vmatpush1.msra.mxu0 0.0
      %2543 = vmatprep.subr.mxu0 0.0
      %2544 = vmatpush1.msra.mxu0 0.0
      %2545 = vmatprep.subr.mxu0 0.0
      %2546 = vmatpush1.msra.mxu0 0.0
      %2547 = vmatprep.subr.mxu0 0.0
      %2548 = vmatpush1.msra.mxu0 0.0
      %2549 = vmatprep.subr.mxu0 0.0
      %2550 = vmatpush1.msra.mxu0 0.0
      %2551 = vmatprep.mubr.f32.mxu0 0.0
      %2552 = vmatmul.mubr.f32.gmra.mrb[0].mxu0 %v577
      %v2553 = vpop.f32.mrb[0].mxu0
      %v2554 = vadd.f32 %v2485, %v2553
      %v2555 = vpop.f32.mrb[0].mxu0
      %2556 = vmatprep.mubr.f32.mxu0 0.0
      %2557 = vmatmul.mubr.f32.gmra.mrb[0].mxu0 %v580
      %v2558 = vpop.f32.mrb[0].mxu0
      %v2559 = vadd.f32 %v2485, %v2558
      %v2560 = vpop.f32.mrb[0].mxu0
      %2561 = vmatprep.mubr.f32.mxu0 0.0
      %2562 = vmatmul.mubr.f32.gmra.mrb[0].mxu0 %v583
      %v2563 = vpop.f32.mrb[0].mxu0
      %v2564 = vadd.f32 %v2485, %v2563
      %v2565 = vpop.f32.mrb[0].mxu0
      %2566 = vdwg.mxu0
      %s2567 = scalar_lea.vmem %s4, 352
      %v2568 = vld [vmem:[%s2567] sm:$0xff]
      %v2569 = vld [vmem:[%s2567 + $0x8] sm:$0xff]
      %v2570 = vld [vmem:[%s2567 + $0x10] sm:$0xff]
      %v2571 = vld [vmem:[%s2567 + $0x18] sm:$0xff]
      %s2572 = scalar_lea.vmem %s5, 11
      %v2573 = vld [vmem:[%s2572] sm:$0x1]
      %v2575 = vlaneseq
      %v2576 = vshrl.u32 %v2575, 7
      %v2577 = vsub.s32 0, %v2576
      %v2578 = vrot.slane %v2573, %v2577
      %2580 = vmatprep.subr.mxu0 0.0
      %2581 = vmatpush1.msra.mxu0 %v2568
      %2582 = vmatprep.subr.mxu0 0.0
      %2583 = vmatpush1.msra.mxu0 %v2569
      %2584 = vmatprep.subr.mxu0 0.0
      %2585 = vmatpush1.msra.mxu0 %v2570
      %2586 = vmatprep.subr.mxu0 0.0
      %2587 = vmatpush1.msra.mxu0 %v2571
      %2588 = vmatprep.subr.mxu0 0.0
      %2589 = vmatpush1.msra.mxu0 0.0
      %2590 = vmatprep.subr.mxu0 0.0
      %2591 = vmatpush1.msra.mxu0 0.0
      %2592 = vmatprep.subr.mxu0 0.0
      %2593 = vmatpush1.msra.mxu0 0.0
      %2594 = vmatprep.subr.mxu0 0.0
      %2595 = vmatpush1.msra.mxu0 0.0
      %2596 = vmatprep.subr.mxu0 0.0
      %2597 = vmatpush1.msra.mxu0 0.0
      %2598 = vmatprep.subr.mxu0 0.0
      %2599 = vmatpush1.msra.mxu0 0.0
      %2600 = vmatprep.subr.mxu0 0.0
      %2601 = vmatpush1.msra.mxu0 0.0
      %2602 = vmatprep.subr.mxu0 0.0
      %2603 = vmatpush1.msra.mxu0 0.0
      %2604 = vmatprep.subr.mxu0 0.0
      %2605 = vmatpush1.msra.mxu0 0.0
      %2606 = vmatprep.subr.mxu0 0.0
      %2607 = vmatpush1.msra.mxu0 0.0
      %2608 = vmatprep.subr.mxu0 0.0
      %2609 = vmatpush1.msra.mxu0 0.0
      %2610 = vmatprep.subr.mxu0 0.0
      %2611 = vmatpush1.msra.mxu0 0.0
      %2612 = vmatprep.subr.mxu0 0.0
      %2613 = vmatpush1.msra.mxu0 0.0
      %2614 = vmatprep.subr.mxu0 0.0
      %2615 = vmatpush1.msra.mxu0 0.0
      %2616 = vmatprep.subr.mxu0 0.0
      %2617 = vmatpush1.msra.mxu0 0.0
      %2618 = vmatprep.subr.mxu0 0.0
      %2619 = vmatpush1.msra.mxu0 0.0
      %2620 = vmatprep.subr.mxu0 0.0
      %2621 = vmatpush1.msra.mxu0 0.0
      %2622 = vmatprep.subr.mxu0 0.0
      %2623 = vmatpush1.msra.mxu0 0.0
      %2624 = vmatprep.subr.mxu0 0.0
      %2625 = vmatpush1.msra.mxu0 0.0
      %2626 = vmatprep.subr.mxu0 0.0
      %2627 = vmatpush1.msra.mxu0 0.0
      %2628 = vmatprep.subr.mxu0 0.0
      %2629 = vmatpush1.msra.mxu0 0.0
      %2630 = vmatprep.subr.mxu0 0.0
      %2631 = vmatpush1.msra.mxu0 0.0
      %2632 = vmatprep.subr.mxu0 0.0
      %2633 = vmatpush1.msra.mxu0 0.0
      %2634 = vmatprep.subr.mxu0 0.0
      %2635 = vmatpush1.msra.mxu0 0.0
      %2636 = vmatprep.subr.mxu0 0.0
      %2637 = vmatpush1.msra.mxu0 0.0
      %2638 = vmatprep.subr.mxu0 0.0
      %2639 = vmatpush1.msra.mxu0 0.0
      %2640 = vmatprep.subr.mxu0 0.0
      %2641 = vmatpush1.msra.mxu0 0.0
      %2642 = vmatprep.subr.mxu0 0.0
      %2643 = vmatpush1.msra.mxu0 0.0
      %2644 = vmatprep.mubr.f32.mxu0 0.0
      %2645 = vmatmul.mubr.f32.gmra.mrb[0].mxu0 %v577
      %v2646 = vpop.f32.mrb[0].mxu0
      %v2647 = vadd.f32 %v2578, %v2646
      %v2648 = vpop.f32.mrb[0].mxu0
      %2649 = vmatprep.mubr.f32.mxu0 0.0
      %2650 = vmatmul.mubr.f32.gmra.mrb[0].mxu0 %v580
      %v2651 = vpop.f32.mrb[0].mxu0
      %v2652 = vadd.f32 %v2578, %v2651
      %v2653 = vpop.f32.mrb[0].mxu0
      %2654 = vmatprep.mubr.f32.mxu0 0.0
      %2655 = vmatmul.mubr.f32.gmra.mrb[0].mxu0 %v583
      %v2656 = vpop.f32.mrb[0].mxu0
      %v2657 = vadd.f32 %v2578, %v2656
      %v2658 = vpop.f32.mrb[0].mxu0
      %2659 = vdwg.mxu0
      %v2661 = vsel %vm851, %v2461, 0
      %v2664 = vsel %vm851, %v2466, 0
      %v2667 = vsel %vm851, %v2471, 0
      %v2670 = vsel %vm851, %v2554, 0
      %v2673 = vsel %vm851, %v2559, 0
      %v2676 = vsel %vm851, %v2564, 0
      %2678 = vmatprep.subr.mxu0 0.0
      %2679 = vmatpush1.xpose.msra.mxu0 %v2670
      %2680 = vmatprep.subr.mxu0 0.0
      %2681 = vmatpush1.xpose.msra.mxu0 %v2673
      %2682 = vmatprep.subr.mxu0 0.0
      %2683 = vmatpush1.xpose.msra.mxu0 %v2676
      %2684 = vmatprep.subr.mxu0 0.0
      %2685 = vmatpush1.xpose.msra.mxu0 0.0
      %2686 = vmatprep.subr.mxu0 0.0
      %2687 = vmatpush1.xpose.msra.mxu0 0.0
      %2688 = vmatprep.subr.mxu0 0.0
      %2689 = vmatpush1.xpose.msra.mxu0 0.0
      %2690 = vmatprep.subr.mxu0 0.0
      %2691 = vmatpush1.xpose.msra.mxu0 0.0
      %2692 = vmatprep.subr.mxu0 0.0
      %2693 = vmatpush1.xpose.msra.mxu0 0.0
      %2694 = vmatprep.subr.mxu0 0.0
      %2695 = vmatpush1.xpose.msra.mxu0 0.0
      %2696 = vmatprep.subr.mxu0 0.0
      %2697 = vmatpush1.xpose.msra.mxu0 0.0
      %2698 = vmatprep.subr.mxu0 0.0
      %2699 = vmatpush1.xpose.msra.mxu0 0.0
      %2700 = vmatprep.subr.mxu0 0.0
      %2701 = vmatpush1.xpose.msra.mxu0 0.0
      %2702 = vmatprep.subr.mxu0 0.0
      %2703 = vmatpush1.xpose.msra.mxu0 0.0
      %2704 = vmatprep.subr.mxu0 0.0
      %2705 = vmatpush1.xpose.msra.mxu0 0.0
      %2706 = vmatprep.subr.mxu0 0.0
      %2707 = vmatpush1.xpose.msra.mxu0 0.0
      %2708 = vmatprep.subr.mxu0 0.0
      %2709 = vmatpush1.xpose.msra.mxu0 0.0
      %2710 = vmatprep.subr.mxu0 0.0
      %2711 = vmatpush1.xpose.msra.mxu0 0.0
      %2712 = vmatprep.subr.mxu0 0.0
      %2713 = vmatpush1.xpose.msra.mxu0 0.0
      %2714 = vmatprep.subr.mxu0 0.0
      %2715 = vmatpush1.xpose.msra.mxu0 0.0
      %2716 = vmatprep.subr.mxu0 0.0
      %2717 = vmatpush1.xpose.msra.mxu0 0.0
      %2718 = vmatprep.subr.mxu0 0.0
      %2719 = vmatpush1.xpose.msra.mxu0 0.0
      %2720 = vmatprep.subr.mxu0 0.0
      %2721 = vmatpush1.xpose.msra.mxu0 0.0
      %2722 = vmatprep.subr.mxu0 0.0
      %2723 = vmatpush1.xpose.msra.mxu0 0.0
      %2724 = vmatprep.subr.mxu0 0.0
      %2725 = vmatpush1.xpose.msra.mxu0 0.0
      %2726 = vmatprep.subr.mxu0 0.0
      %2727 = vmatpush1.xpose.msra.mxu0 0.0
      %2728 = vmatprep.subr.mxu0 0.0
      %2729 = vmatpush1.xpose.msra.mxu0 0.0
      %2730 = vmatprep.subr.mxu0 0.0
      %2731 = vmatpush1.xpose.msra.mxu0 0.0
      %2732 = vmatprep.subr.mxu0 0.0
      %2733 = vmatpush1.xpose.msra.mxu0 0.0
      %2734 = vmatprep.subr.mxu0 0.0
      %2735 = vmatpush1.xpose.msra.mxu0 0.0
      %2736 = vmatprep.subr.mxu0 0.0
      %2737 = vmatpush1.xpose.msra.mxu0 0.0
      %2738 = vmatprep.subr.mxu0 0.0
      %2739 = vmatpush1.xpose.msra.mxu0 0.0
      %2740 = vmatprep.subr.mxu0 0.0
      %2741 = vmatpush1.xpose.msra.mxu0 0.0
      %2742 = vmatprep.mubr.f32.mxu0 0.0
      %2743 = vmatmul.mubr.f32.gmra.mrb[0].mxu0 %v2661
      %v2744 = vpop.f32.mrb[0].mxu0
      %v2745 = vadd.f32 0.0, %v2744
      %v2746 = vpop.f32.mrb[0].mxu0
      %2747 = vmatprep.mubr.f32.mxu0 0.0
      %2748 = vmatmul.mubr.f32.gmra.mrb[0].mxu0 %v2664
      %v2749 = vpop.f32.mrb[0].mxu0
      %v2750 = vadd.f32 0.0, %v2749
      %v2751 = vpop.f32.mrb[0].mxu0
      %2752 = vmatprep.mubr.f32.mxu0 0.0
      %2753 = vmatmul.mubr.f32.gmra.mrb[0].mxu0 %v2667
      %v2754 = vpop.f32.mrb[0].mxu0
      %v2755 = vadd.f32 0.0, %v2754
      %v2756 = vpop.f32.mrb[0].mxu0
      %2757 = vdwg.mxu0
      %v2758 = vmul.f32 %v2745, 0.35355338
      %v2759 = vmul.f32 %v2750, 0.35355338
      %v2760 = vmul.f32 %v2755, 0.35355338
      %v2761 = vadd.f32 %v2758, %v957
      %v2762 = vadd.f32 %v2759, %v957
      %v2763 = vadd.f32 %v2760, %v957
      %v2764 = vsel %vm962, %v2761, -inf
      %2765 = vmax.xlane.f32.xlu0 %v2764
      %v2766 = vpop.xlane.xlu0 %2765
      %v2767 = vsel %vm962, %v2762, -inf
      %2768 = vmax.xlane.f32.xlu0 %v2767
      %v2769 = vpop.xlane.xlu0 %2768
      %v2770 = vsel %vm969, %v2763, -inf
      %2771 = vmax.xlane.f32.xlu0 %v2770
      %v2772 = vpop.xlane.xlu0 %2771
      %v2773 = vsub.f32 %v2761, %v2766
      %v2774 = vsub.f32 %v2762, %v2769
      %v2775 = vsub.f32 %v2763, %v2772
      %v2776 = vmul.f32 %v2773, 1.442695
      %v2777 = vpow.pop %v2776
      %v2778 = vmul.f32 %v2774, 1.442695
      %v2779 = vpow.pop %v2778
      %v2780 = vmul.f32 %v2775, 1.442695
      %v2781 = vpow.pop %v2780
      %v2782 = vsel %vm962, %v2777, 0.0
      %2783 = vadd.xlane.f32.xlu0 %v2782
      %v2784 = vpop.xlane.xlu0 %2783
      %v2785 = vsel %vm962, %v2779, 0.0
      %2786 = vadd.xlane.f32.xlu0 %v2785
      %v2787 = vpop.xlane.xlu0 %2786
      %v2788 = vsel %vm969, %v2781, 0.0
      %2789 = vadd.xlane.f32.xlu0 %v2788
      %v2790 = vpop.xlane.xlu0 %2789
      %v2791 = vrcp.pop %v2784
      %v2792 = vrcp.pop %v2787
      %v2793 = vrcp.pop %v2790
      %v2794 = vmul.f32 %v2777, %v2791
      %v2795 = vmul.f32 %v2779, %v2792
      %v2796 = vmul.f32 %v2781, %v2793
      %v2798 = vsel %vm962, %v2794, 0
      %v2801 = vsel %vm962, %v2795, 0
      %v2804 = vsel %vm962, %v2796, 0
      %v2807 = vsel %vm1006, %v2657, 0
      %2809 = vmatprep.subr.mxu0 0.0
      %2810 = vmatpush1.msra.mxu0 %v2647
      %2811 = vmatprep.subr.mxu0 0.0
      %2812 = vmatpush1.msra.mxu0 %v2652
      %2813 = vmatprep.subr.mxu0 0.0
      %2814 = vmatpush1.msra.mxu0 %v2807
      %2815 = vmatprep.subr.mxu0 0.0
      %2816 = vmatpush1.msra.mxu0 0.0
      %2817 = vmatprep.subr.mxu0 0.0
      %2818 = vmatpush1.msra.mxu0 0.0
      %2819 = vmatprep.subr.mxu0 0.0
      %2820 = vmatpush1.msra.mxu0 0.0
      %2821 = vmatprep.subr.mxu0 0.0
      %2822 = vmatpush1.msra.mxu0 0.0
      %2823 = vmatprep.subr.mxu0 0.0
      %2824 = vmatpush1.msra.mxu0 0.0
      %2825 = vmatprep.subr.mxu0 0.0
      %2826 = vmatpush1.msra.mxu0 0.0
      %2827 = vmatprep.subr.mxu0 0.0
      %2828 = vmatpush1.msra.mxu0 0.0
      %2829 = vmatprep.subr.mxu0 0.0
      %2830 = vmatpush1.msra.mxu0 0.0
      %2831 = vmatprep.subr.mxu0 0.0
      %2832 = vmatpush1.msra.mxu0 0.0
      %2833 = vmatprep.subr.mxu0 0.0
      %2834 = vmatpush1.msra.mxu0 0.0
      %2835 = vmatprep.subr.mxu0 0.0
      %2836 = vmatpush1.msra.mxu0 0.0
      %2837 = vmatprep.subr.mxu0 0.0
      %2838 = vmatpush1.msra.mxu0 0.0
      %2839 = vmatprep.subr.mxu0 0.0
      %2840 = vmatpush1.msra.mxu0 0.0
      %2841 = vmatprep.subr.mxu0 0.0
      %2842 = vmatpush1.msra.mxu0 0.0
      %2843 = vmatprep.subr.mxu0 0.0
      %2844 = vmatpush1.msra.mxu0 0.0
      %2845 = vmatprep.subr.mxu0 0.0
      %2846 = vmatpush1.msra.mxu0 0.0
      %2847 = vmatprep.subr.mxu0 0.0
      %2848 = vmatpush1.msra.mxu0 0.0
      %2849 = vmatprep.subr.mxu0 0.0
      %2850 = vmatpush1.msra.mxu0 0.0
      %2851 = vmatprep.subr.mxu0 0.0
      %2852 = vmatpush1.msra.mxu0 0.0
      %2853 = vmatprep.subr.mxu0 0.0
      %2854 = vmatpush1.msra.mxu0 0.0
      %2855 = vmatprep.subr.mxu0 0.0
      %2856 = vmatpush1.msra.mxu0 0.0
      %2857 = vmatprep.subr.mxu0 0.0
      %2858 = vmatpush1.msra.mxu0 0.0
      %2859 = vmatprep.subr.mxu0 0.0
      %2860 = vmatpush1.msra.mxu0 0.0
      %2861 = vmatprep.subr.mxu0 0.0
      %2862 = vmatpush1.msra.mxu0 0.0
      %2863 = vmatprep.subr.mxu0 0.0
      %2864 = vmatpush1.msra.mxu0 0.0
      %2865 = vmatprep.subr.mxu0 0.0
      %2866 = vmatpush1.msra.mxu0 0.0
      %2867 = vmatprep.subr.mxu0 0.0
      %2868 = vmatpush1.msra.mxu0 0.0
      %2869 = vmatprep.subr.mxu0 0.0
      %2870 = vmatpush1.msra.mxu0 0.0
      %2871 = vmatprep.subr.mxu0 0.0
      %2872 = vmatpush1.msra.mxu0 0.0
      %2873 = vmatprep.mubr.f32.mxu0 0.0
      %2874 = vmatmul.mubr.f32.gmra.mrb[0].mxu0 %v2798
      %v2875 = vpop.f32.mrb[0].mxu0
      %v2876 = vadd.f32 0.0, %v2875
      %v2877 = vpop.f32.mrb[0].mxu0
      %2878 = vmatprep.mubr.f32.mxu0 0.0
      %2879 = vmatmul.mubr.f32.gmra.mrb[0].mxu0 %v2801
      %v2880 = vpop.f32.mrb[0].mxu0
      %v2881 = vadd.f32 0.0, %v2880
      %v2882 = vpop.f32.mrb[0].mxu0
      %2883 = vmatprep.mubr.f32.mxu0 0.0
      %2884 = vmatmul.mubr.f32.gmra.mrb[0].mxu0 %v2804
      %v2885 = vpop.f32.mrb[0].mxu0
      %v2886 = vadd.f32 0.0, %v2885
      %v2887 = vpop.f32.mrb[0].mxu0
      %2888 = vdwg.mxu0
      %s2889 = scalar_lea.vmem %s6, 24
      %v2890 = vld [vmem:[%s2889] sm:$0xff]
      %v2892 = vsel %vm851, %v2876, 0
      %v2895 = vsel %vm851, %v2881, 0
      %v2898 = vsel %vm851, %v2886, 0
      %2900 = vmatprep.subr.mxu0 0.0
      %2901 = vmatpush1.msra.mxu0 %v2890
      %2902 = vmatprep.subr.mxu0 0.0
      %2903 = vmatpush1.msra.mxu0 0.0
      %2904 = vmatprep.subr.mxu0 0.0
      %2905 = vmatpush1.msra.mxu0 0.0
      %2906 = vmatprep.subr.mxu0 0.0
      %2907 = vmatpush1.msra.mxu0 0.0
      %2908 = vmatprep.subr.mxu0 0.0
      %2909 = vmatpush1.msra.mxu0 0.0
      %2910 = vmatprep.subr.mxu0 0.0
      %2911 = vmatpush1.msra.mxu0 0.0
      %2912 = vmatprep.subr.mxu0 0.0
      %2913 = vmatpush1.msra.mxu0 0.0
      %2914 = vmatprep.subr.mxu0 0.0
      %2915 = vmatpush1.msra.mxu0 0.0
      %2916 = vmatprep.subr.mxu0 0.0
      %2917 = vmatpush1.msra.mxu0 0.0
      %2918 = vmatprep.subr.mxu0 0.0
      %2919 = vmatpush1.msra.mxu0 0.0
      %2920 = vmatprep.subr.mxu0 0.0
      %2921 = vmatpush1.msra.mxu0 0.0
      %2922 = vmatprep.subr.mxu0 0.0
      %2923 = vmatpush1.msra.mxu0 0.0
      %2924 = vmatprep.subr.mxu0 0.0
      %2925 = vmatpush1.msra.mxu0 0.0
      %2926 = vmatprep.subr.mxu0 0.0
      %2927 = vmatpush1.msra.mxu0 0.0
      %2928 = vmatprep.subr.mxu0 0.0
      %2929 = vmatpush1.msra.mxu0 0.0
      %2930 = vmatprep.subr.mxu0 0.0
      %2931 = vmatpush1.msra.mxu0 0.0
      %2932 = vmatprep.subr.mxu0 0.0
      %2933 = vmatpush1.msra.mxu0 0.0
      %2934 = vmatprep.subr.mxu0 0.0
      %2935 = vmatpush1.msra.mxu0 0.0
      %2936 = vmatprep.subr.mxu0 0.0
      %2937 = vmatpush1.msra.mxu0 0.0
      %2938 = vmatprep.subr.mxu0 0.0
      %2939 = vmatpush1.msra.mxu0 0.0
      %2940 = vmatprep.subr.mxu0 0.0
      %2941 = vmatpush1.msra.mxu0 0.0
      %2942 = vmatprep.subr.mxu0 0.0
      %2943 = vmatpush1.msra.mxu0 0.0
      %2944 = vmatprep.subr.mxu0 0.0
      %2945 = vmatpush1.msra.mxu0 0.0
      %2946 = vmatprep.subr.mxu0 0.0
      %2947 = vmatpush1.msra.mxu0 0.0
      %2948 = vmatprep.subr.mxu0 0.0
      %2949 = vmatpush1.msra.mxu0 0.0
      %2950 = vmatprep.subr.mxu0 0.0
      %2951 = vmatpush1.msra.mxu0 0.0
      %2952 = vmatprep.subr.mxu0 0.0
      %2953 = vmatpush1.msra.mxu0 0.0
      %2954 = vmatprep.subr.mxu0 0.0
      %2955 = vmatpush1.msra.mxu0 0.0
      %2956 = vmatprep.subr.mxu0 0.0
      %2957 = vmatpush1.msra.mxu0 0.0
      %2958 = vmatprep.subr.mxu0 0.0
      %2959 = vmatpush1.msra.mxu0 0.0
      %2960 = vmatprep.subr.mxu0 0.0
      %2961 = vmatpush1.msra.mxu0 0.0
      %2962 = vmatprep.subr.mxu0 0.0
      %2963 = vmatpush1.msra.mxu0 0.0
      %2964 = vmatprep.mubr.f32.mxu0 0.0
      %2965 = vmatmul.mubr.f32.gmra.mrb[0].mxu0 %v2892
      %v2966 = vpop.f32.mrb[0].mxu0
      %v2967 = vadd.f32 0.0, %v2966
      %v2968 = vpop.f32.mrb[0].mxu0
      %2969 = vmatprep.mubr.f32.mxu0 0.0
      %2970 = vmatmul.mubr.f32.gmra.mrb[0].mxu0 %v2895
      %v2971 = vpop.f32.mrb[0].mxu0
      %v2972 = vadd.f32 0.0, %v2971
      %v2973 = vpop.f32.mrb[0].mxu0
      %2974 = vmatprep.mubr.f32.mxu0 0.0
      %2975 = vmatmul.mubr.f32.gmra.mrb[0].mxu0 %v2898
      %v2976 = vpop.f32.mrb[0].mxu0
      %v2977 = vadd.f32 0.0, %v2976
      %v2978 = vpop.f32.mrb[0].mxu0
      %2979 = vdwg.mxu0
      %v2980 = vadd.f32 %v2378, %v2967
      %v2981 = vadd.f32 %v2379, %v2972
      %v2982 = vadd.f32 %v2380, %v2977
      %v2984 = vlaneseq
      %v2985 = vshrl.u32 %v2984, 7
      %v2986 = vsub.s32 0, %v2985
      %v2987 = vrot.slane %v488, %v2986
      %v2989 = vadd.f32 %v2980, %v2987
      %v2990 = vadd.f32 %v2981, %v2987
      %v2991 = vadd.f32 %v2982, %v2987
      %v2992 = vadd.f32 %v482, %v2989
      %v2993 = vadd.f32 %v483, %v2990
      %v2994 = vadd.f32 %v484, %v2991
      %v2995 = vsel %vm505, %v2992, 0.0
      %2996 = vadd.xlane.f32.xlu0 %v2995
      %v2997 = vpop.xlane.xlu0 %2996
      %v2998 = vsel %vm505, %v2993, 0.0
      %2999 = vadd.xlane.f32.xlu0 %v2998
      %v3000 = vpop.xlane.xlu0 %2999
      %v3001 = vsel %vm512, %v2994, 0.0
      %3002 = vadd.xlane.f32.xlu0 %v3001
      %v3003 = vpop.xlane.xlu0 %3002
      %v3004 = vmul.f32 %v2997, %v516
      %v3005 = vmul.f32 %v3000, %v516
      %v3006 = vmul.f32 %v3003, %v516
      %v3007 = vsub.f32 %v2992, %v3004
      %v3008 = vsub.f32 %v2993, %v3005
      %v3009 = vsub.f32 %v2994, %v3006
      %v3010 = vmul.f32 %v3007, %v3007
      %v3011 = vmul.f32 %v3008, %v3008
      %v3012 = vmul.f32 %v3009, %v3009
      %v3013 = vsel %vm505, %v3010, 0.0
      %3014 = vadd.xlane.f32.xlu0 %v3013
      %v3015 = vpop.xlane.xlu0 %3014
      %v3016 = vsel %vm505, %v3011, 0.0
      %3017 = vadd.xlane.f32.xlu0 %v3016
      %v3018 = vpop.xlane.xlu0 %3017
      %v3019 = vsel %vm512, %v3012, 0.0
      %3020 = vadd.xlane.f32.xlu0 %v3019
      %v3021 = vpop.xlane.xlu0 %3020
      %v3022 = vmul.f32 %v3015, %v516
      %v3023 = vmul.f32 %v3018, %v516
      %v3024 = vmul.f32 %v3021, %v516
      %v3025 = vadd.f32 %v3022, 1e-12
      %v3026 = vadd.f32 %v3023, 1e-12
      %v3027 = vadd.f32 %v3024, 1e-12
      %v3028 = vrsqrt.pop %v3025
      %v3029 = vrsqrt.pop %v3026
      %v3030 = vrsqrt.pop %v3027
      %v3031 = vmul.f32 %v3007, %v3028
      %v3032 = vmul.f32 %v3008, %v3029
      %v3033 = vmul.f32 %v3009, %v3030
      %v3035 = vlaneseq
      %v3036 = vshrl.u32 %v3035, 7
      %v3037 = vsub.s32 0, %v3036
      %v3038 = vrot.slane %v489, %v3037
      %v3040 = vmul.f32 %v3031, %v3038
      %v3041 = vmul.f32 %v3032, %v3038
      %v3042 = vmul.f32 %v3033, %v3038
      %v3044 = vlaneseq
      %v3045 = vshrl.u32 %v3044, 7
      %v3046 = vsub.s32 0, %v3045
      %v3047 = vrot.slane %v490, %v3046
      %v3049 = vadd.f32 %v3040, %v3047
      %v3050 = vadd.f32 %v3041, %v3047
      %v3051 = vadd.f32 %v3042, %v3047
      %v3053 = vlaneseq
      %v3054 = vshrl.u32 %v3053, 7
      %v3055 = vsub.s32 0, %v3054
      %v3056 = vrot.slane %v495, %v3055
      %v3059 = vsel %vm505, %v3049, 0
      %v3062 = vsel %vm505, %v3050, 0
      %v3065 = vsel %vm505, %v3051, 0
      %3067 = vmatprep.subr.mxu0 0.0
      %3068 = vmatpush1.msra.mxu0 %v491
      %3069 = vmatprep.subr.mxu0 0.0
      %3070 = vmatpush1.msra.mxu0 %v492
      %3071 = vmatprep.subr.mxu0 0.0
      %3072 = vmatpush1.msra.mxu0 %v493
      %3073 = vmatprep.subr.mxu0 0.0
      %3074 = vmatpush1.msra.mxu0 %v494
      %3075 = vmatprep.subr.mxu0 0.0
      %3076 = vmatpush1.msra.mxu0 0.0
      %3077 = vmatprep.subr.mxu0 0.0
      %3078 = vmatpush1.msra.mxu0 0.0
      %3079 = vmatprep.subr.mxu0 0.0
      %3080 = vmatpush1.msra.mxu0 0.0
      %3081 = vmatprep.subr.mxu0 0.0
      %3082 = vmatpush1.msra.mxu0 0.0
      %3083 = vmatprep.subr.mxu0 0.0
      %3084 = vmatpush1.msra.mxu0 0.0
      %3085 = vmatprep.subr.mxu0 0.0
      %3086 = vmatpush1.msra.mxu0 0.0
      %3087 = vmatprep.subr.mxu0 0.0
      %3088 = vmatpush1.msra.mxu0 0.0
      %3089 = vmatprep.subr.mxu0 0.0
      %3090 = vmatpush1.msra.mxu0 0.0
      %3091 = vmatprep.subr.mxu0 0.0
      %3092 = vmatpush1.msra.mxu0 0.0
      %3093 = vmatprep.subr.mxu0 0.0
      %3094 = vmatpush1.msra.mxu0 0.0
      %3095 = vmatprep.subr.mxu0 0.0
      %3096 = vmatpush1.msra.mxu0 0.0
      %3097 = vmatprep.subr.mxu0 0.0
      %3098 = vmatpush1.msra.mxu0 0.0
      %3099 = vmatprep.subr.mxu0 0.0
      %3100 = vmatpush1.msra.mxu0 0.0
      %3101 = vmatprep.subr.mxu0 0.0
      %3102 = vmatpush1.msra.mxu0 0.0
      %3103 = vmatprep.subr.mxu0 0.0
      %3104 = vmatpush1.msra.mxu0 0.0
      %3105 = vmatprep.subr.mxu0 0.0
      %3106 = vmatpush1.msra.mxu0 0.0
      %3107 = vmatprep.subr.mxu0 0.0
      %3108 = vmatpush1.msra.mxu0 0.0
      %3109 = vmatprep.subr.mxu0 0.0
      %3110 = vmatpush1.msra.mxu0 0.0
      %3111 = vmatprep.subr.mxu0 0.0
      %3112 = vmatpush1.msra.mxu0 0.0
      %3113 = vmatprep.subr.mxu0 0.0
      %3114 = vmatpush1.msra.mxu0 0.0
      %3115 = vmatprep.subr.mxu0 0.0
      %3116 = vmatpush1.msra.mxu0 0.0
      %3117 = vmatprep.subr.mxu0 0.0
      %3118 = vmatpush1.msra.mxu0 0.0
      %3119 = vmatprep.subr.mxu0 0.0
      %3120 = vmatpush1.msra.mxu0 0.0
      %3121 = vmatprep.subr.mxu0 0.0
      %3122 = vmatpush1.msra.mxu0 0.0
      %3123 = vmatprep.subr.mxu0 0.0
      %3124 = vmatpush1.msra.mxu0 0.0
      %3125 = vmatprep.subr.mxu0 0.0
      %3126 = vmatpush1.msra.mxu0 0.0
      %3127 = vmatprep.subr.mxu0 0.0
      %3128 = vmatpush1.msra.mxu0 0.0
      %3129 = vmatprep.subr.mxu0 0.0
      %3130 = vmatpush1.msra.mxu0 0.0
      %3131 = vmatprep.mubr.f32.mxu0 0.0
      %3132 = vmatmul.mubr.f32.gmra.mrb[0].mxu0 %v3059
      %v3133 = vpop.f32.mrb[0].mxu0
      %v3134 = vadd.f32 %v3056, %v3133
      %v3135 = vpop.f32.mrb[0].mxu0
      %3136 = vmatprep.mubr.f32.mxu0 0.0
      %3137 = vmatmul.mubr.f32.gmra.mrb[0].mxu0 %v3062
      %v3138 = vpop.f32.mrb[0].mxu0
      %v3139 = vadd.f32 %v3056, %v3138
      %v3140 = vpop.f32.mrb[0].mxu0
      %3141 = vmatprep.mubr.f32.mxu0 0.0
      %3142 = vmatmul.mubr.f32.gmra.mrb[0].mxu0 %v3065
      %v3143 = vpop.f32.mrb[0].mxu0
      %v3144 = vadd.f32 %v3056, %v3143
      %v3145 = vpop.f32.mrb[0].mxu0
      %3146 = vdwg.mxu0
      %v3147 = vmul.f32 %v3134, %v3134
      %v3148 = vmul.f32 %v3139, %v3139
      %v3149 = vmul.f32 %v3144, %v3144
      %v3150 = vmul.f32 %v3134, %v3147
      %v3151 = vmul.f32 %v3139, %v3148
      %v3152 = vmul.f32 %v3144, %v3149
      %v3153 = vmul.f32 %v3150, 0.044715
      %v3154 = vmul.f32 %v3151, 0.044715
      %v3155 = vmul.f32 %v3152, 0.044715
      %v3156 = vadd.f32 %v3134, %v3153
      %v3157 = vadd.f32 %v3139, %v3154
      %v3158 = vadd.f32 %v3144, %v3155
      %v3159 = vmul.f32 %v3156, 0.7978846
      %v3160 = vmul.f32 %v3157, 0.7978846
      %v3161 = vmul.f32 %v3158, 0.7978846
      %v3162 = vtanh.pop %v3159
      %v3163 = vtanh.pop %v3160
      %v3164 = vtanh.pop %v3161
      %v3165 = vadd.f32 %v3162, 1.0
      %v3166 = vadd.f32 %v3163, 1.0
      %v3167 = vadd.f32 %v3164, 1.0
      %v3168 = vmul.f32 %v3165, 0.5
      %v3169 = vmul.f32 %v3166, 0.5
      %v3170 = vmul.f32 %v3167, 0.5
      %v3171 = vmul.f32 %v3134, %v3168
      %v3172 = vmul.f32 %v3139, %v3169
      %v3173 = vmul.f32 %v3144, %v3170
      %vm3174 = vcmask 523264
      %v3176 = vsel %vm3174, %v3171, 0
      %v3179 = vsel %vm3174, %v3172, 0
      %v3182 = vsel %vm3174, %v3173, 0
      %3184 = vmatprep.subr.mxu0 0.0
      %3185 = vmatpush1.msra.mxu0 %v496
      %3186 = vmatprep.subr.mxu0 0.0
      %3187 = vmatpush1.msra.mxu0 %v497
      %3188 = vmatprep.subr.mxu0 0.0
      %3189 = vmatpush1.msra.mxu0 %v498
      %3190 = vmatprep.subr.mxu0 0.0
      %3191 = vmatpush1.msra.mxu0 %v499
      %3192 = vmatprep.subr.mxu0 0.0
      %3193 = vmatpush1.msra.mxu0 %v500
      %3194 = vmatprep.subr.mxu0 0.0
      %3195 = vmatpush1.msra.mxu0 %v501
      %3196 = vmatprep.subr.mxu0 0.0
      %3197 = vmatpush1.msra.mxu0 %v502
      %3198 = vmatprep.subr.mxu0 0.0
      %3199 = vmatpush1.msra.mxu0 %v503
      %3200 = vmatprep.subr.mxu0 0.0
      %3201 = vmatpush1.msra.mxu0 0.0
      %3202 = vmatprep.subr.mxu0 0.0
      %3203 = vmatpush1.msra.mxu0 0.0
      %3204 = vmatprep.subr.mxu0 0.0
      %3205 = vmatpush1.msra.mxu0 0.0
      %3206 = vmatprep.subr.mxu0 0.0
      %3207 = vmatpush1.msra.mxu0 0.0
      %3208 = vmatprep.subr.mxu0 0.0
      %3209 = vmatpush1.msra.mxu0 0.0
      %3210 = vmatprep.subr.mxu0 0.0
      %3211 = vmatpush1.msra.mxu0 0.0
      %3212 = vmatprep.subr.mxu0 0.0
      %3213 = vmatpush1.msra.mxu0 0.0
      %3214 = vmatprep.subr.mxu0 0.0
      %3215 = vmatpush1.msra.mxu0 0.0
      %3216 = vmatprep.subr.mxu0 0.0
      %3217 = vmatpush1.msra.mxu0 0.0
      %3218 = vmatprep.subr.mxu0 0.0
      %3219 = vmatpush1.msra.mxu0 0.0
      %3220 = vmatprep.subr.mxu0 0.0
      %3221 = vmatpush1.msra.mxu0 0.0
      %3222 = vmatprep.subr.mxu0 0.0
      %3223 = vmatpush1.msra.mxu0 0.0
      %3224 = vmatprep.subr.mxu0 0.0
      %3225 = vmatpush1.msra.mxu0 0.0
      %3226 = vmatprep.subr.mxu0 0.0
      %3227 = vmatpush1.msra.mxu0 0.0
      %3228 = vmatprep.subr.mxu0 0.0
      %3229 = vmatpush1.msra.mxu0 0.0
      %3230 = vmatprep.subr.mxu0 0.0
      %3231 = vmatpush1.msra.mxu0 0.0
      %3232 = vmatprep.subr.mxu0 0.0
      %3233 = vmatpush1.msra.mxu0 0.0
      %3234 = vmatprep.subr.mxu0 0.0
      %3235 = vmatpush1.msra.mxu0 0.0
      %3236 = vmatprep.subr.mxu0 0.0
      %3237 = vmatpush1.msra.mxu0 0.0
      %3238 = vmatprep.subr.mxu0 0.0
      %3239 = vmatpush1.msra.mxu0 0.0
      %3240 = vmatprep.subr.mxu0 0.0
      %3241 = vmatpush1.msra.mxu0 0.0
      %3242 = vmatprep.subr.mxu0 0.0
      %3243 = vmatpush1.msra.mxu0 0.0
      %3244 = vmatprep.subr.mxu0 0.0
      %3245 = vmatpush1.msra.mxu0 0.0
      %3246 = vmatprep.subr.mxu0 0.0
      %3247 = vmatpush1.msra.mxu0 0.0
      %3248 = vmatprep.mubr.f32.mxu0 0.0
      %3249 = vmatmul.mubr.f32.gmra.mrb[0].mxu0 %v3176
      %v3250 = vpop.f32.mrb[0].mxu0
      %v3251 = vadd.f32 0.0, %v3250
      %v3252 = vpop.f32.mrb[0].mxu0
      %3253 = vmatprep.mubr.f32.mxu0 0.0
      %3254 = vmatmul.mubr.f32.gmra.mrb[0].mxu0 %v3179
      %v3255 = vpop.f32.mrb[0].mxu0
      %v3256 = vadd.f32 0.0, %v3255
      %v3257 = vpop.f32.mrb[0].mxu0
      %3258 = vmatprep.mubr.f32.mxu0 0.0
      %3259 = vmatmul.mubr.f32.gmra.mrb[0].mxu0 %v3182
      %v3260 = vpop.f32.mrb[0].mxu0
      %v3261 = vadd.f32 0.0, %v3260
      %v3262 = vpop.f32.mrb[0].mxu0
      %3263 = vdwg.mxu0
      %v3264 = vadd.f32 %v2992, %v3251
      %v3265 = vadd.f32 %v2993, %v3256
      %v3266 = vadd.f32 %v2994, %v3261
      %v3268 = vlaneseq
      %v3269 = vshrl.u32 %v3268, 7
      %v3270 = vsub.s32 0, %v3269
      %v3271 = vrot.slane %v504, %v3270
      %v3273 = vadd.f32 %v3264, %v3271
      %v3274 = vadd.f32 %v3265, %v3271
      %v3275 = vadd.f32 %v3266, %v3271
      %3276 = vst.msk [vmem:[%s481] sm:$0xff] %vm505, %v3273
      %3277 = vst.msk [vmem:[%s481 + $0x8] sm:$0xff] %vm505, %v3274
      %3278 = vst.msk [vmem:[%s481 + $0x10] sm:$0x1] %vm512, %v3275
      %p3279 = scmp.lt.s32.totalorder %s25, 1
      %s3280 = scalar_select %p3279, %s25, 1
      %s3281 = smul.addr %s3280, 3
      %s3282 = smul.addr %s3281, 8
      %s3283 = scalar_lea.vmem %s14, %s3282
      // Predicated region
      $region77: #{_lambda_.7} parent=75 // pred_check
        %p3284 = pneg %p347
      $region78: #{_lambda_.7} parent=75 // pred_check_branch
        %3286 = sbr.rel (%p3284) target = $region80
      $region79: #{_lambda_.7} parent=75 // pred_region
        _
      $region80: #{_lambda_.7} parent=75 // pred_fallthru
        _
    $region76: #{_lambda_.7} parent=5 // pred_fallthru
      _
    %p3287 = scmp.le.s32.totalorder 2, %s20
    // Predicated region
    $region81: #{_lambda_.7} parent=5 // pred_check
      %p3288 = pneg %p3287
    $region82: #{_lambda_.7} parent=5 // pred_check_branch
      %3290 = sbr.rel (%p3288) target = $region84
    $region83: #{_lambda_.7} parent=5 // pred_region
      %s3291 = ssub.s32 %s20, 2
      // Predicated region
      $region85: #{_lambda_.7} parent=83 // pred_check
        %p3292 = pneg %p353
      $region86: #{_lambda_.7} parent=83 // pred_check_branch
        %3294 = sbr.rel (%p3292) target = $region88
      $region87: #{_lambda_.7} parent=83 // pred_region
        %p3295 = scmp.lt.s32.totalorder %s26, 1
        %s3296 = scalar_select %p3295, %s26, 1
        %s3297 = smul.addr %s3296, 3
        %s3298 = smul.addr %s3297, 8
        %s3299 = scalar_lea.vmem %s14, %s3298
      $region88: #{_lambda_.7} parent=83 // pred_fallthru
        _
    $region84: #{_lambda_.7} parent=5 // pred_fallthru
      _
  $region6: #{_lambda_.7} parent=0 // loop_footer
    %s24 = sadd.s32 1, %s20
  $region7: #{_lambda_.7} parent=0 // loop_footer_branch
    %19 = sbr.rel target = $region3
  $region8: #{_lambda_.7} parent=0 // loop_exit
    _

// kernel: _lambda_.8
$region0: #{_lambda_.8}
  #allocation0 [shape = 'u32[]', space=smem, size = 0x4, offset = 0x4, fixed_abs, tag = 'smem constant byte address 0x4 - core index']
  #allocation1 [shape = 'u32[144,128]{1,0:T(1,128)}', space=vmem, size = 0x12000, scoped, tag = 'internal scratch']
  %s0 = inlined_call_operand.vmem [shape: f32[2,17,32], index: 0, kind: input, shape index: {}]
  %s1 = inlined_call_operand.vmem [shape: f32[2,17,32], index: 1, kind: input, shape index: {}]
  %s2 = inlined_call_operand.vmem [shape: f32[2,1,17], index: 2, kind: input, shape index: {}]
  %s3 = inlined_call_operand.vmem [shape: f32[32,32], index: 3, kind: input, shape index: {}]
  %s4 = inlined_call_operand.vmem [shape: f32[1,32], index: 4, kind: input, shape index: {}, may-alias: {4,6,10,12,16}]
  %s5 = inlined_call_operand.vmem [shape: f32[1,32], index: 5, kind: input, shape index: {}, may-alias: {5,11}]
  %s6 = inlined_call_operand.vmem [shape: f32[1,32], index: 6, kind: input, shape index: {}, may-alias: {4,6,10,12,16}]
  %s7 = inlined_call_operand.vmem [shape: f32[12,32,8], index: 7, kind: input, shape index: {}]
  %s8 = inlined_call_operand.vmem [shape: f32[12,1,8], index: 8, kind: input, shape index: {}]
  %s9 = inlined_call_operand.vmem [shape: f32[4,8,32], index: 9, kind: input, shape index: {}]
  %s10 = inlined_call_operand.vmem [shape: f32[1,32], index: 10, kind: input, shape index: {}, may-alias: {4,6,10,12,16}]
  %s11 = inlined_call_operand.vmem [shape: f32[1,32], index: 11, kind: input, shape index: {}, may-alias: {5,11}]
  %s12 = inlined_call_operand.vmem [shape: f32[1,32], index: 12, kind: input, shape index: {}, may-alias: {4,6,10,12,16}]
  %s13 = inlined_call_operand.vmem [shape: f32[32,64], index: 13, kind: input, shape index: {}]
  %s14 = inlined_call_operand.vmem [shape: f32[1,64], index: 14, kind: input, shape index: {}]
  %s15 = inlined_call_operand.vmem [shape: f32[64,32], index: 15, kind: input, shape index: {}]
  %s16 = inlined_call_operand.vmem [shape: f32[1,32], index: 16, kind: input, shape index: {}, may-alias: {4,6,10,12,16}]
  %s17 = inlined_call_operand.vmem [shape: f32[2,17,32], index: 17, kind: output, shape index: {}]
  %s18 = sld [smem:[#allocation0]]
  $region101: #{_lambda_.8} parent=0
    _
  %s20 = ssub.s32 1, %s18
  %s21 = scalar_select 0, %s20, %s18
  loop: start=0, step=1, limit=4
  $region2: #{_lambda_.8} parent=0 // loop_pre_header
    _
  $region3: #{_lambda_.8} parent=0 // loop_header
    %s23 = sphi 0, %s27
    %p24 = scmp.ge.s32.totalorder %s23, 4
    %s33 = sphi 0, %s35
    %s36 = sphi 0, %s33
    %s37 = sphi 0, %s36
    %s53 = sphi 0, %s37
    %s59 = sphi 0, %s61
    %s62 = sphi 0, %s59
    %s63 = sphi 0, %s62
    %s79 = sphi 0, %s63
    %s85 = sphi 0, %s87
    %s88 = sphi 0, %s85
    %s89 = sphi 0, %s88
    %s105 = sphi 0, %s89
    %s109 = sphi 0, %s109
    %s111 = sphi 0, %s109
    %s112 = sphi 0, %s111
    %s126 = sphi 0, %s112
    %s130 = sphi 0, %s130
    %s132 = sphi 0, %s130
    %s133 = sphi 0, %s132
    %s147 = sphi 0, %s133
    %s151 = sphi 0, %s151
    %s153 = sphi 0, %s151
    %s154 = sphi 0, %s153
    %s168 = sphi 0, %s154
    %s172 = sphi 0, %s172
    %s174 = sphi 0, %s172
    %s175 = sphi 0, %s174
    %s189 = sphi 0, %s175
    %s193 = sphi 0, %s193
    %s195 = sphi 0, %s193
    %s196 = sphi 0, %s195
    %s210 = sphi 0, %s196
    %s214 = sphi 0, %s214
    %s216 = sphi 0, %s214
    %s217 = sphi 0, %s216
    %s231 = sphi 0, %s217
    %s235 = sphi 0, %s235
    %s237 = sphi 0, %s235
    %s238 = sphi 0, %s237
    %s252 = sphi 0, %s238
    %s256 = sphi 0, %s256
    %s258 = sphi 0, %s256
    %s259 = sphi 0, %s258
    %s273 = sphi 0, %s259
    %s277 = sphi 0, %s277
    %s279 = sphi 0, %s277
    %s280 = sphi 0, %s279
    %s294 = sphi 0, %s280
    %s298 = sphi 0, %s298
    %s300 = sphi 0, %s298
    %s301 = sphi 0, %s300
    %s315 = sphi 0, %s301
    %s319 = sphi 0, %s319
    %s321 = sphi 0, %s319
    %s322 = sphi 0, %s321
    %s336 = sphi 0, %s322
    %s340 = sphi 0, %s340
    %s342 = sphi 0, %s340
    %s343 = sphi 0, %s342
    %s357 = sphi 0, %s343
    %s361 = sphi 0, %s361
    %s363 = sphi 0, %s361
    %s364 = sphi 0, %s363
    %s378 = sphi 0, %s364
    %s382 = sphi 0, %s382
    %s384 = sphi 0, %s382
    %s385 = sphi 0, %s384
    %s399 = sphi 0, %s385
    %s405 = sphi 0, %s407
    %s408 = sphi 0, %s405
    %s409 = sphi 0, %s408
    %s425 = sphi 0, %s409
  $region4: #{_lambda_.8} parent=0 // loop_header_branch
    %26 = sbr.rel (%p24) target = $region8
  $region5: #{_lambda_.8} parent=0 // loop_body
    %s28 = ssub.s32 %s23, 1
    %s29 = ssub.s32 %s23, 2
    %s30 = sadd.s32 %s23, 1
    %s31 = ssub.s32 %s23, %s30
    %p32 = scmp.eq.s32.totalorder %s31, 0
    %s34 = sadd.s32 %s33, 1
    %s35 = scalar_select %p32, %s33, %s34
    %p38 = pneg %p32
    %p39 = scmp.eq.s32.totalorder %s23, 1
    %p40 = por %p38, %p39
    %p41 = scmp.ne.s32.totalorder %s33, %s36
    %p42 = scmp.eq.s32.totalorder %s23, 0
    %p43 = por %p41, %p42
    %p44 = scmp.ne.s32.totalorder %s33, %s36
    %p45 = scmp.eq.s32.totalorder %s28, 1
    %p46 = por %p44, %p45
    %p47 = scmp.ne.s32.totalorder %s36, %s37
    %p48 = scmp.eq.s32.totalorder %s28, 0
    %p49 = por %p47, %p48
    %p50 = scmp.ne.s32.totalorder %s36, %s37
    %p51 = scmp.eq.s32.totalorder %s29, 1
    %p52 = por %p50, %p51
    %p54 = scmp.ne.s32.totalorder %s37, %s53
    %p55 = scmp.eq.s32.totalorder %s29, 0
    %p56 = por %p54, %p55
    %s57 = ssub.s32 %s23, %s30
    %p58 = scmp.eq.s32.totalorder %s57, 0
    %s60 = sadd.s32 %s59, 1
    %s61 = scalar_select %p58, %s59, %s60
    %p64 = pneg %p58
    %p65 = scmp.eq.s32.totalorder %s23, 1
    %p66 = por %p64, %p65
    %p67 = scmp.ne.s32.totalorder %s59, %s62
    %p68 = scmp.eq.s32.totalorder %s23, 0
    %p69 = por %p67, %p68
    %p70 = scmp.ne.s32.totalorder %s59, %s62
    %p71 = scmp.eq.s32.totalorder %s28, 1
    %p72 = por %p70, %p71
    %p73 = scmp.ne.s32.totalorder %s62, %s63
    %p74 = scmp.eq.s32.totalorder %s28, 0
    %p75 = por %p73, %p74
    %p76 = scmp.ne.s32.totalorder %s62, %s63
    %p77 = scmp.eq.s32.totalorder %s29, 1
    %p78 = por %p76, %p77
    %p80 = scmp.ne.s32.totalorder %s63, %s79
    %p81 = scmp.eq.s32.totalorder %s29, 0
    %p82 = por %p80, %p81
    %s83 = ssub.s32 %s23, %s30
    %p84 = scmp.eq.s32.totalorder %s83, 0
    %s86 = sadd.s32 %s85, 1
    %s87 = scalar_select %p84, %s85, %s86
    %p90 = pneg %p84
    %p91 = scmp.eq.s32.totalorder %s23, 1
    %p92 = por %p90, %p91
    %p93 = scmp.ne.s32.totalorder %s85, %s88
    %p94 = scmp.eq.s32.totalorder %s23, 0
    %p95 = por %p93, %p94
    %p96 = scmp.ne.s32.totalorder %s85, %s88
    %p97 = scmp.eq.s32.totalorder %s28, 1
    %p98 = por %p96, %p97
    %p99 = scmp.ne.s32.totalorder %s88, %s89
    %p100 = scmp.eq.s32.totalorder %s28, 0
    %p101 = por %p99, %p100
    %p102 = scmp.ne.s32.totalorder %s88, %s89
    %p103 = scmp.eq.s32.totalorder %s29, 1
    %p104 = por %p102, %p103
    %p106 = scmp.ne.s32.totalorder %s89, %s105
    %p107 = scmp.eq.s32.totalorder %s29, 0
    %p108 = por %p106, %p107
    %s110 = sadd.s32 %s109, 1
    %p113 = scmp.eq.s32.totalorder %s23, 1
    %p114 = scmp.ne.s32.totalorder %s109, %s111
    %p115 = scmp.eq.s32.totalorder %s23, 0
    %p116 = por %p114, %p115
    %p117 = scmp.ne.s32.totalorder %s109, %s111
    %p118 = scmp.eq.s32.totalorder %s28, 1
    %p119 = por %p117, %p118
    %p120 = scmp.ne.s32.totalorder %s111, %s112
    %p121 = scmp.eq.s32.totalorder %s28, 0
    %p122 = por %p120, %p121
    %p123 = scmp.ne.s32.totalorder %s111, %s112
    %p124 = scmp.eq.s32.totalorder %s29, 1
    %p125 = por %p123, %p124
    %p127 = scmp.ne.s32.totalorder %s112, %s126
    %p128 = scmp.eq.s32.totalorder %s29, 0
    %p129 = por %p127, %p128
    %s131 = sadd.s32 %s130, 1
    %p134 = scmp.eq.s32.totalorder %s23, 1
    %p135 = scmp.ne.s32.totalorder %s130, %s132
    %p136 = scmp.eq.s32.totalorder %s23, 0
    %p137 = por %p135, %p136
    %p138 = scmp.ne.s32.totalorder %s130, %s132
    %p139 = scmp.eq.s32.totalorder %s28, 1
    %p140 = por %p138, %p139
    %p141 = scmp.ne.s32.totalorder %s132, %s133
    %p142 = scmp.eq.s32.totalorder %s28, 0
    %p143 = por %p141, %p142
    %p144 = scmp.ne.s32.totalorder %s132, %s133
    %p145 = scmp.eq.s32.totalorder %s29, 1
    %p146 = por %p144, %p145
    %p148 = scmp.ne.s32.totalorder %s133, %s147
    %p149 = scmp.eq.s32.totalorder %s29, 0
    %p150 = por %p148, %p149
    %s152 = sadd.s32 %s151, 1
    %p155 = scmp.eq.s32.totalorder %s23, 1
    %p156 = scmp.ne.s32.totalorder %s151, %s153
    %p157 = scmp.eq.s32.totalorder %s23, 0
    %p158 = por %p156, %p157
    %p159 = scmp.ne.s32.totalorder %s151, %s153
    %p160 = scmp.eq.s32.totalorder %s28, 1
    %p161 = por %p159, %p160
    %p162 = scmp.ne.s32.totalorder %s153, %s154
    %p163 = scmp.eq.s32.totalorder %s28, 0
    %p164 = por %p162, %p163
    %p165 = scmp.ne.s32.totalorder %s153, %s154
    %p166 = scmp.eq.s32.totalorder %s29, 1
    %p167 = por %p165, %p166
    %p169 = scmp.ne.s32.totalorder %s154, %s168
    %p170 = scmp.eq.s32.totalorder %s29, 0
    %p171 = por %p169, %p170
    %s173 = sadd.s32 %s172, 1
    %p176 = scmp.eq.s32.totalorder %s23, 1
    %p177 = scmp.ne.s32.totalorder %s172, %s174
    %p178 = scmp.eq.s32.totalorder %s23, 0
    %p179 = por %p177, %p178
    %p180 = scmp.ne.s32.totalorder %s172, %s174
    %p181 = scmp.eq.s32.totalorder %s28, 1
    %p182 = por %p180, %p181
    %p183 = scmp.ne.s32.totalorder %s174, %s175
    %p184 = scmp.eq.s32.totalorder %s28, 0
    %p185 = por %p183, %p184
    %p186 = scmp.ne.s32.totalorder %s174, %s175
    %p187 = scmp.eq.s32.totalorder %s29, 1
    %p188 = por %p186, %p187
    %p190 = scmp.ne.s32.totalorder %s175, %s189
    %p191 = scmp.eq.s32.totalorder %s29, 0
    %p192 = por %p190, %p191
    %s194 = sadd.s32 %s193, 1
    %p197 = scmp.eq.s32.totalorder %s23, 1
    %p198 = scmp.ne.s32.totalorder %s193, %s195
    %p199 = scmp.eq.s32.totalorder %s23, 0
    %p200 = por %p198, %p199
    %p201 = scmp.ne.s32.totalorder %s193, %s195
    %p202 = scmp.eq.s32.totalorder %s28, 1
    %p203 = por %p201, %p202
    %p204 = scmp.ne.s32.totalorder %s195, %s196
    %p205 = scmp.eq.s32.totalorder %s28, 0
    %p206 = por %p204, %p205
    %p207 = scmp.ne.s32.totalorder %s195, %s196
    %p208 = scmp.eq.s32.totalorder %s29, 1
    %p209 = por %p207, %p208
    %p211 = scmp.ne.s32.totalorder %s196, %s210
    %p212 = scmp.eq.s32.totalorder %s29, 0
    %p213 = por %p211, %p212
    %s215 = sadd.s32 %s214, 1
    %p218 = scmp.eq.s32.totalorder %s23, 1
    %p219 = scmp.ne.s32.totalorder %s214, %s216
    %p220 = scmp.eq.s32.totalorder %s23, 0
    %p221 = por %p219, %p220
    %p222 = scmp.ne.s32.totalorder %s214, %s216
    %p223 = scmp.eq.s32.totalorder %s28, 1
    %p224 = por %p222, %p223
    %p225 = scmp.ne.s32.totalorder %s216, %s217
    %p226 = scmp.eq.s32.totalorder %s28, 0
    %p227 = por %p225, %p226
    %p228 = scmp.ne.s32.totalorder %s216, %s217
    %p229 = scmp.eq.s32.totalorder %s29, 1
    %p230 = por %p228, %p229
    %p232 = scmp.ne.s32.totalorder %s217, %s231
    %p233 = scmp.eq.s32.totalorder %s29, 0
    %p234 = por %p232, %p233
    %s236 = sadd.s32 %s235, 1
    %p239 = scmp.eq.s32.totalorder %s23, 1
    %p240 = scmp.ne.s32.totalorder %s235, %s237
    %p241 = scmp.eq.s32.totalorder %s23, 0
    %p242 = por %p240, %p241
    %p243 = scmp.ne.s32.totalorder %s235, %s237
    %p244 = scmp.eq.s32.totalorder %s28, 1
    %p245 = por %p243, %p244
    %p246 = scmp.ne.s32.totalorder %s237, %s238
    %p247 = scmp.eq.s32.totalorder %s28, 0
    %p248 = por %p246, %p247
    %p249 = scmp.ne.s32.totalorder %s237, %s238
    %p250 = scmp.eq.s32.totalorder %s29, 1
    %p251 = por %p249, %p250
    %p253 = scmp.ne.s32.totalorder %s238, %s252
    %p254 = scmp.eq.s32.totalorder %s29, 0
    %p255 = por %p253, %p254
    %s257 = sadd.s32 %s256, 1
    %p260 = scmp.eq.s32.totalorder %s23, 1
    %p261 = scmp.ne.s32.totalorder %s256, %s258
    %p262 = scmp.eq.s32.totalorder %s23, 0
    %p263 = por %p261, %p262
    %p264 = scmp.ne.s32.totalorder %s256, %s258
    %p265 = scmp.eq.s32.totalorder %s28, 1
    %p266 = por %p264, %p265
    %p267 = scmp.ne.s32.totalorder %s258, %s259
    %p268 = scmp.eq.s32.totalorder %s28, 0
    %p269 = por %p267, %p268
    %p270 = scmp.ne.s32.totalorder %s258, %s259
    %p271 = scmp.eq.s32.totalorder %s29, 1
    %p272 = por %p270, %p271
    %p274 = scmp.ne.s32.totalorder %s259, %s273
    %p275 = scmp.eq.s32.totalorder %s29, 0
    %p276 = por %p274, %p275
    %s278 = sadd.s32 %s277, 1
    %p281 = scmp.eq.s32.totalorder %s23, 1
    %p282 = scmp.ne.s32.totalorder %s277, %s279
    %p283 = scmp.eq.s32.totalorder %s23, 0
    %p284 = por %p282, %p283
    %p285 = scmp.ne.s32.totalorder %s277, %s279
    %p286 = scmp.eq.s32.totalorder %s28, 1
    %p287 = por %p285, %p286
    %p288 = scmp.ne.s32.totalorder %s279, %s280
    %p289 = scmp.eq.s32.totalorder %s28, 0
    %p290 = por %p288, %p289
    %p291 = scmp.ne.s32.totalorder %s279, %s280
    %p292 = scmp.eq.s32.totalorder %s29, 1
    %p293 = por %p291, %p292
    %p295 = scmp.ne.s32.totalorder %s280, %s294
    %p296 = scmp.eq.s32.totalorder %s29, 0
    %p297 = por %p295, %p296
    %s299 = sadd.s32 %s298, 1
    %p302 = scmp.eq.s32.totalorder %s23, 1
    %p303 = scmp.ne.s32.totalorder %s298, %s300
    %p304 = scmp.eq.s32.totalorder %s23, 0
    %p305 = por %p303, %p304
    %p306 = scmp.ne.s32.totalorder %s298, %s300
    %p307 = scmp.eq.s32.totalorder %s28, 1
    %p308 = por %p306, %p307
    %p309 = scmp.ne.s32.totalorder %s300, %s301
    %p310 = scmp.eq.s32.totalorder %s28, 0
    %p311 = por %p309, %p310
    %p312 = scmp.ne.s32.totalorder %s300, %s301
    %p313 = scmp.eq.s32.totalorder %s29, 1
    %p314 = por %p312, %p313
    %p316 = scmp.ne.s32.totalorder %s301, %s315
    %p317 = scmp.eq.s32.totalorder %s29, 0
    %p318 = por %p316, %p317
    %s320 = sadd.s32 %s319, 1
    %p323 = scmp.eq.s32.totalorder %s23, 1
    %p324 = scmp.ne.s32.totalorder %s319, %s321
    %p325 = scmp.eq.s32.totalorder %s23, 0
    %p326 = por %p324, %p325
    %p327 = scmp.ne.s32.totalorder %s319, %s321
    %p328 = scmp.eq.s32.totalorder %s28, 1
    %p329 = por %p327, %p328
    %p330 = scmp.ne.s32.totalorder %s321, %s322
    %p331 = scmp.eq.s32.totalorder %s28, 0
    %p332 = por %p330, %p331
    %p333 = scmp.ne.s32.totalorder %s321, %s322
    %p334 = scmp.eq.s32.totalorder %s29, 1
    %p335 = por %p333, %p334
    %p337 = scmp.ne.s32.totalorder %s322, %s336
    %p338 = scmp.eq.s32.totalorder %s29, 0
    %p339 = por %p337, %p338
    %s341 = sadd.s32 %s340, 1
    %p344 = scmp.eq.s32.totalorder %s23, 1
    %p345 = scmp.ne.s32.totalorder %s340, %s342
    %p346 = scmp.eq.s32.totalorder %s23, 0
    %p347 = por %p345, %p346
    %p348 = scmp.ne.s32.totalorder %s340, %s342
    %p349 = scmp.eq.s32.totalorder %s28, 1
    %p350 = por %p348, %p349
    %p351 = scmp.ne.s32.totalorder %s342, %s343
    %p352 = scmp.eq.s32.totalorder %s28, 0
    %p353 = por %p351, %p352
    %p354 = scmp.ne.s32.totalorder %s342, %s343
    %p355 = scmp.eq.s32.totalorder %s29, 1
    %p356 = por %p354, %p355
    %p358 = scmp.ne.s32.totalorder %s343, %s357
    %p359 = scmp.eq.s32.totalorder %s29, 0
    %p360 = por %p358, %p359
    %s362 = sadd.s32 %s361, 1
    %p365 = scmp.eq.s32.totalorder %s23, 1
    %p366 = scmp.ne.s32.totalorder %s361, %s363
    %p367 = scmp.eq.s32.totalorder %s23, 0
    %p368 = por %p366, %p367
    %p369 = scmp.ne.s32.totalorder %s361, %s363
    %p370 = scmp.eq.s32.totalorder %s28, 1
    %p371 = por %p369, %p370
    %p372 = scmp.ne.s32.totalorder %s363, %s364
    %p373 = scmp.eq.s32.totalorder %s28, 0
    %p374 = por %p372, %p373
    %p375 = scmp.ne.s32.totalorder %s363, %s364
    %p376 = scmp.eq.s32.totalorder %s29, 1
    %p377 = por %p375, %p376
    %p379 = scmp.ne.s32.totalorder %s364, %s378
    %p380 = scmp.eq.s32.totalorder %s29, 0
    %p381 = por %p379, %p380
    %s383 = sadd.s32 %s382, 1
    %p386 = scmp.eq.s32.totalorder %s23, 1
    %p387 = scmp.ne.s32.totalorder %s382, %s384
    %p388 = scmp.eq.s32.totalorder %s23, 0
    %p389 = por %p387, %p388
    %p390 = scmp.ne.s32.totalorder %s382, %s384
    %p391 = scmp.eq.s32.totalorder %s28, 1
    %p392 = por %p390, %p391
    %p393 = scmp.ne.s32.totalorder %s384, %s385
    %p394 = scmp.eq.s32.totalorder %s28, 0
    %p395 = por %p393, %p394
    %p396 = scmp.ne.s32.totalorder %s384, %s385
    %p397 = scmp.eq.s32.totalorder %s29, 1
    %p398 = por %p396, %p397
    %p400 = scmp.ne.s32.totalorder %s385, %s399
    %p401 = scmp.eq.s32.totalorder %s29, 0
    %p402 = por %p400, %p401
    %s403 = ssub.s32 %s23, %s30
    %p404 = scmp.eq.s32.totalorder %s403, 0
    %s406 = sadd.s32 %s405, 1
    %s407 = scalar_select %p404, %s405, %s406
    %p410 = pneg %p404
    %p411 = scmp.eq.s32.totalorder %s23, 1
    %p412 = por %p410, %p411
    %p413 = scmp.ne.s32.totalorder %s405, %s408
    %p414 = scmp.eq.s32.totalorder %s23, 0
    %p415 = por %p413, %p414
    %p416 = scmp.ne.s32.totalorder %s405, %s408
    %p417 = scmp.eq.s32.totalorder %s28, 1
    %p418 = por %p416, %p417
    %p419 = scmp.ne.s32.totalorder %s408, %s409
    %p420 = scmp.eq.s32.totalorder %s28, 0
    %p421 = por %p419, %p420
    %p422 = scmp.ne.s32.totalorder %s408, %s409
    %p423 = scmp.eq.s32.totalorder %s29, 1
    %p424 = por %p422, %p423
    %p426 = scmp.ne.s32.totalorder %s409, %s425
    %p427 = scmp.eq.s32.totalorder %s29, 0
    %p428 = por %p426, %p427
    %p429 = scmp.le.s32.totalorder 1, %s23
    %p430 = scmp.lt.s32.totalorder %s23, 3
    %p431 = pnand %p429, %p430
    %p432 = pneg %p431
    // Predicated region
    $region9: #{_lambda_.8} parent=5 // pred_check
      _
    $region10: #{_lambda_.8} parent=5 // pred_check_branch
      %434 = sbr.rel (%p431) target = $region12
    $region11: #{_lambda_.8} parent=5 // pred_region
      %s435 = ssub.s32 %s23, 1
      // Predicated region
      $region13: #{_lambda_.8} parent=11 // pred_check
        %p436 = pneg %p122
      $region14: #{_lambda_.8} parent=11 // pred_check_branch
        %438 = sbr.rel (%p436) target = $region16
      $region15: #{_lambda_.8} parent=11 // pred_region
        _
      $region16: #{_lambda_.8} parent=11 // pred_fallthru
        _
      // Predicated region
      $region17: #{_lambda_.8} parent=11 // pred_check
        %p439 = pneg %p143
      $region18: #{_lambda_.8} parent=11 // pred_check_branch
        %441 = sbr.rel (%p439) target = $region20
      $region19: #{_lambda_.8} parent=11 // pred_region
        _
      $region20: #{_lambda_.8} parent=11 // pred_fallthru
        _
      // Predicated region
      $region21: #{_lambda_.8} parent=11 // pred_check
        %p442 = pneg %p164
      $region22: #{_lambda_.8} parent=11 // pred_check_branch
        %444 = sbr.rel (%p442) target = $region24
      $region23: #{_lambda_.8} parent=11 // pred_region
        _
      $region24: #{_lambda_.8} parent=11 // pred_fallthru
        _
      // Predicated region
      $region25: #{_lambda_.8} parent=11 // pred_check
        %p445 = pneg %p185
      $region26: #{_lambda_.8} parent=11 // pred_check_branch
        %447 = sbr.rel (%p445) target = $region28
      $region27: #{_lambda_.8} parent=11 // pred_region
        _
      $region28: #{_lambda_.8} parent=11 // pred_fallthru
        _
      // Predicated region
      $region29: #{_lambda_.8} parent=11 // pred_check
        %p448 = pneg %p206
      $region30: #{_lambda_.8} parent=11 // pred_check_branch
        %450 = sbr.rel (%p448) target = $region32
      $region31: #{_lambda_.8} parent=11 // pred_region
        _
      $region32: #{_lambda_.8} parent=11 // pred_fallthru
        _
      // Predicated region
      $region33: #{_lambda_.8} parent=11 // pred_check
        %p451 = pneg %p227
      $region34: #{_lambda_.8} parent=11 // pred_check_branch
        %453 = sbr.rel (%p451) target = $region36
      $region35: #{_lambda_.8} parent=11 // pred_region
        _
      $region36: #{_lambda_.8} parent=11 // pred_fallthru
        _
      // Predicated region
      $region37: #{_lambda_.8} parent=11 // pred_check
        %p454 = pneg %p248
      $region38: #{_lambda_.8} parent=11 // pred_check_branch
        %456 = sbr.rel (%p454) target = $region40
      $region39: #{_lambda_.8} parent=11 // pred_region
        _
      $region40: #{_lambda_.8} parent=11 // pred_fallthru
        _
      // Predicated region
      $region41: #{_lambda_.8} parent=11 // pred_check
        %p457 = pneg %p269
      $region42: #{_lambda_.8} parent=11 // pred_check_branch
        %459 = sbr.rel (%p457) target = $region44
      $region43: #{_lambda_.8} parent=11 // pred_region
        _
      $region44: #{_lambda_.8} parent=11 // pred_fallthru
        _
      // Predicated region
      $region45: #{_lambda_.8} parent=11 // pred_check
        %p460 = pneg %p290
      $region46: #{_lambda_.8} parent=11 // pred_check_branch
        %462 = sbr.rel (%p460) target = $region48
      $region47: #{_lambda_.8} parent=11 // pred_region
        _
      $region48: #{_lambda_.8} parent=11 // pred_fallthru
        _
      // Predicated region
      $region49: #{_lambda_.8} parent=11 // pred_check
        %p463 = pneg %p311
      $region50: #{_lambda_.8} parent=11 // pred_check_branch
        %465 = sbr.rel (%p463) target = $region52
      $region51: #{_lambda_.8} parent=11 // pred_region
        _
      $region52: #{_lambda_.8} parent=11 // pred_fallthru
        _
      // Predicated region
      $region53: #{_lambda_.8} parent=11 // pred_check
        %p466 = pneg %p332
      $region54: #{_lambda_.8} parent=11 // pred_check_branch
        %468 = sbr.rel (%p466) target = $region56
      $region55: #{_lambda_.8} parent=11 // pred_region
        _
      $region56: #{_lambda_.8} parent=11 // pred_fallthru
        _
      // Predicated region
      $region57: #{_lambda_.8} parent=11 // pred_check
        %p469 = pneg %p353
      $region58: #{_lambda_.8} parent=11 // pred_check_branch
        %471 = sbr.rel (%p469) target = $region60
      $region59: #{_lambda_.8} parent=11 // pred_region
        _
      $region60: #{_lambda_.8} parent=11 // pred_fallthru
        _
      // Predicated region
      $region61: #{_lambda_.8} parent=11 // pred_check
        %p472 = pneg %p374
      $region62: #{_lambda_.8} parent=11 // pred_check_branch
        %474 = sbr.rel (%p472) target = $region64
      $region63: #{_lambda_.8} parent=11 // pred_region
        _
      $region64: #{_lambda_.8} parent=11 // pred_fallthru
        _
      // Predicated region
      $region65: #{_lambda_.8} parent=11 // pred_check
        %p475 = pneg %p395
      $region66: #{_lambda_.8} parent=11 // pred_check_branch
        %477 = sbr.rel (%p475) target = $region68
      $region67: #{_lambda_.8} parent=11 // pred_region
        _
      $region68: #{_lambda_.8} parent=11 // pred_fallthru
        _
    $region12: #{_lambda_.8} parent=5 // pred_fallthru
      _
    %p478 = scmp.lt.s32.totalorder %s23, 2
    // Predicated region
    $region69: #{_lambda_.8} parent=5 // pred_check
      %p479 = pneg %p478
    $region70: #{_lambda_.8} parent=5 // pred_check_branch
      %481 = sbr.rel (%p479) target = $region72
    $region71: #{_lambda_.8} parent=5 // pred_region
      // Predicated region
      $region73: #{_lambda_.8} parent=71 // pred_check
        %p482 = pneg %p43
      $region74: #{_lambda_.8} parent=71 // pred_check_branch
        %484 = sbr.rel (%p482) target = $region76
      $region75: #{_lambda_.8} parent=71 // pred_region
        %p485 = scmp.lt.s32.totalorder %s23, 1
        %s486 = scalar_select %p485, %s23, 1
        %s487 = smul.addr %s486, 3
        %s488 = smul.addr %s487, 8
        %s489 = scalar_lea.vmem %s0, %s488
      $region76: #{_lambda_.8} parent=71 // pred_fallthru
        _
      // Predicated region
      $region77: #{_lambda_.8} parent=71 // pred_check
        %p490 = pneg %p69
      $region78: #{_lambda_.8} parent=71 // pred_check_branch
        %492 = sbr.rel (%p490) target = $region80
      $region79: #{_lambda_.8} parent=71 // pred_region
        %p493 = scmp.lt.s32.totalorder %s23, 1
        %s494 = scalar_select %p493, %s23, 1
        %s495 = smul.addr %s494, 3
        %s496 = smul.addr %s495, 8
        %s497 = scalar_lea.vmem %s1, %s496
      $region80: #{_lambda_.8} parent=71 // pred_fallthru
        _
      // Predicated region
      $region81: #{_lambda_.8} parent=71 // pred_check
        %p498 = pneg %p95
      $region82: #{_lambda_.8} parent=71 // pred_check_branch
        %500 = sbr.rel (%p498) target = $region84
      $region83: #{_lambda_.8} parent=71 // pred_region
        %p501 = scmp.lt.s32.totalorder %s23, 1
        %s502 = scalar_select %p501, %s23, 1
        %s503 = scalar_lea.vmem %s2, %s502
      $region84: #{_lambda_.8} parent=71 // pred_fallthru
        _
    $region72: #{_lambda_.8} parent=5 // pred_fallthru
      _
    %p504 = scmp.le.s32.totalorder 1, %s23
    %p505 = scmp.lt.s32.totalorder %s23, 3
    %p506 = pnand %p504, %p505
    %p507 = pneg %p506
    // Predicated region
    $region85: #{_lambda_.8} parent=5 // pred_check
      _
    $region86: #{_lambda_.8} parent=5 // pred_check_branch
      %509 = sbr.rel (%p506) target = $region88
    $region87: #{_lambda_.8} parent=5 // pred_region
      %s510 = ssub.s32 %s23, 1
      %p511 = scmp.lt.s32.totalorder %s28, 1
      %s512 = scalar_select %p511, %s28, 1
      %s513 = smul.addr %s512, 3
      %s514 = smul.addr %s513, 8
      %s515 = scalar_lea.vmem %s0, %s514
      %p516 = pneg %p49
      %p517 = pneg %p46
      %p518 = scmp.lt.s32.totalorder %s28, 1
      %s519 = scalar_select %p518, %s28, 1
      %s520 = smul.addr %s519, 3
      %s521 = smul.addr %s520, 8
      %s522 = scalar_lea.vmem %s1, %s521
      %p523 = pneg %p75
      %p524 = pneg %p72
      %p525 = scmp.lt.s32.totalorder %s28, 1
      %s526 = scalar_select %p525, %s28, 1
      %s527 = scalar_lea.vmem %s2, %s526
      %p528 = pneg %p101
      %p529 = pneg %p98
      %p530 = pneg %p122
      %p531 = pneg %p119
      %p532 = pneg %p143
      %p533 = pneg %p140
      %p534 = pneg %p164
      %p535 = pneg %p161
      %p536 = pneg %p185
      %p537 = pneg %p182
      %p538 = pneg %p206
      %p539 = pneg %p203
      %p540 = pneg %p227
      %p541 = pneg %p224
      %p542 = pneg %p248
      %p543 = pneg %p245
      %p544 = pneg %p269
      %p545 = pneg %p266
      %p546 = pneg %p290
      %p547 = pneg %p287
      %p548 = pneg %p311
      %p549 = pneg %p308
      %p550 = pneg %p332
      %p551 = pneg %p329
      %p552 = pneg %p353
      %p553 = pneg %p350
      %p554 = pneg %p374
      %p555 = pneg %p371
      %p556 = pneg %p395
      %p557 = pneg %p392
      %p558 = pneg %p421
      %p559 = pneg %p418
      %p560 = scmp.lt.s32.totalorder %s28, 1
      %s561 = scalar_select %p560, %s28, 1
      %s562 = smul.addr %s561, 3
      %s563 = smul.addr %s562, 8
      %s564 = scalar_lea.vmem %s17, %s563
      %p565 = scmp.lt.s32.totalorder %s28, 1
      %s566 = scalar_select %p565, %s28, 1
      %s567 = smul.addr %s566, 3
      %s568 = smul.addr %s567, 8
      %s569 = scalar_lea.vmem %s0, %s568
      %p570 = scmp.lt.s32.totalorder %s28, 1
      %s571 = scalar_select %p570, %s28, 1
      %s572 = smul.addr %s571, 3
      %s573 = smul.addr %s572, 8
      %s574 = scalar_lea.vmem %s1, %s573
      %p575 = scmp.lt.s32.totalorder %s28, 1
      %s576 = scalar_select %p575, %s28, 1
      %s577 = scalar_lea.vmem %s2, %s576
      %p578 = scmp.lt.s32.totalorder %s28, 1
      %s579 = scalar_select %p578, %s28, 1
      %s580 = smul.addr %s579, 3
      %s581 = smul.addr %s580, 8
      %s582 = scalar_lea.vmem %s17, %s581
      %v583 = vld [vmem:[%s574] sm:$0xff]
      %v584 = vld [vmem:[%s574 + $0x8] sm:$0xff]
      %v585 = vld [vmem:[%s574 + $0x10] sm:$0x1]
      %v586 = vld [vmem:[%s569] sm:$0xff]
      %v587 = vld [vmem:[%s569 + $0x8] sm:$0xff]
      %v588 = vld [vmem:[%s569 + $0x10] sm:$0x1]
      %v589 = vld [vmem:[%s3] sm:$0xff]
      %v590 = vld [vmem:[%s3 + $0x8] sm:$0xff]
      %v591 = vld [vmem:[%s3 + $0x10] sm:$0xff]
      %v592 = vld [vmem:[%s3 + $0x18] sm:$0xff]
      %v593 = vld [vmem:[%s4] sm:$0x1]
      %v595 = vlaneseq
      %v596 = vshrl.u32 %v595, 7
      %v597 = vsub.s32 0, %v596
      %v598 = vrot.slane %v593, %v597
      %vm600 = vcmask 261120
      %v602 = vsel %vm600, %v586, 0
      %v605 = vsel %vm600, %v587, 0
      %v608 = vsel %vm600, %v588, 0
      %610 = vmatprep.subr.mxu0 0.0
      %611 = vmatpush1.msra.mxu0 %v589
      %612 = vmatprep.subr.mxu0 0.0
      %613 = vmatpush1.msra.mxu0 %v590
      %614 = vmatprep.subr.mxu0 0.0
      %615 = vmatpush1.msra.mxu0 %v591
      %616 = vmatprep.subr.mxu0 0.0
      %617 = vmatpush1.msra.mxu0 %v592
      %618 = vmatprep.subr.mxu0 0.0
      %619 = vmatpush1.msra.mxu0 0.0
      %620 = vmatprep.subr.mxu0 0.0
      %621 = vmatpush1.msra.mxu0 0.0
      %622 = vmatprep.subr.mxu0 0.0
      %623 = vmatpush1.msra.mxu0 0.0
      %624 = vmatprep.subr.mxu0 0.0
      %625 = vmatpush1.msra.mxu0 0.0
      %626 = vmatprep.subr.mxu0 0.0
      %627 = vmatpush1.msra.mxu0 0.0
      %628 = vmatprep.subr.mxu0 0.0
      %629 = vmatpush1.msra.mxu0 0.0
      %630 = vmatprep.subr.mxu0 0.0
      %631 = vmatpush1.msra.mxu0 0.0
      %632 = vmatprep.subr.mxu0 0.0
      %633 = vmatpush1.msra.mxu0 0.0
      %634 = vmatprep.subr.mxu0 0.0
      %635 = vmatpush1.msra.mxu0 0.0
      %636 = vmatprep.subr.mxu0 0.0
      %637 = vmatpush1.msra.mxu0 0.0
      %638 = vmatprep.subr.mxu0 0.0
      %639 = vmatpush1.msra.mxu0 0.0
      %640 = vmatprep.subr.mxu0 0.0
      %641 = vmatpush1.msra.mxu0 0.0
      %642 = vmatprep.subr.mxu0 0.0
      %643 = vmatpush1.msra.mxu0 0.0
      %644 = vmatprep.subr.mxu0 0.0
      %645 = vmatpush1.msra.mxu0 0.0
      %646 = vmatprep.subr.mxu0 0.0
      %647 = vmatpush1.msra.mxu0 0.0
      %648 = vmatprep.subr.mxu0 0.0
      %649 = vmatpush1.msra.mxu0 0.0
      %650 = vmatprep.subr.mxu0 0.0
      %651 = vmatpush1.msra.mxu0 0.0
      %652 = vmatprep.subr.mxu0 0.0
      %653 = vmatpush1.msra.mxu0 0.0
      %654 = vmatprep.subr.mxu0 0.0
      %655 = vmatpush1.msra.mxu0 0.0
      %656 = vmatprep.subr.mxu0 0.0
      %657 = vmatpush1.msra.mxu0 0.0
      %658 = vmatprep.subr.mxu0 0.0
      %659 = vmatpush1.msra.mxu0 0.0
      %660 = vmatprep.subr.mxu0 0.0
      %661 = vmatpush1.msra.mxu0 0.0
      %662 = vmatprep.subr.mxu0 0.0
      %663 = vmatpush1.msra.mxu0 0.0
      %664 = vmatprep.subr.mxu0 0.0
      %665 = vmatpush1.msra.mxu0 0.0
      %666 = vmatprep.subr.mxu0 0.0
      %667 = vmatpush1.msra.mxu0 0.0
      %668 = vmatprep.subr.mxu0 0.0
      %669 = vmatpush1.msra.mxu0 0.0
      %670 = vmatprep.subr.mxu0 0.0
      %671 = vmatpush1.msra.mxu0 0.0
      %672 = vmatprep.subr.mxu0 0.0
      %673 = vmatpush1.msra.mxu0 0.0
      %674 = vmatprep.mubr.f32.mxu0 0.0
      %675 = vmatmul.mubr.f32.gmra.mrb[0].mxu0 %v602
      %v676 = vpop.f32.mrb[0].mxu0
      %v677 = vadd.f32 %v598, %v676
      %v678 = vpop.f32.mrb[0].mxu0
      %679 = vmatprep.mubr.f32.mxu0 0.0
      %680 = vmatmul.mubr.f32.gmra.mrb[0].mxu0 %v605
      %v681 = vpop.f32.mrb[0].mxu0
      %v682 = vadd.f32 %v598, %v681
      %v683 = vpop.f32.mrb[0].mxu0
      %684 = vmatprep.mubr.f32.mxu0 0.0
      %685 = vmatmul.mubr.f32.gmra.mrb[0].mxu0 %v608
      %v686 = vpop.f32.mrb[0].mxu0
      %v687 = vadd.f32 %v598, %v686
      %v688 = vpop.f32.mrb[0].mxu0
      %689 = vdwg.mxu0
      %v690 = vmul.f32 %v677, %v677
      %v691 = vmul.f32 %v682, %v682
      %v692 = vmul.f32 %v687, %v687
      %v693 = vmul.f32 %v677, %v690
      %v694 = vmul.f32 %v682, %v691
      %v695 = vmul.f32 %v687, %v692
      %v696 = vmul.f32 %v693, 0.044715
      %v697 = vmul.f32 %v694, 0.044715
      %v698 = vmul.f32 %v695, 0.044715
      %v699 = vadd.f32 %v677, %v696
      %v700 = vadd.f32 %v682, %v697
      %v701 = vadd.f32 %v687, %v698
      %v702 = vmul.f32 %v699, 0.7978846
      %v703 = vmul.f32 %v700, 0.7978846
      %v704 = vmul.f32 %v701, 0.7978846
      %v705 = vtanh.pop %v702
      %v706 = vtanh.pop %v703
      %v707 = vtanh.pop %v704
      %v708 = vadd.f32 %v705, 1.0
      %v709 = vadd.f32 %v706, 1.0
      %v710 = vadd.f32 %v707, 1.0
      %v711 = vmul.f32 %v708, 0.5
      %v712 = vmul.f32 %v709, 0.5
      %v713 = vmul.f32 %v710, 0.5
      %v714 = vmul.f32 %v677, %v711
      %v715 = vmul.f32 %v682, %v712
      %v716 = vmul.f32 %v687, %v713
      %v717 = vadd.f32 %v583, %v714
      %v718 = vadd.f32 %v584, %v715
      %v719 = vadd.f32 %v585, %v716
      %v720 = vld [vmem:[%s577] sm:$0x1]
      %v721 = vld [vmem:[%s5] sm:$0x1]
      %v722 = vld [vmem:[%s6] sm:$0x1]
      %v723 = vld [vmem:[%s10] sm:$0x1]
      %v724 = vld [vmem:[%s11] sm:$0x1]
      %v725 = vld [vmem:[%s12] sm:$0x1]
      %v726 = vld [vmem:[%s13] sm:$0xff]
      %v727 = vld [vmem:[%s13 + $0x8] sm:$0xff]
      %v728 = vld [vmem:[%s13 + $0x10] sm:$0xff]
      %v729 = vld [vmem:[%s13 + $0x18] sm:$0xff]
      %v730 = vld [vmem:[%s14] sm:$0x1]
      %v731 = vld [vmem:[%s15] sm:$0xff]
      %v732 = vld [vmem:[%s15 + $0x8] sm:$0xff]
      %v733 = vld [vmem:[%s15 + $0x10] sm:$0xff]
      %v734 = vld [vmem:[%s15 + $0x18] sm:$0xff]
      %v735 = vld [vmem:[%s15 + $0x20] sm:$0xff]
      %v736 = vld [vmem:[%s15 + $0x28] sm:$0xff]
      %v737 = vld [vmem:[%s15 + $0x30] sm:$0xff]
      %v738 = vld [vmem:[%s15 + $0x38] sm:$0xff]
      %v739 = vld [vmem:[%s16] sm:$0x1]
      %v740 = vsel %vm600, %v717, 0.0
      %741 = vadd.xlane.f32.xlu0 %v740
      %v742 = vpop.xlane.xlu0 %741
      %v743 = vsel %vm600, %v718, 0.0
      %744 = vadd.xlane.f32.xlu0 %v743
      %v745 = vpop.xlane.xlu0 %744
      %vm746 = vcmask 253952
      %v747 = vsel %vm746, %v719, 0.0
      %748 = vadd.xlane.f32.xlu0 %v747
      %v749 = vpop.xlane.xlu0 %748
      %v750 = vrcp.pop 32.0
      %v751 = vmul.f32 %v742, %v750
      %v752 = vmul.f32 %v745, %v750
      %v753 = vmul.f32 %v749, %v750
      %v754 = vsub.f32 %v717, %v751
      %v755 = vsub.f32 %v718, %v752
      %v756 = vsub.f32 %v719, %v753
      %v757 = vmul.f32 %v754, %v754
      %v758 = vmul.f32 %v755, %v755
      %v759 = vmul.f32 %v756, %v756
      %v760 = vsel %vm600, %v757, 0.0
      %761 = vadd.xlane.f32.xlu0 %v760
      %v762 = vpop.xlane.xlu0 %761
      %v763 = vsel %vm600, %v758, 0.0
      %764 = vadd.xlane.f32.xlu0 %v763
      %v765 = vpop.xlane.xlu0 %764
      %v766 = vsel %vm746, %v759, 0.0
      %767 = vadd.xlane.f32.xlu0 %v766
      %v768 = vpop.xlane.xlu0 %767
      %v769 = vmul.f32 %v762, %v750
      %v770 = vmul.f32 %v765, %v750
      %v771 = vmul.f32 %v768, %v750
      %v772 = vadd.f32 %v769, 1e-12
      %v773 = vadd.f32 %v770, 1e-12
      %v774 = vadd.f32 %v771, 1e-12
      %v775 = vrsqrt.pop %v772
      %v776 = vrsqrt.pop %v773
      %v777 = vrsqrt.pop %v774
      %v778 = vmul.f32 %v754, %v775
      %v779 = vmul.f32 %v755, %v776
      %v780 = vmul.f32 %v756, %v777
      %v782 = vlaneseq
      %v783 = vshrl.u32 %v782, 7
      %v784 = vsub.s32 0, %v783
      %v785 = vrot.slane %v721, %v784
      %v787 = vmul.f32 %v778, %v785
      %v788 = vmul.f32 %v779, %v785
      %v789 = vmul.f32 %v780, %v785
      %v791 = vlaneseq
      %v792 = vshrl.u32 %v791, 7
      %v793 = vsub.s32 0, %v792
      %v794 = vrot.slane %v722, %v793
      %v796 = vadd.f32 %v787, %v794
      %v797 = vadd.f32 %v788, %v794
      %v798 = vadd.f32 %v789, %v794
      %v799 = vld [vmem:[%s7] sm:$0xff]
      %v800 = vld [vmem:[%s7 + $0x8] sm:$0xff]
      %v801 = vld [vmem:[%s7 + $0x10] sm:$0xff]
      %v802 = vld [vmem:[%s7 + $0x18] sm:$0xff]
      %v803 = vld [vmem:[%s8] sm:$0x1]
      %v805 = vlaneseq
      %v806 = vshrl.u32 %v805, 7
      %v807 = vsub.s32 0, %v806
      %v808 = vrot.slane %v803, %v807
      %v811 = vsel %vm600, %v796, 0
      %v814 = vsel %vm600, %v797, 0
      %v817 = vsel %vm600, %v798, 0
      %819 = vmatprep.subr.mxu0 0.0
      %820 = vmatpush1.msra.mxu0 %v799
      %821 = vmatprep.subr.mxu0 0.0
      %822 = vmatpush1.msra.mxu0 %v800
      %823 = vmatprep.subr.mxu0 0.0
      %824 = vmatpush1.msra.mxu0 %v801
      %825 = vmatprep.subr.mxu0 0.0
      %826 = vmatpush1.msra.mxu0 %v802
      %827 = vmatprep.subr.mxu0 0.0
      %828 = vmatpush1.msra.mxu0 0.0
      %829 = vmatprep.subr.mxu0 0.0
      %830 = vmatpush1.msra.mxu0 0.0
      %831 = vmatprep.subr.mxu0 0.0
      %832 = vmatpush1.msra.mxu0 0.0
      %833 = vmatprep.subr.mxu0 0.0
      %834 = vmatpush1.msra.mxu0 0.0
      %835 = vmatprep.subr.mxu0 0.0
      %836 = vmatpush1.msra.mxu0 0.0
      %837 = vmatprep.subr.mxu0 0.0
      %838 = vmatpush1.msra.mxu0 0.0
      %839 = vmatprep.subr.mxu0 0.0
      %840 = vmatpush1.msra.mxu0 0.0
      %841 = vmatprep.subr.mxu0 0.0
      %842 = vmatpush1.msra.mxu0 0.0
      %843 = vmatprep.subr.mxu0 0.0
      %844 = vmatpush1.msra.mxu0 0.0
      %845 = vmatprep.subr.mxu0 0.0
      %846 = vmatpush1.msra.mxu0 0.0
      %847 = vmatprep.subr.mxu0 0.0
      %848 = vmatpush1.msra.mxu0 0.0
      %849 = vmatprep.subr.mxu0 0.0
      %850 = vmatpush1.msra.mxu0 0.0
      %851 = vmatprep.subr.mxu0 0.0
      %852 = vmatpush1.msra.mxu0 0.0
      %853 = vmatprep.subr.mxu0 0.0
      %854 = vmatpush1.msra.mxu0 0.0
      %855 = vmatprep.subr.mxu0 0.0
      %856 = vmatpush1.msra.mxu0 0.0
      %857 = vmatprep.subr.mxu0 0.0
      %858 = vmatpush1.msra.mxu0 0.0
      %859 = vmatprep.subr.mxu0 0.0
      %860 = vmatpush1.msra.mxu0 0.0
      %861 = vmatprep.subr.mxu0 0.0
      %862 = vmatpush1.msra.mxu0 0.0
      %863 = vmatprep.subr.mxu0 0.0
      %864 = vmatpush1.msra.mxu0 0.0
      %865 = vmatprep.subr.mxu0 0.0
      %866 = vmatpush1.msra.mxu0 0.0
      %867 = vmatprep.subr.mxu0 0.0
      %868 = vmatpush1.msra.mxu0 0.0
      %869 = vmatprep.subr.mxu0 0.0
      %870 = vmatpush1.msra.mxu0 0.0
      %871 = vmatprep.subr.mxu0 0.0
      %872 = vmatpush1.msra.mxu0 0.0
      %873 = vmatprep.subr.mxu0 0.0
      %874 = vmatpush1.msra.mxu0 0.0
      %875 = vmatprep.subr.mxu0 0.0
      %876 = vmatpush1.msra.mxu0 0.0
      %877 = vmatprep.subr.mxu0 0.0
      %878 = vmatpush1.msra.mxu0 0.0
      %879 = vmatprep.subr.mxu0 0.0
      %880 = vmatpush1.msra.mxu0 0.0
      %881 = vmatprep.subr.mxu0 0.0
      %882 = vmatpush1.msra.mxu0 0.0
      %883 = vmatprep.mubr.f32.mxu0 0.0
      %884 = vmatmul.mubr.f32.gmra.mrb[0].mxu0 %v811
      %v885 = vpop.f32.mrb[0].mxu0
      %v886 = vadd.f32 %v808, %v885
      %v887 = vpop.f32.mrb[0].mxu0
      %888 = vmatprep.mubr.f32.mxu0 0.0
      %889 = vmatmul.mubr.f32.gmra.mrb[0].mxu0 %v814
      %v890 = vpop.f32.mrb[0].mxu0
      %v891 = vadd.f32 %v808, %v890
      %v892 = vpop.f32.mrb[0].mxu0
      %893 = vmatprep.mubr.f32.mxu0 0.0
      %894 = vmatmul.mubr.f32.gmra.mrb[0].mxu0 %v817
      %v895 = vpop.f32.mrb[0].mxu0
      %v896 = vadd.f32 %v808, %v895
      %v897 = vpop.f32.mrb[0].mxu0
      %898 = vdwg.mxu0
      %s899 = scalar_lea.vmem %s7, 128
      %v900 = vld [vmem:[%s899] sm:$0xff]
      %v901 = vld [vmem:[%s899 + $0x8] sm:$0xff]
      %v902 = vld [vmem:[%s899 + $0x10] sm:$0xff]
      %v903 = vld [vmem:[%s899 + $0x18] sm:$0xff]
      %s904 = scalar_lea.vmem %s8, 4
      %v905 = vld [vmem:[%s904] sm:$0x1]
      %v907 = vlaneseq
      %v908 = vshrl.u32 %v907, 7
      %v909 = vsub.s32 0, %v908
      %v910 = vrot.slane %v905, %v909
      %912 = vmatprep.subr.mxu0 0.0
      %913 = vmatpush1.msra.mxu0 %v900
      %914 = vmatprep.subr.mxu0 0.0
      %915 = vmatpush1.msra.mxu0 %v901
      %916 = vmatprep.subr.mxu0 0.0
      %917 = vmatpush1.msra.mxu0 %v902
      %918 = vmatprep.subr.mxu0 0.0
      %919 = vmatpush1.msra.mxu0 %v903
      %920 = vmatprep.subr.mxu0 0.0
      %921 = vmatpush1.msra.mxu0 0.0
      %922 = vmatprep.subr.mxu0 0.0
      %923 = vmatpush1.msra.mxu0 0.0
      %924 = vmatprep.subr.mxu0 0.0
      %925 = vmatpush1.msra.mxu0 0.0
      %926 = vmatprep.subr.mxu0 0.0
      %927 = vmatpush1.msra.mxu0 0.0
      %928 = vmatprep.subr.mxu0 0.0
      %929 = vmatpush1.msra.mxu0 0.0
      %930 = vmatprep.subr.mxu0 0.0
      %931 = vmatpush1.msra.mxu0 0.0
      %932 = vmatprep.subr.mxu0 0.0
      %933 = vmatpush1.msra.mxu0 0.0
      %934 = vmatprep.subr.mxu0 0.0
      %935 = vmatpush1.msra.mxu0 0.0
      %936 = vmatprep.subr.mxu0 0.0
      %937 = vmatpush1.msra.mxu0 0.0
      %938 = vmatprep.subr.mxu0 0.0
      %939 = vmatpush1.msra.mxu0 0.0
      %940 = vmatprep.subr.mxu0 0.0
      %941 = vmatpush1.msra.mxu0 0.0
      %942 = vmatprep.subr.mxu0 0.0
      %943 = vmatpush1.msra.mxu0 0.0
      %944 = vmatprep.subr.mxu0 0.0
      %945 = vmatpush1.msra.mxu0 0.0
      %946 = vmatprep.subr.mxu0 0.0
      %947 = vmatpush1.msra.mxu0 0.0
      %948 = vmatprep.subr.mxu0 0.0
      %949 = vmatpush1.msra.mxu0 0.0
      %950 = vmatprep.subr.mxu0 0.0
      %951 = vmatpush1.msra.mxu0 0.0
      %952 = vmatprep.subr.mxu0 0.0
      %953 = vmatpush1.msra.mxu0 0.0
      %954 = vmatprep.subr.mxu0 0.0
      %955 = vmatpush1.msra.mxu0 0.0
      %956 = vmatprep.subr.mxu0 0.0
      %957 = vmatpush1.msra.mxu0 0.0
      %958 = vmatprep.subr.mxu0 0.0
      %959 = vmatpush1.msra.mxu0 0.0
      %960 = vmatprep.subr.mxu0 0.0
      %961 = vmatpush1.msra.mxu0 0.0
      %962 = vmatprep.subr.mxu0 0.0
      %963 = vmatpush1.msra.mxu0 0.0
      %964 = vmatprep.subr.mxu0 0.0
      %965 = vmatpush1.msra.mxu0 0.0
      %966 = vmatprep.subr.mxu0 0.0
      %967 = vmatpush1.msra.mxu0 0.0
      %968 = vmatprep.subr.mxu0 0.0
      %969 = vmatpush1.msra.mxu0 0.0
      %970 = vmatprep.subr.mxu0 0.0
      %971 = vmatpush1.msra.mxu0 0.0
      %972 = vmatprep.subr.mxu0 0.0
      %973 = vmatpush1.msra.mxu0 0.0
      %974 = vmatprep.subr.mxu0 0.0
      %975 = vmatpush1.msra.mxu0 0.0
      %976 = vmatprep.mubr.f32.mxu0 0.0
      %977 = vmatmul.mubr.f32.gmra.mrb[0].mxu0 %v811
      %v978 = vpop.f32.mrb[0].mxu0
      %v979 = vadd.f32 %v910, %v978
      %v980 = vpop.f32.mrb[0].mxu0
      %981 = vmatprep.mubr.f32.mxu0 0.0
      %982 = vmatmul.mubr.f32.gmra.mrb[0].mxu0 %v814
      %v983 = vpop.f32.mrb[0].mxu0
      %v984 = vadd.f32 %v910, %v983
      %v985 = vpop.f32.mrb[0].mxu0
      %986 = vmatprep.mubr.f32.mxu0 0.0
      %987 = vmatmul.mubr.f32.gmra.mrb[0].mxu0 %v817
      %v988 = vpop.f32.mrb[0].mxu0
      %v989 = vadd.f32 %v910, %v988
      %v990 = vpop.f32.mrb[0].mxu0
      %991 = vdwg.mxu0
      %s992 = scalar_lea.vmem %s7, 256
      %v993 = vld [vmem:[%s992] sm:$0xff]
      %v994 = vld [vmem:[%s992 + $0x8] sm:$0xff]
      %v995 = vld [vmem:[%s992 + $0x10] sm:$0xff]
      %v996 = vld [vmem:[%s992 + $0x18] sm:$0xff]
      %s997 = scalar_lea.vmem %s8, 8
      %v998 = vld [vmem:[%s997] sm:$0x1]
      %v1000 = vlaneseq
      %v1001 = vshrl.u32 %v1000, 7
      %v1002 = vsub.s32 0, %v1001
      %v1003 = vrot.slane %v998, %v1002
      %1005 = vmatprep.subr.mxu0 0.0
      %1006 = vmatpush1.msra.mxu0 %v993
      %1007 = vmatprep.subr.mxu0 0.0
      %1008 = vmatpush1.msra.mxu0 %v994
      %1009 = vmatprep.subr.mxu0 0.0
      %1010 = vmatpush1.msra.mxu0 %v995
      %1011 = vmatprep.subr.mxu0 0.0
      %1012 = vmatpush1.msra.mxu0 %v996
      %1013 = vmatprep.subr.mxu0 0.0
      %1014 = vmatpush1.msra.mxu0 0.0
      %1015 = vmatprep.subr.mxu0 0.0
      %1016 = vmatpush1.msra.mxu0 0.0
      %1017 = vmatprep.subr.mxu0 0.0
      %1018 = vmatpush1.msra.mxu0 0.0
      %1019 = vmatprep.subr.mxu0 0.0
      %1020 = vmatpush1.msra.mxu0 0.0
      %1021 = vmatprep.subr.mxu0 0.0
      %1022 = vmatpush1.msra.mxu0 0.0
      %1023 = vmatprep.subr.mxu0 0.0
      %1024 = vmatpush1.msra.mxu0 0.0
      %1025 = vmatprep.subr.mxu0 0.0
      %1026 = vmatpush1.msra.mxu0 0.0
      %1027 = vmatprep.subr.mxu0 0.0
      %1028 = vmatpush1.msra.mxu0 0.0
      %1029 = vmatprep.subr.mxu0 0.0
      %1030 = vmatpush1.msra.mxu0 0.0
      %1031 = vmatprep.subr.mxu0 0.0
      %1032 = vmatpush1.msra.mxu0 0.0
      %1033 = vmatprep.subr.mxu0 0.0
      %1034 = vmatpush1.msra.mxu0 0.0
      %1035 = vmatprep.subr.mxu0 0.0
      %1036 = vmatpush1.msra.mxu0 0.0
      %1037 = vmatprep.subr.mxu0 0.0
      %1038 = vmatpush1.msra.mxu0 0.0
      %1039 = vmatprep.subr.mxu0 0.0
      %1040 = vmatpush1.msra.mxu0 0.0
      %1041 = vmatprep.subr.mxu0 0.0
      %1042 = vmatpush1.msra.mxu0 0.0
      %1043 = vmatprep.subr.mxu0 0.0
      %1044 = vmatpush1.msra.mxu0 0.0
      %1045 = vmatprep.subr.mxu0 0.0
      %1046 = vmatpush1.msra.mxu0 0.0
      %1047 = vmatprep.subr.mxu0 0.0
      %1048 = vmatpush1.msra.mxu0 0.0
      %1049 = vmatprep.subr.mxu0 0.0
      %1050 = vmatpush1.msra.mxu0 0.0
      %1051 = vmatprep.subr.mxu0 0.0
      %1052 = vmatpush1.msra.mxu0 0.0
      %1053 = vmatprep.subr.mxu0 0.0
      %1054 = vmatpush1.msra.mxu0 0.0
      %1055 = vmatprep.subr.mxu0 0.0
      %1056 = vmatpush1.msra.mxu0 0.0
      %1057 = vmatprep.subr.mxu0 0.0
      %1058 = vmatpush1.msra.mxu0 0.0
      %1059 = vmatprep.subr.mxu0 0.0
      %1060 = vmatpush1.msra.mxu0 0.0
      %1061 = vmatprep.subr.mxu0 0.0
      %1062 = vmatpush1.msra.mxu0 0.0
      %1063 = vmatprep.subr.mxu0 0.0
      %1064 = vmatpush1.msra.mxu0 0.0
      %1065 = vmatprep.subr.mxu0 0.0
      %1066 = vmatpush1.msra.mxu0 0.0
      %1067 = vmatprep.subr.mxu0 0.0
      %1068 = vmatpush1.msra.mxu0 0.0
      %1069 = vmatprep.mubr.f32.mxu0 0.0
      %1070 = vmatmul.mubr.f32.gmra.mrb[0].mxu0 %v811
      %v1071 = vpop.f32.mrb[0].mxu0
      %v1072 = vadd.f32 %v1003, %v1071
      %v1073 = vpop.f32.mrb[0].mxu0
      %1074 = vmatprep.mubr.f32.mxu0 0.0
      %1075 = vmatmul.mubr.f32.gmra.mrb[0].mxu0 %v814
      %v1076 = vpop.f32.mrb[0].mxu0
      %v1077 = vadd.f32 %v1003, %v1076
      %v1078 = vpop.f32.mrb[0].mxu0
      %1079 = vmatprep.mubr.f32.mxu0 0.0
      %1080 = vmatmul.mubr.f32.gmra.mrb[0].mxu0 %v817
      %v1081 = vpop.f32.mrb[0].mxu0
      %v1082 = vadd.f32 %v1003, %v1081
      %v1083 = vpop.f32.mrb[0].mxu0
      %1084 = vdwg.mxu0
      %vm1085 = vcmask 64512
      %v1087 = vsel %vm1085, %v886, 0
      %v1090 = vsel %vm1085, %v891, 0
      %v1093 = vsel %vm1085, %v896, 0
      %v1096 = vsel %vm1085, %v979, 0
      %v1099 = vsel %vm1085, %v984, 0
      %v1102 = vsel %vm1085, %v989, 0
      %1104 = vmatprep.subr.mxu0 0.0
      %1105 = vmatpush1.xpose.msra.mxu0 %v1096
      %1106 = vmatprep.subr.mxu0 0.0
      %1107 = vmatpush1.xpose.msra.mxu0 %v1099
      %1108 = vmatprep.subr.mxu0 0.0
      %1109 = vmatpush1.xpose.msra.mxu0 %v1102
      %1110 = vmatprep.subr.mxu0 0.0
      %1111 = vmatpush1.xpose.msra.mxu0 0.0
      %1112 = vmatprep.subr.mxu0 0.0
      %1113 = vmatpush1.xpose.msra.mxu0 0.0
      %1114 = vmatprep.subr.mxu0 0.0
      %1115 = vmatpush1.xpose.msra.mxu0 0.0
      %1116 = vmatprep.subr.mxu0 0.0
      %1117 = vmatpush1.xpose.msra.mxu0 0.0
      %1118 = vmatprep.subr.mxu0 0.0
      %1119 = vmatpush1.xpose.msra.mxu0 0.0
      %1120 = vmatprep.subr.mxu0 0.0
      %1121 = vmatpush1.xpose.msra.mxu0 0.0
      %1122 = vmatprep.subr.mxu0 0.0
      %1123 = vmatpush1.xpose.msra.mxu0 0.0
      %1124 = vmatprep.subr.mxu0 0.0
      %1125 = vmatpush1.xpose.msra.mxu0 0.0
      %1126 = vmatprep.subr.mxu0 0.0
      %1127 = vmatpush1.xpose.msra.mxu0 0.0
      %1128 = vmatprep.subr.mxu0 0.0
      %1129 = vmatpush1.xpose.msra.mxu0 0.0
      %1130 = vmatprep.subr.mxu0 0.0
      %1131 = vmatpush1.xpose.msra.mxu0 0.0
      %1132 = vmatprep.subr.mxu0 0.0
      %1133 = vmatpush1.xpose.msra.mxu0 0.0
      %1134 = vmatprep.subr.mxu0 0.0
      %1135 = vmatpush1.xpose.msra.mxu0 0.0
      %1136 = vmatprep.subr.mxu0 0.0
      %1137 = vmatpush1.xpose.msra.mxu0 0.0
      %1138 = vmatprep.subr.mxu0 0.0
      %1139 = vmatpush1.xpose.msra.mxu0 0.0
      %1140 = vmatprep.subr.mxu0 0.0
      %1141 = vmatpush1.xpose.msra.mxu0 0.0
      %1142 = vmatprep.subr.mxu0 0.0
      %1143 = vmatpush1.xpose.msra.mxu0 0.0
      %1144 = vmatprep.subr.mxu0 0.0
      %1145 = vmatpush1.xpose.msra.mxu0 0.0
      %1146 = vmatprep.subr.mxu0 0.0
      %1147 = vmatpush1.xpose.msra.mxu0 0.0
      %1148 = vmatprep.subr.mxu0 0.0
      %1149 = vmatpush1.xpose.msra.mxu0 0.0
      %1150 = vmatprep.subr.mxu0 0.0
      %1151 = vmatpush1.xpose.msra.mxu0 0.0
      %1152 = vmatprep.subr.mxu0 0.0
      %1153 = vmatpush1.xpose.msra.mxu0 0.0
      %1154 = vmatprep.subr.mxu0 0.0
      %1155 = vmatpush1.xpose.msra.mxu0 0.0
      %1156 = vmatprep.subr.mxu0 0.0
      %1157 = vmatpush1.xpose.msra.mxu0 0.0
      %1158 = vmatprep.subr.mxu0 0.0
      %1159 = vmatpush1.xpose.msra.mxu0 0.0
      %1160 = vmatprep.subr.mxu0 0.0
      %1161 = vmatpush1.xpose.msra.mxu0 0.0
      %1162 = vmatprep.subr.mxu0 0.0
      %1163 = vmatpush1.xpose.msra.mxu0 0.0
      %1164 = vmatprep.subr.mxu0 0.0
      %1165 = vmatpush1.xpose.msra.mxu0 0.0
      %1166 = vmatprep.subr.mxu0 0.0
      %1167 = vmatpush1.xpose.msra.mxu0 0.0
      %1168 = vmatprep.mubr.f32.mxu0 0.0
      %1169 = vmatmul.mubr.f32.gmra.mrb[0].mxu0 %v1087
      %v1170 = vpop.f32.mrb[0].mxu0
      %v1171 = vadd.f32 0.0, %v1170
      %v1172 = vpop.f32.mrb[0].mxu0
      %1173 = vmatprep.mubr.f32.mxu0 0.0
      %1174 = vmatmul.mubr.f32.gmra.mrb[0].mxu0 %v1090
      %v1175 = vpop.f32.mrb[0].mxu0
      %v1176 = vadd.f32 0.0, %v1175
      %v1177 = vpop.f32.mrb[0].mxu0
      %1178 = vmatprep.mubr.f32.mxu0 0.0
      %1179 = vmatmul.mubr.f32.gmra.mrb[0].mxu0 %v1093
      %v1180 = vpop.f32.mrb[0].mxu0
      %v1181 = vadd.f32 0.0, %v1180
      %v1182 = vpop.f32.mrb[0].mxu0
      %1183 = vdwg.mxu0
      %v1184 = vmul.f32 %v1171, 0.35355338
      %v1185 = vmul.f32 %v1176, 0.35355338
      %v1186 = vmul.f32 %v1181, 0.35355338
      %v1188 = vlaneseq
      %v1189 = vshrl.u32 %v1188, 7
      %v1190 = vsub.s32 0, %v1189
      %v1191 = vrot.slane %v720, %v1190
      %v1193 = vadd.f32 %v1184, %v1191
      %v1194 = vadd.f32 %v1185, %v1191
      %v1195 = vadd.f32 %v1186, %v1191
      %vm1196 = vcmask 138240
      %v1197 = vsel %vm1196, %v1193, -inf
      %1198 = vmax.xlane.f32.xlu0 %v1197
      %v1199 = vpop.xlane.xlu0 %1198
      %v1200 = vsel %vm1196, %v1194, -inf
      %1201 = vmax.xlane.f32.xlu0 %v1200
      %v1202 = vpop.xlane.xlu0 %1201
      %vm1203 = vcmask 131072
      %v1204 = vsel %vm1203, %v1195, -inf
      %1205 = vmax.xlane.f32.xlu0 %v1204
      %v1206 = vpop.xlane.xlu0 %1205
      %v1207 = vsub.f32 %v1193, %v1199
      %v1208 = vsub.f32 %v1194, %v1202
      %v1209 = vsub.f32 %v1195, %v1206
      %v1210 = vmul.f32 %v1207, 1.442695
      %v1211 = vpow.pop %v1210
      %v1212 = vmul.f32 %v1208, 1.442695
      %v1213 = vpow.pop %v1212
      %v1214 = vmul.f32 %v1209, 1.442695
      %v1215 = vpow.pop %v1214
      %v1216 = vsel %vm1196, %v1211, 0.0
      %1217 = vadd.xlane.f32.xlu0 %v1216
      %v1218 = vpop.xlane.xlu0 %1217
      %v1219 = vsel %vm1196, %v1213, 0.0
      %1220 = vadd.xlane.f32.xlu0 %v1219
      %v1221 = vpop.xlane.xlu0 %1220
      %v1222 = vsel %vm1203, %v1215, 0.0
      %1223 = vadd.xlane.f32.xlu0 %v1222
      %v1224 = vpop.xlane.xlu0 %1223
      %v1225 = vrcp.pop %v1218
      %v1226 = vrcp.pop %v1221
      %v1227 = vrcp.pop %v1224
      %v1228 = vmul.f32 %v1211, %v1225
      %v1229 = vmul.f32 %v1213, %v1226
      %v1230 = vmul.f32 %v1215, %v1227
      %v1232 = vsel %vm1196, %v1228, 0
      %v1235 = vsel %vm1196, %v1229, 0
      %v1238 = vsel %vm1196, %v1230, 0
      %vm1240 = vcmask 1040384
      %v1242 = vsel %vm1240, %v1082, 0
      %1244 = vmatprep.subr.mxu0 0.0
      %1245 = vmatpush1.msra.mxu0 %v1072
      %1246 = vmatprep.subr.mxu0 0.0
      %1247 = vmatpush1.msra.mxu0 %v1077
      %1248 = vmatprep.subr.mxu0 0.0
      %1249 = vmatpush1.msra.mxu0 %v1242
      %1250 = vmatprep.subr.mxu0 0.0
      %1251 = vmatpush1.msra.mxu0 0.0
      %1252 = vmatprep.subr.mxu0 0.0
      %1253 = vmatpush1.msra.mxu0 0.0
      %1254 = vmatprep.subr.mxu0 0.0
      %1255 = vmatpush1.msra.mxu0 0.0
      %1256 = vmatprep.subr.mxu0 0.0
      %1257 = vmatpush1.msra.mxu0 0.0
      %1258 = vmatprep.subr.mxu0 0.0
      %1259 = vmatpush1.msra.mxu0 0.0
      %1260 = vmatprep.subr.mxu0 0.0
      %1261 = vmatpush1.msra.mxu0 0.0
      %1262 = vmatprep.subr.mxu0 0.0
      %1263 = vmatpush1.msra.mxu0 0.0
      %1264 = vmatprep.subr.mxu0 0.0
      %1265 = vmatpush1.msra.mxu0 0.0
      %1266 = vmatprep.subr.mxu0 0.0
      %1267 = vmatpush1.msra.mxu0 0.0
      %1268 = vmatprep.subr.mxu0 0.0
      %1269 = vmatpush1.msra.mxu0 0.0
      %1270 = vmatprep.subr.mxu0 0.0
      %1271 = vmatpush1.msra.mxu0 0.0
      %1272 = vmatprep.subr.mxu0 0.0
      %1273 = vmatpush1.msra.mxu0 0.0
      %1274 = vmatprep.subr.mxu0 0.0
      %1275 = vmatpush1.msra.mxu0 0.0
      %1276 = vmatprep.subr.mxu0 0.0
      %1277 = vmatpush1.msra.mxu0 0.0
      %1278 = vmatprep.subr.mxu0 0.0
      %1279 = vmatpush1.msra.mxu0 0.0
      %1280 = vmatprep.subr.mxu0 0.0
      %1281 = vmatpush1.msra.mxu0 0.0
      %1282 = vmatprep.subr.mxu0 0.0
      %1283 = vmatpush1.msra.mxu0 0.0
      %1284 = vmatprep.subr.mxu0 0.0
      %1285 = vmatpush1.msra.mxu0 0.0
      %1286 = vmatprep.subr.mxu0 0.0
      %1287 = vmatpush1.msra.mxu0 0.0
      %1288 = vmatprep.subr.mxu0 0.0
      %1289 = vmatpush1.msra.mxu0 0.0
      %1290 = vmatprep.subr.mxu0 0.0
      %1291 = vmatpush1.msra.mxu0 0.0
      %1292 = vmatprep.subr.mxu0 0.0
      %1293 = vmatpush1.msra.mxu0 0.0
      %1294 = vmatprep.subr.mxu0 0.0
      %1295 = vmatpush1.msra.mxu0 0.0
      %1296 = vmatprep.subr.mxu0 0.0
      %1297 = vmatpush1.msra.mxu0 0.0
      %1298 = vmatprep.subr.mxu0 0.0
      %1299 = vmatpush1.msra.mxu0 0.0
      %1300 = vmatprep.subr.mxu0 0.0
      %1301 = vmatpush1.msra.mxu0 0.0
      %1302 = vmatprep.subr.mxu0 0.0
      %1303 = vmatpush1.msra.mxu0 0.0
      %1304 = vmatprep.subr.mxu0 0.0
      %1305 = vmatpush1.msra.mxu0 0.0
      %1306 = vmatprep.subr.mxu0 0.0
      %1307 = vmatpush1.msra.mxu0 0.0
      %1308 = vmatprep.mubr.f32.mxu0 0.0
      %1309 = vmatmul.mubr.f32.gmra.mrb[0].mxu0 %v1232
      %v1310 = vpop.f32.mrb[0].mxu0
      %v1311 = vadd.f32 0.0, %v1310
      %v1312 = vpop.f32.mrb[0].mxu0
      %1313 = vmatprep.mubr.f32.mxu0 0.0
      %1314 = vmatmul.mubr.f32.gmra.mrb[0].mxu0 %v1235
      %v1315 = vpop.f32.mrb[0].mxu0
      %v1316 = vadd.f32 0.0, %v1315
      %v1317 = vpop.f32.mrb[0].mxu0
      %1318 = vmatprep.mubr.f32.mxu0 0.0
      %1319 = vmatmul.mubr.f32.gmra.mrb[0].mxu0 %v1238
      %v1320 = vpop.f32.mrb[0].mxu0
      %v1321 = vadd.f32 0.0, %v1320
      %v1322 = vpop.f32.mrb[0].mxu0
      %1323 = vdwg.mxu0
      %v1324 = vld [vmem:[%s9] sm:$0xff]
      %s1325 = scalar_lea.vmem %s7, 32
      %v1326 = vld [vmem:[%s1325] sm:$0xff]
      %v1327 = vld [vmem:[%s1325 + $0x8] sm:$0xff]
      %v1328 = vld [vmem:[%s1325 + $0x10] sm:$0xff]
      %v1329 = vld [vmem:[%s1325 + $0x18] sm:$0xff]
      %s1330 = scalar_lea.vmem %s8, 1
      %v1331 = vld [vmem:[%s1330] sm:$0x1]
      %v1333 = vlaneseq
      %v1334 = vshrl.u32 %v1333, 7
      %v1335 = vsub.s32 0, %v1334
      %v1336 = vrot.slane %v1331, %v1335
      %1338 = vmatprep.subr.mxu0 0.0
      %1339 = vmatpush1.msra.mxu0 %v1326
      %1340 = vmatprep.subr.mxu0 0.0
      %1341 = vmatpush1.msra.mxu0 %v1327
      %1342 = vmatprep.subr.mxu0 0.0
      %1343 = vmatpush1.msra.mxu0 %v1328
      %1344 = vmatprep.subr.mxu0 0.0
      %1345 = vmatpush1.msra.mxu0 %v1329
      %1346 = vmatprep.subr.mxu0 0.0
      %1347 = vmatpush1.msra.mxu0 0.0
      %1348 = vmatprep.subr.mxu0 0.0
      %1349 = vmatpush1.msra.mxu0 0.0
      %1350 = vmatprep.subr.mxu0 0.0
      %1351 = vmatpush1.msra.mxu0 0.0
      %1352 = vmatprep.subr.mxu0 0.0
      %1353 = vmatpush1.msra.mxu0 0.0
      %1354 = vmatprep.subr.mxu0 0.0
      %1355 = vmatpush1.msra.mxu0 0.0
      %1356 = vmatprep.subr.mxu0 0.0
      %1357 = vmatpush1.msra.mxu0 0.0
      %1358 = vmatprep.subr.mxu0 0.0
      %1359 = vmatpush1.msra.mxu0 0.0
      %1360 = vmatprep.subr.mxu0 0.0
      %1361 = vmatpush1.msra.mxu0 0.0
      %1362 = vmatprep.subr.mxu0 0.0
      %1363 = vmatpush1.msra.mxu0 0.0
      %1364 = vmatprep.subr.mxu0 0.0
      %1365 = vmatpush1.msra.mxu0 0.0
      %1366 = vmatprep.subr.mxu0 0.0
      %1367 = vmatpush1.msra.mxu0 0.0
      %1368 = vmatprep.subr.mxu0 0.0
      %1369 = vmatpush1.msra.mxu0 0.0
      %1370 = vmatprep.subr.mxu0 0.0
      %1371 = vmatpush1.msra.mxu0 0.0
      %1372 = vmatprep.subr.mxu0 0.0
      %1373 = vmatpush1.msra.mxu0 0.0
      %1374 = vmatprep.subr.mxu0 0.0
      %1375 = vmatpush1.msra.mxu0 0.0
      %1376 = vmatprep.subr.mxu0 0.0
      %1377 = vmatpush1.msra.mxu0 0.0
      %1378 = vmatprep.subr.mxu0 0.0
      %1379 = vmatpush1.msra.mxu0 0.0
      %1380 = vmatprep.subr.mxu0 0.0
      %1381 = vmatpush1.msra.mxu0 0.0
      %1382 = vmatprep.subr.mxu0 0.0
      %1383 = vmatpush1.msra.mxu0 0.0
      %1384 = vmatprep.subr.mxu0 0.0
      %1385 = vmatpush1.msra.mxu0 0.0
      %1386 = vmatprep.subr.mxu0 0.0
      %1387 = vmatpush1.msra.mxu0 0.0
      %1388 = vmatprep.subr.mxu0 0.0
      %1389 = vmatpush1.msra.mxu0 0.0
      %1390 = vmatprep.subr.mxu0 0.0
      %1391 = vmatpush1.msra.mxu0 0.0
      %1392 = vmatprep.subr.mxu0 0.0
      %1393 = vmatpush1.msra.mxu0 0.0
      %1394 = vmatprep.subr.mxu0 0.0
      %1395 = vmatpush1.msra.mxu0 0.0
      %1396 = vmatprep.subr.mxu0 0.0
      %1397 = vmatpush1.msra.mxu0 0.0
      %1398 = vmatprep.subr.mxu0 0.0
      %1399 = vmatpush1.msra.mxu0 0.0
      %1400 = vmatprep.subr.mxu0 0.0
      %1401 = vmatpush1.msra.mxu0 0.0
      %1402 = vmatprep.mubr.f32.mxu0 0.0
      %1403 = vmatmul.mubr.f32.gmra.mrb[0].mxu0 %v811
      %v1404 = vpop.f32.mrb[0].mxu0
      %v1405 = vadd.f32 %v1336, %v1404
      %v1406 = vpop.f32.mrb[0].mxu0
      %1407 = vmatprep.mubr.f32.mxu0 0.0
      %1408 = vmatmul.mubr.f32.gmra.mrb[0].mxu0 %v814
      %v1409 = vpop.f32.mrb[0].mxu0
      %v1410 = vadd.f32 %v1336, %v1409
      %v1411 = vpop.f32.mrb[0].mxu0
      %1412 = vmatprep.mubr.f32.mxu0 0.0
      %1413 = vmatmul.mubr.f32.gmra.mrb[0].mxu0 %v817
      %v1414 = vpop.f32.mrb[0].mxu0
      %v1415 = vadd.f32 %v1336, %v1414
      %v1416 = vpop.f32.mrb[0].mxu0
      %1417 = vdwg.mxu0
      %s1418 = scalar_lea.vmem %s7, 160
      %v1419 = vld [vmem:[%s1418] sm:$0xff]
      %v1420 = vld [vmem:[%s1418 + $0x8] sm:$0xff]
      %v1421 = vld [vmem:[%s1418 + $0x10] sm:$0xff]
      %v1422 = vld [vmem:[%s1418 + $0x18] sm:$0xff]
      %s1423 = scalar_lea.vmem %s8, 5
      %v1424 = vld [vmem:[%s1423] sm:$0x1]
      %v1426 = vlaneseq
      %v1427 = vshrl.u32 %v1426, 7
      %v1428 = vsub.s32 0, %v1427
      %v1429 = vrot.slane %v1424, %v1428
      %1431 = vmatprep.subr.mxu0 0.0
      %1432 = vmatpush1.msra.mxu0 %v1419
      %1433 = vmatprep.subr.mxu0 0.0
      %1434 = vmatpush1.msra.mxu0 %v1420
      %1435 = vmatprep.subr.mxu0 0.0
      %1436 = vmatpush1.msra.mxu0 %v1421
      %1437 = vmatprep.subr.mxu0 0.0
      %1438 = vmatpush1.msra.mxu0 %v1422
      %1439 = vmatprep.subr.mxu0 0.0
      %1440 = vmatpush1.msra.mxu0 0.0
      %1441 = vmatprep.subr.mxu0 0.0
      %1442 = vmatpush1.msra.mxu0 0.0
      %1443 = vmatprep.subr.mxu0 0.0
      %1444 = vmatpush1.msra.mxu0 0.0
      %1445 = vmatprep.subr.mxu0 0.0
      %1446 = vmatpush1.msra.mxu0 0.0
      %1447 = vmatprep.subr.mxu0 0.0
      %1448 = vmatpush1.msra.mxu0 0.0
      %1449 = vmatprep.subr.mxu0 0.0
      %1450 = vmatpush1.msra.mxu0 0.0
      %1451 = vmatprep.subr.mxu0 0.0
      %1452 = vmatpush1.msra.mxu0 0.0
      %1453 = vmatprep.subr.mxu0 0.0
      %1454 = vmatpush1.msra.mxu0 0.0
      %1455 = vmatprep.subr.mxu0 0.0
      %1456 = vmatpush1.msra.mxu0 0.0
      %1457 = vmatprep.subr.mxu0 0.0
      %1458 = vmatpush1.msra.mxu0 0.0
      %1459 = vmatprep.subr.mxu0 0.0
      %1460 = vmatpush1.msra.mxu0 0.0
      %1461 = vmatprep.subr.mxu0 0.0
      %1462 = vmatpush1.msra.mxu0 0.0
      %1463 = vmatprep.subr.mxu0 0.0
      %1464 = vmatpush1.msra.mxu0 0.0
      %1465 = vmatprep.subr.mxu0 0.0
      %1466 = vmatpush1.msra.mxu0 0.0
      %1467 = vmatprep.subr.mxu0 0.0
      %1468 = vmatpush1.msra.mxu0 0.0
      %1469 = vmatprep.subr.mxu0 0.0
      %1470 = vmatpush1.msra.mxu0 0.0
      %1471 = vmatprep.subr.mxu0 0.0
      %1472 = vmatpush1.msra.mxu0 0.0
      %1473 = vmatprep.subr.mxu0 0.0
      %1474 = vmatpush1.msra.mxu0 0.0
      %1475 = vmatprep.subr.mxu0 0.0
      %1476 = vmatpush1.msra.mxu0 0.0
      %1477 = vmatprep.subr.mxu0 0.0
      %1478 = vmatpush1.msra.mxu0 0.0
      %1479 = vmatprep.subr.mxu0 0.0
      %1480 = vmatpush1.msra.mxu0 0.0
      %1481 = vmatprep.subr.mxu0 0.0
      %1482 = vmatpush1.msra.mxu0 0.0
      %1483 = vmatprep.subr.mxu0 0.0
      %1484 = vmatpush1.msra.mxu0 0.0
      %1485 = vmatprep.subr.mxu0 0.0
      %1486 = vmatpush1.msra.mxu0 0.0
      %1487 = vmatprep.subr.mxu0 0.0
      %1488 = vmatpush1.msra.mxu0 0.0
      %1489 = vmatprep.subr.mxu0 0.0
      %1490 = vmatpush1.msra.mxu0 0.0
      %1491 = vmatprep.subr.mxu0 0.0
      %1492 = vmatpush1.msra.mxu0 0.0
      %1493 = vmatprep.subr.mxu0 0.0
      %1494 = vmatpush1.msra.mxu0 0.0
      %1495 = vmatprep.mubr.f32.mxu0 0.0
      %1496 = vmatmul.mubr.f32.gmra.mrb[0].mxu0 %v811
      %v1497 = vpop.f32.mrb[0].mxu0
      %v1498 = vadd.f32 %v1429, %v1497
      %v1499 = vpop.f32.mrb[0].mxu0
      %1500 = vmatprep.mubr.f32.mxu0 0.0
      %1501 = vmatmul.mubr.f32.gmra.mrb[0].mxu0 %v814
      %v1502 = vpop.f32.mrb[0].mxu0
      %v1503 = vadd.f32 %v1429, %v1502
      %v1504 = vpop.f32.mrb[0].mxu0
      %1505 = vmatprep.mubr.f32.mxu0 0.0
      %1506 = vmatmul.mubr.f32.gmra.mrb[0].mxu0 %v817
      %v1507 = vpop.f32.mrb[0].mxu0
      %v1508 = vadd.f32 %v1429, %v1507
      %v1509 = vpop.f32.mrb[0].mxu0
      %1510 = vdwg.mxu0
      %s1511 = scalar_lea.vmem %s7, 288
      %v1512 = vld [vmem:[%s1511] sm:$0xff]
      %v1513 = vld [vmem:[%s1511 + $0x8] sm:$0xff]
      %v1514 = vld [vmem:[%s1511 + $0x10] sm:$0xff]
      %v1515 = vld [vmem:[%s1511 + $0x18] sm:$0xff]
      %s1516 = scalar_lea.vmem %s8, 9
      %v1517 = vld [vmem:[%s1516] sm:$0x1]
      %v1519 = vlaneseq
      %v1520 = vshrl.u32 %v1519, 7
      %v1521 = vsub.s32 0, %v1520
      %v1522 = vrot.slane %v1517, %v1521
      %1524 = vmatprep.subr.mxu0 0.0
      %1525 = vmatpush1.msra.mxu0 %v1512
      %1526 = vmatprep.subr.mxu0 0.0
      %1527 = vmatpush1.msra.mxu0 %v1513
      %1528 = vmatprep.subr.mxu0 0.0
      %1529 = vmatpush1.msra.mxu0 %v1514
      %1530 = vmatprep.subr.mxu0 0.0
      %1531 = vmatpush1.msra.mxu0 %v1515
      %1532 = vmatprep.subr.mxu0 0.0
      %1533 = vmatpush1.msra.mxu0 0.0
      %1534 = vmatprep.subr.mxu0 0.0
      %1535 = vmatpush1.msra.mxu0 0.0
      %1536 = vmatprep.subr.mxu0 0.0
      %1537 = vmatpush1.msra.mxu0 0.0
      %1538 = vmatprep.subr.mxu0 0.0
      %1539 = vmatpush1.msra.mxu0 0.0
      %1540 = vmatprep.subr.mxu0 0.0
      %1541 = vmatpush1.msra.mxu0 0.0
      %1542 = vmatprep.subr.mxu0 0.0
      %1543 = vmatpush1.msra.mxu0 0.0
      %1544 = vmatprep.subr.mxu0 0.0
      %1545 = vmatpush1.msra.mxu0 0.0
      %1546 = vmatprep.subr.mxu0 0.0
      %1547 = vmatpush1.msra.mxu0 0.0
      %1548 = vmatprep.subr.mxu0 0.0
      %1549 = vmatpush1.msra.mxu0 0.0
      %1550 = vmatprep.subr.mxu0 0.0
      %1551 = vmatpush1.msra.mxu0 0.0
      %1552 = vmatprep.subr.mxu0 0.0
      %1553 = vmatpush1.msra.mxu0 0.0
      %1554 = vmatprep.subr.mxu0 0.0
      %1555 = vmatpush1.msra.mxu0 0.0
      %1556 = vmatprep.subr.mxu0 0.0
      %1557 = vmatpush1.msra.mxu0 0.0
      %1558 = vmatprep.subr.mxu0 0.0
      %1559 = vmatpush1.msra.mxu0 0.0
      %1560 = vmatprep.subr.mxu0 0.0
      %1561 = vmatpush1.msra.mxu0 0.0
      %1562 = vmatprep.subr.mxu0 0.0
      %1563 = vmatpush1.msra.mxu0 0.0
      %1564 = vmatprep.subr.mxu0 0.0
      %1565 = vmatpush1.msra.mxu0 0.0
      %1566 = vmatprep.subr.mxu0 0.0
      %1567 = vmatpush1.msra.mxu0 0.0
      %1568 = vmatprep.subr.mxu0 0.0
      %1569 = vmatpush1.msra.mxu0 0.0
      %1570 = vmatprep.subr.mxu0 0.0
      %1571 = vmatpush1.msra.mxu0 0.0
      %1572 = vmatprep.subr.mxu0 0.0
      %1573 = vmatpush1.msra.mxu0 0.0
      %1574 = vmatprep.subr.mxu0 0.0
      %1575 = vmatpush1.msra.mxu0 0.0
      %1576 = vmatprep.subr.mxu0 0.0
      %1577 = vmatpush1.msra.mxu0 0.0
      %1578 = vmatprep.subr.mxu0 0.0
      %1579 = vmatpush1.msra.mxu0 0.0
      %1580 = vmatprep.subr.mxu0 0.0
      %1581 = vmatpush1.msra.mxu0 0.0
      %1582 = vmatprep.subr.mxu0 0.0
      %1583 = vmatpush1.msra.mxu0 0.0
      %1584 = vmatprep.subr.mxu0 0.0
      %1585 = vmatpush1.msra.mxu0 0.0
      %1586 = vmatprep.subr.mxu0 0.0
      %1587 = vmatpush1.msra.mxu0 0.0
      %1588 = vmatprep.mubr.f32.mxu0 0.0
      %1589 = vmatmul.mubr.f32.gmra.mrb[0].mxu0 %v811
      %v1590 = vpop.f32.mrb[0].mxu0
      %v1591 = vadd.f32 %v1522, %v1590
      %v1592 = vpop.f32.mrb[0].mxu0
      %1593 = vmatprep.mubr.f32.mxu0 0.0
      %1594 = vmatmul.mubr.f32.gmra.mrb[0].mxu0 %v814
      %v1595 = vpop.f32.mrb[0].mxu0
      %v1596 = vadd.f32 %v1522, %v1595
      %v1597 = vpop.f32.mrb[0].mxu0
      %1598 = vmatprep.mubr.f32.mxu0 0.0
      %1599 = vmatmul.mubr.f32.gmra.mrb[0].mxu0 %v817
      %v1600 = vpop.f32.mrb[0].mxu0
      %v1601 = vadd.f32 %v1522, %v1600
      %v1602 = vpop.f32.mrb[0].mxu0
      %1603 = vdwg.mxu0
      %v1605 = vsel %vm1085, %v1405, 0
      %v1608 = vsel %vm1085, %v1410, 0
      %v1611 = vsel %vm1085, %v1415, 0
      %v1614 = vsel %vm1085, %v1498, 0
      %v1617 = vsel %vm1085, %v1503, 0
      %v1620 = vsel %vm1085, %v1508, 0
      %1622 = vmatprep.subr.mxu0 0.0
      %1623 = vmatpush1.xpose.msra.mxu0 %v1614
      %1624 = vmatprep.subr.mxu0 0.0
      %1625 = vmatpush1.xpose.msra.mxu0 %v1617
      %1626 = vmatprep.subr.mxu0 0.0
      %1627 = vmatpush1.xpose.msra.mxu0 %v1620
      %1628 = vmatprep.subr.mxu0 0.0
      %1629 = vmatpush1.xpose.msra.mxu0 0.0
      %1630 = vmatprep.subr.mxu0 0.0
      %1631 = vmatpush1.xpose.msra.mxu0 0.0
      %1632 = vmatprep.subr.mxu0 0.0
      %1633 = vmatpush1.xpose.msra.mxu0 0.0
      %1634 = vmatprep.subr.mxu0 0.0
      %1635 = vmatpush1.xpose.msra.mxu0 0.0
      %1636 = vmatprep.subr.mxu0 0.0
      %1637 = vmatpush1.xpose.msra.mxu0 0.0
      %1638 = vmatprep.subr.mxu0 0.0
      %1639 = vmatpush1.xpose.msra.mxu0 0.0
      %1640 = vmatprep.subr.mxu0 0.0
      %1641 = vmatpush1.xpose.msra.mxu0 0.0
      %1642 = vmatprep.subr.mxu0 0.0
      %1643 = vmatpush1.xpose.msra.mxu0 0.0
      %1644 = vmatprep.subr.mxu0 0.0
      %1645 = vmatpush1.xpose.msra.mxu0 0.0
      %1646 = vmatprep.subr.mxu0 0.0
      %1647 = vmatpush1.xpose.msra.mxu0 0.0
      %1648 = vmatprep.subr.mxu0 0.0
      %1649 = vmatpush1.xpose.msra.mxu0 0.0
      %1650 = vmatprep.subr.mxu0 0.0
      %1651 = vmatpush1.xpose.msra.mxu0 0.0
      %1652 = vmatprep.subr.mxu0 0.0
      %1653 = vmatpush1.xpose.msra.mxu0 0.0
      %1654 = vmatprep.subr.mxu0 0.0
      %1655 = vmatpush1.xpose.msra.mxu0 0.0
      %1656 = vmatprep.subr.mxu0 0.0
      %1657 = vmatpush1.xpose.msra.mxu0 0.0
      %1658 = vmatprep.subr.mxu0 0.0
      %1659 = vmatpush1.xpose.msra.mxu0 0.0
      %1660 = vmatprep.subr.mxu0 0.0
      %1661 = vmatpush1.xpose.msra.mxu0 0.0
      %1662 = vmatprep.subr.mxu0 0.0
      %1663 = vmatpush1.xpose.msra.mxu0 0.0
      %1664 = vmatprep.subr.mxu0 0.0
      %1665 = vmatpush1.xpose.msra.mxu0 0.0
      %1666 = vmatprep.subr.mxu0 0.0
      %1667 = vmatpush1.xpose.msra.mxu0 0.0
      %1668 = vmatprep.subr.mxu0 0.0
      %1669 = vmatpush1.xpose.msra.mxu0 0.0
      %1670 = vmatprep.subr.mxu0 0.0
      %1671 = vmatpush1.xpose.msra.mxu0 0.0
      %1672 = vmatprep.subr.mxu0 0.0
      %1673 = vmatpush1.xpose.msra.mxu0 0.0
      %1674 = vmatprep.subr.mxu0 0.0
      %1675 = vmatpush1.xpose.msra.mxu0 0.0
      %1676 = vmatprep.subr.mxu0 0.0
      %1677 = vmatpush1.xpose.msra.mxu0 0.0
      %1678 = vmatprep.subr.mxu0 0.0
      %1679 = vmatpush1.xpose.msra.mxu0 0.0
      %1680 = vmatprep.subr.mxu0 0.0
      %1681 = vmatpush1.xpose.msra.mxu0 0.0
      %1682 = vmatprep.subr.mxu0 0.0
      %1683 = vmatpush1.xpose.msra.mxu0 0.0
      %1684 = vmatprep.subr.mxu0 0.0
      %1685 = vmatpush1.xpose.msra.mxu0 0.0
      %1686 = vmatprep.mubr.f32.mxu0 0.0
      %1687 = vmatmul.mubr.f32.gmra.mrb[0].mxu0 %v1605
      %v1688 = vpop.f32.mrb[0].mxu0
      %v1689 = vadd.f32 0.0, %v1688
      %v1690 = vpop.f32.mrb[0].mxu0
      %1691 = vmatprep.mubr.f32.mxu0 0.0
      %1692 = vmatmul.mubr.f32.gmra.mrb[0].mxu0 %v1608
      %v1693 = vpop.f32.mrb[0].mxu0
      %v1694 = vadd.f32 0.0, %v1693
      %v1695 = vpop.f32.mrb[0].mxu0
      %1696 = vmatprep.mubr.f32.mxu0 0.0
      %1697 = vmatmul.mubr.f32.gmra.mrb[0].mxu0 %v1611
      %v1698 = vpop.f32.mrb[0].mxu0
      %v1699 = vadd.f32 0.0, %v1698
      %v1700 = vpop.f32.mrb[0].mxu0
      %1701 = vdwg.mxu0
      %v1702 = vmul.f32 %v1689, 0.35355338
      %v1703 = vmul.f32 %v1694, 0.35355338
      %v1704 = vmul.f32 %v1699, 0.35355338
      %v1705 = vadd.f32 %v1702, %v1191
      %v1706 = vadd.f32 %v1703, %v1191
      %v1707 = vadd.f32 %v1704, %v1191
      %v1708 = vsel %vm1196, %v1705, -inf
      %1709 = vmax.xlane.f32.xlu0 %v1708
      %v1710 = vpop.xlane.xlu0 %1709
      %v1711 = vsel %vm1196, %v1706, -inf
      %1712 = vmax.xlane.f32.xlu0 %v1711
      %v1713 = vpop.xlane.xlu0 %1712
      %v1714 = vsel %vm1203, %v1707, -inf
      %1715 = vmax.xlane.f32.xlu0 %v1714
      %v1716 = vpop.xlane.xlu0 %1715
      %v1717 = vsub.f32 %v1705, %v1710
      %v1718 = vsub.f32 %v1706, %v1713
      %v1719 = vsub.f32 %v1707, %v1716
      %v1720 = vmul.f32 %v1717, 1.442695
      %v1721 = vpow.pop %v1720
      %v1722 = vmul.f32 %v1718, 1.442695
      %v1723 = vpow.pop %v1722
      %v1724 = vmul.f32 %v1719, 1.442695
      %v1725 = vpow.pop %v1724
      %v1726 = vsel %vm1196, %v1721, 0.0
      %1727 = vadd.xlane.f32.xlu0 %v1726
      %v1728 = vpop.xlane.xlu0 %1727
      %v1729 = vsel %vm1196, %v1723, 0.0
      %1730 = vadd.xlane.f32.xlu0 %v1729
      %v1731 = vpop.xlane.xlu0 %1730
      %v1732 = vsel %vm1203, %v1725, 0.0
      %1733 = vadd.xlane.f32.xlu0 %v1732
      %v1734 = vpop.xlane.xlu0 %1733
      %v1735 = vrcp.pop %v1728
      %v1736 = vrcp.pop %v1731
      %v1737 = vrcp.pop %v1734
      %v1738 = vmul.f32 %v1721, %v1735
      %v1739 = vmul.f32 %v1723, %v1736
      %v1740 = vmul.f32 %v1725, %v1737
      %v1742 = vsel %vm1196, %v1738, 0
      %v1745 = vsel %vm1196, %v1739, 0
      %v1748 = vsel %vm1196, %v1740, 0
      %v1751 = vsel %vm1240, %v1601, 0
      %1753 = vmatprep.subr.mxu0 0.0
      %1754 = vmatpush1.msra.mxu0 %v1591
      %1755 = vmatprep.subr.mxu0 0.0
      %1756 = vmatpush1.msra.mxu0 %v1596
      %1757 = vmatprep.subr.mxu0 0.0
      %1758 = vmatpush1.msra.mxu0 %v1751
      %1759 = vmatprep.subr.mxu0 0.0
      %1760 = vmatpush1.msra.mxu0 0.0
      %1761 = vmatprep.subr.mxu0 0.0
      %1762 = vmatpush1.msra.mxu0 0.0
      %1763 = vmatprep.subr.mxu0 0.0
      %1764 = vmatpush1.msra.mxu0 0.0
      %1765 = vmatprep.subr.mxu0 0.0
      %1766 = vmatpush1.msra.mxu0 0.0
      %1767 = vmatprep.subr.mxu0 0.0
      %1768 = vmatpush1.msra.mxu0 0.0
      %1769 = vmatprep.subr.mxu0 0.0
      %1770 = vmatpush1.msra.mxu0 0.0
      %1771 = vmatprep.subr.mxu0 0.0
      %1772 = vmatpush1.msra.mxu0 0.0
      %1773 = vmatprep.subr.mxu0 0.0
      %1774 = vmatpush1.msra.mxu0 0.0
      %1775 = vmatprep.subr.mxu0 0.0
      %1776 = vmatpush1.msra.mxu0 0.0
      %1777 = vmatprep.subr.mxu0 0.0
      %1778 = vmatpush1.msra.mxu0 0.0
      %1779 = vmatprep.subr.mxu0 0.0
      %1780 = vmatpush1.msra.mxu0 0.0
      %1781 = vmatprep.subr.mxu0 0.0
      %1782 = vmatpush1.msra.mxu0 0.0
      %1783 = vmatprep.subr.mxu0 0.0
      %1784 = vmatpush1.msra.mxu0 0.0
      %1785 = vmatprep.subr.mxu0 0.0
      %1786 = vmatpush1.msra.mxu0 0.0
      %1787 = vmatprep.subr.mxu0 0.0
      %1788 = vmatpush1.msra.mxu0 0.0
      %1789 = vmatprep.subr.mxu0 0.0
      %1790 = vmatpush1.msra.mxu0 0.0
      %1791 = vmatprep.subr.mxu0 0.0
      %1792 = vmatpush1.msra.mxu0 0.0
      %1793 = vmatprep.subr.mxu0 0.0
      %1794 = vmatpush1.msra.mxu0 0.0
      %1795 = vmatprep.subr.mxu0 0.0
      %1796 = vmatpush1.msra.mxu0 0.0
      %1797 = vmatprep.subr.mxu0 0.0
      %1798 = vmatpush1.msra.mxu0 0.0
      %1799 = vmatprep.subr.mxu0 0.0
      %1800 = vmatpush1.msra.mxu0 0.0
      %1801 = vmatprep.subr.mxu0 0.0
      %1802 = vmatpush1.msra.mxu0 0.0
      %1803 = vmatprep.subr.mxu0 0.0
      %1804 = vmatpush1.msra.mxu0 0.0
      %1805 = vmatprep.subr.mxu0 0.0
      %1806 = vmatpush1.msra.mxu0 0.0
      %1807 = vmatprep.subr.mxu0 0.0
      %1808 = vmatpush1.msra.mxu0 0.0
      %1809 = vmatprep.subr.mxu0 0.0
      %1810 = vmatpush1.msra.mxu0 0.0
      %1811 = vmatprep.subr.mxu0 0.0
      %1812 = vmatpush1.msra.mxu0 0.0
      %1813 = vmatprep.subr.mxu0 0.0
      %1814 = vmatpush1.msra.mxu0 0.0
      %1815 = vmatprep.subr.mxu0 0.0
      %1816 = vmatpush1.msra.mxu0 0.0
      %1817 = vmatprep.mubr.f32.mxu0 0.0
      %1818 = vmatmul.mubr.f32.gmra.mrb[0].mxu0 %v1742
      %v1819 = vpop.f32.mrb[0].mxu0
      %v1820 = vadd.f32 0.0, %v1819
      %v1821 = vpop.f32.mrb[0].mxu0
      %1822 = vmatprep.mubr.f32.mxu0 0.0
      %1823 = vmatmul.mubr.f32.gmra.mrb[0].mxu0 %v1745
      %v1824 = vpop.f32.mrb[0].mxu0
      %v1825 = vadd.f32 0.0, %v1824
      %v1826 = vpop.f32.mrb[0].mxu0
      %1827 = vmatprep.mubr.f32.mxu0 0.0
      %1828 = vmatmul.mubr.f32.gmra.mrb[0].mxu0 %v1748
      %v1829 = vpop.f32.mrb[0].mxu0
      %v1830 = vadd.f32 0.0, %v1829
      %v1831 = vpop.f32.mrb[0].mxu0
      %1832 = vdwg.mxu0
      %s1833 = scalar_lea.vmem %s9, 8
      %v1834 = vld [vmem:[%s1833] sm:$0xff]
      %v1836 = vsel %vm1085, %v1820, 0
      %v1839 = vsel %vm1085, %v1825, 0
      %v1842 = vsel %vm1085, %v1830, 0
      %1844 = vmatprep.subr.mxu0 0.0
      %1845 = vmatpush1.msra.mxu0 %v1834
      %1846 = vmatprep.subr.mxu0 0.0
      %1847 = vmatpush1.msra.mxu0 0.0
      %1848 = vmatprep.subr.mxu0 0.0
      %1849 = vmatpush1.msra.mxu0 0.0
      %1850 = vmatprep.subr.mxu0 0.0
      %1851 = vmatpush1.msra.mxu0 0.0
      %1852 = vmatprep.subr.mxu0 0.0
      %1853 = vmatpush1.msra.mxu0 0.0
      %1854 = vmatprep.subr.mxu0 0.0
      %1855 = vmatpush1.msra.mxu0 0.0
      %1856 = vmatprep.subr.mxu0 0.0
      %1857 = vmatpush1.msra.mxu0 0.0
      %1858 = vmatprep.subr.mxu0 0.0
      %1859 = vmatpush1.msra.mxu0 0.0
      %1860 = vmatprep.subr.mxu0 0.0
      %1861 = vmatpush1.msra.mxu0 0.0
      %1862 = vmatprep.subr.mxu0 0.0
      %1863 = vmatpush1.msra.mxu0 0.0
      %1864 = vmatprep.subr.mxu0 0.0
      %1865 = vmatpush1.msra.mxu0 0.0
      %1866 = vmatprep.subr.mxu0 0.0
      %1867 = vmatpush1.msra.mxu0 0.0
      %1868 = vmatprep.subr.mxu0 0.0
      %1869 = vmatpush1.msra.mxu0 0.0
      %1870 = vmatprep.subr.mxu0 0.0
      %1871 = vmatpush1.msra.mxu0 0.0
      %1872 = vmatprep.subr.mxu0 0.0
      %1873 = vmatpush1.msra.mxu0 0.0
      %1874 = vmatprep.subr.mxu0 0.0
      %1875 = vmatpush1.msra.mxu0 0.0
      %1876 = vmatprep.subr.mxu0 0.0
      %1877 = vmatpush1.msra.mxu0 0.0
      %1878 = vmatprep.subr.mxu0 0.0
      %1879 = vmatpush1.msra.mxu0 0.0
      %1880 = vmatprep.subr.mxu0 0.0
      %1881 = vmatpush1.msra.mxu0 0.0
      %1882 = vmatprep.subr.mxu0 0.0
      %1883 = vmatpush1.msra.mxu0 0.0
      %1884 = vmatprep.subr.mxu0 0.0
      %1885 = vmatpush1.msra.mxu0 0.0
      %1886 = vmatprep.subr.mxu0 0.0
      %1887 = vmatpush1.msra.mxu0 0.0
      %1888 = vmatprep.subr.mxu0 0.0
      %1889 = vmatpush1.msra.mxu0 0.0
      %1890 = vmatprep.subr.mxu0 0.0
      %1891 = vmatpush1.msra.mxu0 0.0
      %1892 = vmatprep.subr.mxu0 0.0
      %1893 = vmatpush1.msra.mxu0 0.0
      %1894 = vmatprep.subr.mxu0 0.0
      %1895 = vmatpush1.msra.mxu0 0.0
      %1896 = vmatprep.subr.mxu0 0.0
      %1897 = vmatpush1.msra.mxu0 0.0
      %1898 = vmatprep.subr.mxu0 0.0
      %1899 = vmatpush1.msra.mxu0 0.0
      %1900 = vmatprep.subr.mxu0 0.0
      %1901 = vmatpush1.msra.mxu0 0.0
      %1902 = vmatprep.subr.mxu0 0.0
      %1903 = vmatpush1.msra.mxu0 0.0
      %1904 = vmatprep.subr.mxu0 0.0
      %1905 = vmatpush1.msra.mxu0 0.0
      %1906 = vmatprep.subr.mxu0 0.0
      %1907 = vmatpush1.msra.mxu0 0.0
      %1908 = vmatprep.mubr.f32.mxu0 0.0
      %1909 = vmatmul.mubr.f32.gmra.mrb[0].mxu0 %v1836
      %v1910 = vpop.f32.mrb[0].mxu0
      %v1911 = vadd.f32 0.0, %v1910
      %v1912 = vpop.f32.mrb[0].mxu0
      %1913 = vmatprep.mubr.f32.mxu0 0.0
      %1914 = vmatmul.mubr.f32.gmra.mrb[0].mxu0 %v1839
      %v1915 = vpop.f32.mrb[0].mxu0
      %v1916 = vadd.f32 0.0, %v1915
      %v1917 = vpop.f32.mrb[0].mxu0
      %1918 = vmatprep.mubr.f32.mxu0 0.0
      %1919 = vmatmul.mubr.f32.gmra.mrb[0].mxu0 %v1842
      %v1920 = vpop.f32.mrb[0].mxu0
      %v1921 = vadd.f32 0.0, %v1920
      %v1922 = vpop.f32.mrb[0].mxu0
      %1923 = vdwg.mxu0
      %v1925 = vsel %vm1085, %v1311, 0
      %v1928 = vsel %vm1085, %v1316, 0
      %v1931 = vsel %vm1085, %v1321, 0
      %1933 = vmatprep.subr.mxu0 0.0
      %1934 = vmatpush1.msra.mxu0 %v1324
      %1935 = vmatprep.subr.mxu0 0.0
      %1936 = vmatpush1.msra.mxu0 0.0
      %1937 = vmatprep.subr.mxu0 0.0
      %1938 = vmatpush1.msra.mxu0 0.0
      %1939 = vmatprep.subr.mxu0 0.0
      %1940 = vmatpush1.msra.mxu0 0.0
      %1941 = vmatprep.subr.mxu0 0.0
      %1942 = vmatpush1.msra.mxu0 0.0
      %1943 = vmatprep.subr.mxu0 0.0
      %1944 = vmatpush1.msra.mxu0 0.0
      %1945 = vmatprep.subr.mxu0 0.0
      %1946 = vmatpush1.msra.mxu0 0.0
      %1947 = vmatprep.subr.mxu0 0.0
      %1948 = vmatpush1.msra.mxu0 0.0
      %1949 = vmatprep.subr.mxu0 0.0
      %1950 = vmatpush1.msra.mxu0 0.0
      %1951 = vmatprep.subr.mxu0 0.0
      %1952 = vmatpush1.msra.mxu0 0.0
      %1953 = vmatprep.subr.mxu0 0.0
      %1954 = vmatpush1.msra.mxu0 0.0
      %1955 = vmatprep.subr.mxu0 0.0
      %1956 = vmatpush1.msra.mxu0 0.0
      %1957 = vmatprep.subr.mxu0 0.0
      %1958 = vmatpush1.msra.mxu0 0.0
      %1959 = vmatprep.subr.mxu0 0.0
      %1960 = vmatpush1.msra.mxu0 0.0
      %1961 = vmatprep.subr.mxu0 0.0
      %1962 = vmatpush1.msra.mxu0 0.0
      %1963 = vmatprep.subr.mxu0 0.0
      %1964 = vmatpush1.msra.mxu0 0.0
      %1965 = vmatprep.subr.mxu0 0.0
      %1966 = vmatpush1.msra.mxu0 0.0
      %1967 = vmatprep.subr.mxu0 0.0
      %1968 = vmatpush1.msra.mxu0 0.0
      %1969 = vmatprep.subr.mxu0 0.0
      %1970 = vmatpush1.msra.mxu0 0.0
      %1971 = vmatprep.subr.mxu0 0.0
      %1972 = vmatpush1.msra.mxu0 0.0
      %1973 = vmatprep.subr.mxu0 0.0
      %1974 = vmatpush1.msra.mxu0 0.0
      %1975 = vmatprep.subr.mxu0 0.0
      %1976 = vmatpush1.msra.mxu0 0.0
      %1977 = vmatprep.subr.mxu0 0.0
      %1978 = vmatpush1.msra.mxu0 0.0
      %1979 = vmatprep.subr.mxu0 0.0
      %1980 = vmatpush1.msra.mxu0 0.0
      %1981 = vmatprep.subr.mxu0 0.0
      %1982 = vmatpush1.msra.mxu0 0.0
      %1983 = vmatprep.subr.mxu0 0.0
      %1984 = vmatpush1.msra.mxu0 0.0
      %1985 = vmatprep.subr.mxu0 0.0
      %1986 = vmatpush1.msra.mxu0 0.0
      %1987 = vmatprep.subr.mxu0 0.0
      %1988 = vmatpush1.msra.mxu0 0.0
      %1989 = vmatprep.subr.mxu0 0.0
      %1990 = vmatpush1.msra.mxu0 0.0
      %1991 = vmatprep.subr.mxu0 0.0
      %1992 = vmatpush1.msra.mxu0 0.0
      %1993 = vmatprep.subr.mxu0 0.0
      %1994 = vmatpush1.msra.mxu0 0.0
      %1995 = vmatprep.subr.mxu0 0.0
      %1996 = vmatpush1.msra.mxu0 0.0
      %1997 = vmatprep.mubr.f32.mxu0 0.0
      %1998 = vmatmul.mubr.f32.gmra.mrb[0].mxu0 %v1925
      %v1999 = vpop.f32.mrb[0].mxu0
      %v2000 = vadd.f32 %v1911, %v1999
      %v2001 = vpop.f32.mrb[0].mxu0
      %2002 = vmatprep.mubr.f32.mxu0 0.0
      %2003 = vmatmul.mubr.f32.gmra.mrb[0].mxu0 %v1928
      %v2004 = vpop.f32.mrb[0].mxu0
      %v2005 = vadd.f32 %v1916, %v2004
      %v2006 = vpop.f32.mrb[0].mxu0
      %2007 = vmatprep.mubr.f32.mxu0 0.0
      %2008 = vmatmul.mubr.f32.gmra.mrb[0].mxu0 %v1931
      %v2009 = vpop.f32.mrb[0].mxu0
      %v2010 = vadd.f32 %v1921, %v2009
      %v2011 = vpop.f32.mrb[0].mxu0
      %2012 = vdwg.mxu0
      %s2013 = scalar_lea.vmem %s7, 64
      %v2014 = vld [vmem:[%s2013] sm:$0xff]
      %v2015 = vld [vmem:[%s2013 + $0x8] sm:$0xff]
      %v2016 = vld [vmem:[%s2013 + $0x10] sm:$0xff]
      %v2017 = vld [vmem:[%s2013 + $0x18] sm:$0xff]
      %s2018 = scalar_lea.vmem %s8, 2
      %v2019 = vld [vmem:[%s2018] sm:$0x1]
      %v2021 = vlaneseq
      %v2022 = vshrl.u32 %v2021, 7
      %v2023 = vsub.s32 0, %v2022
      %v2024 = vrot.slane %v2019, %v2023
      %2026 = vmatprep.subr.mxu0 0.0
      %2027 = vmatpush1.msra.mxu0 %v2014
      %2028 = vmatprep.subr.mxu0 0.0
      %2029 = vmatpush1.msra.mxu0 %v2015
      %2030 = vmatprep.subr.mxu0 0.0
      %2031 = vmatpush1.msra.mxu0 %v2016
      %2032 = vmatprep.subr.mxu0 0.0
      %2033 = vmatpush1.msra.mxu0 %v2017
      %2034 = vmatprep.subr.mxu0 0.0
      %2035 = vmatpush1.msra.mxu0 0.0
      %2036 = vmatprep.subr.mxu0 0.0
      %2037 = vmatpush1.msra.mxu0 0.0
      %2038 = vmatprep.subr.mxu0 0.0
      %2039 = vmatpush1.msra.mxu0 0.0
      %2040 = vmatprep.subr.mxu0 0.0
      %2041 = vmatpush1.msra.mxu0 0.0
      %2042 = vmatprep.subr.mxu0 0.0
      %2043 = vmatpush1.msra.mxu0 0.0
      %2044 = vmatprep.subr.mxu0 0.0
      %2045 = vmatpush1.msra.mxu0 0.0
      %2046 = vmatprep.subr.mxu0 0.0
      %2047 = vmatpush1.msra.mxu0 0.0
      %2048 = vmatprep.subr.mxu0 0.0
      %2049 = vmatpush1.msra.mxu0 0.0
      %2050 = vmatprep.subr.mxu0 0.0
      %2051 = vmatpush1.msra.mxu0 0.0
      %2052 = vmatprep.subr.mxu0 0.0
      %2053 = vmatpush1.msra.mxu0 0.0
      %2054 = vmatprep.subr.mxu0 0.0
      %2055 = vmatpush1.msra.mxu0 0.0
      %2056 = vmatprep.subr.mxu0 0.0
      %2057 = vmatpush1.msra.mxu0 0.0
      %2058 = vmatprep.subr.mxu0 0.0
      %2059 = vmatpush1.msra.mxu0 0.0
      %2060 = vmatprep.subr.mxu0 0.0
      %2061 = vmatpush1.msra.mxu0 0.0
      %2062 = vmatprep.subr.mxu0 0.0
      %2063 = vmatpush1.msra.mxu0 0.0
      %2064 = vmatprep.subr.mxu0 0.0
      %2065 = vmatpush1.msra.mxu0 0.0
      %2066 = vmatprep.subr.mxu0 0.0
      %2067 = vmatpush1.msra.mxu0 0.0
      %2068 = vmatprep.subr.mxu0 0.0
      %2069 = vmatpush1.msra.mxu0 0.0
      %2070 = vmatprep.subr.mxu0 0.0
      %2071 = vmatpush1.msra.mxu0 0.0
      %2072 = vmatprep.subr.mxu0 0.0
      %2073 = vmatpush1.msra.mxu0 0.0
      %2074 = vmatprep.subr.mxu0 0.0
      %2075 = vmatpush1.msra.mxu0 0.0
      %2076 = vmatprep.subr.mxu0 0.0
      %2077 = vmatpush1.msra.mxu0 0.0
      %2078 = vmatprep.subr.mxu0 0.0
      %2079 = vmatpush1.msra.mxu0 0.0
      %2080 = vmatprep.subr.mxu0 0.0
      %2081 = vmatpush1.msra.mxu0 0.0
      %2082 = vmatprep.subr.mxu0 0.0
      %2083 = vmatpush1.msra.mxu0 0.0
      %2084 = vmatprep.subr.mxu0 0.0
      %2085 = vmatpush1.msra.mxu0 0.0
      %2086 = vmatprep.subr.mxu0 0.0
      %2087 = vmatpush1.msra.mxu0 0.0
      %2088 = vmatprep.subr.mxu0 0.0
      %2089 = vmatpush1.msra.mxu0 0.0
      %2090 = vmatprep.mubr.f32.mxu0 0.0
      %2091 = vmatmul.mubr.f32.gmra.mrb[0].mxu0 %v811
      %v2092 = vpop.f32.mrb[0].mxu0
      %v2093 = vadd.f32 %v2024, %v2092
      %v2094 = vpop.f32.mrb[0].mxu0
      %2095 = vmatprep.mubr.f32.mxu0 0.0
      %2096 = vmatmul.mubr.f32.gmra.mrb[0].mxu0 %v814
      %v2097 = vpop.f32.mrb[0].mxu0
      %v2098 = vadd.f32 %v2024, %v2097
      %v2099 = vpop.f32.mrb[0].mxu0
      %2100 = vmatprep.mubr.f32.mxu0 0.0
      %2101 = vmatmul.mubr.f32.gmra.mrb[0].mxu0 %v817
      %v2102 = vpop.f32.mrb[0].mxu0
      %v2103 = vadd.f32 %v2024, %v2102
      %v2104 = vpop.f32.mrb[0].mxu0
      %2105 = vdwg.mxu0
      %s2106 = scalar_lea.vmem %s7, 192
      %v2107 = vld [vmem:[%s2106] sm:$0xff]
      %v2108 = vld [vmem:[%s2106 + $0x8] sm:$0xff]
      %v2109 = vld [vmem:[%s2106 + $0x10] sm:$0xff]
      %v2110 = vld [vmem:[%s2106 + $0x18] sm:$0xff]
      %s2111 = scalar_lea.vmem %s8, 6
      %v2112 = vld [vmem:[%s2111] sm:$0x1]
      %v2114 = vlaneseq
      %v2115 = vshrl.u32 %v2114, 7
      %v2116 = vsub.s32 0, %v2115
      %v2117 = vrot.slane %v2112, %v2116
      %2119 = vmatprep.subr.mxu0 0.0
      %2120 = vmatpush1.msra.mxu0 %v2107
      %2121 = vmatprep.subr.mxu0 0.0
      %2122 = vmatpush1.msra.mxu0 %v2108
      %2123 = vmatprep.subr.mxu0 0.0
      %2124 = vmatpush1.msra.mxu0 %v2109
      %2125 = vmatprep.subr.mxu0 0.0
      %2126 = vmatpush1.msra.mxu0 %v2110
      %2127 = vmatprep.subr.mxu0 0.0
      %2128 = vmatpush1.msra.mxu0 0.0
      %2129 = vmatprep.subr.mxu0 0.0
      %2130 = vmatpush1.msra.mxu0 0.0
      %2131 = vmatprep.subr.mxu0 0.0
      %2132 = vmatpush1.msra.mxu0 0.0
      %2133 = vmatprep.subr.mxu0 0.0
      %2134 = vmatpush1.msra.mxu0 0.0
      %2135 = vmatprep.subr.mxu0 0.0
      %2136 = vmatpush1.msra.mxu0 0.0
      %2137 = vmatprep.subr.mxu0 0.0
      %2138 = vmatpush1.msra.mxu0 0.0
      %2139 = vmatprep.subr.mxu0 0.0
      %2140 = vmatpush1.msra.mxu0 0.0
      %2141 = vmatprep.subr.mxu0 0.0
      %2142 = vmatpush1.msra.mxu0 0.0
      %2143 = vmatprep.subr.mxu0 0.0
      %2144 = vmatpush1.msra.mxu0 0.0
      %2145 = vmatprep.subr.mxu0 0.0
      %2146 = vmatpush1.msra.mxu0 0.0
      %2147 = vmatprep.subr.mxu0 0.0
      %2148 = vmatpush1.msra.mxu0 0.0
      %2149 = vmatprep.subr.mxu0 0.0
      %2150 = vmatpush1.msra.mxu0 0.0
      %2151 = vmatprep.subr.mxu0 0.0
      %2152 = vmatpush1.msra.mxu0 0.0
      %2153 = vmatprep.subr.mxu0 0.0
      %2154 = vmatpush1.msra.mxu0 0.0
      %2155 = vmatprep.subr.mxu0 0.0
      %2156 = vmatpush1.msra.mxu0 0.0
      %2157 = vmatprep.subr.mxu0 0.0
      %2158 = vmatpush1.msra.mxu0 0.0
      %2159 = vmatprep.subr.mxu0 0.0
      %2160 = vmatpush1.msra.mxu0 0.0
      %2161 = vmatprep.subr.mxu0 0.0
      %2162 = vmatpush1.msra.mxu0 0.0
      %2163 = vmatprep.subr.mxu0 0.0
      %2164 = vmatpush1.msra.mxu0 0.0
      %2165 = vmatprep.subr.mxu0 0.0
      %2166 = vmatpush1.msra.mxu0 0.0
      %2167 = vmatprep.subr.mxu0 0.0
      %2168 = vmatpush1.msra.mxu0 0.0
      %2169 = vmatprep.subr.mxu0 0.0
      %2170 = vmatpush1.msra.mxu0 0.0
      %2171 = vmatprep.subr.mxu0 0.0
      %2172 = vmatpush1.msra.mxu0 0.0
      %2173 = vmatprep.subr.mxu0 0.0
      %2174 = vmatpush1.msra.mxu0 0.0
      %2175 = vmatprep.subr.mxu0 0.0
      %2176 = vmatpush1.msra.mxu0 0.0
      %2177 = vmatprep.subr.mxu0 0.0
      %2178 = vmatpush1.msra.mxu0 0.0
      %2179 = vmatprep.subr.mxu0 0.0
      %2180 = vmatpush1.msra.mxu0 0.0
      %2181 = vmatprep.subr.mxu0 0.0
      %2182 = vmatpush1.msra.mxu0 0.0
      %2183 = vmatprep.mubr.f32.mxu0 0.0
      %2184 = vmatmul.mubr.f32.gmra.mrb[0].mxu0 %v811
      %v2185 = vpop.f32.mrb[0].mxu0
      %v2186 = vadd.f32 %v2117, %v2185
      %v2187 = vpop.f32.mrb[0].mxu0
      %2188 = vmatprep.mubr.f32.mxu0 0.0
      %2189 = vmatmul.mubr.f32.gmra.mrb[0].mxu0 %v814
      %v2190 = vpop.f32.mrb[0].mxu0
      %v2191 = vadd.f32 %v2117, %v2190
      %v2192 = vpop.f32.mrb[0].mxu0
      %2193 = vmatprep.mubr.f32.mxu0 0.0
      %2194 = vmatmul.mubr.f32.gmra.mrb[0].mxu0 %v817
      %v2195 = vpop.f32.mrb[0].mxu0
      %v2196 = vadd.f32 %v2117, %v2195
      %v2197 = vpop.f32.mrb[0].mxu0
      %2198 = vdwg.mxu0
      %s2199 = scalar_lea.vmem %s7, 320
      %v2200 = vld [vmem:[%s2199] sm:$0xff]
      %v2201 = vld [vmem:[%s2199 + $0x8] sm:$0xff]
      %v2202 = vld [vmem:[%s2199 + $0x10] sm:$0xff]
      %v2203 = vld [vmem:[%s2199 + $0x18] sm:$0xff]
      %s2204 = scalar_lea.vmem %s8, 10
      %v2205 = vld [vmem:[%s2204] sm:$0x1]
      %v2207 = vlaneseq
      %v2208 = vshrl.u32 %v2207, 7
      %v2209 = vsub.s32 0, %v2208
      %v2210 = vrot.slane %v2205, %v2209
      %2212 = vmatprep.subr.mxu0 0.0
      %2213 = vmatpush1.msra.mxu0 %v2200
      %2214 = vmatprep.subr.mxu0 0.0
      %2215 = vmatpush1.msra.mxu0 %v2201
      %2216 = vmatprep.subr.mxu0 0.0
      %2217 = vmatpush1.msra.mxu0 %v2202
      %2218 = vmatprep.subr.mxu0 0.0
      %2219 = vmatpush1.msra.mxu0 %v2203
      %2220 = vmatprep.subr.mxu0 0.0
      %2221 = vmatpush1.msra.mxu0 0.0
      %2222 = vmatprep.subr.mxu0 0.0
      %2223 = vmatpush1.msra.mxu0 0.0
      %2224 = vmatprep.subr.mxu0 0.0
      %2225 = vmatpush1.msra.mxu0 0.0
      %2226 = vmatprep.subr.mxu0 0.0
      %2227 = vmatpush1.msra.mxu0 0.0
      %2228 = vmatprep.subr.mxu0 0.0
      %2229 = vmatpush1.msra.mxu0 0.0
      %2230 = vmatprep.subr.mxu0 0.0
      %2231 = vmatpush1.msra.mxu0 0.0
      %2232 = vmatprep.subr.mxu0 0.0
      %2233 = vmatpush1.msra.mxu0 0.0
      %2234 = vmatprep.subr.mxu0 0.0
      %2235 = vmatpush1.msra.mxu0 0.0
      %2236 = vmatprep.subr.mxu0 0.0
      %2237 = vmatpush1.msra.mxu0 0.0
      %2238 = vmatprep.subr.mxu0 0.0
      %2239 = vmatpush1.msra.mxu0 0.0
      %2240 = vmatprep.subr.mxu0 0.0
      %2241 = vmatpush1.msra.mxu0 0.0
      %2242 = vmatprep.subr.mxu0 0.0
      %2243 = vmatpush1.msra.mxu0 0.0
      %2244 = vmatprep.subr.mxu0 0.0
      %2245 = vmatpush1.msra.mxu0 0.0
      %2246 = vmatprep.subr.mxu0 0.0
      %2247 = vmatpush1.msra.mxu0 0.0
      %2248 = vmatprep.subr.mxu0 0.0
      %2249 = vmatpush1.msra.mxu0 0.0
      %2250 = vmatprep.subr.mxu0 0.0
      %2251 = vmatpush1.msra.mxu0 0.0
      %2252 = vmatprep.subr.mxu0 0.0
      %2253 = vmatpush1.msra.mxu0 0.0
      %2254 = vmatprep.subr.mxu0 0.0
      %2255 = vmatpush1.msra.mxu0 0.0
      %2256 = vmatprep.subr.mxu0 0.0
      %2257 = vmatpush1.msra.mxu0 0.0
      %2258 = vmatprep.subr.mxu0 0.0
      %2259 = vmatpush1.msra.mxu0 0.0
      %2260 = vmatprep.subr.mxu0 0.0
      %2261 = vmatpush1.msra.mxu0 0.0
      %2262 = vmatprep.subr.mxu0 0.0
      %2263 = vmatpush1.msra.mxu0 0.0
      %2264 = vmatprep.subr.mxu0 0.0
      %2265 = vmatpush1.msra.mxu0 0.0
      %2266 = vmatprep.subr.mxu0 0.0
      %2267 = vmatpush1.msra.mxu0 0.0
      %2268 = vmatprep.subr.mxu0 0.0
      %2269 = vmatpush1.msra.mxu0 0.0
      %2270 = vmatprep.subr.mxu0 0.0
      %2271 = vmatpush1.msra.mxu0 0.0
      %2272 = vmatprep.subr.mxu0 0.0
      %2273 = vmatpush1.msra.mxu0 0.0
      %2274 = vmatprep.subr.mxu0 0.0
      %2275 = vmatpush1.msra.mxu0 0.0
      %2276 = vmatprep.mubr.f32.mxu0 0.0
      %2277 = vmatmul.mubr.f32.gmra.mrb[0].mxu0 %v811
      %v2278 = vpop.f32.mrb[0].mxu0
      %v2279 = vadd.f32 %v2210, %v2278
      %v2280 = vpop.f32.mrb[0].mxu0
      %2281 = vmatprep.mubr.f32.mxu0 0.0
      %2282 = vmatmul.mubr.f32.gmra.mrb[0].mxu0 %v814
      %v2283 = vpop.f32.mrb[0].mxu0
      %v2284 = vadd.f32 %v2210, %v2283
      %v2285 = vpop.f32.mrb[0].mxu0
      %2286 = vmatprep.mubr.f32.mxu0 0.0
      %2287 = vmatmul.mubr.f32.gmra.mrb[0].mxu0 %v817
      %v2288 = vpop.f32.mrb[0].mxu0
      %v2289 = vadd.f32 %v2210, %v2288
      %v2290 = vpop.f32.mrb[0].mxu0
      %2291 = vdwg.mxu0
      %v2293 = vsel %vm1085, %v2093, 0
      %v2296 = vsel %vm1085, %v2098, 0
      %v2299 = vsel %vm1085, %v2103, 0
      %v2302 = vsel %vm1085, %v2186, 0
      %v2305 = vsel %vm1085, %v2191, 0
      %v2308 = vsel %vm1085, %v2196, 0
      %2310 = vmatprep.subr.mxu0 0.0
      %2311 = vmatpush1.xpose.msra.mxu0 %v2302
      %2312 = vmatprep.subr.mxu0 0.0
      %2313 = vmatpush1.xpose.msra.mxu0 %v2305
      %2314 = vmatprep.subr.mxu0 0.0
      %2315 = vmatpush1.xpose.msra.mxu0 %v2308
      %2316 = vmatprep.subr.mxu0 0.0
      %2317 = vmatpush1.xpose.msra.mxu0 0.0
      %2318 = vmatprep.subr.mxu0 0.0
      %2319 = vmatpush1.xpose.msra.mxu0 0.0
      %2320 = vmatprep.subr.mxu0 0.0
      %2321 = vmatpush1.xpose.msra.mxu0 0.0
      %2322 = vmatprep.subr.mxu0 0.0
      %2323 = vmatpush1.xpose.msra.mxu0 0.0
      %2324 = vmatprep.subr.mxu0 0.0
      %2325 = vmatpush1.xpose.msra.mxu0 0.0
      %2326 = vmatprep.subr.mxu0 0.0
      %2327 = vmatpush1.xpose.msra.mxu0 0.0
      %2328 = vmatprep.subr.mxu0 0.0
      %2329 = vmatpush1.xpose.msra.mxu0 0.0
      %2330 = vmatprep.subr.mxu0 0.0
      %2331 = vmatpush1.xpose.msra.mxu0 0.0
      %2332 = vmatprep.subr.mxu0 0.0
      %2333 = vmatpush1.xpose.msra.mxu0 0.0
      %2334 = vmatprep.subr.mxu0 0.0
      %2335 = vmatpush1.xpose.msra.mxu0 0.0
      %2336 = vmatprep.subr.mxu0 0.0
      %2337 = vmatpush1.xpose.msra.mxu0 0.0
      %2338 = vmatprep.subr.mxu0 0.0
      %2339 = vmatpush1.xpose.msra.mxu0 0.0
      %2340 = vmatprep.subr.mxu0 0.0
      %2341 = vmatpush1.xpose.msra.mxu0 0.0
      %2342 = vmatprep.subr.mxu0 0.0
      %2343 = vmatpush1.xpose.msra.mxu0 0.0
      %2344 = vmatprep.subr.mxu0 0.0
      %2345 = vmatpush1.xpose.msra.mxu0 0.0
      %2346 = vmatprep.subr.mxu0 0.0
      %2347 = vmatpush1.xpose.msra.mxu0 0.0
      %2348 = vmatprep.subr.mxu0 0.0
      %2349 = vmatpush1.xpose.msra.mxu0 0.0
      %2350 = vmatprep.subr.mxu0 0.0
      %2351 = vmatpush1.xpose.msra.mxu0 0.0
      %2352 = vmatprep.subr.mxu0 0.0
      %2353 = vmatpush1.xpose.msra.mxu0 0.0
      %2354 = vmatprep.subr.mxu0 0.0
      %2355 = vmatpush1.xpose.msra.mxu0 0.0
      %2356 = vmatprep.subr.mxu0 0.0
      %2357 = vmatpush1.xpose.msra.mxu0 0.0
      %2358 = vmatprep.subr.mxu0 0.0
      %2359 = vmatpush1.xpose.msra.mxu0 0.0
      %2360 = vmatprep.subr.mxu0 0.0
      %2361 = vmatpush1.xpose.msra.mxu0 0.0
      %2362 = vmatprep.subr.mxu0 0.0
      %2363 = vmatpush1.xpose.msra.mxu0 0.0
      %2364 = vmatprep.subr.mxu0 0.0
      %2365 = vmatpush1.xpose.msra.mxu0 0.0
      %2366 = vmatprep.subr.mxu0 0.0
      %2367 = vmatpush1.xpose.msra.mxu0 0.0
      %2368 = vmatprep.subr.mxu0 0.0
      %2369 = vmatpush1.xpose.msra.mxu0 0.0
      %2370 = vmatprep.subr.mxu0 0.0
      %2371 = vmatpush1.xpose.msra.mxu0 0.0
      %2372 = vmatprep.subr.mxu0 0.0
      %2373 = vmatpush1.xpose.msra.mxu0 0.0
      %2374 = vmatprep.mubr.f32.mxu0 0.0
      %2375 = vmatmul.mubr.f32.gmra.mrb[0].mxu0 %v2293
      %v2376 = vpop.f32.mrb[0].mxu0
      %v2377 = vadd.f32 0.0, %v2376
      %v2378 = vpop.f32.mrb[0].mxu0
      %2379 = vmatprep.mubr.f32.mxu0 0.0
      %2380 = vmatmul.mubr.f32.gmra.mrb[0].mxu0 %v2296
      %v2381 = vpop.f32.mrb[0].mxu0
      %v2382 = vadd.f32 0.0, %v2381
      %v2383 = vpop.f32.mrb[0].mxu0
      %2384 = vmatprep.mubr.f32.mxu0 0.0
      %2385 = vmatmul.mubr.f32.gmra.mrb[0].mxu0 %v2299
      %v2386 = vpop.f32.mrb[0].mxu0
      %v2387 = vadd.f32 0.0, %v2386
      %v2388 = vpop.f32.mrb[0].mxu0
      %2389 = vdwg.mxu0
      %v2390 = vmul.f32 %v2377, 0.35355338
      %v2391 = vmul.f32 %v2382, 0.35355338
      %v2392 = vmul.f32 %v2387, 0.35355338
      %v2393 = vadd.f32 %v2390, %v1191
      %v2394 = vadd.f32 %v2391, %v1191
      %v2395 = vadd.f32 %v2392, %v1191
      %v2396 = vsel %vm1196, %v2393, -inf
      %2397 = vmax.xlane.f32.xlu0 %v2396
      %v2398 = vpop.xlane.xlu0 %2397
      %v2399 = vsel %vm1196, %v2394, -inf
      %2400 = vmax.xlane.f32.xlu0 %v2399
      %v2401 = vpop.xlane.xlu0 %2400
      %v2402 = vsel %vm1203, %v2395, -inf
      %2403 = vmax.xlane.f32.xlu0 %v2402
      %v2404 = vpop.xlane.xlu0 %2403
      %v2405 = vsub.f32 %v2393, %v2398
      %v2406 = vsub.f32 %v2394, %v2401
      %v2407 = vsub.f32 %v2395, %v2404
      %v2408 = vmul.f32 %v2405, 1.442695
      %v2409 = vpow.pop %v2408
      %v2410 = vmul.f32 %v2406, 1.442695
      %v2411 = vpow.pop %v2410
      %v2412 = vmul.f32 %v2407, 1.442695
      %v2413 = vpow.pop %v2412
      %v2414 = vsel %vm1196, %v2409, 0.0
      %2415 = vadd.xlane.f32.xlu0 %v2414
      %v2416 = vpop.xlane.xlu0 %2415
      %v2417 = vsel %vm1196, %v2411, 0.0
      %2418 = vadd.xlane.f32.xlu0 %v2417
      %v2419 = vpop.xlane.xlu0 %2418
      %v2420 = vsel %vm1203, %v2413, 0.0
      %2421 = vadd.xlane.f32.xlu0 %v2420
      %v2422 = vpop.xlane.xlu0 %2421
      %v2423 = vrcp.pop %v2416
      %v2424 = vrcp.pop %v2419
      %v2425 = vrcp.pop %v2422
      %v2426 = vmul.f32 %v2409, %v2423
      %v2427 = vmul.f32 %v2411, %v2424
      %v2428 = vmul.f32 %v2413, %v2425
      %v2430 = vsel %vm1196, %v2426, 0
      %v2433 = vsel %vm1196, %v2427, 0
      %v2436 = vsel %vm1196, %v2428, 0
      %v2439 = vsel %vm1240, %v2289, 0
      %2441 = vmatprep.subr.mxu0 0.0
      %2442 = vmatpush1.msra.mxu0 %v2279
      %2443 = vmatprep.subr.mxu0 0.0
      %2444 = vmatpush1.msra.mxu0 %v2284
      %2445 = vmatprep.subr.mxu0 0.0
      %2446 = vmatpush1.msra.mxu0 %v2439
      %2447 = vmatprep.subr.mxu0 0.0
      %2448 = vmatpush1.msra.mxu0 0.0
      %2449 = vmatprep.subr.mxu0 0.0
      %2450 = vmatpush1.msra.mxu0 0.0
      %2451 = vmatprep.subr.mxu0 0.0
      %2452 = vmatpush1.msra.mxu0 0.0
      %2453 = vmatprep.subr.mxu0 0.0
      %2454 = vmatpush1.msra.mxu0 0.0
      %2455 = vmatprep.subr.mxu0 0.0
      %2456 = vmatpush1.msra.mxu0 0.0
      %2457 = vmatprep.subr.mxu0 0.0
      %2458 = vmatpush1.msra.mxu0 0.0
      %2459 = vmatprep.subr.mxu0 0.0
      %2460 = vmatpush1.msra.mxu0 0.0
      %2461 = vmatprep.subr.mxu0 0.0
      %2462 = vmatpush1.msra.mxu0 0.0
      %2463 = vmatprep.subr.mxu0 0.0
      %2464 = vmatpush1.msra.mxu0 0.0
      %2465 = vmatprep.subr.mxu0 0.0
      %2466 = vmatpush1.msra.mxu0 0.0
      %2467 = vmatprep.subr.mxu0 0.0
      %2468 = vmatpush1.msra.mxu0 0.0
      %2469 = vmatprep.subr.mxu0 0.0
      %2470 = vmatpush1.msra.mxu0 0.0
      %2471 = vmatprep.subr.mxu0 0.0
      %2472 = vmatpush1.msra.mxu0 0.0
      %2473 = vmatprep.subr.mxu0 0.0
      %2474 = vmatpush1.msra.mxu0 0.0
      %2475 = vmatprep.subr.mxu0 0.0
      %2476 = vmatpush1.msra.mxu0 0.0
      %2477 = vmatprep.subr.mxu0 0.0
      %2478 = vmatpush1.msra.mxu0 0.0
      %2479 = vmatprep.subr.mxu0 0.0
      %2480 = vmatpush1.msra.mxu0 0.0
      %2481 = vmatprep.subr.mxu0 0.0
      %2482 = vmatpush1.msra.mxu0 0.0
      %2483 = vmatprep.subr.mxu0 0.0
      %2484 = vmatpush1.msra.mxu0 0.0
      %2485 = vmatprep.subr.mxu0 0.0
      %2486 = vmatpush1.msra.mxu0 0.0
      %2487 = vmatprep.subr.mxu0 0.0
      %2488 = vmatpush1.msra.mxu0 0.0
      %2489 = vmatprep.subr.mxu0 0.0
      %2490 = vmatpush1.msra.mxu0 0.0
      %2491 = vmatprep.subr.mxu0 0.0
      %2492 = vmatpush1.msra.mxu0 0.0
      %2493 = vmatprep.subr.mxu0 0.0
      %2494 = vmatpush1.msra.mxu0 0.0
      %2495 = vmatprep.subr.mxu0 0.0
      %2496 = vmatpush1.msra.mxu0 0.0
      %2497 = vmatprep.subr.mxu0 0.0
      %2498 = vmatpush1.msra.mxu0 0.0
      %2499 = vmatprep.subr.mxu0 0.0
      %2500 = vmatpush1.msra.mxu0 0.0
      %2501 = vmatprep.subr.mxu0 0.0
      %2502 = vmatpush1.msra.mxu0 0.0
      %2503 = vmatprep.subr.mxu0 0.0
      %2504 = vmatpush1.msra.mxu0 0.0
      %2505 = vmatprep.mubr.f32.mxu0 0.0
      %2506 = vmatmul.mubr.f32.gmra.mrb[0].mxu0 %v2430
      %v2507 = vpop.f32.mrb[0].mxu0
      %v2508 = vadd.f32 0.0, %v2507
      %v2509 = vpop.f32.mrb[0].mxu0
      %2510 = vmatprep.mubr.f32.mxu0 0.0
      %2511 = vmatmul.mubr.f32.gmra.mrb[0].mxu0 %v2433
      %v2512 = vpop.f32.mrb[0].mxu0
      %v2513 = vadd.f32 0.0, %v2512
      %v2514 = vpop.f32.mrb[0].mxu0
      %2515 = vmatprep.mubr.f32.mxu0 0.0
      %2516 = vmatmul.mubr.f32.gmra.mrb[0].mxu0 %v2436
      %v2517 = vpop.f32.mrb[0].mxu0
      %v2518 = vadd.f32 0.0, %v2517
      %v2519 = vpop.f32.mrb[0].mxu0
      %2520 = vdwg.mxu0
      %s2521 = scalar_lea.vmem %s9, 16
      %v2522 = vld [vmem:[%s2521] sm:$0xff]
      %v2524 = vsel %vm1085, %v2508, 0
      %v2527 = vsel %vm1085, %v2513, 0
      %v2530 = vsel %vm1085, %v2518, 0
      %2532 = vmatprep.subr.mxu0 0.0
      %2533 = vmatpush1.msra.mxu0 %v2522
      %2534 = vmatprep.subr.mxu0 0.0
      %2535 = vmatpush1.msra.mxu0 0.0
      %2536 = vmatprep.subr.mxu0 0.0
      %2537 = vmatpush1.msra.mxu0 0.0
      %2538 = vmatprep.subr.mxu0 0.0
      %2539 = vmatpush1.msra.mxu0 0.0
      %2540 = vmatprep.subr.mxu0 0.0
      %2541 = vmatpush1.msra.mxu0 0.0
      %2542 = vmatprep.subr.mxu0 0.0
      %2543 = vmatpush1.msra.mxu0 0.0
      %2544 = vmatprep.subr.mxu0 0.0
      %2545 = vmatpush1.msra.mxu0 0.0
      %2546 = vmatprep.subr.mxu0 0.0
      %2547 = vmatpush1.msra.mxu0 0.0
      %2548 = vmatprep.subr.mxu0 0.0
      %2549 = vmatpush1.msra.mxu0 0.0
      %2550 = vmatprep.subr.mxu0 0.0
      %2551 = vmatpush1.msra.mxu0 0.0
      %2552 = vmatprep.subr.mxu0 0.0
      %2553 = vmatpush1.msra.mxu0 0.0
      %2554 = vmatprep.subr.mxu0 0.0
      %2555 = vmatpush1.msra.mxu0 0.0
      %2556 = vmatprep.subr.mxu0 0.0
      %2557 = vmatpush1.msra.mxu0 0.0
      %2558 = vmatprep.subr.mxu0 0.0
      %2559 = vmatpush1.msra.mxu0 0.0
      %2560 = vmatprep.subr.mxu0 0.0
      %2561 = vmatpush1.msra.mxu0 0.0
      %2562 = vmatprep.subr.mxu0 0.0
      %2563 = vmatpush1.msra.mxu0 0.0
      %2564 = vmatprep.subr.mxu0 0.0
      %2565 = vmatpush1.msra.mxu0 0.0
      %2566 = vmatprep.subr.mxu0 0.0
      %2567 = vmatpush1.msra.mxu0 0.0
      %2568 = vmatprep.subr.mxu0 0.0
      %2569 = vmatpush1.msra.mxu0 0.0
      %2570 = vmatprep.subr.mxu0 0.0
      %2571 = vmatpush1.msra.mxu0 0.0
      %2572 = vmatprep.subr.mxu0 0.0
      %2573 = vmatpush1.msra.mxu0 0.0
      %2574 = vmatprep.subr.mxu0 0.0
      %2575 = vmatpush1.msra.mxu0 0.0
      %2576 = vmatprep.subr.mxu0 0.0
      %2577 = vmatpush1.msra.mxu0 0.0
      %2578 = vmatprep.subr.mxu0 0.0
      %2579 = vmatpush1.msra.mxu0 0.0
      %2580 = vmatprep.subr.mxu0 0.0
      %2581 = vmatpush1.msra.mxu0 0.0
      %2582 = vmatprep.subr.mxu0 0.0
      %2583 = vmatpush1.msra.mxu0 0.0
      %2584 = vmatprep.subr.mxu0 0.0
      %2585 = vmatpush1.msra.mxu0 0.0
      %2586 = vmatprep.subr.mxu0 0.0
      %2587 = vmatpush1.msra.mxu0 0.0
      %2588 = vmatprep.subr.mxu0 0.0
      %2589 = vmatpush1.msra.mxu0 0.0
      %2590 = vmatprep.subr.mxu0 0.0
      %2591 = vmatpush1.msra.mxu0 0.0
      %2592 = vmatprep.subr.mxu0 0.0
      %2593 = vmatpush1.msra.mxu0 0.0
      %2594 = vmatprep.subr.mxu0 0.0
      %2595 = vmatpush1.msra.mxu0 0.0
      %2596 = vmatprep.mubr.f32.mxu0 0.0
      %2597 = vmatmul.mubr.f32.gmra.mrb[0].mxu0 %v2524
      %v2598 = vpop.f32.mrb[0].mxu0
      %v2599 = vadd.f32 0.0, %v2598
      %v2600 = vpop.f32.mrb[0].mxu0
      %2601 = vmatprep.mubr.f32.mxu0 0.0
      %2602 = vmatmul.mubr.f32.gmra.mrb[0].mxu0 %v2527
      %v2603 = vpop.f32.mrb[0].mxu0
      %v2604 = vadd.f32 0.0, %v2603
      %v2605 = vpop.f32.mrb[0].mxu0
      %2606 = vmatprep.mubr.f32.mxu0 0.0
      %2607 = vmatmul.mubr.f32.gmra.mrb[0].mxu0 %v2530
      %v2608 = vpop.f32.mrb[0].mxu0
      %v2609 = vadd.f32 0.0, %v2608
      %v2610 = vpop.f32.mrb[0].mxu0
      %2611 = vdwg.mxu0
      %v2612 = vadd.f32 %v2000, %v2599
      %v2613 = vadd.f32 %v2005, %v2604
      %v2614 = vadd.f32 %v2010, %v2609
      %s2615 = scalar_lea.vmem %s7, 96
      %v2616 = vld [vmem:[%s2615] sm:$0xff]
      %v2617 = vld [vmem:[%s2615 + $0x8] sm:$0xff]
      %v2618 = vld [vmem:[%s2615 + $0x10] sm:$0xff]
      %v2619 = vld [vmem:[%s2615 + $0x18] sm:$0xff]
      %s2620 = scalar_lea.vmem %s8, 3
      %v2621 = vld [vmem:[%s2620] sm:$0x1]
      %v2623 = vlaneseq
      %v2624 = vshrl.u32 %v2623, 7
      %v2625 = vsub.s32 0, %v2624
      %v2626 = vrot.slane %v2621, %v2625
      %2628 = vmatprep.subr.mxu0 0.0
      %2629 = vmatpush1.msra.mxu0 %v2616
      %2630 = vmatprep.subr.mxu0 0.0
      %2631 = vmatpush1.msra.mxu0 %v2617
      %2632 = vmatprep.subr.mxu0 0.0
      %2633 = vmatpush1.msra.mxu0 %v2618
      %2634 = vmatprep.subr.mxu0 0.0
      %2635 = vmatpush1.msra.mxu0 %v2619
      %2636 = vmatprep.subr.mxu0 0.0
      %2637 = vmatpush1.msra.mxu0 0.0
      %2638 = vmatprep.subr.mxu0 0.0
      %2639 = vmatpush1.msra.mxu0 0.0
      %2640 = vmatprep.subr.mxu0 0.0
      %2641 = vmatpush1.msra.mxu0 0.0
      %2642 = vmatprep.subr.mxu0 0.0
      %2643 = vmatpush1.msra.mxu0 0.0
      %2644 = vmatprep.subr.mxu0 0.0
      %2645 = vmatpush1.msra.mxu0 0.0
      %2646 = vmatprep.subr.mxu0 0.0
      %2647 = vmatpush1.msra.mxu0 0.0
      %2648 = vmatprep.subr.mxu0 0.0
      %2649 = vmatpush1.msra.mxu0 0.0
      %2650 = vmatprep.subr.mxu0 0.0
      %2651 = vmatpush1.msra.mxu0 0.0
      %2652 = vmatprep.subr.mxu0 0.0
      %2653 = vmatpush1.msra.mxu0 0.0
      %2654 = vmatprep.subr.mxu0 0.0
      %2655 = vmatpush1.msra.mxu0 0.0
      %2656 = vmatprep.subr.mxu0 0.0
      %2657 = vmatpush1.msra.mxu0 0.0
      %2658 = vmatprep.subr.mxu0 0.0
      %2659 = vmatpush1.msra.mxu0 0.0
      %2660 = vmatprep.subr.mxu0 0.0
      %2661 = vmatpush1.msra.mxu0 0.0
      %2662 = vmatprep.subr.mxu0 0.0
      %2663 = vmatpush1.msra.mxu0 0.0
      %2664 = vmatprep.subr.mxu0 0.0
      %2665 = vmatpush1.msra.mxu0 0.0
      %2666 = vmatprep.subr.mxu0 0.0
      %2667 = vmatpush1.msra.mxu0 0.0
      %2668 = vmatprep.subr.mxu0 0.0
      %2669 = vmatpush1.msra.mxu0 0.0
      %2670 = vmatprep.subr.mxu0 0.0
      %2671 = vmatpush1.msra.mxu0 0.0
      %2672 = vmatprep.subr.mxu0 0.0
      %2673 = vmatpush1.msra.mxu0 0.0
      %2674 = vmatprep.subr.mxu0 0.0
      %2675 = vmatpush1.msra.mxu0 0.0
      %2676 = vmatprep.subr.mxu0 0.0
      %2677 = vmatpush1.msra.mxu0 0.0
      %2678 = vmatprep.subr.mxu0 0.0
      %2679 = vmatpush1.msra.mxu0 0.0
      %2680 = vmatprep.subr.mxu0 0.0
      %2681 = vmatpush1.msra.mxu0 0.0
      %2682 = vmatprep.subr.mxu0 0.0
      %2683 = vmatpush1.msra.mxu0 0.0
      %2684 = vmatprep.subr.mxu0 0.0
      %2685 = vmatpush1.msra.mxu0 0.0
      %2686 = vmatprep.subr.mxu0 0.0
      %2687 = vmatpush1.msra.mxu0 0.0
      %2688 = vmatprep.subr.mxu0 0.0
      %2689 = vmatpush1.msra.mxu0 0.0
      %2690 = vmatprep.subr.mxu0 0.0
      %2691 = vmatpush1.msra.mxu0 0.0
      %2692 = vmatprep.mubr.f32.mxu0 0.0
      %2693 = vmatmul.mubr.f32.gmra.mrb[0].mxu0 %v811
      %v2694 = vpop.f32.mrb[0].mxu0
      %v2695 = vadd.f32 %v2626, %v2694
      %v2696 = vpop.f32.mrb[0].mxu0
      %2697 = vmatprep.mubr.f32.mxu0 0.0
      %2698 = vmatmul.mubr.f32.gmra.mrb[0].mxu0 %v814
      %v2699 = vpop.f32.mrb[0].mxu0
      %v2700 = vadd.f32 %v2626, %v2699
      %v2701 = vpop.f32.mrb[0].mxu0
      %2702 = vmatprep.mubr.f32.mxu0 0.0
      %2703 = vmatmul.mubr.f32.gmra.mrb[0].mxu0 %v817
      %v2704 = vpop.f32.mrb[0].mxu0
      %v2705 = vadd.f32 %v2626, %v2704
      %v2706 = vpop.f32.mrb[0].mxu0
      %2707 = vdwg.mxu0
      %s2708 = scalar_lea.vmem %s7, 224
      %v2709 = vld [vmem:[%s2708] sm:$0xff]
      %v2710 = vld [vmem:[%s2708 + $0x8] sm:$0xff]
      %v2711 = vld [vmem:[%s2708 + $0x10] sm:$0xff]
      %v2712 = vld [vmem:[%s2708 + $0x18] sm:$0xff]
      %s2713 = scalar_lea.vmem %s8, 7
      %v2714 = vld [vmem:[%s2713] sm:$0x1]
      %v2716 = vlaneseq
      %v2717 = vshrl.u32 %v2716, 7
      %v2718 = vsub.s32 0, %v2717
      %v2719 = vrot.slane %v2714, %v2718
      %2721 = vmatprep.subr.mxu0 0.0
      %2722 = vmatpush1.msra.mxu0 %v2709
      %2723 = vmatprep.subr.mxu0 0.0
      %2724 = vmatpush1.msra.mxu0 %v2710
      %2725 = vmatprep.subr.mxu0 0.0
      %2726 = vmatpush1.msra.mxu0 %v2711
      %2727 = vmatprep.subr.mxu0 0.0
      %2728 = vmatpush1.msra.mxu0 %v2712
      %2729 = vmatprep.subr.mxu0 0.0
      %2730 = vmatpush1.msra.mxu0 0.0
      %2731 = vmatprep.subr.mxu0 0.0
      %2732 = vmatpush1.msra.mxu0 0.0
      %2733 = vmatprep.subr.mxu0 0.0
      %2734 = vmatpush1.msra.mxu0 0.0
      %2735 = vmatprep.subr.mxu0 0.0
      %2736 = vmatpush1.msra.mxu0 0.0
      %2737 = vmatprep.subr.mxu0 0.0
      %2738 = vmatpush1.msra.mxu0 0.0
      %2739 = vmatprep.subr.mxu0 0.0
      %2740 = vmatpush1.msra.mxu0 0.0
      %2741 = vmatprep.subr.mxu0 0.0
      %2742 = vmatpush1.msra.mxu0 0.0
      %2743 = vmatprep.subr.mxu0 0.0
      %2744 = vmatpush1.msra.mxu0 0.0
      %2745 = vmatprep.subr.mxu0 0.0
      %2746 = vmatpush1.msra.mxu0 0.0
      %2747 = vmatprep.subr.mxu0 0.0
      %2748 = vmatpush1.msra.mxu0 0.0
      %2749 = vmatprep.subr.mxu0 0.0
      %2750 = vmatpush1.msra.mxu0 0.0
      %2751 = vmatprep.subr.mxu0 0.0
      %2752 = vmatpush1.msra.mxu0 0.0
      %2753 = vmatprep.subr.mxu0 0.0
      %2754 = vmatpush1.msra.mxu0 0.0
      %2755 = vmatprep.subr.mxu0 0.0
      %2756 = vmatpush1.msra.mxu0 0.0
      %2757 = vmatprep.subr.mxu0 0.0
      %2758 = vmatpush1.msra.mxu0 0.0
      %2759 = vmatprep.subr.mxu0 0.0
      %2760 = vmatpush1.msra.mxu0 0.0
      %2761 = vmatprep.subr.mxu0 0.0
      %2762 = vmatpush1.msra.mxu0 0.0
      %2763 = vmatprep.subr.mxu0 0.0
      %2764 = vmatpush1.msra.mxu0 0.0
      %2765 = vmatprep.subr.mxu0 0.0
      %2766 = vmatpush1.msra.mxu0 0.0
      %2767 = vmatprep.subr.mxu0 0.0
      %2768 = vmatpush1.msra.mxu0 0.0
      %2769 = vmatprep.subr.mxu0 0.0
      %2770 = vmatpush1.msra.mxu0 0.0
      %2771 = vmatprep.subr.mxu0 0.0
      %2772 = vmatpush1.msra.mxu0 0.0
      %2773 = vmatprep.subr.mxu0 0.0
      %2774 = vmatpush1.msra.mxu0 0.0
      %2775 = vmatprep.subr.mxu0 0.0
      %2776 = vmatpush1.msra.mxu0 0.0
      %2777 = vmatprep.subr.mxu0 0.0
      %2778 = vmatpush1.msra.mxu0 0.0
      %2779 = vmatprep.subr.mxu0 0.0
      %2780 = vmatpush1.msra.mxu0 0.0
      %2781 = vmatprep.subr.mxu0 0.0
      %2782 = vmatpush1.msra.mxu0 0.0
      %2783 = vmatprep.subr.mxu0 0.0
      %2784 = vmatpush1.msra.mxu0 0.0
      %2785 = vmatprep.mubr.f32.mxu0 0.0
      %2786 = vmatmul.mubr.f32.gmra.mrb[0].mxu0 %v811
      %v2787 = vpop.f32.mrb[0].mxu0
      %v2788 = vadd.f32 %v2719, %v2787
      %v2789 = vpop.f32.mrb[0].mxu0
      %2790 = vmatprep.mubr.f32.mxu0 0.0
      %2791 = vmatmul.mubr.f32.gmra.mrb[0].mxu0 %v814
      %v2792 = vpop.f32.mrb[0].mxu0
      %v2793 = vadd.f32 %v2719, %v2792
      %v2794 = vpop.f32.mrb[0].mxu0
      %2795 = vmatprep.mubr.f32.mxu0 0.0
      %2796 = vmatmul.mubr.f32.gmra.mrb[0].mxu0 %v817
      %v2797 = vpop.f32.mrb[0].mxu0
      %v2798 = vadd.f32 %v2719, %v2797
      %v2799 = vpop.f32.mrb[0].mxu0
      %2800 = vdwg.mxu0
      %s2801 = scalar_lea.vmem %s7, 352
      %v2802 = vld [vmem:[%s2801] sm:$0xff]
      %v2803 = vld [vmem:[%s2801 + $0x8] sm:$0xff]
      %v2804 = vld [vmem:[%s2801 + $0x10] sm:$0xff]
      %v2805 = vld [vmem:[%s2801 + $0x18] sm:$0xff]
      %s2806 = scalar_lea.vmem %s8, 11
      %v2807 = vld [vmem:[%s2806] sm:$0x1]
      %v2809 = vlaneseq
      %v2810 = vshrl.u32 %v2809, 7
      %v2811 = vsub.s32 0, %v2810
      %v2812 = vrot.slane %v2807, %v2811
      %2814 = vmatprep.subr.mxu0 0.0
      %2815 = vmatpush1.msra.mxu0 %v2802
      %2816 = vmatprep.subr.mxu0 0.0
      %2817 = vmatpush1.msra.mxu0 %v2803
      %2818 = vmatprep.subr.mxu0 0.0
      %2819 = vmatpush1.msra.mxu0 %v2804
      %2820 = vmatprep.subr.mxu0 0.0
      %2821 = vmatpush1.msra.mxu0 %v2805
      %2822 = vmatprep.subr.mxu0 0.0
      %2823 = vmatpush1.msra.mxu0 0.0
      %2824 = vmatprep.subr.mxu0 0.0
      %2825 = vmatpush1.msra.mxu0 0.0
      %2826 = vmatprep.subr.mxu0 0.0
      %2827 = vmatpush1.msra.mxu0 0.0
      %2828 = vmatprep.subr.mxu0 0.0
      %2829 = vmatpush1.msra.mxu0 0.0
      %2830 = vmatprep.subr.mxu0 0.0
      %2831 = vmatpush1.msra.mxu0 0.0
      %2832 = vmatprep.subr.mxu0 0.0
      %2833 = vmatpush1.msra.mxu0 0.0
      %2834 = vmatprep.subr.mxu0 0.0
      %2835 = vmatpush1.msra.mxu0 0.0
      %2836 = vmatprep.subr.mxu0 0.0
      %2837 = vmatpush1.msra.mxu0 0.0
      %2838 = vmatprep.subr.mxu0 0.0
      %2839 = vmatpush1.msra.mxu0 0.0
      %2840 = vmatprep.subr.mxu0 0.0
      %2841 = vmatpush1.msra.mxu0 0.0
      %2842 = vmatprep.subr.mxu0 0.0
      %2843 = vmatpush1.msra.mxu0 0.0
      %2844 = vmatprep.subr.mxu0 0.0
      %2845 = vmatpush1.msra.mxu0 0.0
      %2846 = vmatprep.subr.mxu0 0.0
      %2847 = vmatpush1.msra.mxu0 0.0
      %2848 = vmatprep.subr.mxu0 0.0
      %2849 = vmatpush1.msra.mxu0 0.0
      %2850 = vmatprep.subr.mxu0 0.0
      %2851 = vmatpush1.msra.mxu0 0.0
      %2852 = vmatprep.subr.mxu0 0.0
      %2853 = vmatpush1.msra.mxu0 0.0
      %2854 = vmatprep.subr.mxu0 0.0
      %2855 = vmatpush1.msra.mxu0 0.0
      %2856 = vmatprep.subr.mxu0 0.0
      %2857 = vmatpush1.msra.mxu0 0.0
      %2858 = vmatprep.subr.mxu0 0.0
      %2859 = vmatpush1.msra.mxu0 0.0
      %2860 = vmatprep.subr.mxu0 0.0
      %2861 = vmatpush1.msra.mxu0 0.0
      %2862 = vmatprep.subr.mxu0 0.0
      %2863 = vmatpush1.msra.mxu0 0.0
      %2864 = vmatprep.subr.mxu0 0.0
      %2865 = vmatpush1.msra.mxu0 0.0
      %2866 = vmatprep.subr.mxu0 0.0
      %2867 = vmatpush1.msra.mxu0 0.0
      %2868 = vmatprep.subr.mxu0 0.0
      %2869 = vmatpush1.msra.mxu0 0.0
      %2870 = vmatprep.subr.mxu0 0.0
      %2871 = vmatpush1.msra.mxu0 0.0
      %2872 = vmatprep.subr.mxu0 0.0
      %2873 = vmatpush1.msra.mxu0 0.0
      %2874 = vmatprep.subr.mxu0 0.0
      %2875 = vmatpush1.msra.mxu0 0.0
      %2876 = vmatprep.subr.mxu0 0.0
      %2877 = vmatpush1.msra.mxu0 0.0
      %2878 = vmatprep.mubr.f32.mxu0 0.0
      %2879 = vmatmul.mubr.f32.gmra.mrb[0].mxu0 %v811
      %v2880 = vpop.f32.mrb[0].mxu0
      %v2881 = vadd.f32 %v2812, %v2880
      %v2882 = vpop.f32.mrb[0].mxu0
      %2883 = vmatprep.mubr.f32.mxu0 0.0
      %2884 = vmatmul.mubr.f32.gmra.mrb[0].mxu0 %v814
      %v2885 = vpop.f32.mrb[0].mxu0
      %v2886 = vadd.f32 %v2812, %v2885
      %v2887 = vpop.f32.mrb[0].mxu0
      %2888 = vmatprep.mubr.f32.mxu0 0.0
      %2889 = vmatmul.mubr.f32.gmra.mrb[0].mxu0 %v817
      %v2890 = vpop.f32.mrb[0].mxu0
      %v2891 = vadd.f32 %v2812, %v2890
      %v2892 = vpop.f32.mrb[0].mxu0
      %2893 = vdwg.mxu0
      %v2895 = vsel %vm1085, %v2695, 0
      %v2898 = vsel %vm1085, %v2700, 0
      %v2901 = vsel %vm1085, %v2705, 0
      %v2904 = vsel %vm1085, %v2788, 0
      %v2907 = vsel %vm1085, %v2793, 0
      %v2910 = vsel %vm1085, %v2798, 0
      %2912 = vmatprep.subr.mxu0 0.0
      %2913 = vmatpush1.xpose.msra.mxu0 %v2904
      %2914 = vmatprep.subr.mxu0 0.0
      %2915 = vmatpush1.xpose.msra.mxu0 %v2907
      %2916 = vmatprep.subr.mxu0 0.0
      %2917 = vmatpush1.xpose.msra.mxu0 %v2910
      %2918 = vmatprep.subr.mxu0 0.0
      %2919 = vmatpush1.xpose.msra.mxu0 0.0
      %2920 = vmatprep.subr.mxu0 0.0
      %2921 = vmatpush1.xpose.msra.mxu0 0.0
      %2922 = vmatprep.subr.mxu0 0.0
      %2923 = vmatpush1.xpose.msra.mxu0 0.0
      %2924 = vmatprep.subr.mxu0 0.0
      %2925 = vmatpush1.xpose.msra.mxu0 0.0
      %2926 = vmatprep.subr.mxu0 0.0
      %2927 = vmatpush1.xpose.msra.mxu0 0.0
      %2928 = vmatprep.subr.mxu0 0.0
      %2929 = vmatpush1.xpose.msra.mxu0 0.0
      %2930 = vmatprep.subr.mxu0 0.0
      %2931 = vmatpush1.xpose.msra.mxu0 0.0
      %2932 = vmatprep.subr.mxu0 0.0
      %2933 = vmatpush1.xpose.msra.mxu0 0.0
      %2934 = vmatprep.subr.mxu0 0.0
      %2935 = vmatpush1.xpose.msra.mxu0 0.0
      %2936 = vmatprep.subr.mxu0 0.0
      %2937 = vmatpush1.xpose.msra.mxu0 0.0
      %2938 = vmatprep.subr.mxu0 0.0
      %2939 = vmatpush1.xpose.msra.mxu0 0.0
      %2940 = vmatprep.subr.mxu0 0.0
      %2941 = vmatpush1.xpose.msra.mxu0 0.0
      %2942 = vmatprep.subr.mxu0 0.0
      %2943 = vmatpush1.xpose.msra.mxu0 0.0
      %2944 = vmatprep.subr.mxu0 0.0
      %2945 = vmatpush1.xpose.msra.mxu0 0.0
      %2946 = vmatprep.subr.mxu0 0.0
      %2947 = vmatpush1.xpose.msra.mxu0 0.0
      %2948 = vmatprep.subr.mxu0 0.0
      %2949 = vmatpush1.xpose.msra.mxu0 0.0
      %2950 = vmatprep.subr.mxu0 0.0
      %2951 = vmatpush1.xpose.msra.mxu0 0.0
      %2952 = vmatprep.subr.mxu0 0.0
      %2953 = vmatpush1.xpose.msra.mxu0 0.0
      %2954 = vmatprep.subr.mxu0 0.0
      %2955 = vmatpush1.xpose.msra.mxu0 0.0
      %2956 = vmatprep.subr.mxu0 0.0
      %2957 = vmatpush1.xpose.msra.mxu0 0.0
      %2958 = vmatprep.subr.mxu0 0.0
      %2959 = vmatpush1.xpose.msra.mxu0 0.0
      %2960 = vmatprep.subr.mxu0 0.0
      %2961 = vmatpush1.xpose.msra.mxu0 0.0
      %2962 = vmatprep.subr.mxu0 0.0
      %2963 = vmatpush1.xpose.msra.mxu0 0.0
      %2964 = vmatprep.subr.mxu0 0.0
      %2965 = vmatpush1.xpose.msra.mxu0 0.0
      %2966 = vmatprep.subr.mxu0 0.0
      %2967 = vmatpush1.xpose.msra.mxu0 0.0
      %2968 = vmatprep.subr.mxu0 0.0
      %2969 = vmatpush1.xpose.msra.mxu0 0.0
      %2970 = vmatprep.subr.mxu0 0.0
      %2971 = vmatpush1.xpose.msra.mxu0 0.0
      %2972 = vmatprep.subr.mxu0 0.0
      %2973 = vmatpush1.xpose.msra.mxu0 0.0
      %2974 = vmatprep.subr.mxu0 0.0
      %2975 = vmatpush1.xpose.msra.mxu0 0.0
      %2976 = vmatprep.mubr.f32.mxu0 0.0
      %2977 = vmatmul.mubr.f32.gmra.mrb[0].mxu0 %v2895
      %v2978 = vpop.f32.mrb[0].mxu0
      %v2979 = vadd.f32 0.0, %v2978
      %v2980 = vpop.f32.mrb[0].mxu0
      %2981 = vmatprep.mubr.f32.mxu0 0.0
      %2982 = vmatmul.mubr.f32.gmra.mrb[0].mxu0 %v2898
      %v2983 = vpop.f32.mrb[0].mxu0
      %v2984 = vadd.f32 0.0, %v2983
      %v2985 = vpop.f32.mrb[0].mxu0
      %2986 = vmatprep.mubr.f32.mxu0 0.0
      %2987 = vmatmul.mubr.f32.gmra.mrb[0].mxu0 %v2901
      %v2988 = vpop.f32.mrb[0].mxu0
      %v2989 = vadd.f32 0.0, %v2988
      %v2990 = vpop.f32.mrb[0].mxu0
      %2991 = vdwg.mxu0
      %v2992 = vmul.f32 %v2979, 0.35355338
      %v2993 = vmul.f32 %v2984, 0.35355338
      %v2994 = vmul.f32 %v2989, 0.35355338
      %v2995 = vadd.f32 %v2992, %v1191
      %v2996 = vadd.f32 %v2993, %v1191
      %v2997 = vadd.f32 %v2994, %v1191
      %v2998 = vsel %vm1196, %v2995, -inf
      %2999 = vmax.xlane.f32.xlu0 %v2998
      %v3000 = vpop.xlane.xlu0 %2999
      %v3001 = vsel %vm1196, %v2996, -inf
      %3002 = vmax.xlane.f32.xlu0 %v3001
      %v3003 = vpop.xlane.xlu0 %3002
      %v3004 = vsel %vm1203, %v2997, -inf
      %3005 = vmax.xlane.f32.xlu0 %v3004
      %v3006 = vpop.xlane.xlu0 %3005
      %v3007 = vsub.f32 %v2995, %v3000
      %v3008 = vsub.f32 %v2996, %v3003
      %v3009 = vsub.f32 %v2997, %v3006
      %v3010 = vmul.f32 %v3007, 1.442695
      %v3011 = vpow.pop %v3010
      %v3012 = vmul.f32 %v3008, 1.442695
      %v3013 = vpow.pop %v3012
      %v3014 = vmul.f32 %v3009, 1.442695
      %v3015 = vpow.pop %v3014
      %v3016 = vsel %vm1196, %v3011, 0.0
      %3017 = vadd.xlane.f32.xlu0 %v3016
      %v3018 = vpop.xlane.xlu0 %3017
      %v3019 = vsel %vm1196, %v3013, 0.0
      %3020 = vadd.xlane.f32.xlu0 %v3019
      %v3021 = vpop.xlane.xlu0 %3020
      %v3022 = vsel %vm1203, %v3015, 0.0
      %3023 = vadd.xlane.f32.xlu0 %v3022
      %v3024 = vpop.xlane.xlu0 %3023
      %v3025 = vrcp.pop %v3018
      %v3026 = vrcp.pop %v3021
      %v3027 = vrcp.pop %v3024
      %v3028 = vmul.f32 %v3011, %v3025
      %v3029 = vmul.f32 %v3013, %v3026
      %v3030 = vmul.f32 %v3015, %v3027
      %v3032 = vsel %vm1196, %v3028, 0
      %v3035 = vsel %vm1196, %v3029, 0
      %v3038 = vsel %vm1196, %v3030, 0
      %v3041 = vsel %vm1240, %v2891, 0
      %3043 = vmatprep.subr.mxu0 0.0
      %3044 = vmatpush1.msra.mxu0 %v2881
      %3045 = vmatprep.subr.mxu0 0.0
      %3046 = vmatpush1.msra.mxu0 %v2886
      %3047 = vmatprep.subr.mxu0 0.0
      %3048 = vmatpush1.msra.mxu0 %v3041
      %3049 = vmatprep.subr.mxu0 0.0
      %3050 = vmatpush1.msra.mxu0 0.0
      %3051 = vmatprep.subr.mxu0 0.0
      %3052 = vmatpush1.msra.mxu0 0.0
      %3053 = vmatprep.subr.mxu0 0.0
      %3054 = vmatpush1.msra.mxu0 0.0
      %3055 = vmatprep.subr.mxu0 0.0
      %3056 = vmatpush1.msra.mxu0 0.0
      %3057 = vmatprep.subr.mxu0 0.0
      %3058 = vmatpush1.msra.mxu0 0.0
      %3059 = vmatprep.subr.mxu0 0.0
      %3060 = vmatpush1.msra.mxu0 0.0
      %3061 = vmatprep.subr.mxu0 0.0
      %3062 = vmatpush1.msra.mxu0 0.0
      %3063 = vmatprep.subr.mxu0 0.0
      %3064 = vmatpush1.msra.mxu0 0.0
      %3065 = vmatprep.subr.mxu0 0.0
      %3066 = vmatpush1.msra.mxu0 0.0
      %3067 = vmatprep.subr.mxu0 0.0
      %3068 = vmatpush1.msra.mxu0 0.0
      %3069 = vmatprep.subr.mxu0 0.0
      %3070 = vmatpush1.msra.mxu0 0.0
      %3071 = vmatprep.subr.mxu0 0.0
      %3072 = vmatpush1.msra.mxu0 0.0
      %3073 = vmatprep.subr.mxu0 0.0
      %3074 = vmatpush1.msra.mxu0 0.0
      %3075 = vmatprep.subr.mxu0 0.0
      %3076 = vmatpush1.msra.mxu0 0.0
      %3077 = vmatprep.subr.mxu0 0.0
      %3078 = vmatpush1.msra.mxu0 0.0
      %3079 = vmatprep.subr.mxu0 0.0
      %3080 = vmatpush1.msra.mxu0 0.0
      %3081 = vmatprep.subr.mxu0 0.0
      %3082 = vmatpush1.msra.mxu0 0.0
      %3083 = vmatprep.subr.mxu0 0.0
      %3084 = vmatpush1.msra.mxu0 0.0
      %3085 = vmatprep.subr.mxu0 0.0
      %3086 = vmatpush1.msra.mxu0 0.0
      %3087 = vmatprep.subr.mxu0 0.0
      %3088 = vmatpush1.msra.mxu0 0.0
      %3089 = vmatprep.subr.mxu0 0.0
      %3090 = vmatpush1.msra.mxu0 0.0
      %3091 = vmatprep.subr.mxu0 0.0
      %3092 = vmatpush1.msra.mxu0 0.0
      %3093 = vmatprep.subr.mxu0 0.0
      %3094 = vmatpush1.msra.mxu0 0.0
      %3095 = vmatprep.subr.mxu0 0.0
      %3096 = vmatpush1.msra.mxu0 0.0
      %3097 = vmatprep.subr.mxu0 0.0
      %3098 = vmatpush1.msra.mxu0 0.0
      %3099 = vmatprep.subr.mxu0 0.0
      %3100 = vmatpush1.msra.mxu0 0.0
      %3101 = vmatprep.subr.mxu0 0.0
      %3102 = vmatpush1.msra.mxu0 0.0
      %3103 = vmatprep.subr.mxu0 0.0
      %3104 = vmatpush1.msra.mxu0 0.0
      %3105 = vmatprep.subr.mxu0 0.0
      %3106 = vmatpush1.msra.mxu0 0.0
      %3107 = vmatprep.mubr.f32.mxu0 0.0
      %3108 = vmatmul.mubr.f32.gmra.mrb[0].mxu0 %v3032
      %v3109 = vpop.f32.mrb[0].mxu0
      %v3110 = vadd.f32 0.0, %v3109
      %v3111 = vpop.f32.mrb[0].mxu0
      %3112 = vmatprep.mubr.f32.mxu0 0.0
      %3113 = vmatmul.mubr.f32.gmra.mrb[0].mxu0 %v3035
      %v3114 = vpop.f32.mrb[0].mxu0
      %v3115 = vadd.f32 0.0, %v3114
      %v3116 = vpop.f32.mrb[0].mxu0
      %3117 = vmatprep.mubr.f32.mxu0 0.0
      %3118 = vmatmul.mubr.f32.gmra.mrb[0].mxu0 %v3038
      %v3119 = vpop.f32.mrb[0].mxu0
      %v3120 = vadd.f32 0.0, %v3119
      %v3121 = vpop.f32.mrb[0].mxu0
      %3122 = vdwg.mxu0
      %s3123 = scalar_lea.vmem %s9, 24
      %v3124 = vld [vmem:[%s3123] sm:$0xff]
      %v3126 = vsel %vm1085, %v3110, 0
      %v3129 = vsel %vm1085, %v3115, 0
      %v3132 = vsel %vm1085, %v3120, 0
      %3134 = vmatprep.subr.mxu0 0.0
      %3135 = vmatpush1.msra.mxu0 %v3124
      %3136 = vmatprep.subr.mxu0 0.0
      %3137 = vmatpush1.msra.mxu0 0.0
      %3138 = vmatprep.subr.mxu0 0.0
      %3139 = vmatpush1.msra.mxu0 0.0
      %3140 = vmatprep.subr.mxu0 0.0
      %3141 = vmatpush1.msra.mxu0 0.0
      %3142 = vmatprep.subr.mxu0 0.0
      %3143 = vmatpush1.msra.mxu0 0.0
      %3144 = vmatprep.subr.mxu0 0.0
      %3145 = vmatpush1.msra.mxu0 0.0
      %3146 = vmatprep.subr.mxu0 0.0
      %3147 = vmatpush1.msra.mxu0 0.0
      %3148 = vmatprep.subr.mxu0 0.0
      %3149 = vmatpush1.msra.mxu0 0.0
      %3150 = vmatprep.subr.mxu0 0.0
      %3151 = vmatpush1.msra.mxu0 0.0
      %3152 = vmatprep.subr.mxu0 0.0
      %3153 = vmatpush1.msra.mxu0 0.0
      %3154 = vmatprep.subr.mxu0 0.0
      %3155 = vmatpush1.msra.mxu0 0.0
      %3156 = vmatprep.subr.mxu0 0.0
      %3157 = vmatpush1.msra.mxu0 0.0
      %3158 = vmatprep.subr.mxu0 0.0
      %3159 = vmatpush1.msra.mxu0 0.0
      %3160 = vmatprep.subr.mxu0 0.0
      %3161 = vmatpush1.msra.mxu0 0.0
      %3162 = vmatprep.subr.mxu0 0.0
      %3163 = vmatpush1.msra.mxu0 0.0
      %3164 = vmatprep.subr.mxu0 0.0
      %3165 = vmatpush1.msra.mxu0 0.0
      %3166 = vmatprep.subr.mxu0 0.0
      %3167 = vmatpush1.msra.mxu0 0.0
      %3168 = vmatprep.subr.mxu0 0.0
      %3169 = vmatpush1.msra.mxu0 0.0
      %3170 = vmatprep.subr.mxu0 0.0
      %3171 = vmatpush1.msra.mxu0 0.0
      %3172 = vmatprep.subr.mxu0 0.0
      %3173 = vmatpush1.msra.mxu0 0.0
      %3174 = vmatprep.subr.mxu0 0.0
      %3175 = vmatpush1.msra.mxu0 0.0
      %3176 = vmatprep.subr.mxu0 0.0
      %3177 = vmatpush1.msra.mxu0 0.0
      %3178 = vmatprep.subr.mxu0 0.0
      %3179 = vmatpush1.msra.mxu0 0.0
      %3180 = vmatprep.subr.mxu0 0.0
      %3181 = vmatpush1.msra.mxu0 0.0
      %3182 = vmatprep.subr.mxu0 0.0
      %3183 = vmatpush1.msra.mxu0 0.0
      %3184 = vmatprep.subr.mxu0 0.0
      %3185 = vmatpush1.msra.mxu0 0.0
      %3186 = vmatprep.subr.mxu0 0.0
      %3187 = vmatpush1.msra.mxu0 0.0
      %3188 = vmatprep.subr.mxu0 0.0
      %3189 = vmatpush1.msra.mxu0 0.0
      %3190 = vmatprep.subr.mxu0 0.0
      %3191 = vmatpush1.msra.mxu0 0.0
      %3192 = vmatprep.subr.mxu0 0.0
      %3193 = vmatpush1.msra.mxu0 0.0
      %3194 = vmatprep.subr.mxu0 0.0
      %3195 = vmatpush1.msra.mxu0 0.0
      %3196 = vmatprep.subr.mxu0 0.0
      %3197 = vmatpush1.msra.mxu0 0.0
      %3198 = vmatprep.mubr.f32.mxu0 0.0
      %3199 = vmatmul.mubr.f32.gmra.mrb[0].mxu0 %v3126
      %v3200 = vpop.f32.mrb[0].mxu0
      %v3201 = vadd.f32 0.0, %v3200
      %v3202 = vpop.f32.mrb[0].mxu0
      %3203 = vmatprep.mubr.f32.mxu0 0.0
      %3204 = vmatmul.mubr.f32.gmra.mrb[0].mxu0 %v3129
      %v3205 = vpop.f32.mrb[0].mxu0
      %v3206 = vadd.f32 0.0, %v3205
      %v3207 = vpop.f32.mrb[0].mxu0
      %3208 = vmatprep.mubr.f32.mxu0 0.0
      %3209 = vmatmul.mubr.f32.gmra.mrb[0].mxu0 %v3132
      %v3210 = vpop.f32.mrb[0].mxu0
      %v3211 = vadd.f32 0.0, %v3210
      %v3212 = vpop.f32.mrb[0].mxu0
      %3213 = vdwg.mxu0
      %v3214 = vadd.f32 %v2612, %v3201
      %v3215 = vadd.f32 %v2613, %v3206
      %v3216 = vadd.f32 %v2614, %v3211
      %v3218 = vlaneseq
      %v3219 = vshrl.u32 %v3218, 7
      %v3220 = vsub.s32 0, %v3219
      %v3221 = vrot.slane %v723, %v3220
      %v3223 = vadd.f32 %v3214, %v3221
      %v3224 = vadd.f32 %v3215, %v3221
      %v3225 = vadd.f32 %v3216, %v3221
      %v3226 = vadd.f32 %v717, %v3223
      %v3227 = vadd.f32 %v718, %v3224
      %v3228 = vadd.f32 %v719, %v3225
      %v3229 = vsel %vm600, %v3226, 0.0
      %3230 = vadd.xlane.f32.xlu0 %v3229
      %v3231 = vpop.xlane.xlu0 %3230
      %v3232 = vsel %vm600, %v3227, 0.0
      %3233 = vadd.xlane.f32.xlu0 %v3232
      %v3234 = vpop.xlane.xlu0 %3233
      %v3235 = vsel %vm746, %v3228, 0.0
      %3236 = vadd.xlane.f32.xlu0 %v3235
      %v3237 = vpop.xlane.xlu0 %3236
      %v3238 = vmul.f32 %v3231, %v750
      %v3239 = vmul.f32 %v3234, %v750
      %v3240 = vmul.f32 %v3237, %v750
      %v3241 = vsub.f32 %v3226, %v3238
      %v3242 = vsub.f32 %v3227, %v3239
      %v3243 = vsub.f32 %v3228, %v3240
      %v3244 = vmul.f32 %v3241, %v3241
      %v3245 = vmul.f32 %v3242, %v3242
      %v3246 = vmul.f32 %v3243, %v3243
      %v3247 = vsel %vm600, %v3244, 0.0
      %3248 = vadd.xlane.f32.xlu0 %v3247
      %v3249 = vpop.xlane.xlu0 %3248
      %v3250 = vsel %vm600, %v3245, 0.0
      %3251 = vadd.xlane.f32.xlu0 %v3250
      %v3252 = vpop.xlane.xlu0 %3251
      %v3253 = vsel %vm746, %v3246, 0.0
      %3254 = vadd.xlane.f32.xlu0 %v3253
      %v3255 = vpop.xlane.xlu0 %3254
      %v3256 = vmul.f32 %v3249, %v750
      %v3257 = vmul.f32 %v3252, %v750
      %v3258 = vmul.f32 %v3255, %v750
      %v3259 = vadd.f32 %v3256, 1e-12
      %v3260 = vadd.f32 %v3257, 1e-12
      %v3261 = vadd.f32 %v3258, 1e-12
      %v3262 = vrsqrt.pop %v3259
      %v3263 = vrsqrt.pop %v3260
      %v3264 = vrsqrt.pop %v3261
      %v3265 = vmul.f32 %v3241, %v3262
      %v3266 = vmul.f32 %v3242, %v3263
      %v3267 = vmul.f32 %v3243, %v3264
      %v3269 = vlaneseq
      %v3270 = vshrl.u32 %v3269, 7
      %v3271 = vsub.s32 0, %v3270
      %v3272 = vrot.slane %v724, %v3271
      %v3274 = vmul.f32 %v3265, %v3272
      %v3275 = vmul.f32 %v3266, %v3272
      %v3276 = vmul.f32 %v3267, %v3272
      %v3278 = vlaneseq
      %v3279 = vshrl.u32 %v3278, 7
      %v3280 = vsub.s32 0, %v3279
      %v3281 = vrot.slane %v725, %v3280
      %v3283 = vadd.f32 %v3274, %v3281
      %v3284 = vadd.f32 %v3275, %v3281
      %v3285 = vadd.f32 %v3276, %v3281
      %v3287 = vlaneseq
      %v3288 = vshrl.u32 %v3287, 7
      %v3289 = vsub.s32 0, %v3288
      %v3290 = vrot.slane %v730, %v3289
      %v3293 = vsel %vm600, %v3283, 0
      %v3296 = vsel %vm600, %v3284, 0
      %v3299 = vsel %vm600, %v3285, 0
      %3301 = vmatprep.subr.mxu0 0.0
      %3302 = vmatpush1.msra.mxu0 %v726
      %3303 = vmatprep.subr.mxu0 0.0
      %3304 = vmatpush1.msra.mxu0 %v727
      %3305 = vmatprep.subr.mxu0 0.0
      %3306 = vmatpush1.msra.mxu0 %v728
      %3307 = vmatprep.subr.mxu0 0.0
      %3308 = vmatpush1.msra.mxu0 %v729
      %3309 = vmatprep.subr.mxu0 0.0
      %3310 = vmatpush1.msra.mxu0 0.0
      %3311 = vmatprep.subr.mxu0 0.0
      %3312 = vmatpush1.msra.mxu0 0.0
      %3313 = vmatprep.subr.mxu0 0.0
      %3314 = vmatpush1.msra.mxu0 0.0
      %3315 = vmatprep.subr.mxu0 0.0
      %3316 = vmatpush1.msra.mxu0 0.0
      %3317 = vmatprep.subr.mxu0 0.0
      %3318 = vmatpush1.msra.mxu0 0.0
      %3319 = vmatprep.subr.mxu0 0.0
      %3320 = vmatpush1.msra.mxu0 0.0
      %3321 = vmatprep.subr.mxu0 0.0
      %3322 = vmatpush1.msra.mxu0 0.0
      %3323 = vmatprep.subr.mxu0 0.0
      %3324 = vmatpush1.msra.mxu0 0.0
      %3325 = vmatprep.subr.mxu0 0.0
      %3326 = vmatpush1.msra.mxu0 0.0
      %3327 = vmatprep.subr.mxu0 0.0
      %3328 = vmatpush1.msra.mxu0 0.0
      %3329 = vmatprep.subr.mxu0 0.0
      %3330 = vmatpush1.msra.mxu0 0.0
      %3331 = vmatprep.subr.mxu0 0.0
      %3332 = vmatpush1.msra.mxu0 0.0
      %3333 = vmatprep.subr.mxu0 0.0
      %3334 = vmatpush1.msra.mxu0 0.0
      %3335 = vmatprep.subr.mxu0 0.0
      %3336 = vmatpush1.msra.mxu0 0.0
      %3337 = vmatprep.subr.mxu0 0.0
      %3338 = vmatpush1.msra.mxu0 0.0
      %3339 = vmatprep.subr.mxu0 0.0
      %3340 = vmatpush1.msra.mxu0 0.0
      %3341 = vmatprep.subr.mxu0 0.0
      %3342 = vmatpush1.msra.mxu0 0.0
      %3343 = vmatprep.subr.mxu0 0.0
      %3344 = vmatpush1.msra.mxu0 0.0
      %3345 = vmatprep.subr.mxu0 0.0
      %3346 = vmatpush1.msra.mxu0 0.0
      %3347 = vmatprep.subr.mxu0 0.0
      %3348 = vmatpush1.msra.mxu0 0.0
      %3349 = vmatprep.subr.mxu0 0.0
      %3350 = vmatpush1.msra.mxu0 0.0
      %3351 = vmatprep.subr.mxu0 0.0
      %3352 = vmatpush1.msra.mxu0 0.0
      %3353 = vmatprep.subr.mxu0 0.0
      %3354 = vmatpush1.msra.mxu0 0.0
      %3355 = vmatprep.subr.mxu0 0.0
      %3356 = vmatpush1.msra.mxu0 0.0
      %3357 = vmatprep.subr.mxu0 0.0
      %3358 = vmatpush1.msra.mxu0 0.0
      %3359 = vmatprep.subr.mxu0 0.0
      %3360 = vmatpush1.msra.mxu0 0.0
      %3361 = vmatprep.subr.mxu0 0.0
      %3362 = vmatpush1.msra.mxu0 0.0
      %3363 = vmatprep.subr.mxu0 0.0
      %3364 = vmatpush1.msra.mxu0 0.0
      %3365 = vmatprep.mubr.f32.mxu0 0.0
      %3366 = vmatmul.mubr.f32.gmra.mrb[0].mxu0 %v3293
      %v3367 = vpop.f32.mrb[0].mxu0
      %v3368 = vadd.f32 %v3290, %v3367
      %v3369 = vpop.f32.mrb[0].mxu0
      %3370 = vmatprep.mubr.f32.mxu0 0.0
      %3371 = vmatmul.mubr.f32.gmra.mrb[0].mxu0 %v3296
      %v3372 = vpop.f32.mrb[0].mxu0
      %v3373 = vadd.f32 %v3290, %v3372
      %v3374 = vpop.f32.mrb[0].mxu0
      %3375 = vmatprep.mubr.f32.mxu0 0.0
      %3376 = vmatmul.mubr.f32.gmra.mrb[0].mxu0 %v3299
      %v3377 = vpop.f32.mrb[0].mxu0
      %v3378 = vadd.f32 %v3290, %v3377
      %v3379 = vpop.f32.mrb[0].mxu0
      %3380 = vdwg.mxu0
      %v3381 = vmul.f32 %v3368, %v3368
      %v3382 = vmul.f32 %v3373, %v3373
      %v3383 = vmul.f32 %v3378, %v3378
      %v3384 = vmul.f32 %v3368, %v3381
      %v3385 = vmul.f32 %v3373, %v3382
      %v3386 = vmul.f32 %v3378, %v3383
      %v3387 = vmul.f32 %v3384, 0.044715
      %v3388 = vmul.f32 %v3385, 0.044715
      %v3389 = vmul.f32 %v3386, 0.044715
      %v3390 = vadd.f32 %v3368, %v3387
      %v3391 = vadd.f32 %v3373, %v3388
      %v3392 = vadd.f32 %v3378, %v3389
      %v3393 = vmul.f32 %v3390, 0.7978846
      %v3394 = vmul.f32 %v3391, 0.7978846
      %v3395 = vmul.f32 %v3392, 0.7978846
      %v3396 = vtanh.pop %v3393
      %v3397 = vtanh.pop %v3394
      %v3398 = vtanh.pop %v3395
      %v3399 = vadd.f32 %v3396, 1.0
      %v3400 = vadd.f32 %v3397, 1.0
      %v3401 = vadd.f32 %v3398, 1.0
      %v3402 = vmul.f32 %v3399, 0.5
      %v3403 = vmul.f32 %v3400, 0.5
      %v3404 = vmul.f32 %v3401, 0.5
      %v3405 = vmul.f32 %v3368, %v3402
      %v3406 = vmul.f32 %v3373, %v3403
      %v3407 = vmul.f32 %v3378, %v3404
      %vm3408 = vcmask 523264
      %v3410 = vsel %vm3408, %v3405, 0
      %v3413 = vsel %vm3408, %v3406, 0
      %v3416 = vsel %vm3408, %v3407, 0
      %3418 = vmatprep.subr.mxu0 0.0
      %3419 = vmatpush1.msra.mxu0 %v731
      %3420 = vmatprep.subr.mxu0 0.0
      %3421 = vmatpush1.msra.mxu0 %v732
      %3422 = vmatprep.subr.mxu0 0.0
      %3423 = vmatpush1.msra.mxu0 %v733
      %3424 = vmatprep.subr.mxu0 0.0
      %3425 = vmatpush1.msra.mxu0 %v734
      %3426 = vmatprep.subr.mxu0 0.0
      %3427 = vmatpush1.msra.mxu0 %v735
      %3428 = vmatprep.subr.mxu0 0.0
      %3429 = vmatpush1.msra.mxu0 %v736
      %3430 = vmatprep.subr.mxu0 0.0
      %3431 = vmatpush1.msra.mxu0 %v737
      %3432 = vmatprep.subr.mxu0 0.0
      %3433 = vmatpush1.msra.mxu0 %v738
      %3434 = vmatprep.subr.mxu0 0.0
      %3435 = vmatpush1.msra.mxu0 0.0
      %3436 = vmatprep.subr.mxu0 0.0
      %3437 = vmatpush1.msra.mxu0 0.0
      %3438 = vmatprep.subr.mxu0 0.0
      %3439 = vmatpush1.msra.mxu0 0.0
      %3440 = vmatprep.subr.mxu0 0.0
      %3441 = vmatpush1.msra.mxu0 0.0
      %3442 = vmatprep.subr.mxu0 0.0
      %3443 = vmatpush1.msra.mxu0 0.0
      %3444 = vmatprep.subr.mxu0 0.0
      %3445 = vmatpush1.msra.mxu0 0.0
      %3446 = vmatprep.subr.mxu0 0.0
      %3447 = vmatpush1.msra.mxu0 0.0
      %3448 = vmatprep.subr.mxu0 0.0
      %3449 = vmatpush1.msra.mxu0 0.0
      %3450 = vmatprep.subr.mxu0 0.0
      %3451 = vmatpush1.msra.mxu0 0.0
      %3452 = vmatprep.subr.mxu0 0.0
      %3453 = vmatpush1.msra.mxu0 0.0
      %3454 = vmatprep.subr.mxu0 0.0
      %3455 = vmatpush1.msra.mxu0 0.0
      %3456 = vmatprep.subr.mxu0 0.0
      %3457 = vmatpush1.msra.mxu0 0.0
      %3458 = vmatprep.subr.mxu0 0.0
      %3459 = vmatpush1.msra.mxu0 0.0
      %3460 = vmatprep.subr.mxu0 0.0
      %3461 = vmatpush1.msra.mxu0 0.0
      %3462 = vmatprep.subr.mxu0 0.0
      %3463 = vmatpush1.msra.mxu0 0.0
      %3464 = vmatprep.subr.mxu0 0.0
      %3465 = vmatpush1.msra.mxu0 0.0
      %3466 = vmatprep.subr.mxu0 0.0
      %3467 = vmatpush1.msra.mxu0 0.0
      %3468 = vmatprep.subr.mxu0 0.0
      %3469 = vmatpush1.msra.mxu0 0.0
      %3470 = vmatprep.subr.mxu0 0.0
      %3471 = vmatpush1.msra.mxu0 0.0
      %3472 = vmatprep.subr.mxu0 0.0
      %3473 = vmatpush1.msra.mxu0 0.0
      %3474 = vmatprep.subr.mxu0 0.0
      %3475 = vmatpush1.msra.mxu0 0.0
      %3476 = vmatprep.subr.mxu0 0.0
      %3477 = vmatpush1.msra.mxu0 0.0
      %3478 = vmatprep.subr.mxu0 0.0
      %3479 = vmatpush1.msra.mxu0 0.0
      %3480 = vmatprep.subr.mxu0 0.0
      %3481 = vmatpush1.msra.mxu0 0.0
      %3482 = vmatprep.mubr.f32.mxu0 0.0
      %3483 = vmatmul.mubr.f32.gmra.mrb[0].mxu0 %v3410
      %v3484 = vpop.f32.mrb[0].mxu0
      %v3485 = vadd.f32 0.0, %v3484
      %v3486 = vpop.f32.mrb[0].mxu0
      %3487 = vmatprep.mubr.f32.mxu0 0.0
      %3488 = vmatmul.mubr.f32.gmra.mrb[0].mxu0 %v3413
      %v3489 = vpop.f32.mrb[0].mxu0
      %v3490 = vadd.f32 0.0, %v3489
      %v3491 = vpop.f32.mrb[0].mxu0
      %3492 = vmatprep.mubr.f32.mxu0 0.0
      %3493 = vmatmul.mubr.f32.gmra.mrb[0].mxu0 %v3416
      %v3494 = vpop.f32.mrb[0].mxu0
      %v3495 = vadd.f32 0.0, %v3494
      %v3496 = vpop.f32.mrb[0].mxu0
      %3497 = vdwg.mxu0
      %v3498 = vadd.f32 %v3226, %v3485
      %v3499 = vadd.f32 %v3227, %v3490
      %v3500 = vadd.f32 %v3228, %v3495
      %v3502 = vlaneseq
      %v3503 = vshrl.u32 %v3502, 7
      %v3504 = vsub.s32 0, %v3503
      %v3505 = vrot.slane %v739, %v3504
      %v3507 = vadd.f32 %v3498, %v3505
      %v3508 = vadd.f32 %v3499, %v3505
      %v3509 = vadd.f32 %v3500, %v3505
      %3510 = vst.msk [vmem:[%s582] sm:$0xff] %vm600, %v3507
      %3511 = vst.msk [vmem:[%s582 + $0x8] sm:$0xff] %vm600, %v3508
      %3512 = vst.msk [vmem:[%s582 + $0x10] sm:$0x1] %vm746, %v3509
      %p3513 = scmp.lt.s32.totalorder %s28, 1
      %s3514 = scalar_select %p3513, %s28, 1
      %s3515 = smul.addr %s3514, 3
      %s3516 = smul.addr %s3515, 8
      %s3517 = scalar_lea.vmem %s17, %s3516
      // Predicated region
      $region89: #{_lambda_.8} parent=87 // pred_check
        %p3518 = pneg %p418
      $region90: #{_lambda_.8} parent=87 // pred_check_branch
        %3520 = sbr.rel (%p3518) target = $region92
      $region91: #{_lambda_.8} parent=87 // pred_region
        _
      $region92: #{_lambda_.8} parent=87 // pred_fallthru
        _
    $region88: #{_lambda_.8} parent=5 // pred_fallthru
      _
    %p3521 = scmp.le.s32.totalorder 2, %s23
    // Predicated region
    $region93: #{_lambda_.8} parent=5 // pred_check
      %p3522 = pneg %p3521
    $region94: #{_lambda_.8} parent=5 // pred_check_branch
      %3524 = sbr.rel (%p3522) target = $region96
    $region95: #{_lambda_.8} parent=5 // pred_region
      %s3525 = ssub.s32 %s23, 2
      // Predicated region
      $region97: #{_lambda_.8} parent=95 // pred_check
        %p3526 = pneg %p424
      $region98: #{_lambda_.8} parent=95 // pred_check_branch
        %3528 = sbr.rel (%p3526) target = $region100
      $region99: #{_lambda_.8} parent=95 // pred_region
        %p3529 = scmp.lt.s32.totalorder %s29, 1
        %s3530 = scalar_select %p3529, %s29, 1
        %s3531 = smul.addr %s3530, 3
        %s3532 = smul.addr %s3531, 8
        %s3533 = scalar_lea.vmem %s17, %s3532
      $region100: #{_lambda_.8} parent=95 // pred_fallthru
        _
    $region96: #{_lambda_.8} parent=5 // pred_fallthru
      _
  $region6: #{_lambda_.8} parent=0 // loop_footer
    %s27 = sadd.s32 1, %s23
  $region7: #{_lambda_.8} parent=0 // loop_footer_branch
    %22 = sbr.rel target = $region3
  $region8: #{_lambda_.8} parent=0 // loop_exit
    _

</llo_original>
